<compile_context>
chip_gen: v7x
topology: tpu7x:2x2x1
jax: 0.10.0
libtpu: 0.0.40
codegen_flags: <defaults>
</compile_context>

<pallas_src>
import functools

import jax
import jax.numpy as jnp
from jax import lax
from jax.experimental import pallas as pl
from jax.experimental.pallas import tpu as pltpu

C_PAD = 128          # every layer's channels are zero-padded to 128 lanes
N_LAYERS = 16        # in1, in2, 6 x (conv1, conv2), mid, out
N_BLOCKS = 6
TILE_M = 128         # M-tile rows (per-image padded-flat rows)
GUARD = 32           # slack rows above/below the flat activation (>= W+3)


# ------------------------------ fused kernel --------------------------------

def _fused_noiseresnet_kernel(
    x_ref,       # [1, M_IMG, 128]    bf16  padded-flat input image
    imask_ref,   # [M_IMG, 128]       bf16  1.0 on interior rows, 0.0 on pads
    w_ref,       # [16*9, 128, 128]   bf16  per-layer, per-tap weights (resident)
    scale_ref,   # [16, 1, 128]       f32   folded BN scale
    bias_ref,    # [16, 1, 128]       f32   folded BN bias (+conv bias)
    o_ref,       # [1, M_IMG, 128]    f32   last layer's output (padded-flat)
    act_ref,     # scratch [2, M_IMG + 2*GUARD, 128] bf16  ping-pong activation
    res_ref,     # scratch [M_IMG, 128] f32  residual-block input snapshot
    *, wp2, c, m_img, guard, tile_m, n_layers, n_blocks):

  n_tiles = m_img // tile_m
  last = n_layers - 1
  add_res_hi = 2 * n_blocks + 1          # last block-conv2 layer index (13)
  save_res_hi = add_res_hi - 2           # last layer whose output is a residual (11)

  # ---- per-image init: load input, zero guard rows + residual buffer ----
  zg = jnp.zeros((guard, c), jnp.bfloat16)
  act_ref[0, guard:guard + m_img, :] = x_ref[0]
  act_ref[0, 0:guard, :] = zg
  act_ref[0, guard + m_img:, :] = zg
  act_ref[1, 0:guard, :] = zg
  act_ref[1, guard + m_img:, :] = zg
  res_ref[...] = jnp.zeros_like(res_ref)

  def layer_body(l, carry):
    rd = l % 2                     # read buffer (layer parity), write the other
    wr = 1 - rd
    is_odd = (l % 2) == 1
    do_relu = jnp.logical_and(l >= 1, l <= last - 1)
    add_res = jnp.logical_and(is_odd, jnp.logical_and(l >= 3, l <= add_res_hi))
    save_res = jnp.logical_and(is_odd, jnp.logical_and(l >= 1, l <= save_res_hi))
    relu_low = jnp.where(do_relu, jnp.float32(0.0), jnp.float32(-3.0e38))

    # hoisted per-layer (cheap implicit [1,C] broadcast inside each tile)
    scale_v = scale_ref[l]         # [1, C] f32
    bias_v = bias_ref[l]           # [1, C] f32

    for mi in range(n_tiles):
      m0 = mi * tile_m
      acc = jnp.zeros((tile_m, c), jnp.float32)
      # 3x3 conv = 9 statically shifted flat slices -> 9 accumulated K=128 dots
      for ky in range(3):
        for kx in range(3):
          s = (ky - 1) * wp2 + (kx - 1)
          a = act_ref[rd, guard + m0 + s: guard + m0 + s + tile_m, :]
          wt = w_ref[l * 9 + ky * 3 + kx]
          acc = acc + jnp.dot(a, wt, preferred_element_type=jnp.float32)

      # fused f32 epilogue: folded BN, residual, relu
      acc = acc * scale_v + bias_v
      acc = acc + jnp.where(add_res, res_ref[m0:m0 + tile_m, :], 0.0)
      acc = jnp.maximum(acc, relu_low)              # relu iff do_relu

      # writeback for the next layer; pad rows forced back to exact zero
      mask = imask_ref[m0:m0 + tile_m, :]
      nxt = jnp.where(mask > 0, acc.astype(jnp.bfloat16),
                      jnp.zeros((tile_m, c), jnp.bfloat16))
      act_ref[wr, guard + m0: guard + m0 + tile_m, :] = nxt

      @pl.when(save_res)
      def _():
        res_ref[m0:m0 + tile_m, :] = acc

      @pl.when(l == last)
      def _():
        o_ref[0, m0:m0 + tile_m, :] = acc

    return carry

  lax.fori_loop(0, n_layers, layer_body, 0)


def noise_resnet_fused(w_all, scale_all, bias_all, x_flat, imask,
                       *, n, h, w, c=C_PAD, n_layers=N_LAYERS,
                       n_blocks=N_BLOCKS, tile_m=TILE_M, guard=GUARD):
  wp2 = w + 2
  m_img = x_flat.shape[1]
  assert m_img % tile_m == 0 and guard >= wp2 + 1 and c == C_PAD

  kernel = functools.partial(
      _fused_noiseresnet_kernel, wp2=wp2, c=c, m_img=m_img, guard=guard,
      tile_m=tile_m, n_layers=n_layers, n_blocks=n_blocks)

  grid_spec = pltpu.PrefetchScalarGridSpec(
      num_scalar_prefetch=0,
      grid=(n,),                        # batch axis: parallel across v7x cores
      in_specs=[
          pl.BlockSpec((1, m_img, c), lambda b: (b, 0, 0)),         # x (per image)
          pl.BlockSpec((m_img, c), lambda b: (0, 0)),               # interior mask
          pl.BlockSpec((n_layers * 9, c, c), lambda b: (0, 0, 0)),  # weights
          pl.BlockSpec((n_layers, 1, c), lambda b: (0, 0, 0)),      # scale
          pl.BlockSpec((n_layers, 1, c), lambda b: (0, 0, 0)),      # bias
      ],
      out_specs=pl.BlockSpec((1, m_img, c), lambda b: (b, 0, 0)),
      scratch_shapes=[
          pltpu.VMEM((2, m_img + 2 * guard, c), jnp.bfloat16),      # ping-pong act
          pltpu.VMEM((m_img, c), jnp.float32),                      # residual snap
      ],
  )

  return pl.pallas_call(
      kernel,
      out_shape=jax.ShapeDtypeStruct((n, m_img, c), jnp.float32),
      grid_spec=grid_spec,
      compiler_params=pltpu.CompilerParams(
          dimension_semantics=("parallel",),
          vmem_limit_bytes=32 * 1024 * 1024,
      ),
  )(x_flat, imask, w_all, scale_all, bias_all)


# --------------------------- parameter creation ------------------------------

def _init_conv(key, cin, cout):
  kw, kb = jax.random.split(key)
  fan_in = 9 * cin
  w = jax.random.normal(kw, (3, 3, cin, cout), jnp.float32) / jnp.sqrt(fan_in)
  b = 0.01 * jax.random.normal(kb, (cout,), jnp.float32)
  return w, b


def _init_bn(key, c):
  k1, k2, k3, k4 = jax.random.split(key, 4)
  gamma = 1.0 + 0.1 * jax.random.normal(k1, (c,), jnp.float32)
  beta = 0.1 * jax.random.normal(k2, (c,), jnp.float32)
  mean = 0.1 * jax.random.normal(k3, (c,), jnp.float32)
  var = 0.5 + jax.random.uniform(k4, (c,), jnp.float32)
  return gamma, beta, mean, var


def _fold_conv_bn(key, cin, cout, eps=1e-5):
  kc, kb = jax.random.split(key)
  w, b = _init_conv(kc, cin, cout)
  gamma, beta, mean, var = _init_bn(kb, cout)
  s = gamma / jnp.sqrt(var + eps)
  return w, s, (b - mean) * s + beta


def make_layer_params(key, in_channels=4, out_channels=4):
  """Returns the 16 layers as a flat list of (w[3,3,cin,cout], scale, bias)."""
  keys = iter(jax.random.split(key, 40))
  layers = [
      _fold_conv_bn(next(keys), in_channels, 64),     # conv_in1 + bn_in1
      _fold_conv_bn(next(keys), 64, 128),             # conv_in2 + bn_in2
  ]
  for _ in range(N_BLOCKS):
    layers.append(_fold_conv_bn(next(keys), 128, 128))   # block.conv1 + bn1
    layers.append(_fold_conv_bn(next(keys), 128, 128))   # block.conv2 + bn2
  layers.append(_fold_conv_bn(next(keys), 128, 64))      # conv_mid + bn_mid
  w_out, b_out = _init_conv(next(keys), 64, out_channels)
  layers.append((w_out, jnp.ones((out_channels,), jnp.float32), b_out))  # conv_out
  return layers


def pack_params(layers, c=C_PAD):
  """Zero-pad every layer to 128 in/out channels; [16*9, 128, 128] tap weights.

  NOTE: padded out-channels MUST keep scale=0 / bias=0 so the padded lanes of
  every activation stay exactly zero (the residual path would propagate any
  leakage).  That is guaranteed by building from jnp.zeros().at[].set().
  """
  w_list, s_list, b_list = [], [], []
  for wconv, s, b in layers:
    _, _, cin, cout = wconv.shape
    wp = jnp.zeros((3, 3, c, c), jnp.float32).at[:, :, :cin, :cout].set(wconv)
    sp = jnp.zeros((c,), jnp.float32).at[:cout].set(s)
    bp = jnp.zeros((c,), jnp.float32).at[:cout].set(b)
    w_list.append(wp.reshape(9, c, c))      # tap index = ky*3 + kx
    s_list.append(sp)
    b_list.append(bp)
  w_all = jnp.concatenate(w_list, axis=0).astype(jnp.bfloat16)   # [144,128,128]
  s_all = jnp.stack(s_list)[:, None, :]                          # [16,1,128] f32
  b_all = jnp.stack(b_list)[:, None, :]                          # [16,1,128] f32
  return w_all, s_all, b_all


# ------------------------------- forward pass --------------------------------

@jax.jit
def noise_resnet(packed, x_nchw):
  w_all, s_all, b_all = packed
  n, cin, h, w = x_nchw.shape
  c = C_PAD
  hp2, wp2 = h + 2, w + 2
  m_raw = hp2 * wp2
  m_img = pl.cdiv(m_raw, TILE_M) * TILE_M

  x_nhwc = jnp.transpose(x_nchw, (0, 2, 3, 1))                        # NHWC f32
  xcp = jnp.pad(x_nhwc, ((0, 0), (0, 0), (0, 0), (0, c - cin)))       # channel pad
  xsp = jnp.pad(xcp, ((0, 0), (1, 1), (1, 1), (0, 0)))                # spatial pad
  x_flat = xsp.reshape(n, m_raw, c)
  x_flat = jnp.pad(x_flat, ((0, 0), (0, m_img - m_raw), (0, 0)))
  x_flat = x_flat.astype(jnp.bfloat16)                                # [N,M_IMG,128]

  r = jnp.arange(m_img)
  hp_i = r // wp2
  wp_i = r % wp2
  interior = ((r < m_raw) & (hp_i >= 1) & (hp_i <= h)
              & (wp_i >= 1) & (wp_i <= w))
  imask = jnp.broadcast_to(interior[:, None], (m_img, c)).astype(jnp.bfloat16)

  out_flat = noise_resnet_fused(w_all, s_all, b_all, x_flat, imask,
                                n=n, h=h, w=w, c=c)
  y = out_flat[:, :m_raw, :].reshape(n, hp2, wp2, c)[:, 1:h + 1, 1:w + 1, :4]
  y = y + x_nhwc[..., :4]                 # identity add (conv_out + x[:, :4])
  return jnp.transpose(y, (0, 3, 1, 2))                               # NCHW


# ---------------------------- pure-JAX reference ------------------------------

def _ref_conv_bn(x, wconv, s, b, residual=None, relu=False):
  # bf16 operands / f32 accumulation, mirroring the kernel's MXU precision.
  y = jax.lax.conv_general_dilated(
      x.astype(jnp.bfloat16), wconv.astype(jnp.bfloat16), (1, 1), "SAME",
      dimension_numbers=("NHWC", "HWIO", "NHWC"),
      preferred_element_type=jnp.float32)
  y = y * s + b
  if residual is not None:
    y = y + residual
  if relu:
    y = jnp.maximum(y, 0.0)
  return y


@jax.jit
def noise_resnet_ref(layers, x_nchw):
  x = jnp.transpose(x_nchw, (0, 2, 3, 1))
  identity = x[..., :4]
  hcur = _ref_conv_bn(x, *layers[0], relu=False)
  hcur = _ref_conv_bn(hcur, *layers[1], relu=True)
  for bidx in range(N_BLOCKS):
    r = hcur
    hcur = _ref_conv_bn(hcur, *layers[2 + 2 * bidx], relu=True)
    hcur = _ref_conv_bn(hcur, *layers[3 + 2 * bidx], residual=r, relu=True)
  hcur = _ref_conv_bn(hcur, *layers[14], relu=True)
  hcur = _ref_conv_bn(hcur, *layers[15], residual=identity, relu=False)
  return jnp.transpose(hcur, (0, 3, 1, 2))


# ----------------------------------- main ------------------------------------

if __name__ == "__main__":
  key = jax.random.PRNGKey(0)
  k_in, k_par = jax.random.split(key)

  x = jax.random.normal(k_in, (2, 4, 16, 16), jnp.float32)   # NCHW, like PyTorch
  layers = make_layer_params(k_par, in_channels=4, out_channels=4)
  packed = pack_params(layers)

  out = jax.block_until_ready(noise_resnet(packed, x))
  assert out.shape == (2, 4, 16, 16), out.shape

  ref = jax.block_until_ready(noise_resnet_ref(layers, x))
  rel_err = float(jnp.max(jnp.abs(out - ref)) / (jnp.max(jnp.abs(ref)) + 1e-6))
  assert rel_err < 1e-2, f"relative error too large: {rel_err}"

  print("KERNEL_OK")
</pallas_src>

<mosaic_0001>
module attributes {stable_mosaic.version = 11 : i64} {
  func.func @_fused_noiseresnet_kernel(%arg0: i32, %arg1: memref<1x384x128xbf16, #tpu.memory_space<vmem>>, %arg2: memref<384x128xbf16, #tpu.memory_space<vmem>>, %arg3: memref<144x128x128xbf16, #tpu.memory_space<vmem>>, %arg4: memref<16x1x128xf32, #tpu.memory_space<vmem>>, %arg5: memref<16x1x128xf32, #tpu.memory_space<vmem>>, %arg6: memref<1x384x128xf32, #tpu.memory_space<vmem>>, %arg7: memref<2x448x128xbf16, #tpu.memory_space<vmem>>, %arg8: memref<384x128xf32, #tpu.memory_space<vmem>>) attributes {dimension_semantics = [#tpu.dimension_semantics<parallel>], iteration_bounds = array<i64: 2>, scalar_prefetch = 0 : i64, scratch_operands = 2 : i64, tpu.core_type = #tpu.core_type<tc>, window_params = [{transform_indices = @transform_0, window_bounds = array<i64: 1, 384, 128>}, {pipeline_mode = #tpu.pipeline_mode<synchronous>, transform_indices = @transform_1, window_bounds = array<i64: 384, 128>}, {pipeline_mode = #tpu.pipeline_mode<synchronous>, transform_indices = @transform_2, window_bounds = array<i64: 144, 128, 128>}, {pipeline_mode = #tpu.pipeline_mode<synchronous>, transform_indices = @transform_3, window_bounds = array<i64: 16, 1, 128>}, {pipeline_mode = #tpu.pipeline_mode<synchronous>, transform_indices = @transform_4, window_bounds = array<i64: 16, 1, 128>}, {transform_indices = @transform_5, window_bounds = array<i64: 1, 384, 128>}]} {
    %cst = arith.constant 0.000000e+00 : bf16
    %0 = vector.broadcast %cst : bf16 to vector<32x128xbf16>
    %c0 = arith.constant 0 : index
    %c0_0 = arith.constant 0 : index
    %c0_1 = arith.constant 0 : index
    %1 = vector.load %arg1[%c0, %c0_0, %c0_1] : memref<1x384x128xbf16, #tpu.memory_space<vmem>>, vector<1x384x128xbf16>
    %2 = vector.shape_cast %1 : vector<1x384x128xbf16> to vector<384x128xbf16>
    %c0_2 = arith.constant 0 : index
    %c32 = arith.constant 32 : index
    %c0_3 = arith.constant 0 : index
    %3 = vector.load %arg7[%c0_2, %c32, %c0_3] : memref<2x448x128xbf16, #tpu.memory_space<vmem>>, vector<1x384x128xbf16>
    %4 = vector.shape_cast %3 : vector<1x384x128xbf16> to vector<384x128xbf16>
    %5 = vector.shape_cast %2 : vector<384x128xbf16> to vector<1x384x128xbf16>
    tpu.vector_store %arg7[%c0_2, %c32, %c0_3], %5 {strides = array<i32>} : memref<2x448x128xbf16, #tpu.memory_space<vmem>>, vector<1x384x128xbf16>,
    %c0_4 = arith.constant 0 : index
    %c0_5 = arith.constant 0 : index
    %c0_6 = arith.constant 0 : index
    %6 = vector.load %arg7[%c0_4, %c0_5, %c0_6] : memref<2x448x128xbf16, #tpu.memory_space<vmem>>, vector<1x32x128xbf16>
    %7 = vector.shape_cast %6 : vector<1x32x128xbf16> to vector<32x128xbf16>
    %8 = vector.shape_cast %0 : vector<32x128xbf16> to vector<1x32x128xbf16>
    tpu.vector_store %arg7[%c0_4, %c0_5, %c0_6], %8 {strides = array<i32>} : memref<2x448x128xbf16, #tpu.memory_space<vmem>>, vector<1x32x128xbf16>,
    %c0_7 = arith.constant 0 : index
    %c416 = arith.constant 416 : index
    %c0_8 = arith.constant 0 : index
    %9 = vector.load %arg7[%c0_7, %c416, %c0_8] : memref<2x448x128xbf16, #tpu.memory_space<vmem>>, vector<1x32x128xbf16>
    %10 = vector.shape_cast %9 : vector<1x32x128xbf16> to vector<32x128xbf16>
    %11 = vector.shape_cast %0 : vector<32x128xbf16> to vector<1x32x128xbf16>
    tpu.vector_store %arg7[%c0_7, %c416, %c0_8], %11 {strides = array<i32>} : memref<2x448x128xbf16, #tpu.memory_space<vmem>>, vector<1x32x128xbf16>,
    %c1 = arith.constant 1 : index
    %c0_9 = arith.constant 0 : index
    %c0_10 = arith.constant 0 : index
    %12 = vector.load %arg7[%c1, %c0_9, %c0_10] : memref<2x448x128xbf16, #tpu.memory_space<vmem>>, vector<1x32x128xbf16>
    %13 = vector.shape_cast %12 : vector<1x32x128xbf16> to vector<32x128xbf16>
    %14 = vector.shape_cast %0 : vector<32x128xbf16> to vector<1x32x128xbf16>
    tpu.vector_store %arg7[%c1, %c0_9, %c0_10], %14 {strides = array<i32>} : memref<2x448x128xbf16, #tpu.memory_space<vmem>>, vector<1x32x128xbf16>,
    %c1_11 = arith.constant 1 : index
    %c416_12 = arith.constant 416 : index
    %c0_13 = arith.constant 0 : index
    %15 = vector.load %arg7[%c1_11, %c416_12, %c0_13] : memref<2x448x128xbf16, #tpu.memory_space<vmem>>, vector<1x32x128xbf16>
    %16 = vector.shape_cast %15 : vector<1x32x128xbf16> to vector<32x128xbf16>
    %17 = vector.shape_cast %0 : vector<32x128xbf16> to vector<1x32x128xbf16>
    tpu.vector_store %arg7[%c1_11, %c416_12, %c0_13], %17 {strides = array<i32>} : memref<2x448x128xbf16, #tpu.memory_space<vmem>>, vector<1x32x128xbf16>,
    %cst_14 = arith.constant 0.000000e+00 : f32
    %18 = vector.broadcast %cst_14 : f32 to vector<384x128xf32>
    %c0_15 = arith.constant 0 : index
    %c0_16 = arith.constant 0 : index
    %19 = vector.load %arg8[%c0_15, %c0_16] : memref<384x128xf32, #tpu.memory_space<vmem>>, vector<384x128xf32>
    tpu.vector_store %arg8[%c0_15, %c0_16], %18 {strides = array<i32>} : memref<384x128xf32, #tpu.memory_space<vmem>>, vector<384x128xf32>,
    %c0_i32 = arith.constant 0 : i32
    %c16_i32 = arith.constant 16 : i32
    %20 = arith.addi %c0_i32, %c16_i32 : i32
    %c1_i32 = arith.constant 1 : i32
    scf.for %arg9 = %c0_i32 to %20 step %c1_i32  : i32 {
      %c2_i32 = arith.constant 2 : i32
      %c0_i32_18 = arith.constant 0 : i32
      %21 = arith.cmpi eq, %c2_i32, %c0_i32_18 : i32
      %c1_i32_19 = arith.constant 1 : i32
      %22 = arith.select %21, %c1_i32_19, %c2_i32 : i32
      %23 = arith.remsi %arg9, %22 : i32
      %c0_i32_20 = arith.constant 0 : i32
      %24 = arith.cmpi ne, %23, %c0_i32_20 : i32
      %c0_i32_21 = arith.constant 0 : i32
      %25 = arith.cmpi slt, %23, %c0_i32_21 : i32
      %c0_i32_22 = arith.constant 0 : i32
      %26 = arith.cmpi slt, %22, %c0_i32_22 : i32
      %27 = arith.xori %25, %26 : i1
      %28 = arith.andi %27, %24 : i1
      %29 = arith.addi %23, %22 : i32
      %30 = arith.select %28, %29, %23 : i32
      %c1_i32_23 = arith.constant 1 : i32
      %31 = arith.subi %c1_i32_23, %30 : i32
      %c2_i32_24 = arith.constant 2 : i32
      %c0_i32_25 = arith.constant 0 : i32
      %32 = arith.cmpi eq, %c2_i32_24, %c0_i32_25 : i32
      %c1_i32_26 = arith.constant 1 : i32
      %33 = arith.select %32, %c1_i32_26, %c2_i32_24 : i32
      %34 = arith.remsi %arg9, %33 : i32
      %c0_i32_27 = arith.constant 0 : i32
      %35 = arith.cmpi ne, %34, %c0_i32_27 : i32
      %c0_i32_28 = arith.constant 0 : i32
      %36 = arith.cmpi slt, %34, %c0_i32_28 : i32
      %c0_i32_29 = arith.constant 0 : i32
      %37 = arith.cmpi slt, %33, %c0_i32_29 : i32
      %38 = arith.xori %36, %37 : i1
      %39 = arith.andi %38, %35 : i1
      %40 = arith.addi %34, %33 : i32
      %41 = arith.select %39, %40, %34 : i32
      %c1_i32_30 = arith.constant 1 : i32
      %42 = arith.cmpi eq, %41, %c1_i32_30 : i32
      %c1_i32_31 = arith.constant 1 : i32
      %43 = arith.cmpi sge, %arg9, %c1_i32_31 : i32
      %c14_i32 = arith.constant 14 : i32
      %44 = arith.cmpi sle, %arg9, %c14_i32 : i32
      %45 = arith.andi %43, %44 : i1
      %c3_i32 = arith.constant 3 : i32
      %46 = arith.cmpi sge, %arg9, %c3_i32 : i32
      %c13_i32 = arith.constant 13 : i32
      %47 = arith.cmpi sle, %arg9, %c13_i32 : i32
      %48 = arith.andi %46, %47 : i1
      %49 = arith.andi %42, %48 : i1
      %c1_i32_32 = arith.constant 1 : i32
      %50 = arith.cmpi sge, %arg9, %c1_i32_32 : i32
      %c11_i32 = arith.constant 11 : i32
      %51 = arith.cmpi sle, %arg9, %c11_i32 : i32
      %52 = arith.andi %50, %51 : i1
      %53 = arith.andi %42, %52 : i1
      %cst_33 = arith.constant 0.000000e+00 : f32
      %cst_34 = arith.constant -3.000000e+38 : f32
      %54 = arith.select %45, %cst_33, %cst_34 : f32
      %55 = arith.index_cast %arg9 : i32 to index
      %c0_35 = arith.constant 0 : index
      %c0_36 = arith.constant 0 : index
      %56 = vector.load %arg4[%55, %c0_35, %c0_36] : memref<16x1x128xf32, #tpu.memory_space<vmem>>, vector<1x1x128xf32>
      %57 = vector.shape_cast %56 : vector<1x1x128xf32> to vector<1x128xf32>
      %58 = arith.index_cast %arg9 : i32 to index
      %c0_37 = arith.constant 0 : index
      %c0_38 = arith.constant 0 : index
      %59 = vector.load %arg5[%58, %c0_37, %c0_38] : memref<16x1x128xf32, #tpu.memory_space<vmem>>, vector<1x1x128xf32>
      %60 = vector.shape_cast %59 : vector<1x1x128xf32> to vector<1x128xf32>
      %cst_39 = arith.constant 0.000000e+00 : f32
      %61 = vector.broadcast %cst_39 : f32 to vector<128x128xf32>
      %62 = arith.index_cast %30 : i32 to index
      %c13 = arith.constant 13 : index
      %c0_40 = arith.constant 0 : index
      %63 = vector.load %arg7[%62, %c13, %c0_40] : memref<2x448x128xbf16, #tpu.memory_space<vmem>>, vector<1x128x128xbf16>
      %64 = vector.shape_cast %63 : vector<1x128x128xbf16> to vector<128x128xbf16>
      %c9_i32 = arith.constant 9 : i32
      %65 = arith.muli %arg9, %c9_i32 : i32
      %c0_i32_41 = arith.constant 0 : i32
      %66 = arith.addi %65, %c0_i32_41 : i32
      %c0_i32_42 = arith.constant 0 : i32
      %67 = arith.addi %66, %c0_i32_42 : i32
      %68 = arith.index_cast %67 : i32 to index
      %c0_43 = arith.constant 0 : index
      %c0_44 = arith.constant 0 : index
      %69 = vector.load %arg3[%68, %c0_43, %c0_44] : memref<144x128x128xbf16, #tpu.memory_space<vmem>>, vector<1x128x128xbf16>
      %70 = vector.shape_cast %69 : vector<1x128x128xbf16> to vector<128x128xbf16>
      %cst_45 = arith.constant dense<0.000000e+00> : vector<128x128xf32>
      %71 = tpu.matmul %64, %70, %cst_45 {dimension_numbers = #tpu.dot_dimension_numbers<[1], [0], [0], [1], [0, 0, 1, 1], [], []>} : vector<128x128xbf16>, vector<128x128xbf16>, vector<128x128xf32> -> vector<128x128xf32>
      %72 = arith.addf %61, %71 : vector<128x128xf32>
      %73 = arith.index_cast %30 : i32 to index
      %c14 = arith.constant 14 : index
      %c0_46 = arith.constant 0 : index
      %74 = vector.load %arg7[%73, %c14, %c0_46] : memref<2x448x128xbf16, #tpu.memory_space<vmem>>, vector<1x128x128xbf16>
      %75 = vector.shape_cast %74 : vector<1x128x128xbf16> to vector<128x128xbf16>
      %c9_i32_47 = arith.constant 9 : i32
      %76 = arith.muli %arg9, %c9_i32_47 : i32
      %c0_i32_48 = arith.constant 0 : i32
      %77 = arith.addi %76, %c0_i32_48 : i32
      %c1_i32_49 = arith.constant 1 : i32
      %78 = arith.addi %77, %c1_i32_49 : i32
      %79 = arith.index_cast %78 : i32 to index
      %c0_50 = arith.constant 0 : index
      %c0_51 = arith.constant 0 : index
      %80 = vector.load %arg3[%79, %c0_50, %c0_51] : memref<144x128x128xbf16, #tpu.memory_space<vmem>>, vector<1x128x128xbf16>
      %81 = vector.shape_cast %80 : vector<1x128x128xbf16> to vector<128x128xbf16>
      %cst_52 = arith.constant dense<0.000000e+00> : vector<128x128xf32>
      %82 = tpu.matmul %75, %81, %cst_52 {dimension_numbers = #tpu.dot_dimension_numbers<[1], [0], [0], [1], [0, 0, 1, 1], [], []>} : vector<128x128xbf16>, vector<128x128xbf16>, vector<128x128xf32> -> vector<128x128xf32>
      %83 = arith.addf %72, %82 : vector<128x128xf32>
      %84 = arith.index_cast %30 : i32 to index
      %c15 = arith.constant 15 : index
      %c0_53 = arith.constant 0 : index
      %85 = vector.load %arg7[%84, %c15, %c0_53] : memref<2x448x128xbf16, #tpu.memory_space<vmem>>, vector<1x128x128xbf16>
      %86 = vector.shape_cast %85 : vector<1x128x128xbf16> to vector<128x128xbf16>
      %c9_i32_54 = arith.constant 9 : i32
      %87 = arith.muli %arg9, %c9_i32_54 : i32
      %c0_i32_55 = arith.constant 0 : i32
      %88 = arith.addi %87, %c0_i32_55 : i32
      %c2_i32_56 = arith.constant 2 : i32
      %89 = arith.addi %88, %c2_i32_56 : i32
      %90 = arith.index_cast %89 : i32 to index
      %c0_57 = arith.constant 0 : index
      %c0_58 = arith.constant 0 : index
      %91 = vector.load %arg3[%90, %c0_57, %c0_58] : memref<144x128x128xbf16, #tpu.memory_space<vmem>>, vector<1x128x128xbf16>
      %92 = vector.shape_cast %91 : vector<1x128x128xbf16> to vector<128x128xbf16>
      %cst_59 = arith.constant dense<0.000000e+00> : vector<128x128xf32>
      %93 = tpu.matmul %86, %92, %cst_59 {dimension_numbers = #tpu.dot_dimension_numbers<[1], [0], [0], [1], [0, 0, 1, 1], [], []>} : vector<128x128xbf16>, vector<128x128xbf16>, vector<128x128xf32> -> vector<128x128xf32>
      %94 = arith.addf %83, %93 : vector<128x128xf32>
      %95 = arith.index_cast %30 : i32 to index
      %c31 = arith.constant 31 : index
      %c0_60 = arith.constant 0 : index
      %96 = vector.load %arg7[%95, %c31, %c0_60] : memref<2x448x128xbf16, #tpu.memory_space<vmem>>, vector<1x128x128xbf16>
      %97 = vector.shape_cast %96 : vector<1x128x128xbf16> to vector<128x128xbf16>
      %c9_i32_61 = arith.constant 9 : i32
      %98 = arith.muli %arg9, %c9_i32_61 : i32
      %c3_i32_62 = arith.constant 3 : i32
      %99 = arith.addi %98, %c3_i32_62 : i32
      %c0_i32_63 = arith.constant 0 : i32
      %100 = arith.addi %99, %c0_i32_63 : i32
      %101 = arith.index_cast %100 : i32 to index
      %c0_64 = arith.constant 0 : index
      %c0_65 = arith.constant 0 : index
      %102 = vector.load %arg3[%101, %c0_64, %c0_65] : memref<144x128x128xbf16, #tpu.memory_space<vmem>>, vector<1x128x128xbf16>
      %103 = vector.shape_cast %102 : vector<1x128x128xbf16> to vector<128x128xbf16>
      %cst_66 = arith.constant dense<0.000000e+00> : vector<128x128xf32>
      %104 = tpu.matmul %97, %103, %cst_66 {dimension_numbers = #tpu.dot_dimension_numbers<[1], [0], [0], [1], [0, 0, 1, 1], [], []>} : vector<128x128xbf16>, vector<128x128xbf16>, vector<128x128xf32> -> vector<128x128xf32>
      %105 = arith.addf %94, %104 : vector<128x128xf32>
      %106 = arith.index_cast %30 : i32 to index
      %c32_67 = arith.constant 32 : index
      %c0_68 = arith.constant 0 : index
      %107 = vector.load %arg7[%106, %c32_67, %c0_68] : memref<2x448x128xbf16, #tpu.memory_space<vmem>>, vector<1x128x128xbf16>
      %108 = vector.shape_cast %107 : vector<1x128x128xbf16> to vector<128x128xbf16>
      %c9_i32_69 = arith.constant 9 : i32
      %109 = arith.muli %arg9, %c9_i32_69 : i32
      %c3_i32_70 = arith.constant 3 : i32
      %110 = arith.addi %109, %c3_i32_70 : i32
      %c1_i32_71 = arith.constant 1 : i32
      %111 = arith.addi %110, %c1_i32_71 : i32
      %112 = arith.index_cast %111 : i32 to index
      %c0_72 = arith.constant 0 : index
      %c0_73 = arith.constant 0 : index
      %113 = vector.load %arg3[%112, %c0_72, %c0_73] : memref<144x128x128xbf16, #tpu.memory_space<vmem>>, vector<1x128x128xbf16>
      %114 = vector.shape_cast %113 : vector<1x128x128xbf16> to vector<128x128xbf16>
      %cst_74 = arith.constant dense<0.000000e+00> : vector<128x128xf32>
      %115 = tpu.matmul %108, %114, %cst_74 {dimension_numbers = #tpu.dot_dimension_numbers<[1], [0], [0], [1], [0, 0, 1, 1], [], []>} : vector<128x128xbf16>, vector<128x128xbf16>, vector<128x128xf32> -> vector<128x128xf32>
      %116 = arith.addf %105, %115 : vector<128x128xf32>
      %117 = arith.index_cast %30 : i32 to index
      %c33 = arith.constant 33 : index
      %c0_75 = arith.constant 0 : index
      %118 = vector.load %arg7[%117, %c33, %c0_75] : memref<2x448x128xbf16, #tpu.memory_space<vmem>>, vector<1x128x128xbf16>
      %119 = vector.shape_cast %118 : vector<1x128x128xbf16> to vector<128x128xbf16>
      %c9_i32_76 = arith.constant 9 : i32
      %120 = arith.muli %arg9, %c9_i32_76 : i32
      %c3_i32_77 = arith.constant 3 : i32
      %121 = arith.addi %120, %c3_i32_77 : i32
      %c2_i32_78 = arith.constant 2 : i32
      %122 = arith.addi %121, %c2_i32_78 : i32
      %123 = arith.index_cast %122 : i32 to index
      %c0_79 = arith.constant 0 : index
      %c0_80 = arith.constant 0 : index
      %124 = vector.load %arg3[%123, %c0_79, %c0_80] : memref<144x128x128xbf16, #tpu.memory_space<vmem>>, vector<1x128x128xbf16>
      %125 = vector.shape_cast %124 : vector<1x128x128xbf16> to vector<128x128xbf16>
      %cst_81 = arith.constant dense<0.000000e+00> : vector<128x128xf32>
      %126 = tpu.matmul %119, %125, %cst_81 {dimension_numbers = #tpu.dot_dimension_numbers<[1], [0], [0], [1], [0, 0, 1, 1], [], []>} : vector<128x128xbf16>, vector<128x128xbf16>, vector<128x128xf32> -> vector<128x128xf32>
      %127 = arith.addf %116, %126 : vector<128x128xf32>
      %128 = arith.index_cast %30 : i32 to index
      %c49 = arith.constant 49 : index
      %c0_82 = arith.constant 0 : index
      %129 = vector.load %arg7[%128, %c49, %c0_82] : memref<2x448x128xbf16, #tpu.memory_space<vmem>>, vector<1x128x128xbf16>
      %130 = vector.shape_cast %129 : vector<1x128x128xbf16> to vector<128x128xbf16>
      %c9_i32_83 = arith.constant 9 : i32
      %131 = arith.muli %arg9, %c9_i32_83 : i32
      %c6_i32 = arith.constant 6 : i32
      %132 = arith.addi %131, %c6_i32 : i32
      %c0_i32_84 = arith.constant 0 : i32
      %133 = arith.addi %132, %c0_i32_84 : i32
      %134 = arith.index_cast %133 : i32 to index
      %c0_85 = arith.constant 0 : index
      %c0_86 = arith.constant 0 : index
      %135 = vector.load %arg3[%134, %c0_85, %c0_86] : memref<144x128x128xbf16, #tpu.memory_space<vmem>>, vector<1x128x128xbf16>
      %136 = vector.shape_cast %135 : vector<1x128x128xbf16> to vector<128x128xbf16>
      %cst_87 = arith.constant dense<0.000000e+00> : vector<128x128xf32>
      %137 = tpu.matmul %130, %136, %cst_87 {dimension_numbers = #tpu.dot_dimension_numbers<[1], [0], [0], [1], [0, 0, 1, 1], [], []>} : vector<128x128xbf16>, vector<128x128xbf16>, vector<128x128xf32> -> vector<128x128xf32>
      %138 = arith.addf %127, %137 : vector<128x128xf32>
      %139 = arith.index_cast %30 : i32 to index
      %c50 = arith.constant 50 : index
      %c0_88 = arith.constant 0 : index
      %140 = vector.load %arg7[%139, %c50, %c0_88] : memref<2x448x128xbf16, #tpu.memory_space<vmem>>, vector<1x128x128xbf16>
      %141 = vector.shape_cast %140 : vector<1x128x128xbf16> to vector<128x128xbf16>
      %c9_i32_89 = arith.constant 9 : i32
      %142 = arith.muli %arg9, %c9_i32_89 : i32
      %c6_i32_90 = arith.constant 6 : i32
      %143 = arith.addi %142, %c6_i32_90 : i32
      %c1_i32_91 = arith.constant 1 : i32
      %144 = arith.addi %143, %c1_i32_91 : i32
      %145 = arith.index_cast %144 : i32 to index
      %c0_92 = arith.constant 0 : index
      %c0_93 = arith.constant 0 : index
      %146 = vector.load %arg3[%145, %c0_92, %c0_93] : memref<144x128x128xbf16, #tpu.memory_space<vmem>>, vector<1x128x128xbf16>
      %147 = vector.shape_cast %146 : vector<1x128x128xbf16> to vector<128x128xbf16>
      %cst_94 = arith.constant dense<0.000000e+00> : vector<128x128xf32>
      %148 = tpu.matmul %141, %147, %cst_94 {dimension_numbers = #tpu.dot_dimension_numbers<[1], [0], [0], [1], [0, 0, 1, 1], [], []>} : vector<128x128xbf16>, vector<128x128xbf16>, vector<128x128xf32> -> vector<128x128xf32>
      %149 = arith.addf %138, %148 : vector<128x128xf32>
      %150 = arith.index_cast %30 : i32 to index
      %c51 = arith.constant 51 : index
      %c0_95 = arith.constant 0 : index
      %151 = vector.load %arg7[%150, %c51, %c0_95] : memref<2x448x128xbf16, #tpu.memory_space<vmem>>, vector<1x128x128xbf16>
      %152 = vector.shape_cast %151 : vector<1x128x128xbf16> to vector<128x128xbf16>
      %c9_i32_96 = arith.constant 9 : i32
      %153 = arith.muli %arg9, %c9_i32_96 : i32
      %c6_i32_97 = arith.constant 6 : i32
      %154 = arith.addi %153, %c6_i32_97 : i32
      %c2_i32_98 = arith.constant 2 : i32
      %155 = arith.addi %154, %c2_i32_98 : i32
      %156 = arith.index_cast %155 : i32 to index
      %c0_99 = arith.constant 0 : index
      %c0_100 = arith.constant 0 : index
      %157 = vector.load %arg3[%156, %c0_99, %c0_100] : memref<144x128x128xbf16, #tpu.memory_space<vmem>>, vector<1x128x128xbf16>
      %158 = vector.shape_cast %157 : vector<1x128x128xbf16> to vector<128x128xbf16>
      %cst_101 = arith.constant dense<0.000000e+00> : vector<128x128xf32>
      %159 = tpu.matmul %152, %158, %cst_101 {dimension_numbers = #tpu.dot_dimension_numbers<[1], [0], [0], [1], [0, 0, 1, 1], [], []>} : vector<128x128xbf16>, vector<128x128xbf16>, vector<128x128xf32> -> vector<128x128xf32>
      %160 = arith.addf %149, %159 : vector<128x128xf32>
      %161 = vector.broadcast %57 : vector<1x128xf32> to vector<128x128xf32>
      %162 = arith.mulf %160, %161 : vector<128x128xf32>
      %163 = vector.broadcast %60 : vector<1x128xf32> to vector<128x128xf32>
      %164 = arith.addf %162, %163 : vector<128x128xf32>
      %c0_102 = arith.constant 0 : index
      %c0_103 = arith.constant 0 : index
      %165 = vector.load %arg8[%c0_102, %c0_103] : memref<384x128xf32, #tpu.memory_space<vmem>>, vector<128x128xf32>
      %cst_104 = arith.constant 0.000000e+00 : f32
      %166 = vector.broadcast %cst_104 : f32 to vector<128x128xf32>
      %167 = arith.select %49, %165, %166 : vector<128x128xf32>
      %168 = arith.addf %164, %167 : vector<128x128xf32>
      %169 = vector.broadcast %54 : f32 to vector<128x128xf32>
      %170 = arith.maximumf %168, %169 : vector<128x128xf32>
      %c0_105 = arith.constant 0 : index
      %c0_106 = arith.constant 0 : index
      %171 = vector.load %arg2[%c0_105, %c0_106] : memref<384x128xbf16, #tpu.memory_space<vmem>>, vector<128x128xbf16>
      %cst_107 = arith.constant 0.000000e+00 : bf16
      %172 = vector.broadcast %cst_107 : bf16 to vector<128x128xbf16>
      %173 = arith.cmpf ogt, %171, %172 : vector<128x128xbf16>
      %174 = arith.truncf %170 : vector<128x128xf32> to vector<128x128xbf16>
      %cst_108 = arith.constant 0.000000e+00 : bf16
      %175 = vector.broadcast %cst_108 : bf16 to vector<128x128xbf16>
      %176 = arith.select %173, %174, %175 : vector<128x128xi1>, vector<128x128xbf16>
      %177 = arith.index_cast %31 : i32 to index
      %c32_109 = arith.constant 32 : index
      %c0_110 = arith.constant 0 : index
      %178 = vector.load %arg7[%177, %c32_109, %c0_110] : memref<2x448x128xbf16, #tpu.memory_space<vmem>>, vector<1x128x128xbf16>
      %179 = vector.shape_cast %178 : vector<1x128x128xbf16> to vector<128x128xbf16>
      %180 = vector.shape_cast %176 : vector<128x128xbf16> to vector<1x128x128xbf16>
      tpu.vector_store %arg7[%177, %c32_109, %c0_110], %180 {strides = array<i32>} : memref<2x448x128xbf16, #tpu.memory_space<vmem>>, vector<1x128x128xbf16>,
      %181 = arith.extui %53 : i1 to i32
      %c0_i32_111 = arith.constant 0 : i32
      %182 = arith.cmpi ne, %181, %c0_i32_111 : i32
      scf.if %182 {
        %c0_263 = arith.constant 0 : index
        %c0_264 = arith.constant 0 : index
        %436 = vector.load %arg8[%c0_263, %c0_264] : memref<384x128xf32, #tpu.memory_space<vmem>>, vector<128x128xf32>
        tpu.vector_store %arg8[%c0_263, %c0_264], %170 {strides = array<i32>} : memref<384x128xf32, #tpu.memory_space<vmem>>, vector<128x128xf32>,
      } else {
      }
      %c15_i32 = arith.constant 15 : i32
      %183 = arith.cmpi eq, %arg9, %c15_i32 : i32
      %184 = arith.extui %183 : i1 to i32
      %c0_i32_112 = arith.constant 0 : i32
      %185 = arith.cmpi ne, %184, %c0_i32_112 : i32
      scf.if %185 {
        %c0_263 = arith.constant 0 : index
        %c0_264 = arith.constant 0 : index
        %c0_265 = arith.constant 0 : index
        %436 = vector.load %arg6[%c0_263, %c0_264, %c0_265] : memref<1x384x128xf32, #tpu.memory_space<vmem>>, vector<1x128x128xf32>
        %437 = vector.shape_cast %436 : vector<1x128x128xf32> to vector<128x128xf32>
        %438 = vector.shape_cast %170 : vector<128x128xf32> to vector<1x128x128xf32>
        tpu.vector_store %arg6[%c0_263, %c0_264, %c0_265], %438 {strides = array<i32>} : memref<1x384x128xf32, #tpu.memory_space<vmem>>, vector<1x128x128xf32>,
      } else {
      }
      %cst_113 = arith.constant 0.000000e+00 : f32
      %186 = vector.broadcast %cst_113 : f32 to vector<128x128xf32>
      %187 = arith.index_cast %30 : i32 to index
      %c141 = arith.constant 141 : index
      %c0_114 = arith.constant 0 : index
      %188 = vector.load %arg7[%187, %c141, %c0_114] : memref<2x448x128xbf16, #tpu.memory_space<vmem>>, vector<1x128x128xbf16>
      %189 = vector.shape_cast %188 : vector<1x128x128xbf16> to vector<128x128xbf16>
      %c9_i32_115 = arith.constant 9 : i32
      %190 = arith.muli %arg9, %c9_i32_115 : i32
      %c0_i32_116 = arith.constant 0 : i32
      %191 = arith.addi %190, %c0_i32_116 : i32
      %c0_i32_117 = arith.constant 0 : i32
      %192 = arith.addi %191, %c0_i32_117 : i32
      %193 = arith.index_cast %192 : i32 to index
      %c0_118 = arith.constant 0 : index
      %c0_119 = arith.constant 0 : index
      %194 = vector.load %arg3[%193, %c0_118, %c0_119] : memref<144x128x128xbf16, #tpu.memory_space<vmem>>, vector<1x128x128xbf16>
      %195 = vector.shape_cast %194 : vector<1x128x128xbf16> to vector<128x128xbf16>
      %cst_120 = arith.constant dense<0.000000e+00> : vector<128x128xf32>
      %196 = tpu.matmul %189, %195, %cst_120 {dimension_numbers = #tpu.dot_dimension_numbers<[1], [0], [0], [1], [0, 0, 1, 1], [], []>} : vector<128x128xbf16>, vector<128x128xbf16>, vector<128x128xf32> -> vector<128x128xf32>
      %197 = arith.addf %186, %196 : vector<128x128xf32>
      %198 = arith.index_cast %30 : i32 to index
      %c142 = arith.constant 142 : index
      %c0_121 = arith.constant 0 : index
      %199 = vector.load %arg7[%198, %c142, %c0_121] : memref<2x448x128xbf16, #tpu.memory_space<vmem>>, vector<1x128x128xbf16>
      %200 = vector.shape_cast %199 : vector<1x128x128xbf16> to vector<128x128xbf16>
      %c9_i32_122 = arith.constant 9 : i32
      %201 = arith.muli %arg9, %c9_i32_122 : i32
      %c0_i32_123 = arith.constant 0 : i32
      %202 = arith.addi %201, %c0_i32_123 : i32
      %c1_i32_124 = arith.constant 1 : i32
      %203 = arith.addi %202, %c1_i32_124 : i32
      %204 = arith.index_cast %203 : i32 to index
      %c0_125 = arith.constant 0 : index
      %c0_126 = arith.constant 0 : index
      %205 = vector.load %arg3[%204, %c0_125, %c0_126] : memref<144x128x128xbf16, #tpu.memory_space<vmem>>, vector<1x128x128xbf16>
      %206 = vector.shape_cast %205 : vector<1x128x128xbf16> to vector<128x128xbf16>
      %cst_127 = arith.constant dense<0.000000e+00> : vector<128x128xf32>
      %207 = tpu.matmul %200, %206, %cst_127 {dimension_numbers = #tpu.dot_dimension_numbers<[1], [0], [0], [1], [0, 0, 1, 1], [], []>} : vector<128x128xbf16>, vector<128x128xbf16>, vector<128x128xf32> -> vector<128x128xf32>
      %208 = arith.addf %197, %207 : vector<128x128xf32>
      %209 = arith.index_cast %30 : i32 to index
      %c143 = arith.constant 143 : index
      %c0_128 = arith.constant 0 : index
      %210 = vector.load %arg7[%209, %c143, %c0_128] : memref<2x448x128xbf16, #tpu.memory_space<vmem>>, vector<1x128x128xbf16>
      %211 = vector.shape_cast %210 : vector<1x128x128xbf16> to vector<128x128xbf16>
      %c9_i32_129 = arith.constant 9 : i32
      %212 = arith.muli %arg9, %c9_i32_129 : i32
      %c0_i32_130 = arith.constant 0 : i32
      %213 = arith.addi %212, %c0_i32_130 : i32
      %c2_i32_131 = arith.constant 2 : i32
      %214 = arith.addi %213, %c2_i32_131 : i32
      %215 = arith.index_cast %214 : i32 to index
      %c0_132 = arith.constant 0 : index
      %c0_133 = arith.constant 0 : index
      %216 = vector.load %arg3[%215, %c0_132, %c0_133] : memref<144x128x128xbf16, #tpu.memory_space<vmem>>, vector<1x128x128xbf16>
      %217 = vector.shape_cast %216 : vector<1x128x128xbf16> to vector<128x128xbf16>
      %cst_134 = arith.constant dense<0.000000e+00> : vector<128x128xf32>
      %218 = tpu.matmul %211, %217, %cst_134 {dimension_numbers = #tpu.dot_dimension_numbers<[1], [0], [0], [1], [0, 0, 1, 1], [], []>} : vector<128x128xbf16>, vector<128x128xbf16>, vector<128x128xf32> -> vector<128x128xf32>
      %219 = arith.addf %208, %218 : vector<128x128xf32>
      %220 = arith.index_cast %30 : i32 to index
      %c159 = arith.constant 159 : index
      %c0_135 = arith.constant 0 : index
      %221 = vector.load %arg7[%220, %c159, %c0_135] : memref<2x448x128xbf16, #tpu.memory_space<vmem>>, vector<1x128x128xbf16>
      %222 = vector.shape_cast %221 : vector<1x128x128xbf16> to vector<128x128xbf16>
      %c9_i32_136 = arith.constant 9 : i32
      %223 = arith.muli %arg9, %c9_i32_136 : i32
      %c3_i32_137 = arith.constant 3 : i32
      %224 = arith.addi %223, %c3_i32_137 : i32
      %c0_i32_138 = arith.constant 0 : i32
      %225 = arith.addi %224, %c0_i32_138 : i32
      %226 = arith.index_cast %225 : i32 to index
      %c0_139 = arith.constant 0 : index
      %c0_140 = arith.constant 0 : index
      %227 = vector.load %arg3[%226, %c0_139, %c0_140] : memref<144x128x128xbf16, #tpu.memory_space<vmem>>, vector<1x128x128xbf16>
      %228 = vector.shape_cast %227 : vector<1x128x128xbf16> to vector<128x128xbf16>
      %cst_141 = arith.constant dense<0.000000e+00> : vector<128x128xf32>
      %229 = tpu.matmul %222, %228, %cst_141 {dimension_numbers = #tpu.dot_dimension_numbers<[1], [0], [0], [1], [0, 0, 1, 1], [], []>} : vector<128x128xbf16>, vector<128x128xbf16>, vector<128x128xf32> -> vector<128x128xf32>
      %230 = arith.addf %219, %229 : vector<128x128xf32>
      %231 = arith.index_cast %30 : i32 to index
      %c160 = arith.constant 160 : index
      %c0_142 = arith.constant 0 : index
      %232 = vector.load %arg7[%231, %c160, %c0_142] : memref<2x448x128xbf16, #tpu.memory_space<vmem>>, vector<1x128x128xbf16>
      %233 = vector.shape_cast %232 : vector<1x128x128xbf16> to vector<128x128xbf16>
      %c9_i32_143 = arith.constant 9 : i32
      %234 = arith.muli %arg9, %c9_i32_143 : i32
      %c3_i32_144 = arith.constant 3 : i32
      %235 = arith.addi %234, %c3_i32_144 : i32
      %c1_i32_145 = arith.constant 1 : i32
      %236 = arith.addi %235, %c1_i32_145 : i32
      %237 = arith.index_cast %236 : i32 to index
      %c0_146 = arith.constant 0 : index
      %c0_147 = arith.constant 0 : index
      %238 = vector.load %arg3[%237, %c0_146, %c0_147] : memref<144x128x128xbf16, #tpu.memory_space<vmem>>, vector<1x128x128xbf16>
      %239 = vector.shape_cast %238 : vector<1x128x128xbf16> to vector<128x128xbf16>
      %cst_148 = arith.constant dense<0.000000e+00> : vector<128x128xf32>
      %240 = tpu.matmul %233, %239, %cst_148 {dimension_numbers = #tpu.dot_dimension_numbers<[1], [0], [0], [1], [0, 0, 1, 1], [], []>} : vector<128x128xbf16>, vector<128x128xbf16>, vector<128x128xf32> -> vector<128x128xf32>
      %241 = arith.addf %230, %240 : vector<128x128xf32>
      %242 = arith.index_cast %30 : i32 to index
      %c161 = arith.constant 161 : index
      %c0_149 = arith.constant 0 : index
      %243 = vector.load %arg7[%242, %c161, %c0_149] : memref<2x448x128xbf16, #tpu.memory_space<vmem>>, vector<1x128x128xbf16>
      %244 = vector.shape_cast %243 : vector<1x128x128xbf16> to vector<128x128xbf16>
      %c9_i32_150 = arith.constant 9 : i32
      %245 = arith.muli %arg9, %c9_i32_150 : i32
      %c3_i32_151 = arith.constant 3 : i32
      %246 = arith.addi %245, %c3_i32_151 : i32
      %c2_i32_152 = arith.constant 2 : i32
      %247 = arith.addi %246, %c2_i32_152 : i32
      %248 = arith.index_cast %247 : i32 to index
      %c0_153 = arith.constant 0 : index
      %c0_154 = arith.constant 0 : index
      %249 = vector.load %arg3[%248, %c0_153, %c0_154] : memref<144x128x128xbf16, #tpu.memory_space<vmem>>, vector<1x128x128xbf16>
      %250 = vector.shape_cast %249 : vector<1x128x128xbf16> to vector<128x128xbf16>
      %cst_155 = arith.constant dense<0.000000e+00> : vector<128x128xf32>
      %251 = tpu.matmul %244, %250, %cst_155 {dimension_numbers = #tpu.dot_dimension_numbers<[1], [0], [0], [1], [0, 0, 1, 1], [], []>} : vector<128x128xbf16>, vector<128x128xbf16>, vector<128x128xf32> -> vector<128x128xf32>
      %252 = arith.addf %241, %251 : vector<128x128xf32>
      %253 = arith.index_cast %30 : i32 to index
      %c177 = arith.constant 177 : index
      %c0_156 = arith.constant 0 : index
      %254 = vector.load %arg7[%253, %c177, %c0_156] : memref<2x448x128xbf16, #tpu.memory_space<vmem>>, vector<1x128x128xbf16>
      %255 = vector.shape_cast %254 : vector<1x128x128xbf16> to vector<128x128xbf16>
      %c9_i32_157 = arith.constant 9 : i32
      %256 = arith.muli %arg9, %c9_i32_157 : i32
      %c6_i32_158 = arith.constant 6 : i32
      %257 = arith.addi %256, %c6_i32_158 : i32
      %c0_i32_159 = arith.constant 0 : i32
      %258 = arith.addi %257, %c0_i32_159 : i32
      %259 = arith.index_cast %258 : i32 to index
      %c0_160 = arith.constant 0 : index
      %c0_161 = arith.constant 0 : index
      %260 = vector.load %arg3[%259, %c0_160, %c0_161] : memref<144x128x128xbf16, #tpu.memory_space<vmem>>, vector<1x128x128xbf16>
      %261 = vector.shape_cast %260 : vector<1x128x128xbf16> to vector<128x128xbf16>
      %cst_162 = arith.constant dense<0.000000e+00> : vector<128x128xf32>
      %262 = tpu.matmul %255, %261, %cst_162 {dimension_numbers = #tpu.dot_dimension_numbers<[1], [0], [0], [1], [0, 0, 1, 1], [], []>} : vector<128x128xbf16>, vector<128x128xbf16>, vector<128x128xf32> -> vector<128x128xf32>
      %263 = arith.addf %252, %262 : vector<128x128xf32>
      %264 = arith.index_cast %30 : i32 to index
      %c178 = arith.constant 178 : index
      %c0_163 = arith.constant 0 : index
      %265 = vector.load %arg7[%264, %c178, %c0_163] : memref<2x448x128xbf16, #tpu.memory_space<vmem>>, vector<1x128x128xbf16>
      %266 = vector.shape_cast %265 : vector<1x128x128xbf16> to vector<128x128xbf16>
      %c9_i32_164 = arith.constant 9 : i32
      %267 = arith.muli %arg9, %c9_i32_164 : i32
      %c6_i32_165 = arith.constant 6 : i32
      %268 = arith.addi %267, %c6_i32_165 : i32
      %c1_i32_166 = arith.constant 1 : i32
      %269 = arith.addi %268, %c1_i32_166 : i32
      %270 = arith.index_cast %269 : i32 to index
      %c0_167 = arith.constant 0 : index
      %c0_168 = arith.constant 0 : index
      %271 = vector.load %arg3[%270, %c0_167, %c0_168] : memref<144x128x128xbf16, #tpu.memory_space<vmem>>, vector<1x128x128xbf16>
      %272 = vector.shape_cast %271 : vector<1x128x128xbf16> to vector<128x128xbf16>
      %cst_169 = arith.constant dense<0.000000e+00> : vector<128x128xf32>
      %273 = tpu.matmul %266, %272, %cst_169 {dimension_numbers = #tpu.dot_dimension_numbers<[1], [0], [0], [1], [0, 0, 1, 1], [], []>} : vector<128x128xbf16>, vector<128x128xbf16>, vector<128x128xf32> -> vector<128x128xf32>
      %274 = arith.addf %263, %273 : vector<128x128xf32>
      %275 = arith.index_cast %30 : i32 to index
      %c179 = arith.constant 179 : index
      %c0_170 = arith.constant 0 : index
      %276 = vector.load %arg7[%275, %c179, %c0_170] : memref<2x448x128xbf16, #tpu.memory_space<vmem>>, vector<1x128x128xbf16>
      %277 = vector.shape_cast %276 : vector<1x128x128xbf16> to vector<128x128xbf16>
      %c9_i32_171 = arith.constant 9 : i32
      %278 = arith.muli %arg9, %c9_i32_171 : i32
      %c6_i32_172 = arith.constant 6 : i32
      %279 = arith.addi %278, %c6_i32_172 : i32
      %c2_i32_173 = arith.constant 2 : i32
      %280 = arith.addi %279, %c2_i32_173 : i32
      %281 = arith.index_cast %280 : i32 to index
      %c0_174 = arith.constant 0 : index
      %c0_175 = arith.constant 0 : index
      %282 = vector.load %arg3[%281, %c0_174, %c0_175] : memref<144x128x128xbf16, #tpu.memory_space<vmem>>, vector<1x128x128xbf16>
      %283 = vector.shape_cast %282 : vector<1x128x128xbf16> to vector<128x128xbf16>
      %cst_176 = arith.constant dense<0.000000e+00> : vector<128x128xf32>
      %284 = tpu.matmul %277, %283, %cst_176 {dimension_numbers = #tpu.dot_dimension_numbers<[1], [0], [0], [1], [0, 0, 1, 1], [], []>} : vector<128x128xbf16>, vector<128x128xbf16>, vector<128x128xf32> -> vector<128x128xf32>
      %285 = arith.addf %274, %284 : vector<128x128xf32>
      %286 = vector.broadcast %57 : vector<1x128xf32> to vector<128x128xf32>
      %287 = arith.mulf %285, %286 : vector<128x128xf32>
      %288 = vector.broadcast %60 : vector<1x128xf32> to vector<128x128xf32>
      %289 = arith.addf %287, %288 : vector<128x128xf32>
      %c128 = arith.constant 128 : index
      %c0_177 = arith.constant 0 : index
      %290 = vector.load %arg8[%c128, %c0_177] : memref<384x128xf32, #tpu.memory_space<vmem>>, vector<128x128xf32>
      %cst_178 = arith.constant 0.000000e+00 : f32
      %291 = vector.broadcast %cst_178 : f32 to vector<128x128xf32>
      %292 = arith.select %49, %290, %291 : vector<128x128xf32>
      %293 = arith.addf %289, %292 : vector<128x128xf32>
      %294 = vector.broadcast %54 : f32 to vector<128x128xf32>
      %295 = arith.maximumf %293, %294 : vector<128x128xf32>
      %c128_179 = arith.constant 128 : index
      %c0_180 = arith.constant 0 : index
      %296 = vector.load %arg2[%c128_179, %c0_180] : memref<384x128xbf16, #tpu.memory_space<vmem>>, vector<128x128xbf16>
      %cst_181 = arith.constant 0.000000e+00 : bf16
      %297 = vector.broadcast %cst_181 : bf16 to vector<128x128xbf16>
      %298 = arith.cmpf ogt, %296, %297 : vector<128x128xbf16>
      %299 = arith.truncf %295 : vector<128x128xf32> to vector<128x128xbf16>
      %cst_182 = arith.constant 0.000000e+00 : bf16
      %300 = vector.broadcast %cst_182 : bf16 to vector<128x128xbf16>
      %301 = arith.select %298, %299, %300 : vector<128x128xi1>, vector<128x128xbf16>
      %302 = arith.index_cast %31 : i32 to index
      %c160_183 = arith.constant 160 : index
      %c0_184 = arith.constant 0 : index
      %303 = vector.load %arg7[%302, %c160_183, %c0_184] : memref<2x448x128xbf16, #tpu.memory_space<vmem>>, vector<1x128x128xbf16>
      %304 = vector.shape_cast %303 : vector<1x128x128xbf16> to vector<128x128xbf16>
      %305 = vector.shape_cast %301 : vector<128x128xbf16> to vector<1x128x128xbf16>
      tpu.vector_store %arg7[%302, %c160_183, %c0_184], %305 {strides = array<i32>} : memref<2x448x128xbf16, #tpu.memory_space<vmem>>, vector<1x128x128xbf16>,
      %306 = arith.extui %53 : i1 to i32
      %c0_i32_185 = arith.constant 0 : i32
      %307 = arith.cmpi ne, %306, %c0_i32_185 : i32
      scf.if %307 {
        %c128_263 = arith.constant 128 : index
        %c0_264 = arith.constant 0 : index
        %436 = vector.load %arg8[%c128_263, %c0_264] : memref<384x128xf32, #tpu.memory_space<vmem>>, vector<128x128xf32>
        tpu.vector_store %arg8[%c128_263, %c0_264], %295 {strides = array<i32>} : memref<384x128xf32, #tpu.memory_space<vmem>>, vector<128x128xf32>,
      } else {
      }
      %c15_i32_186 = arith.constant 15 : i32
      %308 = arith.cmpi eq, %arg9, %c15_i32_186 : i32
      %309 = arith.extui %308 : i1 to i32
      %c0_i32_187 = arith.constant 0 : i32
      %310 = arith.cmpi ne, %309, %c0_i32_187 : i32
      scf.if %310 {
        %c0_263 = arith.constant 0 : index
        %c128_264 = arith.constant 128 : index
        %c0_265 = arith.constant 0 : index
        %436 = vector.load %arg6[%c0_263, %c128_264, %c0_265] : memref<1x384x128xf32, #tpu.memory_space<vmem>>, vector<1x128x128xf32>
        %437 = vector.shape_cast %436 : vector<1x128x128xf32> to vector<128x128xf32>
        %438 = vector.shape_cast %295 : vector<128x128xf32> to vector<1x128x128xf32>
        tpu.vector_store %arg6[%c0_263, %c128_264, %c0_265], %438 {strides = array<i32>} : memref<1x384x128xf32, #tpu.memory_space<vmem>>, vector<1x128x128xf32>,
      } else {
      }
      %cst_188 = arith.constant 0.000000e+00 : f32
      %311 = vector.broadcast %cst_188 : f32 to vector<128x128xf32>
      %312 = arith.index_cast %30 : i32 to index
      %c269 = arith.constant 269 : index
      %c0_189 = arith.constant 0 : index
      %313 = vector.load %arg7[%312, %c269, %c0_189] : memref<2x448x128xbf16, #tpu.memory_space<vmem>>, vector<1x128x128xbf16>
      %314 = vector.shape_cast %313 : vector<1x128x128xbf16> to vector<128x128xbf16>
      %c9_i32_190 = arith.constant 9 : i32
      %315 = arith.muli %arg9, %c9_i32_190 : i32
      %c0_i32_191 = arith.constant 0 : i32
      %316 = arith.addi %315, %c0_i32_191 : i32
      %c0_i32_192 = arith.constant 0 : i32
      %317 = arith.addi %316, %c0_i32_192 : i32
      %318 = arith.index_cast %317 : i32 to index
      %c0_193 = arith.constant 0 : index
      %c0_194 = arith.constant 0 : index
      %319 = vector.load %arg3[%318, %c0_193, %c0_194] : memref<144x128x128xbf16, #tpu.memory_space<vmem>>, vector<1x128x128xbf16>
      %320 = vector.shape_cast %319 : vector<1x128x128xbf16> to vector<128x128xbf16>
      %cst_195 = arith.constant dense<0.000000e+00> : vector<128x128xf32>
      %321 = tpu.matmul %314, %320, %cst_195 {dimension_numbers = #tpu.dot_dimension_numbers<[1], [0], [0], [1], [0, 0, 1, 1], [], []>} : vector<128x128xbf16>, vector<128x128xbf16>, vector<128x128xf32> -> vector<128x128xf32>
      %322 = arith.addf %311, %321 : vector<128x128xf32>
      %323 = arith.index_cast %30 : i32 to index
      %c270 = arith.constant 270 : index
      %c0_196 = arith.constant 0 : index
      %324 = vector.load %arg7[%323, %c270, %c0_196] : memref<2x448x128xbf16, #tpu.memory_space<vmem>>, vector<1x128x128xbf16>
      %325 = vector.shape_cast %324 : vector<1x128x128xbf16> to vector<128x128xbf16>
      %c9_i32_197 = arith.constant 9 : i32
      %326 = arith.muli %arg9, %c9_i32_197 : i32
      %c0_i32_198 = arith.constant 0 : i32
      %327 = arith.addi %326, %c0_i32_198 : i32
      %c1_i32_199 = arith.constant 1 : i32
      %328 = arith.addi %327, %c1_i32_199 : i32
      %329 = arith.index_cast %328 : i32 to index
      %c0_200 = arith.constant 0 : index
      %c0_201 = arith.constant 0 : index
      %330 = vector.load %arg3[%329, %c0_200, %c0_201] : memref<144x128x128xbf16, #tpu.memory_space<vmem>>, vector<1x128x128xbf16>
      %331 = vector.shape_cast %330 : vector<1x128x128xbf16> to vector<128x128xbf16>
      %cst_202 = arith.constant dense<0.000000e+00> : vector<128x128xf32>
      %332 = tpu.matmul %325, %331, %cst_202 {dimension_numbers = #tpu.dot_dimension_numbers<[1], [0], [0], [1], [0, 0, 1, 1], [], []>} : vector<128x128xbf16>, vector<128x128xbf16>, vector<128x128xf32> -> vector<128x128xf32>
      %333 = arith.addf %322, %332 : vector<128x128xf32>
      %334 = arith.index_cast %30 : i32 to index
      %c271 = arith.constant 271 : index
      %c0_203 = arith.constant 0 : index
      %335 = vector.load %arg7[%334, %c271, %c0_203] : memref<2x448x128xbf16, #tpu.memory_space<vmem>>, vector<1x128x128xbf16>
      %336 = vector.shape_cast %335 : vector<1x128x128xbf16> to vector<128x128xbf16>
      %c9_i32_204 = arith.constant 9 : i32
      %337 = arith.muli %arg9, %c9_i32_204 : i32
      %c0_i32_205 = arith.constant 0 : i32
      %338 = arith.addi %337, %c0_i32_205 : i32
      %c2_i32_206 = arith.constant 2 : i32
      %339 = arith.addi %338, %c2_i32_206 : i32
      %340 = arith.index_cast %339 : i32 to index
      %c0_207 = arith.constant 0 : index
      %c0_208 = arith.constant 0 : index
      %341 = vector.load %arg3[%340, %c0_207, %c0_208] : memref<144x128x128xbf16, #tpu.memory_space<vmem>>, vector<1x128x128xbf16>
      %342 = vector.shape_cast %341 : vector<1x128x128xbf16> to vector<128x128xbf16>
      %cst_209 = arith.constant dense<0.000000e+00> : vector<128x128xf32>
      %343 = tpu.matmul %336, %342, %cst_209 {dimension_numbers = #tpu.dot_dimension_numbers<[1], [0], [0], [1], [0, 0, 1, 1], [], []>} : vector<128x128xbf16>, vector<128x128xbf16>, vector<128x128xf32> -> vector<128x128xf32>
      %344 = arith.addf %333, %343 : vector<128x128xf32>
      %345 = arith.index_cast %30 : i32 to index
      %c287 = arith.constant 287 : index
      %c0_210 = arith.constant 0 : index
      %346 = vector.load %arg7[%345, %c287, %c0_210] : memref<2x448x128xbf16, #tpu.memory_space<vmem>>, vector<1x128x128xbf16>
      %347 = vector.shape_cast %346 : vector<1x128x128xbf16> to vector<128x128xbf16>
      %c9_i32_211 = arith.constant 9 : i32
      %348 = arith.muli %arg9, %c9_i32_211 : i32
      %c3_i32_212 = arith.constant 3 : i32
      %349 = arith.addi %348, %c3_i32_212 : i32
      %c0_i32_213 = arith.constant 0 : i32
      %350 = arith.addi %349, %c0_i32_213 : i32
      %351 = arith.index_cast %350 : i32 to index
      %c0_214 = arith.constant 0 : index
      %c0_215 = arith.constant 0 : index
      %352 = vector.load %arg3[%351, %c0_214, %c0_215] : memref<144x128x128xbf16, #tpu.memory_space<vmem>>, vector<1x128x128xbf16>
      %353 = vector.shape_cast %352 : vector<1x128x128xbf16> to vector<128x128xbf16>
      %cst_216 = arith.constant dense<0.000000e+00> : vector<128x128xf32>
      %354 = tpu.matmul %347, %353, %cst_216 {dimension_numbers = #tpu.dot_dimension_numbers<[1], [0], [0], [1], [0, 0, 1, 1], [], []>} : vector<128x128xbf16>, vector<128x128xbf16>, vector<128x128xf32> -> vector<128x128xf32>
      %355 = arith.addf %344, %354 : vector<128x128xf32>
      %356 = arith.index_cast %30 : i32 to index
      %c288 = arith.constant 288 : index
      %c0_217 = arith.constant 0 : index
      %357 = vector.load %arg7[%356, %c288, %c0_217] : memref<2x448x128xbf16, #tpu.memory_space<vmem>>, vector<1x128x128xbf16>
      %358 = vector.shape_cast %357 : vector<1x128x128xbf16> to vector<128x128xbf16>
      %c9_i32_218 = arith.constant 9 : i32
      %359 = arith.muli %arg9, %c9_i32_218 : i32
      %c3_i32_219 = arith.constant 3 : i32
      %360 = arith.addi %359, %c3_i32_219 : i32
      %c1_i32_220 = arith.constant 1 : i32
      %361 = arith.addi %360, %c1_i32_220 : i32
      %362 = arith.index_cast %361 : i32 to index
      %c0_221 = arith.constant 0 : index
      %c0_222 = arith.constant 0 : index
      %363 = vector.load %arg3[%362, %c0_221, %c0_222] : memref<144x128x128xbf16, #tpu.memory_space<vmem>>, vector<1x128x128xbf16>
      %364 = vector.shape_cast %363 : vector<1x128x128xbf16> to vector<128x128xbf16>
      %cst_223 = arith.constant dense<0.000000e+00> : vector<128x128xf32>
      %365 = tpu.matmul %358, %364, %cst_223 {dimension_numbers = #tpu.dot_dimension_numbers<[1], [0], [0], [1], [0, 0, 1, 1], [], []>} : vector<128x128xbf16>, vector<128x128xbf16>, vector<128x128xf32> -> vector<128x128xf32>
      %366 = arith.addf %355, %365 : vector<128x128xf32>
      %367 = arith.index_cast %30 : i32 to index
      %c289 = arith.constant 289 : index
      %c0_224 = arith.constant 0 : index
      %368 = vector.load %arg7[%367, %c289, %c0_224] : memref<2x448x128xbf16, #tpu.memory_space<vmem>>, vector<1x128x128xbf16>
      %369 = vector.shape_cast %368 : vector<1x128x128xbf16> to vector<128x128xbf16>
      %c9_i32_225 = arith.constant 9 : i32
      %370 = arith.muli %arg9, %c9_i32_225 : i32
      %c3_i32_226 = arith.constant 3 : i32
      %371 = arith.addi %370, %c3_i32_226 : i32
      %c2_i32_227 = arith.constant 2 : i32
      %372 = arith.addi %371, %c2_i32_227 : i32
      %373 = arith.index_cast %372 : i32 to index
      %c0_228 = arith.constant 0 : index
      %c0_229 = arith.constant 0 : index
      %374 = vector.load %arg3[%373, %c0_228, %c0_229] : memref<144x128x128xbf16, #tpu.memory_space<vmem>>, vector<1x128x128xbf16>
      %375 = vector.shape_cast %374 : vector<1x128x128xbf16> to vector<128x128xbf16>
      %cst_230 = arith.constant dense<0.000000e+00> : vector<128x128xf32>
      %376 = tpu.matmul %369, %375, %cst_230 {dimension_numbers = #tpu.dot_dimension_numbers<[1], [0], [0], [1], [0, 0, 1, 1], [], []>} : vector<128x128xbf16>, vector<128x128xbf16>, vector<128x128xf32> -> vector<128x128xf32>
      %377 = arith.addf %366, %376 : vector<128x128xf32>
      %378 = arith.index_cast %30 : i32 to index
      %c305 = arith.constant 305 : index
      %c0_231 = arith.constant 0 : index
      %379 = vector.load %arg7[%378, %c305, %c0_231] : memref<2x448x128xbf16, #tpu.memory_space<vmem>>, vector<1x128x128xbf16>
      %380 = vector.shape_cast %379 : vector<1x128x128xbf16> to vector<128x128xbf16>
      %c9_i32_232 = arith.constant 9 : i32
      %381 = arith.muli %arg9, %c9_i32_232 : i32
      %c6_i32_233 = arith.constant 6 : i32
      %382 = arith.addi %381, %c6_i32_233 : i32
      %c0_i32_234 = arith.constant 0 : i32
      %383 = arith.addi %382, %c0_i32_234 : i32
      %384 = arith.index_cast %383 : i32 to index
      %c0_235 = arith.constant 0 : index
      %c0_236 = arith.constant 0 : index
      %385 = vector.load %arg3[%384, %c0_235, %c0_236] : memref<144x128x128xbf16, #tpu.memory_space<vmem>>, vector<1x128x128xbf16>
      %386 = vector.shape_cast %385 : vector<1x128x128xbf16> to vector<128x128xbf16>
      %cst_237 = arith.constant dense<0.000000e+00> : vector<128x128xf32>
      %387 = tpu.matmul %380, %386, %cst_237 {dimension_numbers = #tpu.dot_dimension_numbers<[1], [0], [0], [1], [0, 0, 1, 1], [], []>} : vector<128x128xbf16>, vector<128x128xbf16>, vector<128x128xf32> -> vector<128x128xf32>
      %388 = arith.addf %377, %387 : vector<128x128xf32>
      %389 = arith.index_cast %30 : i32 to index
      %c306 = arith.constant 306 : index
      %c0_238 = arith.constant 0 : index
      %390 = vector.load %arg7[%389, %c306, %c0_238] : memref<2x448x128xbf16, #tpu.memory_space<vmem>>, vector<1x128x128xbf16>
      %391 = vector.shape_cast %390 : vector<1x128x128xbf16> to vector<128x128xbf16>
      %c9_i32_239 = arith.constant 9 : i32
      %392 = arith.muli %arg9, %c9_i32_239 : i32
      %c6_i32_240 = arith.constant 6 : i32
      %393 = arith.addi %392, %c6_i32_240 : i32
      %c1_i32_241 = arith.constant 1 : i32
      %394 = arith.addi %393, %c1_i32_241 : i32
      %395 = arith.index_cast %394 : i32 to index
      %c0_242 = arith.constant 0 : index
      %c0_243 = arith.constant 0 : index
      %396 = vector.load %arg3[%395, %c0_242, %c0_243] : memref<144x128x128xbf16, #tpu.memory_space<vmem>>, vector<1x128x128xbf16>
      %397 = vector.shape_cast %396 : vector<1x128x128xbf16> to vector<128x128xbf16>
      %cst_244 = arith.constant dense<0.000000e+00> : vector<128x128xf32>
      %398 = tpu.matmul %391, %397, %cst_244 {dimension_numbers = #tpu.dot_dimension_numbers<[1], [0], [0], [1], [0, 0, 1, 1], [], []>} : vector<128x128xbf16>, vector<128x128xbf16>, vector<128x128xf32> -> vector<128x128xf32>
      %399 = arith.addf %388, %398 : vector<128x128xf32>
      %400 = arith.index_cast %30 : i32 to index
      %c307 = arith.constant 307 : index
      %c0_245 = arith.constant 0 : index
      %401 = vector.load %arg7[%400, %c307, %c0_245] : memref<2x448x128xbf16, #tpu.memory_space<vmem>>, vector<1x128x128xbf16>
      %402 = vector.shape_cast %401 : vector<1x128x128xbf16> to vector<128x128xbf16>
      %c9_i32_246 = arith.constant 9 : i32
      %403 = arith.muli %arg9, %c9_i32_246 : i32
      %c6_i32_247 = arith.constant 6 : i32
      %404 = arith.addi %403, %c6_i32_247 : i32
      %c2_i32_248 = arith.constant 2 : i32
      %405 = arith.addi %404, %c2_i32_248 : i32
      %406 = arith.index_cast %405 : i32 to index
      %c0_249 = arith.constant 0 : index
      %c0_250 = arith.constant 0 : index
      %407 = vector.load %arg3[%406, %c0_249, %c0_250] : memref<144x128x128xbf16, #tpu.memory_space<vmem>>, vector<1x128x128xbf16>
      %408 = vector.shape_cast %407 : vector<1x128x128xbf16> to vector<128x128xbf16>
      %cst_251 = arith.constant dense<0.000000e+00> : vector<128x128xf32>
      %409 = tpu.matmul %402, %408, %cst_251 {dimension_numbers = #tpu.dot_dimension_numbers<[1], [0], [0], [1], [0, 0, 1, 1], [], []>} : vector<128x128xbf16>, vector<128x128xbf16>, vector<128x128xf32> -> vector<128x128xf32>
      %410 = arith.addf %399, %409 : vector<128x128xf32>
      %411 = vector.broadcast %57 : vector<1x128xf32> to vector<128x128xf32>
      %412 = arith.mulf %410, %411 : vector<128x128xf32>
      %413 = vector.broadcast %60 : vector<1x128xf32> to vector<128x128xf32>
      %414 = arith.addf %412, %413 : vector<128x128xf32>
      %c256 = arith.constant 256 : index
      %c0_252 = arith.constant 0 : index
      %415 = vector.load %arg8[%c256, %c0_252] : memref<384x128xf32, #tpu.memory_space<vmem>>, vector<128x128xf32>
      %cst_253 = arith.constant 0.000000e+00 : f32
      %416 = vector.broadcast %cst_253 : f32 to vector<128x128xf32>
      %417 = arith.select %49, %415, %416 : vector<128x128xf32>
      %418 = arith.addf %414, %417 : vector<128x128xf32>
      %419 = vector.broadcast %54 : f32 to vector<128x128xf32>
      %420 = arith.maximumf %418, %419 : vector<128x128xf32>
      %c256_254 = arith.constant 256 : index
      %c0_255 = arith.constant 0 : index
      %421 = vector.load %arg2[%c256_254, %c0_255] : memref<384x128xbf16, #tpu.memory_space<vmem>>, vector<128x128xbf16>
      %cst_256 = arith.constant 0.000000e+00 : bf16
      %422 = vector.broadcast %cst_256 : bf16 to vector<128x128xbf16>
      %423 = arith.cmpf ogt, %421, %422 : vector<128x128xbf16>
      %424 = arith.truncf %420 : vector<128x128xf32> to vector<128x128xbf16>
      %cst_257 = arith.constant 0.000000e+00 : bf16
      %425 = vector.broadcast %cst_257 : bf16 to vector<128x128xbf16>
      %426 = arith.select %423, %424, %425 : vector<128x128xi1>, vector<128x128xbf16>
      %427 = arith.index_cast %31 : i32 to index
      %c288_258 = arith.constant 288 : index
      %c0_259 = arith.constant 0 : index
      %428 = vector.load %arg7[%427, %c288_258, %c0_259] : memref<2x448x128xbf16, #tpu.memory_space<vmem>>, vector<1x128x128xbf16>
      %429 = vector.shape_cast %428 : vector<1x128x128xbf16> to vector<128x128xbf16>
      %430 = vector.shape_cast %426 : vector<128x128xbf16> to vector<1x128x128xbf16>
      tpu.vector_store %arg7[%427, %c288_258, %c0_259], %430 {strides = array<i32>} : memref<2x448x128xbf16, #tpu.memory_space<vmem>>, vector<1x128x128xbf16>,
      %431 = arith.extui %53 : i1 to i32
      %c0_i32_260 = arith.constant 0 : i32
      %432 = arith.cmpi ne, %431, %c0_i32_260 : i32
      scf.if %432 {
        %c256_263 = arith.constant 256 : index
        %c0_264 = arith.constant 0 : index
        %436 = vector.load %arg8[%c256_263, %c0_264] : memref<384x128xf32, #tpu.memory_space<vmem>>, vector<128x128xf32>
        tpu.vector_store %arg8[%c256_263, %c0_264], %420 {strides = array<i32>} : memref<384x128xf32, #tpu.memory_space<vmem>>, vector<128x128xf32>,
      } else {
      }
      %c15_i32_261 = arith.constant 15 : i32
      %433 = arith.cmpi eq, %arg9, %c15_i32_261 : i32
      %434 = arith.extui %433 : i1 to i32
      %c0_i32_262 = arith.constant 0 : i32
      %435 = arith.cmpi ne, %434, %c0_i32_262 : i32
      scf.if %435 {
        %c0_263 = arith.constant 0 : index
        %c256_264 = arith.constant 256 : index
        %c0_265 = arith.constant 0 : index
        %436 = vector.load %arg6[%c0_263, %c256_264, %c0_265] : memref<1x384x128xf32, #tpu.memory_space<vmem>>, vector<1x128x128xf32>
        %437 = vector.shape_cast %436 : vector<1x128x128xf32> to vector<128x128xf32>
        %438 = vector.shape_cast %420 : vector<128x128xf32> to vector<1x128x128xf32>
        tpu.vector_store %arg6[%c0_263, %c256_264, %c0_265], %438 {strides = array<i32>} : memref<1x384x128xf32, #tpu.memory_space<vmem>>, vector<1x128x128xf32>,
      } else {
      }
    }
    %c16_i32_17 = arith.constant 16 : i32
    return
  }
  func.func @transform_0(%arg0: i32) -> (i32, i32, i32) {
    %c0_i32 = arith.constant 0 : i32
    %c0_i32_0 = arith.constant 0 : i32
    %c0_i32_1 = arith.constant 0 : i32
    return %arg0, %c0_i32, %c0_i32_0 : i32, i32, i32
  }
  func.func @transform_1(%arg0: i32) -> (i32, i32) {
    %c0_i32 = arith.constant 0 : i32
    %c0_i32_0 = arith.constant 0 : i32
    %c0_i32_1 = arith.constant 0 : i32
    return %c0_i32, %c0_i32_0 : i32, i32
  }
  func.func @transform_2(%arg0: i32) -> (i32, i32, i32) {
    %c0_i32 = arith.constant 0 : i32
    %c0_i32_0 = arith.constant 0 : i32
    %c0_i32_1 = arith.constant 0 : i32
    %c0_i32_2 = arith.constant 0 : i32
    return %c0_i32, %c0_i32_0, %c0_i32_1 : i32, i32, i32
  }
  func.func @transform_3(%arg0: i32) -> (i32, i32, i32) {
    %c0_i32 = arith.constant 0 : i32
    %c0_i32_0 = arith.constant 0 : i32
    %c0_i32_1 = arith.constant 0 : i32
    %c0_i32_2 = arith.constant 0 : i32
    return %c0_i32, %c0_i32_0, %c0_i32_1 : i32, i32, i32
  }
  func.func @transform_4(%arg0: i32) -> (i32, i32, i32) {
    %c0_i32 = arith.constant 0 : i32
    %c0_i32_0 = arith.constant 0 : i32
    %c0_i32_1 = arith.constant 0 : i32
    %c0_i32_2 = arith.constant 0 : i32
    return %c0_i32, %c0_i32_0, %c0_i32_1 : i32, i32, i32
  }
  func.func @transform_5(%arg0: i32) -> (i32, i32, i32) {
    %c0_i32 = arith.constant 0 : i32
    %c0_i32_0 = arith.constant 0 : i32
    %c0_i32_1 = arith.constant 0 : i32
    return %arg0, %c0_i32, %c0_i32_0 : i32, i32, i32
  }
}

</mosaic_0001>

<llo_original>
// kernel: noise_resnet.1
$region0: #{noise_resnet.1}
  #allocation0 [shape = 'u32[]', space=smem, size = 0x4, offset = 0x4, fixed_abs, tag = 'smem constant byte address 0x4 - core index']
  #allocation1 [shape = 'u32[144,128]{1,0:T(1,128)}', space=vmem, size = 0x12000, scoped, tag = 'internal scratch']
  #allocation2 [shape = 'bf16[2,448,128]{2,1,0:T(16,128)(2,1)}', space=vmem, size = 0x38000, scoped, tag = 'scratch operand']
  #allocation3 [shape = 'f32[384,128]{1,0:T(8,128)}', space=vmem, size = 0x30000, scoped, tag = 'scratch operand']
  %s0 = inlined_call_operand.vmem [shape: bf16[2,384,128], index: 0, kind: input, shape index: {}]
  %s1 = inlined_call_operand.vmem [shape: bf16[384,128], index: 1, kind: input, shape index: {}]
  %s2 = inlined_call_operand.hbm [shape: bf16[144,128,128], index: 2, kind: input, shape index: {}]
  %s3 = inlined_call_operand.hbm [shape: f32[16,1,128], index: 3, kind: input, shape index: {}]
  %s4 = inlined_call_operand.hbm [shape: f32[16,1,128], index: 4, kind: input, shape index: {}]
  %s5 = inlined_call_operand.vmem [shape: f32[2,384,128], index: 5, kind: output, shape index: {}]
  %s6 = sld [smem:[#allocation0]]
  $region96: #{noise_resnet.1} parent=0
    _
  %s8 = ssub.s32 1, %s6
  %s9 = scalar_select 0, %s8, %s6
  $region1: #{noise_resnet.1} parent=0
    #allocation4 [shape = 'u8[4718592]{0}', space=vmem, size = 0x480000, scoped, tag = 'input window, operand 2, single buffered']
    #allocation5 [shape = 's32[2]{0}', space=sflag, size = 0x8, scoped, tag = 'scoped memory for noise_resnet.1']
    #allocation6 [shape = 'u8[8192]{0}', space=vmem, size = 0x2000, scoped, tag = 'input window, operand 3, single buffered']
    #allocation7 [shape = 's32[1]{0}', space=sflag, size = 0x4, scoped, tag = 'scoped memory for noise_resnet.1']
    #allocation8 [shape = 'u8[8192]{0}', space=vmem, size = 0x2000, scoped, tag = 'input window, operand 4, single buffered']
    %10 = vsyncpa [#allocation5], 0
    %11 = vsyncpa [#allocation7], 0
    loop: start=0, step=1, limit=4
    $region2: #{noise_resnet.1} parent=1 // loop_pre_header
      _
    $region3: #{noise_resnet.1} parent=1 // loop_header
      %s13 = sphi 0, %s17
      %p14 = scmp.ge.s32.totalorder %s13, 4
      %s23 = sphi 0, %s25
      %s26 = sphi 0, %s23
      %s27 = sphi 0, %s26
      %s43 = sphi 0, %s27
      %s47 = sphi 0, %s47
      %s49 = sphi 0, %s47
      %s50 = sphi 0, %s49
      %s64 = sphi 0, %s50
      %s68 = sphi 0, %s68
      %s70 = sphi 0, %s68
      %s71 = sphi 0, %s70
      %s85 = sphi 0, %s71
      %s89 = sphi 0, %s89
      %s91 = sphi 0, %s89
      %s92 = sphi 0, %s91
      %s106 = sphi 0, %s92
      %s110 = sphi 0, %s110
      %s112 = sphi 0, %s110
      %s113 = sphi 0, %s112
      %s127 = sphi 0, %s113
      %s133 = sphi 0, %s135
      %s136 = sphi 0, %s133
      %s137 = sphi 0, %s136
      %s153 = sphi 0, %s137
    $region4: #{noise_resnet.1} parent=1 // loop_header_branch
      %16 = sbr.rel (%p14) target = $region8
    $region5: #{noise_resnet.1} parent=1 // loop_body
      %s18 = ssub.s32 %s13, 1
      %s19 = ssub.s32 %s13, 2
      %s20 = sadd.s32 %s13, 1
      %s21 = ssub.s32 %s13, %s20
      %p22 = scmp.eq.s32.totalorder %s21, 0
      %s24 = sadd.s32 %s23, 1
      %s25 = scalar_select %p22, %s23, %s24
      %p28 = pneg %p22
      %p29 = scmp.eq.s32.totalorder %s13, 1
      %p30 = por %p28, %p29
      %p31 = scmp.ne.s32.totalorder %s23, %s26
      %p32 = scmp.eq.s32.totalorder %s13, 0
      %p33 = por %p31, %p32
      %p34 = scmp.ne.s32.totalorder %s23, %s26
      %p35 = scmp.eq.s32.totalorder %s18, 1
      %p36 = por %p34, %p35
      %p37 = scmp.ne.s32.totalorder %s26, %s27
      %p38 = scmp.eq.s32.totalorder %s18, 0
      %p39 = por %p37, %p38
      %p40 = scmp.ne.s32.totalorder %s26, %s27
      %p41 = scmp.eq.s32.totalorder %s19, 1
      %p42 = por %p40, %p41
      %p44 = scmp.ne.s32.totalorder %s27, %s43
      %p45 = scmp.eq.s32.totalorder %s19, 0
      %p46 = por %p44, %p45
      %s48 = sadd.s32 %s47, 1
      %p51 = scmp.eq.s32.totalorder %s13, 1
      %p52 = scmp.ne.s32.totalorder %s47, %s49
      %p53 = scmp.eq.s32.totalorder %s13, 0
      %p54 = por %p52, %p53
      %p55 = scmp.ne.s32.totalorder %s47, %s49
      %p56 = scmp.eq.s32.totalorder %s18, 1
      %p57 = por %p55, %p56
      %p58 = scmp.ne.s32.totalorder %s49, %s50
      %p59 = scmp.eq.s32.totalorder %s18, 0
      %p60 = por %p58, %p59
      %p61 = scmp.ne.s32.totalorder %s49, %s50
      %p62 = scmp.eq.s32.totalorder %s19, 1
      %p63 = por %p61, %p62
      %p65 = scmp.ne.s32.totalorder %s50, %s64
      %p66 = scmp.eq.s32.totalorder %s19, 0
      %p67 = por %p65, %p66
      %s69 = sadd.s32 %s68, 1
      %p72 = scmp.eq.s32.totalorder %s13, 1
      %p73 = scmp.ne.s32.totalorder %s68, %s70
      %p74 = scmp.eq.s32.totalorder %s13, 0
      %p75 = por %p73, %p74
      %p76 = scmp.ne.s32.totalorder %s68, %s70
      %p77 = scmp.eq.s32.totalorder %s18, 1
      %p78 = por %p76, %p77
      %p79 = scmp.ne.s32.totalorder %s70, %s71
      %p80 = scmp.eq.s32.totalorder %s18, 0
      %p81 = por %p79, %p80
      %p82 = scmp.ne.s32.totalorder %s70, %s71
      %p83 = scmp.eq.s32.totalorder %s19, 1
      %p84 = por %p82, %p83
      %p86 = scmp.ne.s32.totalorder %s71, %s85
      %p87 = scmp.eq.s32.totalorder %s19, 0
      %p88 = por %p86, %p87
      %s90 = sadd.s32 %s89, 1
      %p93 = scmp.eq.s32.totalorder %s13, 1
      %p94 = scmp.ne.s32.totalorder %s89, %s91
      %p95 = scmp.eq.s32.totalorder %s13, 0
      %p96 = por %p94, %p95
      %p97 = scmp.ne.s32.totalorder %s89, %s91
      %p98 = scmp.eq.s32.totalorder %s18, 1
      %p99 = por %p97, %p98
      %p100 = scmp.ne.s32.totalorder %s91, %s92
      %p101 = scmp.eq.s32.totalorder %s18, 0
      %p102 = por %p100, %p101
      %p103 = scmp.ne.s32.totalorder %s91, %s92
      %p104 = scmp.eq.s32.totalorder %s19, 1
      %p105 = por %p103, %p104
      %p107 = scmp.ne.s32.totalorder %s92, %s106
      %p108 = scmp.eq.s32.totalorder %s19, 0
      %p109 = por %p107, %p108
      %s111 = sadd.s32 %s110, 1
      %p114 = scmp.eq.s32.totalorder %s13, 1
      %p115 = scmp.ne.s32.totalorder %s110, %s112
      %p116 = scmp.eq.s32.totalorder %s13, 0
      %p117 = por %p115, %p116
      %p118 = scmp.ne.s32.totalorder %s110, %s112
      %p119 = scmp.eq.s32.totalorder %s18, 1
      %p120 = por %p118, %p119
      %p121 = scmp.ne.s32.totalorder %s112, %s113
      %p122 = scmp.eq.s32.totalorder %s18, 0
      %p123 = por %p121, %p122
      %p124 = scmp.ne.s32.totalorder %s112, %s113
      %p125 = scmp.eq.s32.totalorder %s19, 1
      %p126 = por %p124, %p125
      %p128 = scmp.ne.s32.totalorder %s113, %s127
      %p129 = scmp.eq.s32.totalorder %s19, 0
      %p130 = por %p128, %p129
      %s131 = ssub.s32 %s13, %s20
      %p132 = scmp.eq.s32.totalorder %s131, 0
      %s134 = sadd.s32 %s133, 1
      %s135 = scalar_select %p132, %s133, %s134
      %p138 = pneg %p132
      %p139 = scmp.eq.s32.totalorder %s13, 1
      %p140 = por %p138, %p139
      %p141 = scmp.ne.s32.totalorder %s133, %s136
      %p142 = scmp.eq.s32.totalorder %s13, 0
      %p143 = por %p141, %p142
      %p144 = scmp.ne.s32.totalorder %s133, %s136
      %p145 = scmp.eq.s32.totalorder %s18, 1
      %p146 = por %p144, %p145
      %p147 = scmp.ne.s32.totalorder %s136, %s137
      %p148 = scmp.eq.s32.totalorder %s18, 0
      %p149 = por %p147, %p148
      %p150 = scmp.ne.s32.totalorder %s136, %s137
      %p151 = scmp.eq.s32.totalorder %s19, 1
      %p152 = por %p150, %p151
      %p154 = scmp.ne.s32.totalorder %s137, %s153
      %p155 = scmp.eq.s32.totalorder %s19, 0
      %p156 = por %p154, %p155
      %p157 = scmp.le.s32.totalorder 1, %s13
      %p158 = scmp.lt.s32.totalorder %s13, 3
      %p159 = pnand %p157, %p158
      %p160 = pneg %p159
      // Predicated region
      $region9: #{noise_resnet.1} parent=5 // pred_check
        _
      $region10: #{noise_resnet.1} parent=5 // pred_check_branch
        %162 = sbr.rel (%p159) target = $region12
      $region11: #{noise_resnet.1} parent=5 // pred_region
        %s163 = ssub.s32 %s13, 1
        // Predicated region
        $region13: #{noise_resnet.1} parent=11 // pred_check
          %p164 = pneg %p60
        $region14: #{noise_resnet.1} parent=11 // pred_check_branch
          %166 = sbr.rel (%p164) target = $region16
        $region15: #{noise_resnet.1} parent=11 // pred_region
          _
        $region16: #{noise_resnet.1} parent=11 // pred_fallthru
          _
        // Predicated region
        $region17: #{noise_resnet.1} parent=11 // pred_check
          %p167 = pneg %p81
        $region18: #{noise_resnet.1} parent=11 // pred_check_branch
          %169 = sbr.rel (%p167) target = $region20
        $region19: #{noise_resnet.1} parent=11 // pred_region
          %s171 = ssub.s32 147456, 147456
          %172 = vsyncadd [#allocation5], %s171
          %s173 = sshll.u32 [#allocation4], 4
          %s174 = int_to_ptr.vmem [resolvable:$true] %s173
          %179 = dma.hbm_to_vmem [thread:$0]  %s2, 147456, %s174, [#allocation5], 64, 64, 4
        $region20: #{noise_resnet.1} parent=11 // pred_fallthru
          _
        // Predicated region
        $region21: #{noise_resnet.1} parent=11 // pred_check
          %p180 = pneg %p102
        $region22: #{noise_resnet.1} parent=11 // pred_check_branch
          %182 = sbr.rel (%p180) target = $region24
        $region23: #{noise_resnet.1} parent=11 // pred_region
          %s184 = ssub.s32 256, 256
          %185 = vsyncadd [#allocation7], %s184
          %s186 = sshll.u32 [#allocation6], 4
          %s187 = int_to_ptr.vmem [resolvable:$true] %s186
          %192 = dma.hbm_to_vmem [thread:$0]  %s3, 256, %s187, [#allocation7], 16, 16, 1
        $region24: #{noise_resnet.1} parent=11 // pred_fallthru
          _
        // Predicated region
        $region25: #{noise_resnet.1} parent=11 // pred_check
          %p193 = pneg %p123
        $region26: #{noise_resnet.1} parent=11 // pred_check_branch
          %195 = sbr.rel (%p193) target = $region28
        $region27: #{noise_resnet.1} parent=11 // pred_region
          %s197 = ssub.s32 256, 256
          %198 = vsyncadd [#allocation7], %s197
          %s199 = sshll.u32 [#allocation8], 4
          %s200 = int_to_ptr.vmem [resolvable:$true] %s199
          %205 = dma.hbm_to_vmem [thread:$0]  %s4, 256, %s200, [#allocation7], 16, 16, 1
        $region28: #{noise_resnet.1} parent=11 // pred_fallthru
          _
      $region12: #{noise_resnet.1} parent=5 // pred_fallthru
        _
      %p206 = scmp.lt.s32.totalorder %s13, 2
      // Predicated region
      $region29: #{noise_resnet.1} parent=5 // pred_check
        %p207 = pneg %p206
      $region30: #{noise_resnet.1} parent=5 // pred_check_branch
        %209 = sbr.rel (%p207) target = $region32
      $region31: #{noise_resnet.1} parent=5 // pred_region
        // Predicated region
        $region33: #{noise_resnet.1} parent=31 // pred_check
          %p210 = pneg %p33
        $region34: #{noise_resnet.1} parent=31 // pred_check_branch
          %212 = sbr.rel (%p210) target = $region36
        $region35: #{noise_resnet.1} parent=31 // pred_region
          %p213 = scmp.lt.s32.totalorder %s13, 1
          %s214 = scalar_select %p213, %s13, 1
          %s215 = smul.addr %s214, 48
          %s216 = smul.addr %s215, 4
          %s217 = scalar_lea.vmem %s0, %s216
        $region36: #{noise_resnet.1} parent=31 // pred_fallthru
          _
      $region32: #{noise_resnet.1} parent=5 // pred_fallthru
        _
      %p218 = scmp.le.s32.totalorder 1, %s13
      %p219 = scmp.lt.s32.totalorder %s13, 3
      %p220 = pnand %p218, %p219
      %p221 = pneg %p220
      // Predicated region
      $region37: #{noise_resnet.1} parent=5 // pred_check
        _
      $region38: #{noise_resnet.1} parent=5 // pred_check_branch
        %223 = sbr.rel (%p220) target = $region40
      $region39: #{noise_resnet.1} parent=5 // pred_region
        %s224 = ssub.s32 %s13, 1
        // Predicated region
        $region41: #{noise_resnet.1} parent=39 // pred_check
          %p225 = pneg %p81
        $region42: #{noise_resnet.1} parent=39 // pred_check_branch
          %227 = sbr.rel (%p225) target = $region44
        $region43: #{noise_resnet.1} parent=39 // pred_region
          %228 = dma.done [#allocation5], 147456
        $region44: #{noise_resnet.1} parent=39 // pred_fallthru
          _
        // Predicated region
        $region45: #{noise_resnet.1} parent=39 // pred_check
          %p229 = pneg %p102
        $region46: #{noise_resnet.1} parent=39 // pred_check_branch
          %231 = sbr.rel (%p229) target = $region48
        $region47: #{noise_resnet.1} parent=39 // pred_region
          %232 = dma.done [#allocation7], 256
        $region48: #{noise_resnet.1} parent=39 // pred_fallthru
          _
        // Predicated region
        $region49: #{noise_resnet.1} parent=39 // pred_check
          %p233 = pneg %p123
        $region50: #{noise_resnet.1} parent=39 // pred_check_branch
          %235 = sbr.rel (%p233) target = $region52
        $region51: #{noise_resnet.1} parent=39 // pred_region
          %236 = dma.done [#allocation7], 256
        $region52: #{noise_resnet.1} parent=39 // pred_fallthru
          _
        %p237 = scmp.lt.s32.totalorder %s18, 1
        %s238 = scalar_select %p237, %s18, 1
        %s239 = smul.addr %s238, 48
        %s240 = smul.addr %s239, 4
        %s241 = scalar_lea.vmem %s0, %s240
        %p242 = pneg %p39
        %p243 = pneg %p36
        %p244 = pneg %p60
        %p245 = pneg %p57
        %p246 = pneg %p81
        %p247 = pneg %p78
        %p248 = pneg %p102
        %p249 = pneg %p99
        %p250 = pneg %p123
        %p251 = pneg %p120
        %p252 = pneg %p149
        %p253 = pneg %p146
        %p254 = scmp.lt.s32.totalorder %s18, 1
        %s255 = scalar_select %p254, %s18, 1
        %s256 = smul.addr %s255, 48
        %s257 = smul.addr %s256, 8
        %s258 = scalar_lea.vmem %s5, %s257
        %p259 = scmp.lt.s32.totalorder %s18, 1
        %s260 = scalar_select %p259, %s18, 1
        %s261 = smul.addr %s260, 48
        %s262 = smul.addr %s261, 4
        %s263 = scalar_lea.vmem %s0, %s262
        %p264 = scmp.lt.s32.totalorder %s18, 1
        %s265 = scalar_select %p264, %s18, 1
        %s266 = smul.addr %s265, 48
        %s267 = smul.addr %s266, 8
        %s268 = scalar_lea.vmem %s5, %s267
        %v270 = vld [vmem:[%s263] sm:$0xf]
        %v271 = vld [vmem:[%s263 + $0x4] sm:$0xf]
        %v272 = vld [vmem:[%s263 + $0x8] sm:$0xf]
        %v273 = vld [vmem:[%s263 + $0xc] sm:$0xf]
        %v274 = vld [vmem:[%s263 + $0x10] sm:$0xf]
        %v275 = vld [vmem:[%s263 + $0x14] sm:$0xf]
        %v276 = vld [vmem:[%s263 + $0x18] sm:$0xf]
        %v277 = vld [vmem:[%s263 + $0x1c] sm:$0xf]
        %v278 = vld [vmem:[%s263 + $0x20] sm:$0xf]
        %v279 = vld [vmem:[%s263 + $0x24] sm:$0xf]
        %v280 = vld [vmem:[%s263 + $0x28] sm:$0xf]
        %v281 = vld [vmem:[%s263 + $0x2c] sm:$0xf]
        %v282 = vld [vmem:[%s263 + $0x30] sm:$0xf]
        %v283 = vld [vmem:[%s263 + $0x34] sm:$0xf]
        %v284 = vld [vmem:[%s263 + $0x38] sm:$0xf]
        %v285 = vld [vmem:[%s263 + $0x3c] sm:$0xf]
        %v286 = vld [vmem:[%s263 + $0x40] sm:$0xf]
        %v287 = vld [vmem:[%s263 + $0x44] sm:$0xf]
        %v288 = vld [vmem:[%s263 + $0x48] sm:$0xf]
        %v289 = vld [vmem:[%s263 + $0x4c] sm:$0xf]
        %v290 = vld [vmem:[%s263 + $0x50] sm:$0xf]
        %v291 = vld [vmem:[%s263 + $0x54] sm:$0xf]
        %v292 = vld [vmem:[%s263 + $0x58] sm:$0xf]
        %v293 = vld [vmem:[%s263 + $0x5c] sm:$0xf]
        %v294 = vld [vmem:[%s263 + $0x60] sm:$0xf]
        %v295 = vld [vmem:[%s263 + $0x64] sm:$0xf]
        %v296 = vld [vmem:[%s263 + $0x68] sm:$0xf]
        %v297 = vld [vmem:[%s263 + $0x6c] sm:$0xf]
        %v298 = vld [vmem:[%s263 + $0x70] sm:$0xf]
        %v299 = vld [vmem:[%s263 + $0x74] sm:$0xf]
        %v300 = vld [vmem:[%s263 + $0x78] sm:$0xf]
        %v301 = vld [vmem:[%s263 + $0x7c] sm:$0xf]
        %v302 = vld [vmem:[%s263 + $0x80] sm:$0xf]
        %v303 = vld [vmem:[%s263 + $0x84] sm:$0xf]
        %v304 = vld [vmem:[%s263 + $0x88] sm:$0xf]
        %v305 = vld [vmem:[%s263 + $0x8c] sm:$0xf]
        %v306 = vld [vmem:[%s263 + $0x90] sm:$0xf]
        %v307 = vld [vmem:[%s263 + $0x94] sm:$0xf]
        %v308 = vld [vmem:[%s263 + $0x98] sm:$0xf]
        %v309 = vld [vmem:[%s263 + $0x9c] sm:$0xf]
        %v310 = vld [vmem:[%s263 + $0xa0] sm:$0xf]
        %v311 = vld [vmem:[%s263 + $0xa4] sm:$0xf]
        %v312 = vld [vmem:[%s263 + $0xa8] sm:$0xf]
        %v313 = vld [vmem:[%s263 + $0xac] sm:$0xf]
        %v314 = vld [vmem:[%s263 + $0xb0] sm:$0xf]
        %v315 = vld [vmem:[%s263 + $0xb4] sm:$0xf]
        %v316 = vld [vmem:[%s263 + $0xb8] sm:$0xf]
        %v317 = vld [vmem:[%s263 + $0xbc] sm:$0xf]
        %v366 = vunpack.c.l.b16 %v270
        %v367 = vunpack.c.l.b16 %v271
        %v368 = vunpack.c.l.b16 %v272
        %v369 = vunpack.c.l.b16 %v273
        %v370 = vunpack.c.l.b16 %v274
        %v371 = vunpack.c.l.b16 %v275
        %v372 = vunpack.c.l.b16 %v276
        %v373 = vunpack.c.l.b16 %v277
        %v374 = vunpack.c.l.b16 %v278
        %v375 = vunpack.c.l.b16 %v279
        %v376 = vunpack.c.l.b16 %v280
        %v377 = vunpack.c.l.b16 %v281
        %v378 = vunpack.c.l.b16 %v282
        %v379 = vunpack.c.l.b16 %v283
        %v380 = vunpack.c.l.b16 %v284
        %v381 = vunpack.c.l.b16 %v285
        %v382 = vunpack.c.l.b16 %v286
        %v383 = vunpack.c.l.b16 %v287
        %v384 = vunpack.c.l.b16 %v288
        %v385 = vunpack.c.l.b16 %v289
        %v386 = vunpack.c.l.b16 %v290
        %v387 = vunpack.c.l.b16 %v291
        %v388 = vunpack.c.l.b16 %v292
        %v389 = vunpack.c.l.b16 %v293
        %v390 = vunpack.c.l.b16 %v294
        %v391 = vunpack.c.l.b16 %v295
        %v392 = vunpack.c.l.b16 %v296
        %v393 = vunpack.c.l.b16 %v297
        %v394 = vunpack.c.l.b16 %v298
        %v395 = vunpack.c.l.b16 %v299
        %v396 = vunpack.c.l.b16 %v300
        %v397 = vunpack.c.l.b16 %v301
        %v398 = vunpack.c.l.b16 %v302
        %v399 = vunpack.c.l.b16 %v303
        %v400 = vunpack.c.l.b16 %v304
        %v401 = vunpack.c.l.b16 %v305
        %v402 = vunpack.c.l.b16 %v306
        %v403 = vunpack.c.l.b16 %v307
        %v404 = vunpack.c.l.b16 %v308
        %v405 = vunpack.c.l.b16 %v309
        %v406 = vunpack.c.l.b16 %v310
        %v407 = vunpack.c.l.b16 %v311
        %v408 = vunpack.c.l.b16 %v312
        %v409 = vunpack.c.l.b16 %v313
        %v410 = vunpack.c.l.b16 %v314
        %v411 = vunpack.c.l.b16 %v315
        %v412 = vunpack.c.l.b16 %v316
        %v413 = vunpack.c.l.b16 %v317
        %v414 = vpack.c.b16 %v367, %v366
        %v415 = vpack.c.b16 %v369, %v368
        %v416 = vpack.c.b16 %v371, %v370
        %v417 = vpack.c.b16 %v373, %v372
        %v418 = vpack.c.b16 %v375, %v374
        %v419 = vpack.c.b16 %v377, %v376
        %v420 = vpack.c.b16 %v379, %v378
        %v421 = vpack.c.b16 %v381, %v380
        %v422 = vpack.c.b16 %v383, %v382
        %v423 = vpack.c.b16 %v385, %v384
        %v424 = vpack.c.b16 %v387, %v386
        %v425 = vpack.c.b16 %v389, %v388
        %v426 = vpack.c.b16 %v391, %v390
        %v427 = vpack.c.b16 %v393, %v392
        %v428 = vpack.c.b16 %v395, %v394
        %v429 = vpack.c.b16 %v397, %v396
        %v430 = vpack.c.b16 %v399, %v398
        %v431 = vpack.c.b16 %v401, %v400
        %v432 = vpack.c.b16 %v403, %v402
        %v433 = vpack.c.b16 %v405, %v404
        %v434 = vpack.c.b16 %v407, %v406
        %v435 = vpack.c.b16 %v409, %v408
        %v436 = vpack.c.b16 %v411, %v410
        %v437 = vpack.c.b16 %v413, %v412
        %462 = vst [vmem:[#allocation2 + $0x10] sm:$0xff] %v414
        %463 = vst [vmem:[#allocation2 + $0x18] sm:$0xff] %v415
        %464 = vst [vmem:[#allocation2 + $0x20] sm:$0xff] %v416
        %465 = vst [vmem:[#allocation2 + $0x28] sm:$0xff] %v417
        %466 = vst [vmem:[#allocation2 + $0x30] sm:$0xff] %v418
        %467 = vst [vmem:[#allocation2 + $0x38] sm:$0xff] %v419
        %468 = vst [vmem:[#allocation2 + $0x40] sm:$0xff] %v420
        %469 = vst [vmem:[#allocation2 + $0x48] sm:$0xff] %v421
        %470 = vst [vmem:[#allocation2 + $0x50] sm:$0xff] %v422
        %471 = vst [vmem:[#allocation2 + $0x58] sm:$0xff] %v423
        %472 = vst [vmem:[#allocation2 + $0x60] sm:$0xff] %v424
        %473 = vst [vmem:[#allocation2 + $0x68] sm:$0xff] %v425
        %474 = vst [vmem:[#allocation2 + $0x70] sm:$0xff] %v426
        %475 = vst [vmem:[#allocation2 + $0x78] sm:$0xff] %v427
        %476 = vst [vmem:[#allocation2 + $0x80] sm:$0xff] %v428
        %477 = vst [vmem:[#allocation2 + $0x88] sm:$0xff] %v429
        %478 = vst [vmem:[#allocation2 + $0x90] sm:$0xff] %v430
        %479 = vst [vmem:[#allocation2 + $0x98] sm:$0xff] %v431
        %480 = vst [vmem:[#allocation2 + $0xa0] sm:$0xff] %v432
        %481 = vst [vmem:[#allocation2 + $0xa8] sm:$0xff] %v433
        %482 = vst [vmem:[#allocation2 + $0xb0] sm:$0xff] %v434
        %483 = vst [vmem:[#allocation2 + $0xb8] sm:$0xff] %v435
        %484 = vst [vmem:[#allocation2 + $0xc0] sm:$0xff] %v436
        %485 = vst [vmem:[#allocation2 + $0xc8] sm:$0xff] %v437
        %486 = vst [vmem:[#allocation2] sm:$0xff] 0
        %487 = vst [vmem:[#allocation2 + $0x8] sm:$0xff] 0
        %488 = vst [vmem:[#allocation2 + $0xd0] sm:$0xff] 0
        %489 = vst [vmem:[#allocation2 + $0xd8] sm:$0xff] 0
        %s490 = scalar_lea.vmem [#allocation2], 224
        %491 = vst [vmem:[%s490] sm:$0xff] 0
        %492 = vst [vmem:[%s490 + $0x8] sm:$0xff] 0
        %493 = vst [vmem:[%s490 + $0xd0] sm:$0xff] 0
        %494 = vst [vmem:[%s490 + $0xd8] sm:$0xff] 0
        %495 = vst [vmem:[#allocation3] sm:$0xff] 0.0
        %496 = vst [vmem:[#allocation3 + $0x8] sm:$0xff] 0.0
        %497 = vst [vmem:[#allocation3 + $0x10] sm:$0xff] 0.0
        %498 = vst [vmem:[#allocation3 + $0x18] sm:$0xff] 0.0
        %499 = vst [vmem:[#allocation3 + $0x20] sm:$0xff] 0.0
        %500 = vst [vmem:[#allocation3 + $0x28] sm:$0xff] 0.0
        %501 = vst [vmem:[#allocation3 + $0x30] sm:$0xff] 0.0
        %502 = vst [vmem:[#allocation3 + $0x38] sm:$0xff] 0.0
        %503 = vst [vmem:[#allocation3 + $0x40] sm:$0xff] 0.0
        %504 = vst [vmem:[#allocation3 + $0x48] sm:$0xff] 0.0
        %505 = vst [vmem:[#allocation3 + $0x50] sm:$0xff] 0.0
        %506 = vst [vmem:[#allocation3 + $0x58] sm:$0xff] 0.0
        %507 = vst [vmem:[#allocation3 + $0x60] sm:$0xff] 0.0
        %508 = vst [vmem:[#allocation3 + $0x68] sm:$0xff] 0.0
        %509 = vst [vmem:[#allocation3 + $0x70] sm:$0xff] 0.0
        %510 = vst [vmem:[#allocation3 + $0x78] sm:$0xff] 0.0
        %511 = vst [vmem:[#allocation3 + $0x80] sm:$0xff] 0.0
        %512 = vst [vmem:[#allocation3 + $0x88] sm:$0xff] 0.0
        %513 = vst [vmem:[#allocation3 + $0x90] sm:$0xff] 0.0
        %514 = vst [vmem:[#allocation3 + $0x98] sm:$0xff] 0.0
        %515 = vst [vmem:[#allocation3 + $0xa0] sm:$0xff] 0.0
        %516 = vst [vmem:[#allocation3 + $0xa8] sm:$0xff] 0.0
        %517 = vst [vmem:[#allocation3 + $0xb0] sm:$0xff] 0.0
        %518 = vst [vmem:[#allocation3 + $0xb8] sm:$0xff] 0.0
        %519 = vst [vmem:[#allocation3 + $0xc0] sm:$0xff] 0.0
        %520 = vst [vmem:[#allocation3 + $0xc8] sm:$0xff] 0.0
        %521 = vst [vmem:[#allocation3 + $0xd0] sm:$0xff] 0.0
        %522 = vst [vmem:[#allocation3 + $0xd8] sm:$0xff] 0.0
        %523 = vst [vmem:[#allocation3 + $0xe0] sm:$0xff] 0.0
        %524 = vst [vmem:[#allocation3 + $0xe8] sm:$0xff] 0.0
        %525 = vst [vmem:[#allocation3 + $0xf0] sm:$0xff] 0.0
        %526 = vst [vmem:[#allocation3 + $0xf8] sm:$0xff] 0.0
        %527 = vst [vmem:[#allocation3 + $0x100] sm:$0xff] 0.0
        %528 = vst [vmem:[#allocation3 + $0x108] sm:$0xff] 0.0
        %529 = vst [vmem:[#allocation3 + $0x110] sm:$0xff] 0.0
        %530 = vst [vmem:[#allocation3 + $0x118] sm:$0xff] 0.0
        %531 = vst [vmem:[#allocation3 + $0x120] sm:$0xff] 0.0
        %532 = vst [vmem:[#allocation3 + $0x128] sm:$0xff] 0.0
        %533 = vst [vmem:[#allocation3 + $0x130] sm:$0xff] 0.0
        %534 = vst [vmem:[#allocation3 + $0x138] sm:$0xff] 0.0
        %535 = vst [vmem:[#allocation3 + $0x140] sm:$0xff] 0.0
        %536 = vst [vmem:[#allocation3 + $0x148] sm:$0xff] 0.0
        %537 = vst [vmem:[#allocation3 + $0x150] sm:$0xff] 0.0
        %538 = vst [vmem:[#allocation3 + $0x158] sm:$0xff] 0.0
        %539 = vst [vmem:[#allocation3 + $0x160] sm:$0xff] 0.0
        %540 = vst [vmem:[#allocation3 + $0x168] sm:$0xff] 0.0
        %541 = vst [vmem:[#allocation3 + $0x170] sm:$0xff] 0.0
        %542 = vst [vmem:[#allocation3 + $0x178] sm:$0xff] 0.0
        loop: start=0, step=1, limit=16
        $region53: #{noise_resnet.1} parent=39 // loop_pre_header
          _
        $region54: #{noise_resnet.1} parent=39 // loop_header
          %s544 = sphi 0, %s548
          %p545 = scmp.ge.s32.totalorder %s544, 16
        $region55: #{noise_resnet.1} parent=39 // loop_header_branch
          %547 = sbr.rel (%p545) target = $region59
        $region56: #{noise_resnet.1} parent=39 // loop_body
          %p549 = scmp.lt.s32.totalorder %s544, 0
          %s550 = ssub.s32 0, %s544
          %s551 = scalar_select %p549, %s550, %s544
          %s552 = sand.u32 %s551, 1
          %s553 = ssub.s32 0, %s552
          %s554 = scalar_select %p549, %s553, %s552
          %p555 = scmp.ne.s32.totalorder %s554, 0
          %p556 = scmp.lt.s32.totalorder %s554, 0
          %p557 = pnand %p556, %p555
          %p558 = pneg %p557
          %s559 = sadd.s32 %s554, 2
          %s560 = scalar_select %p558, %s559, %s554
          %s561 = ssub.s32 1, %s560
          %p562 = scmp.eq.s32.totalorder %s560, 1
          %p563 = scmp.ge.s32.totalorder %s544, 1
          %p564 = scmp.le.s32.totalorder %s544, 14
          %p565 = pnand %p563, %p564
          %p566 = pneg %p565
          %p567 = scmp.ge.s32.totalorder %s544, 3
          %p568 = scmp.le.s32.totalorder %s544, 13
          %p569 = pnand %p567, %p568
          %p570 = pneg %p569
          %p571 = pnand %p562, %p570
          %p572 = pneg %p571
          %p573 = scmp.le.s32.totalorder %s544, 11
          %p574 = pnand %p563, %p573
          %p575 = pneg %p574
          %p576 = pnand %p562, %p575
          %p577 = pneg %p576
          %s578 = scalar_select %p566, 0.0, -3e+38
          %s579 = scalar_lea.vmem [#allocation6], %s544
          %v580 = vld [vmem:[%s579] sm:$0x1]
          %s581 = scalar_lea.vmem [#allocation8], %s544
          %v582 = vld [vmem:[%s581] sm:$0x1]
          %s583 = smul.u32 %s560, 28
          %s584 = smul.addr %s583, 8
          %s585 = scalar_lea.vmem [#allocation2], %s584
          %v586 = vld [vmem:[%s585] sm:$0xc0]
          %v587 = vld [vmem:[%s585 + $0x8] sm:$0xff]
          %v588 = vld [vmem:[%s585 + $0x10] sm:$0xff]
          %v589 = vld [vmem:[%s585 + $0x18] sm:$0xff]
          %v590 = vld [vmem:[%s585 + $0x20] sm:$0xff]
          %v591 = vld [vmem:[%s585 + $0x28] sm:$0xff]
          %v592 = vld [vmem:[%s585 + $0x30] sm:$0xff]
          %v593 = vld [vmem:[%s585 + $0x38] sm:$0xff]
          %v594 = vld [vmem:[%s585 + $0x40] sm:$0x7f]
          %s595 = smul.u32 %s544, 9
          %s596 = smul.u32 %s595, 16
          %s597 = smul.addr %s596, 4
          %s598 = scalar_lea.vmem [#allocation4], %s597
          %v599 = vld [vmem:[%s598] sm:$0xf]
          %v600 = vld [vmem:[%s598 + $0x4] sm:$0xf]
          %v601 = vld [vmem:[%s598 + $0x8] sm:$0xf]
          %v602 = vld [vmem:[%s598 + $0xc] sm:$0xf]
          %v603 = vld [vmem:[%s598 + $0x10] sm:$0xf]
          %v604 = vld [vmem:[%s598 + $0x14] sm:$0xf]
          %v605 = vld [vmem:[%s598 + $0x18] sm:$0xf]
          %v606 = vld [vmem:[%s598 + $0x1c] sm:$0xf]
          %v607 = vld [vmem:[%s598 + $0x20] sm:$0xf]
          %v608 = vld [vmem:[%s598 + $0x24] sm:$0xf]
          %v609 = vld [vmem:[%s598 + $0x28] sm:$0xf]
          %v610 = vld [vmem:[%s598 + $0x2c] sm:$0xf]
          %v611 = vld [vmem:[%s598 + $0x30] sm:$0xf]
          %v612 = vld [vmem:[%s598 + $0x34] sm:$0xf]
          %v613 = vld [vmem:[%s598 + $0x38] sm:$0xf]
          %v614 = vld [vmem:[%s598 + $0x3c] sm:$0xf]
          %v615 = vld [vmem:[%s585] sm:$0x80]
          %s616 = sadd.s32 %s595, 1
          %s617 = smul.u32 %s616, 16
          %s618 = smul.addr %s617, 4
          %s619 = scalar_lea.vmem [#allocation4], %s618
          %v620 = vld [vmem:[%s619] sm:$0xf]
          %v621 = vld [vmem:[%s619 + $0x4] sm:$0xf]
          %v622 = vld [vmem:[%s619 + $0x8] sm:$0xf]
          %v623 = vld [vmem:[%s619 + $0xc] sm:$0xf]
          %v624 = vld [vmem:[%s619 + $0x10] sm:$0xf]
          %v625 = vld [vmem:[%s619 + $0x14] sm:$0xf]
          %v626 = vld [vmem:[%s619 + $0x18] sm:$0xf]
          %v627 = vld [vmem:[%s619 + $0x1c] sm:$0xf]
          %v628 = vld [vmem:[%s619 + $0x20] sm:$0xf]
          %v629 = vld [vmem:[%s619 + $0x24] sm:$0xf]
          %v630 = vld [vmem:[%s619 + $0x28] sm:$0xf]
          %v631 = vld [vmem:[%s619 + $0x2c] sm:$0xf]
          %v632 = vld [vmem:[%s619 + $0x30] sm:$0xf]
          %v633 = vld [vmem:[%s619 + $0x34] sm:$0xf]
          %v634 = vld [vmem:[%s619 + $0x38] sm:$0xf]
          %v635 = vld [vmem:[%s619 + $0x3c] sm:$0xf]
          %vm645 = vcmask 1040384
          %v646 = vrot.slane %v615, 7
          %v647 = vrot.slane %v587, 7
          %v648 = vsel %vm645, %v646, %v647
          %v649 = vrot.slane %v588, 7
          %v650 = vsel %vm645, %v647, %v649
          %v651 = vrot.slane %v589, 7
          %v652 = vsel %vm645, %v649, %v651
          %v653 = vrot.slane %v590, 7
          %v654 = vsel %vm645, %v651, %v653
          %v655 = vrot.slane %v591, 7
          %v656 = vsel %vm645, %v653, %v655
          %v657 = vrot.slane %v592, 7
          %v658 = vsel %vm645, %v655, %v657
          %v659 = vrot.slane %v593, 7
          %v660 = vsel %vm645, %v657, %v659
          %v661 = vrot.slane %v594, 7
          %v662 = vsel %vm645, %v659, %v661
          %v687 = vunpack.c.l.b16 %v620
          %v688 = vunpack.c.l.b16 %v621
          %v689 = vunpack.c.l.b16 %v622
          %v690 = vunpack.c.l.b16 %v623
          %v691 = vunpack.c.l.b16 %v624
          %v692 = vunpack.c.l.b16 %v625
          %v693 = vunpack.c.l.b16 %v626
          %v694 = vunpack.c.l.b16 %v627
          %v695 = vunpack.c.l.b16 %v628
          %v696 = vunpack.c.l.b16 %v629
          %v697 = vunpack.c.l.b16 %v630
          %v698 = vunpack.c.l.b16 %v631
          %v699 = vunpack.c.l.b16 %v632
          %v700 = vunpack.c.l.b16 %v633
          %v701 = vunpack.c.l.b16 %v634
          %v702 = vunpack.c.l.b16 %v635
          %v703 = vpack.c.b16 %v688, %v687
          %v704 = vpack.c.b16 %v690, %v689
          %v705 = vpack.c.b16 %v692, %v691
          %v706 = vpack.c.b16 %v694, %v693
          %v707 = vpack.c.b16 %v696, %v695
          %v708 = vpack.c.b16 %v698, %v697
          %v709 = vpack.c.b16 %v700, %v699
          %v710 = vpack.c.b16 %v702, %v701
          %719 = vmatprep.subr.bf16.mxu0 0
          %720 = vmatpush1.bf16.msra.mxu0 %v703
          %721 = vmatprep.subr.bf16.mxu0 0
          %722 = vmatpush1.bf16.msra.mxu0 %v704
          %723 = vmatprep.subr.bf16.mxu0 0
          %724 = vmatpush1.bf16.msra.mxu0 %v705
          %725 = vmatprep.subr.bf16.mxu0 0
          %726 = vmatpush1.bf16.msra.mxu0 %v706
          %727 = vmatprep.subr.bf16.mxu0 0
          %728 = vmatpush1.bf16.msra.mxu0 %v707
          %729 = vmatprep.subr.bf16.mxu0 0
          %730 = vmatpush1.bf16.msra.mxu0 %v708
          %731 = vmatprep.subr.bf16.mxu0 0
          %732 = vmatpush1.bf16.msra.mxu0 %v709
          %733 = vmatprep.subr.bf16.mxu0 0
          %734 = vmatpush1.bf16.msra.mxu0 %v710
          %735 = vmatprep.subr.bf16.mxu0 0
          %736 = vmatpush1.bf16.msra.mxu0 0
          %737 = vmatprep.subr.bf16.mxu0 0
          %738 = vmatpush1.bf16.msra.mxu0 0
          %739 = vmatprep.subr.bf16.mxu0 0
          %740 = vmatpush1.bf16.msra.mxu0 0
          %741 = vmatprep.subr.bf16.mxu0 0
          %742 = vmatpush1.bf16.msra.mxu0 0
          %743 = vmatprep.subr.bf16.mxu0 0
          %744 = vmatpush1.bf16.msra.mxu0 0
          %745 = vmatprep.subr.bf16.mxu0 0
          %746 = vmatpush1.bf16.msra.mxu0 0
          %747 = vmatprep.subr.bf16.mxu0 0
          %748 = vmatpush1.bf16.msra.mxu0 0
          %749 = vmatprep.subr.bf16.mxu0 0
          %750 = vmatpush1.bf16.msra.mxu0 0
          %751 = vmatprep.mubr.bf16.mxu0 0
          %752 = vmatmul.mubr.bf16.gmra.mrb[0].mxu0 %v648
          %v753 = vpop.f32.mrb[0].mxu0
          %v754 = vadd.f32 0.0, %v753
          %v755 = vpop.f32.mrb[0].mxu0
          %v756 = vpop.f32.mrb[0].mxu0
          %v757 = vadd.f32 0.0, %v756
          %v758 = vpop.f32.mrb[0].mxu0
          %759 = vmatprep.mubr.bf16.mxu0 0
          %760 = vmatmul.mubr.bf16.gmra.mrb[0].mxu0 %v650
          %v761 = vpop.f32.mrb[0].mxu0
          %v762 = vadd.f32 0.0, %v761
          %v763 = vpop.f32.mrb[0].mxu0
          %v764 = vpop.f32.mrb[0].mxu0
          %v765 = vadd.f32 0.0, %v764
          %v766 = vpop.f32.mrb[0].mxu0
          %767 = vmatprep.mubr.bf16.mxu0 0
          %768 = vmatmul.mubr.bf16.gmra.mrb[0].mxu0 %v652
          %v769 = vpop.f32.mrb[0].mxu0
          %v770 = vadd.f32 0.0, %v769
          %v771 = vpop.f32.mrb[0].mxu0
          %v772 = vpop.f32.mrb[0].mxu0
          %v773 = vadd.f32 0.0, %v772
          %v774 = vpop.f32.mrb[0].mxu0
          %775 = vmatprep.mubr.bf16.mxu0 0
          %776 = vmatmul.mubr.bf16.gmra.mrb[0].mxu0 %v654
          %v777 = vpop.f32.mrb[0].mxu0
          %v778 = vadd.f32 0.0, %v777
          %v779 = vpop.f32.mrb[0].mxu0
          %v780 = vpop.f32.mrb[0].mxu0
          %v781 = vadd.f32 0.0, %v780
          %v782 = vpop.f32.mrb[0].mxu0
          %783 = vmatprep.mubr.bf16.mxu0 0
          %784 = vmatmul.mubr.bf16.gmra.mrb[0].mxu0 %v656
          %v785 = vpop.f32.mrb[0].mxu0
          %v786 = vadd.f32 0.0, %v785
          %v787 = vpop.f32.mrb[0].mxu0
          %v788 = vpop.f32.mrb[0].mxu0
          %v789 = vadd.f32 0.0, %v788
          %v790 = vpop.f32.mrb[0].mxu0
          %791 = vmatprep.mubr.bf16.mxu0 0
          %792 = vmatmul.mubr.bf16.gmra.mrb[0].mxu0 %v658
          %v793 = vpop.f32.mrb[0].mxu0
          %v794 = vadd.f32 0.0, %v793
          %v795 = vpop.f32.mrb[0].mxu0
          %v796 = vpop.f32.mrb[0].mxu0
          %v797 = vadd.f32 0.0, %v796
          %v798 = vpop.f32.mrb[0].mxu0
          %799 = vmatprep.mubr.bf16.mxu0 0
          %800 = vmatmul.mubr.bf16.gmra.mrb[0].mxu0 %v660
          %v801 = vpop.f32.mrb[0].mxu0
          %v802 = vadd.f32 0.0, %v801
          %v803 = vpop.f32.mrb[0].mxu0
          %v804 = vpop.f32.mrb[0].mxu0
          %v805 = vadd.f32 0.0, %v804
          %v806 = vpop.f32.mrb[0].mxu0
          %807 = vmatprep.mubr.bf16.mxu0 0
          %808 = vmatmul.mubr.bf16.gmra.mrb[0].mxu0 %v662
          %v809 = vpop.f32.mrb[0].mxu0
          %v810 = vadd.f32 0.0, %v809
          %v811 = vpop.f32.mrb[0].mxu0
          %v812 = vpop.f32.mrb[0].mxu0
          %v813 = vadd.f32 0.0, %v812
          %v814 = vpop.f32.mrb[0].mxu0
          %815 = vdwg.mxu0
          %vm816 = vsmask.f32 1280
          %v818 = vshrl.u32 %v586, 16
          %v820 = vrot.slane %v818, 6
          %v821 = vshll.u32 %v586, 16
          %v823 = vrot.slane %v821, 7
          %v824 = vor.u32 %v820, %v823
          %v826 = vshrl.u32 %v587, 16
          %v828 = vrot.slane %v826, 6
          %v829 = vshll.u32 %v587, 16
          %v831 = vrot.slane %v829, 7
          %v832 = vor.u32 %v828, %v831
          %v833 = vsel %vm816, %v824, %v832
          %v835 = vshrl.u32 %v588, 16
          %v837 = vrot.slane %v835, 6
          %v838 = vshll.u32 %v588, 16
          %v840 = vrot.slane %v838, 7
          %v841 = vor.u32 %v837, %v840
          %v842 = vsel %vm816, %v832, %v841
          %v844 = vshrl.u32 %v589, 16
          %v846 = vrot.slane %v844, 6
          %v847 = vshll.u32 %v589, 16
          %v849 = vrot.slane %v847, 7
          %v850 = vor.u32 %v846, %v849
          %v851 = vsel %vm816, %v841, %v850
          %v853 = vshrl.u32 %v590, 16
          %v855 = vrot.slane %v853, 6
          %v856 = vshll.u32 %v590, 16
          %v858 = vrot.slane %v856, 7
          %v859 = vor.u32 %v855, %v858
          %v860 = vsel %vm816, %v850, %v859
          %v862 = vshrl.u32 %v591, 16
          %v864 = vrot.slane %v862, 6
          %v865 = vshll.u32 %v591, 16
          %v867 = vrot.slane %v865, 7
          %v868 = vor.u32 %v864, %v867
          %v869 = vsel %vm816, %v859, %v868
          %v871 = vshrl.u32 %v592, 16
          %v873 = vrot.slane %v871, 6
          %v874 = vshll.u32 %v592, 16
          %v876 = vrot.slane %v874, 7
          %v877 = vor.u32 %v873, %v876
          %v878 = vsel %vm816, %v868, %v877
          %v880 = vshrl.u32 %v593, 16
          %v882 = vrot.slane %v880, 6
          %v883 = vshll.u32 %v593, 16
          %v885 = vrot.slane %v883, 7
          %v886 = vor.u32 %v882, %v885
          %v887 = vsel %vm816, %v877, %v886
          %v889 = vshrl.u32 %v594, 16
          %v891 = vrot.slane %v889, 6
          %v892 = vshll.u32 %v594, 16
          %v894 = vrot.slane %v892, 7
          %v895 = vor.u32 %v891, %v894
          %v896 = vsel %vm816, %v886, %v895
          %v921 = vunpack.c.l.b16 %v599
          %v922 = vunpack.c.l.b16 %v600
          %v923 = vunpack.c.l.b16 %v601
          %v924 = vunpack.c.l.b16 %v602
          %v925 = vunpack.c.l.b16 %v603
          %v926 = vunpack.c.l.b16 %v604
          %v927 = vunpack.c.l.b16 %v605
          %v928 = vunpack.c.l.b16 %v606
          %v929 = vunpack.c.l.b16 %v607
          %v930 = vunpack.c.l.b16 %v608
          %v931 = vunpack.c.l.b16 %v609
          %v932 = vunpack.c.l.b16 %v610
          %v933 = vunpack.c.l.b16 %v611
          %v934 = vunpack.c.l.b16 %v612
          %v935 = vunpack.c.l.b16 %v613
          %v936 = vunpack.c.l.b16 %v614
          %v937 = vpack.c.b16 %v922, %v921
          %v938 = vpack.c.b16 %v924, %v923
          %v939 = vpack.c.b16 %v926, %v925
          %v940 = vpack.c.b16 %v928, %v927
          %v941 = vpack.c.b16 %v930, %v929
          %v942 = vpack.c.b16 %v932, %v931
          %v943 = vpack.c.b16 %v934, %v933
          %v944 = vpack.c.b16 %v936, %v935
          %953 = vmatprep.subr.bf16.mxu0 0
          %954 = vmatpush1.bf16.msra.mxu0 %v937
          %955 = vmatprep.subr.bf16.mxu0 0
          %956 = vmatpush1.bf16.msra.mxu0 %v938
          %957 = vmatprep.subr.bf16.mxu0 0
          %958 = vmatpush1.bf16.msra.mxu0 %v939
          %959 = vmatprep.subr.bf16.mxu0 0
          %960 = vmatpush1.bf16.msra.mxu0 %v940
          %961 = vmatprep.subr.bf16.mxu0 0
          %962 = vmatpush1.bf16.msra.mxu0 %v941
          %963 = vmatprep.subr.bf16.mxu0 0
          %964 = vmatpush1.bf16.msra.mxu0 %v942
          %965 = vmatprep.subr.bf16.mxu0 0
          %966 = vmatpush1.bf16.msra.mxu0 %v943
          %967 = vmatprep.subr.bf16.mxu0 0
          %968 = vmatpush1.bf16.msra.mxu0 %v944
          %969 = vmatprep.subr.bf16.mxu0 0
          %970 = vmatpush1.bf16.msra.mxu0 0
          %971 = vmatprep.subr.bf16.mxu0 0
          %972 = vmatpush1.bf16.msra.mxu0 0
          %973 = vmatprep.subr.bf16.mxu0 0
          %974 = vmatpush1.bf16.msra.mxu0 0
          %975 = vmatprep.subr.bf16.mxu0 0
          %976 = vmatpush1.bf16.msra.mxu0 0
          %977 = vmatprep.subr.bf16.mxu0 0
          %978 = vmatpush1.bf16.msra.mxu0 0
          %979 = vmatprep.subr.bf16.mxu0 0
          %980 = vmatpush1.bf16.msra.mxu0 0
          %981 = vmatprep.subr.bf16.mxu0 0
          %982 = vmatpush1.bf16.msra.mxu0 0
          %983 = vmatprep.subr.bf16.mxu0 0
          %984 = vmatpush1.bf16.msra.mxu0 0
          %985 = vmatprep.mubr.bf16.mxu0 0
          %986 = vmatmul.mubr.bf16.gmra.mrb[0].mxu0 %v833
          %v987 = vpop.f32.mrb[0].mxu0
          %v988 = vadd.f32 %v754, %v987
          %v989 = vpop.f32.mrb[0].mxu0
          %v990 = vpop.f32.mrb[0].mxu0
          %v991 = vadd.f32 %v757, %v990
          %v992 = vpop.f32.mrb[0].mxu0
          %993 = vmatprep.mubr.bf16.mxu0 0
          %994 = vmatmul.mubr.bf16.gmra.mrb[0].mxu0 %v842
          %v995 = vpop.f32.mrb[0].mxu0
          %v996 = vadd.f32 %v762, %v995
          %v997 = vpop.f32.mrb[0].mxu0
          %v998 = vpop.f32.mrb[0].mxu0
          %v999 = vadd.f32 %v765, %v998
          %v1000 = vpop.f32.mrb[0].mxu0
          %1001 = vmatprep.mubr.bf16.mxu0 0
          %1002 = vmatmul.mubr.bf16.gmra.mrb[0].mxu0 %v851
          %v1003 = vpop.f32.mrb[0].mxu0
          %v1004 = vadd.f32 %v770, %v1003
          %v1005 = vpop.f32.mrb[0].mxu0
          %v1006 = vpop.f32.mrb[0].mxu0
          %v1007 = vadd.f32 %v773, %v1006
          %v1008 = vpop.f32.mrb[0].mxu0
          %1009 = vmatprep.mubr.bf16.mxu0 0
          %1010 = vmatmul.mubr.bf16.gmra.mrb[0].mxu0 %v860
          %v1011 = vpop.f32.mrb[0].mxu0
          %v1012 = vadd.f32 %v778, %v1011
          %v1013 = vpop.f32.mrb[0].mxu0
          %v1014 = vpop.f32.mrb[0].mxu0
          %v1015 = vadd.f32 %v781, %v1014
          %v1016 = vpop.f32.mrb[0].mxu0
          %1017 = vmatprep.mubr.bf16.mxu0 0
          %1018 = vmatmul.mubr.bf16.gmra.mrb[0].mxu0 %v869
          %v1019 = vpop.f32.mrb[0].mxu0
          %v1020 = vadd.f32 %v786, %v1019
          %v1021 = vpop.f32.mrb[0].mxu0
          %v1022 = vpop.f32.mrb[0].mxu0
          %v1023 = vadd.f32 %v789, %v1022
          %v1024 = vpop.f32.mrb[0].mxu0
          %1025 = vmatprep.mubr.bf16.mxu0 0
          %1026 = vmatmul.mubr.bf16.gmra.mrb[0].mxu0 %v878
          %v1027 = vpop.f32.mrb[0].mxu0
          %v1028 = vadd.f32 %v794, %v1027
          %v1029 = vpop.f32.mrb[0].mxu0
          %v1030 = vpop.f32.mrb[0].mxu0
          %v1031 = vadd.f32 %v797, %v1030
          %v1032 = vpop.f32.mrb[0].mxu0
          %1033 = vmatprep.mubr.bf16.mxu0 0
          %1034 = vmatmul.mubr.bf16.gmra.mrb[0].mxu0 %v887
          %v1035 = vpop.f32.mrb[0].mxu0
          %v1036 = vadd.f32 %v802, %v1035
          %v1037 = vpop.f32.mrb[0].mxu0
          %v1038 = vpop.f32.mrb[0].mxu0
          %v1039 = vadd.f32 %v805, %v1038
          %v1040 = vpop.f32.mrb[0].mxu0
          %1041 = vmatprep.mubr.bf16.mxu0 0
          %1042 = vmatmul.mubr.bf16.gmra.mrb[0].mxu0 %v896
          %v1043 = vpop.f32.mrb[0].mxu0
          %v1044 = vadd.f32 %v810, %v1043
          %v1045 = vpop.f32.mrb[0].mxu0
          %v1046 = vpop.f32.mrb[0].mxu0
          %v1047 = vadd.f32 %v813, %v1046
          %v1048 = vpop.f32.mrb[0].mxu0
          %1049 = vdwg.mxu0
          %v1050 = vld [vmem:[%s585 + $0x40] sm:$0xff]
          %s1051 = sadd.s32 %s595, 2
          %s1052 = smul.u32 %s1051, 16
          %s1053 = smul.addr %s1052, 4
          %s1054 = scalar_lea.vmem [#allocation4], %s1053
          %v1055 = vld [vmem:[%s1054] sm:$0xf]
          %v1056 = vld [vmem:[%s1054 + $0x4] sm:$0xf]
          %v1057 = vld [vmem:[%s1054 + $0x8] sm:$0xf]
          %v1058 = vld [vmem:[%s1054 + $0xc] sm:$0xf]
          %v1059 = vld [vmem:[%s1054 + $0x10] sm:$0xf]
          %v1060 = vld [vmem:[%s1054 + $0x14] sm:$0xf]
          %v1061 = vld [vmem:[%s1054 + $0x18] sm:$0xf]
          %v1062 = vld [vmem:[%s1054 + $0x1c] sm:$0xf]
          %v1063 = vld [vmem:[%s1054 + $0x20] sm:$0xf]
          %v1064 = vld [vmem:[%s1054 + $0x24] sm:$0xf]
          %v1065 = vld [vmem:[%s1054 + $0x28] sm:$0xf]
          %v1066 = vld [vmem:[%s1054 + $0x2c] sm:$0xf]
          %v1067 = vld [vmem:[%s1054 + $0x30] sm:$0xf]
          %v1068 = vld [vmem:[%s1054 + $0x34] sm:$0xf]
          %v1069 = vld [vmem:[%s1054 + $0x38] sm:$0xf]
          %v1070 = vld [vmem:[%s1054 + $0x3c] sm:$0xf]
          %vm1071 = vsmask.f32 256
          %v1073 = vshrl.u32 %v615, 16
          %v1075 = vrot.slane %v1073, 7
          %v1076 = vrot.slane %v826, 7
          %v1077 = vor.u32 %v1076, %v829
          %v1078 = vsel %vm1071, %v1075, %v1077
          %v1079 = vrot.slane %v835, 7
          %v1080 = vor.u32 %v1079, %v838
          %v1081 = vsel %vm1071, %v1076, %v1080
          %v1082 = vrot.slane %v844, 7
          %v1083 = vor.u32 %v1082, %v847
          %v1084 = vsel %vm1071, %v1079, %v1083
          %v1085 = vrot.slane %v853, 7
          %v1086 = vor.u32 %v1085, %v856
          %v1087 = vsel %vm1071, %v1082, %v1086
          %v1088 = vrot.slane %v862, 7
          %v1089 = vor.u32 %v1088, %v865
          %v1090 = vsel %vm1071, %v1085, %v1089
          %v1091 = vrot.slane %v871, 7
          %v1092 = vor.u32 %v1091, %v874
          %v1093 = vsel %vm1071, %v1088, %v1092
          %v1094 = vrot.slane %v880, 7
          %v1095 = vor.u32 %v1094, %v883
          %v1096 = vsel %vm1071, %v1091, %v1095
          %v1098 = vshrl.u32 %v1050, 16
          %v1100 = vrot.slane %v1098, 7
          %v1101 = vshll.u32 %v1050, 16
          %v1103 = vor.u32 %v1100, %v1101
          %v1104 = vsel %vm1071, %v1094, %v1103
          %v1129 = vunpack.c.l.b16 %v1055
          %v1130 = vunpack.c.l.b16 %v1056
          %v1131 = vunpack.c.l.b16 %v1057
          %v1132 = vunpack.c.l.b16 %v1058
          %v1133 = vunpack.c.l.b16 %v1059
          %v1134 = vunpack.c.l.b16 %v1060
          %v1135 = vunpack.c.l.b16 %v1061
          %v1136 = vunpack.c.l.b16 %v1062
          %v1137 = vunpack.c.l.b16 %v1063
          %v1138 = vunpack.c.l.b16 %v1064
          %v1139 = vunpack.c.l.b16 %v1065
          %v1140 = vunpack.c.l.b16 %v1066
          %v1141 = vunpack.c.l.b16 %v1067
          %v1142 = vunpack.c.l.b16 %v1068
          %v1143 = vunpack.c.l.b16 %v1069
          %v1144 = vunpack.c.l.b16 %v1070
          %v1145 = vpack.c.b16 %v1130, %v1129
          %v1146 = vpack.c.b16 %v1132, %v1131
          %v1147 = vpack.c.b16 %v1134, %v1133
          %v1148 = vpack.c.b16 %v1136, %v1135
          %v1149 = vpack.c.b16 %v1138, %v1137
          %v1150 = vpack.c.b16 %v1140, %v1139
          %v1151 = vpack.c.b16 %v1142, %v1141
          %v1152 = vpack.c.b16 %v1144, %v1143
          %1161 = vmatprep.subr.bf16.mxu0 0
          %1162 = vmatpush1.bf16.msra.mxu0 %v1145
          %1163 = vmatprep.subr.bf16.mxu0 0
          %1164 = vmatpush1.bf16.msra.mxu0 %v1146
          %1165 = vmatprep.subr.bf16.mxu0 0
          %1166 = vmatpush1.bf16.msra.mxu0 %v1147
          %1167 = vmatprep.subr.bf16.mxu0 0
          %1168 = vmatpush1.bf16.msra.mxu0 %v1148
          %1169 = vmatprep.subr.bf16.mxu0 0
          %1170 = vmatpush1.bf16.msra.mxu0 %v1149
          %1171 = vmatprep.subr.bf16.mxu0 0
          %1172 = vmatpush1.bf16.msra.mxu0 %v1150
          %1173 = vmatprep.subr.bf16.mxu0 0
          %1174 = vmatpush1.bf16.msra.mxu0 %v1151
          %1175 = vmatprep.subr.bf16.mxu0 0
          %1176 = vmatpush1.bf16.msra.mxu0 %v1152
          %1177 = vmatprep.subr.bf16.mxu0 0
          %1178 = vmatpush1.bf16.msra.mxu0 0
          %1179 = vmatprep.subr.bf16.mxu0 0
          %1180 = vmatpush1.bf16.msra.mxu0 0
          %1181 = vmatprep.subr.bf16.mxu0 0
          %1182 = vmatpush1.bf16.msra.mxu0 0
          %1183 = vmatprep.subr.bf16.mxu0 0
          %1184 = vmatpush1.bf16.msra.mxu0 0
          %1185 = vmatprep.subr.bf16.mxu0 0
          %1186 = vmatpush1.bf16.msra.mxu0 0
          %1187 = vmatprep.subr.bf16.mxu0 0
          %1188 = vmatpush1.bf16.msra.mxu0 0
          %1189 = vmatprep.subr.bf16.mxu0 0
          %1190 = vmatpush1.bf16.msra.mxu0 0
          %1191 = vmatprep.subr.bf16.mxu0 0
          %1192 = vmatpush1.bf16.msra.mxu0 0
          %1193 = vmatprep.mubr.bf16.mxu0 0
          %1194 = vmatmul.mubr.bf16.gmra.mrb[0].mxu0 %v1078
          %v1195 = vpop.f32.mrb[0].mxu0
          %v1196 = vadd.f32 0.0, %v1195
          %v1197 = vpop.f32.mrb[0].mxu0
          %v1198 = vpop.f32.mrb[0].mxu0
          %v1199 = vadd.f32 0.0, %v1198
          %v1200 = vpop.f32.mrb[0].mxu0
          %1201 = vmatprep.mubr.bf16.mxu0 0
          %1202 = vmatmul.mubr.bf16.gmra.mrb[0].mxu0 %v1081
          %v1203 = vpop.f32.mrb[0].mxu0
          %v1204 = vadd.f32 0.0, %v1203
          %v1205 = vpop.f32.mrb[0].mxu0
          %v1206 = vpop.f32.mrb[0].mxu0
          %v1207 = vadd.f32 0.0, %v1206
          %v1208 = vpop.f32.mrb[0].mxu0
          %1209 = vmatprep.mubr.bf16.mxu0 0
          %1210 = vmatmul.mubr.bf16.gmra.mrb[0].mxu0 %v1084
          %v1211 = vpop.f32.mrb[0].mxu0
          %v1212 = vadd.f32 0.0, %v1211
          %v1213 = vpop.f32.mrb[0].mxu0
          %v1214 = vpop.f32.mrb[0].mxu0
          %v1215 = vadd.f32 0.0, %v1214
          %v1216 = vpop.f32.mrb[0].mxu0
          %1217 = vmatprep.mubr.bf16.mxu0 0
          %1218 = vmatmul.mubr.bf16.gmra.mrb[0].mxu0 %v1087
          %v1219 = vpop.f32.mrb[0].mxu0
          %v1220 = vadd.f32 0.0, %v1219
          %v1221 = vpop.f32.mrb[0].mxu0
          %v1222 = vpop.f32.mrb[0].mxu0
          %v1223 = vadd.f32 0.0, %v1222
          %v1224 = vpop.f32.mrb[0].mxu0
          %1225 = vmatprep.mubr.bf16.mxu0 0
          %1226 = vmatmul.mubr.bf16.gmra.mrb[0].mxu0 %v1090
          %v1227 = vpop.f32.mrb[0].mxu0
          %v1228 = vadd.f32 0.0, %v1227
          %v1229 = vpop.f32.mrb[0].mxu0
          %v1230 = vpop.f32.mrb[0].mxu0
          %v1231 = vadd.f32 0.0, %v1230
          %v1232 = vpop.f32.mrb[0].mxu0
          %1233 = vmatprep.mubr.bf16.mxu0 0
          %1234 = vmatmul.mubr.bf16.gmra.mrb[0].mxu0 %v1093
          %v1235 = vpop.f32.mrb[0].mxu0
          %v1236 = vadd.f32 0.0, %v1235
          %v1237 = vpop.f32.mrb[0].mxu0
          %v1238 = vpop.f32.mrb[0].mxu0
          %v1239 = vadd.f32 0.0, %v1238
          %v1240 = vpop.f32.mrb[0].mxu0
          %1241 = vmatprep.mubr.bf16.mxu0 0
          %1242 = vmatmul.mubr.bf16.gmra.mrb[0].mxu0 %v1096
          %v1243 = vpop.f32.mrb[0].mxu0
          %v1244 = vadd.f32 0.0, %v1243
          %v1245 = vpop.f32.mrb[0].mxu0
          %v1246 = vpop.f32.mrb[0].mxu0
          %v1247 = vadd.f32 0.0, %v1246
          %v1248 = vpop.f32.mrb[0].mxu0
          %1249 = vmatprep.mubr.bf16.mxu0 0
          %1250 = vmatmul.mubr.bf16.gmra.mrb[0].mxu0 %v1104
          %v1251 = vpop.f32.mrb[0].mxu0
          %v1252 = vadd.f32 0.0, %v1251
          %v1253 = vpop.f32.mrb[0].mxu0
          %v1254 = vpop.f32.mrb[0].mxu0
          %v1255 = vadd.f32 0.0, %v1254
          %v1256 = vpop.f32.mrb[0].mxu0
          %1257 = vdwg.mxu0
          %v1258 = vadd.f32 %v988, %v1196
          %v1259 = vadd.f32 %v991, %v1199
          %v1260 = vadd.f32 %v996, %v1204
          %v1261 = vadd.f32 %v999, %v1207
          %v1262 = vadd.f32 %v1004, %v1212
          %v1263 = vadd.f32 %v1007, %v1215
          %v1264 = vadd.f32 %v1012, %v1220
          %v1265 = vadd.f32 %v1015, %v1223
          %v1266 = vadd.f32 %v1020, %v1228
          %v1267 = vadd.f32 %v1023, %v1231
          %v1268 = vadd.f32 %v1028, %v1236
          %v1269 = vadd.f32 %v1031, %v1239
          %v1270 = vadd.f32 %v1036, %v1244
          %v1271 = vadd.f32 %v1039, %v1247
          %v1272 = vadd.f32 %v1044, %v1252
          %v1273 = vadd.f32 %v1047, %v1255
          %v1274 = vld [vmem:[%s585 + $0x8] sm:$0x80]
          %v1275 = vld [vmem:[%s585 + $0x10] sm:$0xff]
          %v1276 = vld [vmem:[%s585 + $0x18] sm:$0xff]
          %v1277 = vld [vmem:[%s585 + $0x20] sm:$0xff]
          %v1278 = vld [vmem:[%s585 + $0x28] sm:$0xff]
          %v1279 = vld [vmem:[%s585 + $0x30] sm:$0xff]
          %v1280 = vld [vmem:[%s585 + $0x38] sm:$0xff]
          %v1281 = vld [vmem:[%s585 + $0x40] sm:$0xff]
          %v1282 = vld [vmem:[%s585 + $0x48] sm:$0xff]
          %s1283 = sadd.s32 %s595, 3
          %s1284 = smul.u32 %s1283, 16
          %s1285 = smul.addr %s1284, 4
          %s1286 = scalar_lea.vmem [#allocation4], %s1285
          %v1287 = vld [vmem:[%s1286] sm:$0xf]
          %v1288 = vld [vmem:[%s1286 + $0x4] sm:$0xf]
          %v1289 = vld [vmem:[%s1286 + $0x8] sm:$0xf]
          %v1290 = vld [vmem:[%s1286 + $0xc] sm:$0xf]
          %v1291 = vld [vmem:[%s1286 + $0x10] sm:$0xf]
          %v1292 = vld [vmem:[%s1286 + $0x14] sm:$0xf]
          %v1293 = vld [vmem:[%s1286 + $0x18] sm:$0xf]
          %v1294 = vld [vmem:[%s1286 + $0x1c] sm:$0xf]
          %v1295 = vld [vmem:[%s1286 + $0x20] sm:$0xf]
          %v1296 = vld [vmem:[%s1286 + $0x24] sm:$0xf]
          %v1297 = vld [vmem:[%s1286 + $0x28] sm:$0xf]
          %v1298 = vld [vmem:[%s1286 + $0x2c] sm:$0xf]
          %v1299 = vld [vmem:[%s1286 + $0x30] sm:$0xf]
          %v1300 = vld [vmem:[%s1286 + $0x34] sm:$0xf]
          %v1301 = vld [vmem:[%s1286 + $0x38] sm:$0xf]
          %v1302 = vld [vmem:[%s1286 + $0x3c] sm:$0xf]
          %v1304 = vshrl.u32 %v1274, 16
          %v1306 = vrot.slane %v1304, 7
          %v1308 = vshrl.u32 %v1275, 16
          %v1310 = vrot.slane %v1308, 7
          %v1311 = vshll.u32 %v1275, 16
          %v1313 = vor.u32 %v1310, %v1311
          %v1314 = vsel %vm1071, %v1306, %v1313
          %v1316 = vshrl.u32 %v1276, 16
          %v1318 = vrot.slane %v1316, 7
          %v1319 = vshll.u32 %v1276, 16
          %v1321 = vor.u32 %v1318, %v1319
          %v1322 = vsel %vm1071, %v1310, %v1321
          %v1324 = vshrl.u32 %v1277, 16
          %v1326 = vrot.slane %v1324, 7
          %v1327 = vshll.u32 %v1277, 16
          %v1329 = vor.u32 %v1326, %v1327
          %v1330 = vsel %vm1071, %v1318, %v1329
          %v1332 = vshrl.u32 %v1278, 16
          %v1334 = vrot.slane %v1332, 7
          %v1335 = vshll.u32 %v1278, 16
          %v1337 = vor.u32 %v1334, %v1335
          %v1338 = vsel %vm1071, %v1326, %v1337
          %v1340 = vshrl.u32 %v1279, 16
          %v1342 = vrot.slane %v1340, 7
          %v1343 = vshll.u32 %v1279, 16
          %v1345 = vor.u32 %v1342, %v1343
          %v1346 = vsel %vm1071, %v1334, %v1345
          %v1348 = vshrl.u32 %v1280, 16
          %v1350 = vrot.slane %v1348, 7
          %v1351 = vshll.u32 %v1280, 16
          %v1353 = vor.u32 %v1350, %v1351
          %v1354 = vsel %vm1071, %v1342, %v1353
          %v1356 = vshrl.u32 %v1281, 16
          %v1358 = vrot.slane %v1356, 7
          %v1359 = vshll.u32 %v1281, 16
          %v1361 = vor.u32 %v1358, %v1359
          %v1362 = vsel %vm1071, %v1350, %v1361
          %v1364 = vshrl.u32 %v1282, 16
          %v1366 = vrot.slane %v1364, 7
          %v1367 = vshll.u32 %v1282, 16
          %v1369 = vor.u32 %v1366, %v1367
          %v1370 = vsel %vm1071, %v1358, %v1369
          %v1395 = vunpack.c.l.b16 %v1287
          %v1396 = vunpack.c.l.b16 %v1288
          %v1397 = vunpack.c.l.b16 %v1289
          %v1398 = vunpack.c.l.b16 %v1290
          %v1399 = vunpack.c.l.b16 %v1291
          %v1400 = vunpack.c.l.b16 %v1292
          %v1401 = vunpack.c.l.b16 %v1293
          %v1402 = vunpack.c.l.b16 %v1294
          %v1403 = vunpack.c.l.b16 %v1295
          %v1404 = vunpack.c.l.b16 %v1296
          %v1405 = vunpack.c.l.b16 %v1297
          %v1406 = vunpack.c.l.b16 %v1298
          %v1407 = vunpack.c.l.b16 %v1299
          %v1408 = vunpack.c.l.b16 %v1300
          %v1409 = vunpack.c.l.b16 %v1301
          %v1410 = vunpack.c.l.b16 %v1302
          %v1411 = vpack.c.b16 %v1396, %v1395
          %v1412 = vpack.c.b16 %v1398, %v1397
          %v1413 = vpack.c.b16 %v1400, %v1399
          %v1414 = vpack.c.b16 %v1402, %v1401
          %v1415 = vpack.c.b16 %v1404, %v1403
          %v1416 = vpack.c.b16 %v1406, %v1405
          %v1417 = vpack.c.b16 %v1408, %v1407
          %v1418 = vpack.c.b16 %v1410, %v1409
          %1427 = vmatprep.subr.bf16.mxu0 0
          %1428 = vmatpush1.bf16.msra.mxu0 %v1411
          %1429 = vmatprep.subr.bf16.mxu0 0
          %1430 = vmatpush1.bf16.msra.mxu0 %v1412
          %1431 = vmatprep.subr.bf16.mxu0 0
          %1432 = vmatpush1.bf16.msra.mxu0 %v1413
          %1433 = vmatprep.subr.bf16.mxu0 0
          %1434 = vmatpush1.bf16.msra.mxu0 %v1414
          %1435 = vmatprep.subr.bf16.mxu0 0
          %1436 = vmatpush1.bf16.msra.mxu0 %v1415
          %1437 = vmatprep.subr.bf16.mxu0 0
          %1438 = vmatpush1.bf16.msra.mxu0 %v1416
          %1439 = vmatprep.subr.bf16.mxu0 0
          %1440 = vmatpush1.bf16.msra.mxu0 %v1417
          %1441 = vmatprep.subr.bf16.mxu0 0
          %1442 = vmatpush1.bf16.msra.mxu0 %v1418
          %1443 = vmatprep.subr.bf16.mxu0 0
          %1444 = vmatpush1.bf16.msra.mxu0 0
          %1445 = vmatprep.subr.bf16.mxu0 0
          %1446 = vmatpush1.bf16.msra.mxu0 0
          %1447 = vmatprep.subr.bf16.mxu0 0
          %1448 = vmatpush1.bf16.msra.mxu0 0
          %1449 = vmatprep.subr.bf16.mxu0 0
          %1450 = vmatpush1.bf16.msra.mxu0 0
          %1451 = vmatprep.subr.bf16.mxu0 0
          %1452 = vmatpush1.bf16.msra.mxu0 0
          %1453 = vmatprep.subr.bf16.mxu0 0
          %1454 = vmatpush1.bf16.msra.mxu0 0
          %1455 = vmatprep.subr.bf16.mxu0 0
          %1456 = vmatpush1.bf16.msra.mxu0 0
          %1457 = vmatprep.subr.bf16.mxu0 0
          %1458 = vmatpush1.bf16.msra.mxu0 0
          %1459 = vmatprep.mubr.bf16.mxu0 0
          %1460 = vmatmul.mubr.bf16.gmra.mrb[0].mxu0 %v1314
          %v1461 = vpop.f32.mrb[0].mxu0
          %v1462 = vadd.f32 0.0, %v1461
          %v1463 = vpop.f32.mrb[0].mxu0
          %v1464 = vpop.f32.mrb[0].mxu0
          %v1465 = vadd.f32 0.0, %v1464
          %v1466 = vpop.f32.mrb[0].mxu0
          %1467 = vmatprep.mubr.bf16.mxu0 0
          %1468 = vmatmul.mubr.bf16.gmra.mrb[0].mxu0 %v1322
          %v1469 = vpop.f32.mrb[0].mxu0
          %v1470 = vadd.f32 0.0, %v1469
          %v1471 = vpop.f32.mrb[0].mxu0
          %v1472 = vpop.f32.mrb[0].mxu0
          %v1473 = vadd.f32 0.0, %v1472
          %v1474 = vpop.f32.mrb[0].mxu0
          %1475 = vmatprep.mubr.bf16.mxu0 0
          %1476 = vmatmul.mubr.bf16.gmra.mrb[0].mxu0 %v1330
          %v1477 = vpop.f32.mrb[0].mxu0
          %v1478 = vadd.f32 0.0, %v1477
          %v1479 = vpop.f32.mrb[0].mxu0
          %v1480 = vpop.f32.mrb[0].mxu0
          %v1481 = vadd.f32 0.0, %v1480
          %v1482 = vpop.f32.mrb[0].mxu0
          %1483 = vmatprep.mubr.bf16.mxu0 0
          %1484 = vmatmul.mubr.bf16.gmra.mrb[0].mxu0 %v1338
          %v1485 = vpop.f32.mrb[0].mxu0
          %v1486 = vadd.f32 0.0, %v1485
          %v1487 = vpop.f32.mrb[0].mxu0
          %v1488 = vpop.f32.mrb[0].mxu0
          %v1489 = vadd.f32 0.0, %v1488
          %v1490 = vpop.f32.mrb[0].mxu0
          %1491 = vmatprep.mubr.bf16.mxu0 0
          %1492 = vmatmul.mubr.bf16.gmra.mrb[0].mxu0 %v1346
          %v1493 = vpop.f32.mrb[0].mxu0
          %v1494 = vadd.f32 0.0, %v1493
          %v1495 = vpop.f32.mrb[0].mxu0
          %v1496 = vpop.f32.mrb[0].mxu0
          %v1497 = vadd.f32 0.0, %v1496
          %v1498 = vpop.f32.mrb[0].mxu0
          %1499 = vmatprep.mubr.bf16.mxu0 0
          %1500 = vmatmul.mubr.bf16.gmra.mrb[0].mxu0 %v1354
          %v1501 = vpop.f32.mrb[0].mxu0
          %v1502 = vadd.f32 0.0, %v1501
          %v1503 = vpop.f32.mrb[0].mxu0
          %v1504 = vpop.f32.mrb[0].mxu0
          %v1505 = vadd.f32 0.0, %v1504
          %v1506 = vpop.f32.mrb[0].mxu0
          %1507 = vmatprep.mubr.bf16.mxu0 0
          %1508 = vmatmul.mubr.bf16.gmra.mrb[0].mxu0 %v1362
          %v1509 = vpop.f32.mrb[0].mxu0
          %v1510 = vadd.f32 0.0, %v1509
          %v1511 = vpop.f32.mrb[0].mxu0
          %v1512 = vpop.f32.mrb[0].mxu0
          %v1513 = vadd.f32 0.0, %v1512
          %v1514 = vpop.f32.mrb[0].mxu0
          %1515 = vmatprep.mubr.bf16.mxu0 0
          %1516 = vmatmul.mubr.bf16.gmra.mrb[0].mxu0 %v1370
          %v1517 = vpop.f32.mrb[0].mxu0
          %v1518 = vadd.f32 0.0, %v1517
          %v1519 = vpop.f32.mrb[0].mxu0
          %v1520 = vpop.f32.mrb[0].mxu0
          %v1521 = vadd.f32 0.0, %v1520
          %v1522 = vpop.f32.mrb[0].mxu0
          %1523 = vdwg.mxu0
          %v1524 = vadd.f32 %v1258, %v1462
          %v1525 = vadd.f32 %v1259, %v1465
          %v1526 = vadd.f32 %v1260, %v1470
          %v1527 = vadd.f32 %v1261, %v1473
          %v1528 = vadd.f32 %v1262, %v1478
          %v1529 = vadd.f32 %v1263, %v1481
          %v1530 = vadd.f32 %v1264, %v1486
          %v1531 = vadd.f32 %v1265, %v1489
          %v1532 = vadd.f32 %v1266, %v1494
          %v1533 = vadd.f32 %v1267, %v1497
          %v1534 = vadd.f32 %v1268, %v1502
          %v1535 = vadd.f32 %v1269, %v1505
          %v1536 = vadd.f32 %v1270, %v1510
          %v1537 = vadd.f32 %v1271, %v1513
          %v1538 = vadd.f32 %v1272, %v1518
          %v1539 = vadd.f32 %v1273, %v1521
          %s1540 = sadd.s32 %s595, 4
          %s1541 = smul.u32 %s1540, 16
          %s1542 = smul.addr %s1541, 4
          %s1543 = scalar_lea.vmem [#allocation4], %s1542
          %v1544 = vld [vmem:[%s1543] sm:$0xf]
          %v1545 = vld [vmem:[%s1543 + $0x4] sm:$0xf]
          %v1546 = vld [vmem:[%s1543 + $0x8] sm:$0xf]
          %v1547 = vld [vmem:[%s1543 + $0xc] sm:$0xf]
          %v1548 = vld [vmem:[%s1543 + $0x10] sm:$0xf]
          %v1549 = vld [vmem:[%s1543 + $0x14] sm:$0xf]
          %v1550 = vld [vmem:[%s1543 + $0x18] sm:$0xf]
          %v1551 = vld [vmem:[%s1543 + $0x1c] sm:$0xf]
          %v1552 = vld [vmem:[%s1543 + $0x20] sm:$0xf]
          %v1553 = vld [vmem:[%s1543 + $0x24] sm:$0xf]
          %v1554 = vld [vmem:[%s1543 + $0x28] sm:$0xf]
          %v1555 = vld [vmem:[%s1543 + $0x2c] sm:$0xf]
          %v1556 = vld [vmem:[%s1543 + $0x30] sm:$0xf]
          %v1557 = vld [vmem:[%s1543 + $0x34] sm:$0xf]
          %v1558 = vld [vmem:[%s1543 + $0x38] sm:$0xf]
          %v1559 = vld [vmem:[%s1543 + $0x3c] sm:$0xf]
          %v1576 = vunpack.c.l.b16 %v1544
          %v1577 = vunpack.c.l.b16 %v1545
          %v1578 = vunpack.c.l.b16 %v1546
          %v1579 = vunpack.c.l.b16 %v1547
          %v1580 = vunpack.c.l.b16 %v1548
          %v1581 = vunpack.c.l.b16 %v1549
          %v1582 = vunpack.c.l.b16 %v1550
          %v1583 = vunpack.c.l.b16 %v1551
          %v1584 = vunpack.c.l.b16 %v1552
          %v1585 = vunpack.c.l.b16 %v1553
          %v1586 = vunpack.c.l.b16 %v1554
          %v1587 = vunpack.c.l.b16 %v1555
          %v1588 = vunpack.c.l.b16 %v1556
          %v1589 = vunpack.c.l.b16 %v1557
          %v1590 = vunpack.c.l.b16 %v1558
          %v1591 = vunpack.c.l.b16 %v1559
          %v1592 = vpack.c.b16 %v1577, %v1576
          %v1593 = vpack.c.b16 %v1579, %v1578
          %v1594 = vpack.c.b16 %v1581, %v1580
          %v1595 = vpack.c.b16 %v1583, %v1582
          %v1596 = vpack.c.b16 %v1585, %v1584
          %v1597 = vpack.c.b16 %v1587, %v1586
          %v1598 = vpack.c.b16 %v1589, %v1588
          %v1599 = vpack.c.b16 %v1591, %v1590
          %1608 = vmatprep.subr.bf16.mxu0 0
          %1609 = vmatpush1.bf16.msra.mxu0 %v1592
          %1610 = vmatprep.subr.bf16.mxu0 0
          %1611 = vmatpush1.bf16.msra.mxu0 %v1593
          %1612 = vmatprep.subr.bf16.mxu0 0
          %1613 = vmatpush1.bf16.msra.mxu0 %v1594
          %1614 = vmatprep.subr.bf16.mxu0 0
          %1615 = vmatpush1.bf16.msra.mxu0 %v1595
          %1616 = vmatprep.subr.bf16.mxu0 0
          %1617 = vmatpush1.bf16.msra.mxu0 %v1596
          %1618 = vmatprep.subr.bf16.mxu0 0
          %1619 = vmatpush1.bf16.msra.mxu0 %v1597
          %1620 = vmatprep.subr.bf16.mxu0 0
          %1621 = vmatpush1.bf16.msra.mxu0 %v1598
          %1622 = vmatprep.subr.bf16.mxu0 0
          %1623 = vmatpush1.bf16.msra.mxu0 %v1599
          %1624 = vmatprep.subr.bf16.mxu0 0
          %1625 = vmatpush1.bf16.msra.mxu0 0
          %1626 = vmatprep.subr.bf16.mxu0 0
          %1627 = vmatpush1.bf16.msra.mxu0 0
          %1628 = vmatprep.subr.bf16.mxu0 0
          %1629 = vmatpush1.bf16.msra.mxu0 0
          %1630 = vmatprep.subr.bf16.mxu0 0
          %1631 = vmatpush1.bf16.msra.mxu0 0
          %1632 = vmatprep.subr.bf16.mxu0 0
          %1633 = vmatpush1.bf16.msra.mxu0 0
          %1634 = vmatprep.subr.bf16.mxu0 0
          %1635 = vmatpush1.bf16.msra.mxu0 0
          %1636 = vmatprep.subr.bf16.mxu0 0
          %1637 = vmatpush1.bf16.msra.mxu0 0
          %1638 = vmatprep.subr.bf16.mxu0 0
          %1639 = vmatpush1.bf16.msra.mxu0 0
          %1640 = vmatprep.mubr.bf16.mxu0 0
          %1641 = vmatmul.mubr.bf16.gmra.mrb[0].mxu0 %v1275
          %v1642 = vpop.f32.mrb[0].mxu0
          %v1643 = vadd.f32 0.0, %v1642
          %v1644 = vpop.f32.mrb[0].mxu0
          %v1645 = vpop.f32.mrb[0].mxu0
          %v1646 = vadd.f32 0.0, %v1645
          %v1647 = vpop.f32.mrb[0].mxu0
          %1648 = vmatprep.mubr.bf16.mxu0 0
          %1649 = vmatmul.mubr.bf16.gmra.mrb[0].mxu0 %v1276
          %v1650 = vpop.f32.mrb[0].mxu0
          %v1651 = vadd.f32 0.0, %v1650
          %v1652 = vpop.f32.mrb[0].mxu0
          %v1653 = vpop.f32.mrb[0].mxu0
          %v1654 = vadd.f32 0.0, %v1653
          %v1655 = vpop.f32.mrb[0].mxu0
          %1656 = vmatprep.mubr.bf16.mxu0 0
          %1657 = vmatmul.mubr.bf16.gmra.mrb[0].mxu0 %v1277
          %v1658 = vpop.f32.mrb[0].mxu0
          %v1659 = vadd.f32 0.0, %v1658
          %v1660 = vpop.f32.mrb[0].mxu0
          %v1661 = vpop.f32.mrb[0].mxu0
          %v1662 = vadd.f32 0.0, %v1661
          %v1663 = vpop.f32.mrb[0].mxu0
          %1664 = vmatprep.mubr.bf16.mxu0 0
          %1665 = vmatmul.mubr.bf16.gmra.mrb[0].mxu0 %v1278
          %v1666 = vpop.f32.mrb[0].mxu0
          %v1667 = vadd.f32 0.0, %v1666
          %v1668 = vpop.f32.mrb[0].mxu0
          %v1669 = vpop.f32.mrb[0].mxu0
          %v1670 = vadd.f32 0.0, %v1669
          %v1671 = vpop.f32.mrb[0].mxu0
          %1672 = vmatprep.mubr.bf16.mxu0 0
          %1673 = vmatmul.mubr.bf16.gmra.mrb[0].mxu0 %v1279
          %v1674 = vpop.f32.mrb[0].mxu0
          %v1675 = vadd.f32 0.0, %v1674
          %v1676 = vpop.f32.mrb[0].mxu0
          %v1677 = vpop.f32.mrb[0].mxu0
          %v1678 = vadd.f32 0.0, %v1677
          %v1679 = vpop.f32.mrb[0].mxu0
          %1680 = vmatprep.mubr.bf16.mxu0 0
          %1681 = vmatmul.mubr.bf16.gmra.mrb[0].mxu0 %v1280
          %v1682 = vpop.f32.mrb[0].mxu0
          %v1683 = vadd.f32 0.0, %v1682
          %v1684 = vpop.f32.mrb[0].mxu0
          %v1685 = vpop.f32.mrb[0].mxu0
          %v1686 = vadd.f32 0.0, %v1685
          %v1687 = vpop.f32.mrb[0].mxu0
          %1688 = vmatprep.mubr.bf16.mxu0 0
          %1689 = vmatmul.mubr.bf16.gmra.mrb[0].mxu0 %v1281
          %v1690 = vpop.f32.mrb[0].mxu0
          %v1691 = vadd.f32 0.0, %v1690
          %v1692 = vpop.f32.mrb[0].mxu0
          %v1693 = vpop.f32.mrb[0].mxu0
          %v1694 = vadd.f32 0.0, %v1693
          %v1695 = vpop.f32.mrb[0].mxu0
          %1696 = vmatprep.mubr.bf16.mxu0 0
          %1697 = vmatmul.mubr.bf16.gmra.mrb[0].mxu0 %v1282
          %v1698 = vpop.f32.mrb[0].mxu0
          %v1699 = vadd.f32 0.0, %v1698
          %v1700 = vpop.f32.mrb[0].mxu0
          %v1701 = vpop.f32.mrb[0].mxu0
          %v1702 = vadd.f32 0.0, %v1701
          %v1703 = vpop.f32.mrb[0].mxu0
          %1704 = vdwg.mxu0
          %v1705 = vadd.f32 %v1524, %v1643
          %v1706 = vadd.f32 %v1525, %v1646
          %v1707 = vadd.f32 %v1526, %v1651
          %v1708 = vadd.f32 %v1527, %v1654
          %v1709 = vadd.f32 %v1528, %v1659
          %v1710 = vadd.f32 %v1529, %v1662
          %v1711 = vadd.f32 %v1530, %v1667
          %v1712 = vadd.f32 %v1531, %v1670
          %v1713 = vadd.f32 %v1532, %v1675
          %v1714 = vadd.f32 %v1533, %v1678
          %v1715 = vadd.f32 %v1534, %v1683
          %v1716 = vadd.f32 %v1535, %v1686
          %v1717 = vadd.f32 %v1536, %v1691
          %v1718 = vadd.f32 %v1537, %v1694
          %v1719 = vadd.f32 %v1538, %v1699
          %v1720 = vadd.f32 %v1539, %v1702
          %v1721 = vld [vmem:[%s585 + $0x10] sm:$0xff]
          %v1722 = vld [vmem:[%s585 + $0x18] sm:$0xff]
          %v1723 = vld [vmem:[%s585 + $0x20] sm:$0xff]
          %v1724 = vld [vmem:[%s585 + $0x28] sm:$0xff]
          %v1725 = vld [vmem:[%s585 + $0x30] sm:$0xff]
          %v1726 = vld [vmem:[%s585 + $0x38] sm:$0xff]
          %v1727 = vld [vmem:[%s585 + $0x40] sm:$0xff]
          %v1728 = vld [vmem:[%s585 + $0x48] sm:$0xff]
          %v1729 = vld [vmem:[%s585 + $0x50] sm:$0x1]
          %s1730 = sadd.s32 %s595, 5
          %s1731 = smul.u32 %s1730, 16
          %s1732 = smul.addr %s1731, 4
          %s1733 = scalar_lea.vmem [#allocation4], %s1732
          %v1734 = vld [vmem:[%s1733] sm:$0xf]
          %v1735 = vld [vmem:[%s1733 + $0x4] sm:$0xf]
          %v1736 = vld [vmem:[%s1733 + $0x8] sm:$0xf]
          %v1737 = vld [vmem:[%s1733 + $0xc] sm:$0xf]
          %v1738 = vld [vmem:[%s1733 + $0x10] sm:$0xf]
          %v1739 = vld [vmem:[%s1733 + $0x14] sm:$0xf]
          %v1740 = vld [vmem:[%s1733 + $0x18] sm:$0xf]
          %v1741 = vld [vmem:[%s1733 + $0x1c] sm:$0xf]
          %v1742 = vld [vmem:[%s1733 + $0x20] sm:$0xf]
          %v1743 = vld [vmem:[%s1733 + $0x24] sm:$0xf]
          %v1744 = vld [vmem:[%s1733 + $0x28] sm:$0xf]
          %v1745 = vld [vmem:[%s1733 + $0x2c] sm:$0xf]
          %v1746 = vld [vmem:[%s1733 + $0x30] sm:$0xf]
          %v1747 = vld [vmem:[%s1733 + $0x34] sm:$0xf]
          %v1748 = vld [vmem:[%s1733 + $0x38] sm:$0xf]
          %v1749 = vld [vmem:[%s1733 + $0x3c] sm:$0xf]
          %vm1750 = vsmask.f32 7424
          %v1752 = vshrl.u32 %v1721, 16
          %v1754 = vshll.u32 %v1721, 16
          %v1756 = vrot.slane %v1754, 1
          %v1757 = vor.u32 %v1752, %v1756
          %v1759 = vshll.u32 %v1722, 16
          %v1761 = vrot.slane %v1759, 1
          %v1762 = vsel %vm1750, %v1757, %v1761
          %v1763 = vshrl.u32 %v1722, 16
          %v1765 = vor.u32 %v1763, %v1761
          %v1767 = vshll.u32 %v1723, 16
          %v1769 = vrot.slane %v1767, 1
          %v1770 = vsel %vm1750, %v1765, %v1769
          %v1771 = vshrl.u32 %v1723, 16
          %v1773 = vor.u32 %v1771, %v1769
          %v1775 = vshll.u32 %v1724, 16
          %v1777 = vrot.slane %v1775, 1
          %v1778 = vsel %vm1750, %v1773, %v1777
          %v1779 = vshrl.u32 %v1724, 16
          %v1781 = vor.u32 %v1779, %v1777
          %v1783 = vshll.u32 %v1725, 16
          %v1785 = vrot.slane %v1783, 1
          %v1786 = vsel %vm1750, %v1781, %v1785
          %v1787 = vshrl.u32 %v1725, 16
          %v1789 = vor.u32 %v1787, %v1785
          %v1791 = vshll.u32 %v1726, 16
          %v1793 = vrot.slane %v1791, 1
          %v1794 = vsel %vm1750, %v1789, %v1793
          %v1795 = vshrl.u32 %v1726, 16
          %v1797 = vor.u32 %v1795, %v1793
          %v1799 = vshll.u32 %v1727, 16
          %v1801 = vrot.slane %v1799, 1
          %v1802 = vsel %vm1750, %v1797, %v1801
          %v1803 = vshrl.u32 %v1727, 16
          %v1805 = vor.u32 %v1803, %v1801
          %v1807 = vshll.u32 %v1728, 16
          %v1809 = vrot.slane %v1807, 1
          %v1810 = vsel %vm1750, %v1805, %v1809
          %v1811 = vshrl.u32 %v1728, 16
          %v1813 = vor.u32 %v1811, %v1809
          %v1815 = vshll.u32 %v1729, 16
          %v1817 = vrot.slane %v1815, 1
          %v1818 = vsel %vm1750, %v1813, %v1817
          %v1843 = vunpack.c.l.b16 %v1734
          %v1844 = vunpack.c.l.b16 %v1735
          %v1845 = vunpack.c.l.b16 %v1736
          %v1846 = vunpack.c.l.b16 %v1737
          %v1847 = vunpack.c.l.b16 %v1738
          %v1848 = vunpack.c.l.b16 %v1739
          %v1849 = vunpack.c.l.b16 %v1740
          %v1850 = vunpack.c.l.b16 %v1741
          %v1851 = vunpack.c.l.b16 %v1742
          %v1852 = vunpack.c.l.b16 %v1743
          %v1853 = vunpack.c.l.b16 %v1744
          %v1854 = vunpack.c.l.b16 %v1745
          %v1855 = vunpack.c.l.b16 %v1746
          %v1856 = vunpack.c.l.b16 %v1747
          %v1857 = vunpack.c.l.b16 %v1748
          %v1858 = vunpack.c.l.b16 %v1749
          %v1859 = vpack.c.b16 %v1844, %v1843
          %v1860 = vpack.c.b16 %v1846, %v1845
          %v1861 = vpack.c.b16 %v1848, %v1847
          %v1862 = vpack.c.b16 %v1850, %v1849
          %v1863 = vpack.c.b16 %v1852, %v1851
          %v1864 = vpack.c.b16 %v1854, %v1853
          %v1865 = vpack.c.b16 %v1856, %v1855
          %v1866 = vpack.c.b16 %v1858, %v1857
          %1875 = vmatprep.subr.bf16.mxu0 0
          %1876 = vmatpush1.bf16.msra.mxu0 %v1859
          %1877 = vmatprep.subr.bf16.mxu0 0
          %1878 = vmatpush1.bf16.msra.mxu0 %v1860
          %1879 = vmatprep.subr.bf16.mxu0 0
          %1880 = vmatpush1.bf16.msra.mxu0 %v1861
          %1881 = vmatprep.subr.bf16.mxu0 0
          %1882 = vmatpush1.bf16.msra.mxu0 %v1862
          %1883 = vmatprep.subr.bf16.mxu0 0
          %1884 = vmatpush1.bf16.msra.mxu0 %v1863
          %1885 = vmatprep.subr.bf16.mxu0 0
          %1886 = vmatpush1.bf16.msra.mxu0 %v1864
          %1887 = vmatprep.subr.bf16.mxu0 0
          %1888 = vmatpush1.bf16.msra.mxu0 %v1865
          %1889 = vmatprep.subr.bf16.mxu0 0
          %1890 = vmatpush1.bf16.msra.mxu0 %v1866
          %1891 = vmatprep.subr.bf16.mxu0 0
          %1892 = vmatpush1.bf16.msra.mxu0 0
          %1893 = vmatprep.subr.bf16.mxu0 0
          %1894 = vmatpush1.bf16.msra.mxu0 0
          %1895 = vmatprep.subr.bf16.mxu0 0
          %1896 = vmatpush1.bf16.msra.mxu0 0
          %1897 = vmatprep.subr.bf16.mxu0 0
          %1898 = vmatpush1.bf16.msra.mxu0 0
          %1899 = vmatprep.subr.bf16.mxu0 0
          %1900 = vmatpush1.bf16.msra.mxu0 0
          %1901 = vmatprep.subr.bf16.mxu0 0
          %1902 = vmatpush1.bf16.msra.mxu0 0
          %1903 = vmatprep.subr.bf16.mxu0 0
          %1904 = vmatpush1.bf16.msra.mxu0 0
          %1905 = vmatprep.subr.bf16.mxu0 0
          %1906 = vmatpush1.bf16.msra.mxu0 0
          %1907 = vmatprep.mubr.bf16.mxu0 0
          %1908 = vmatmul.mubr.bf16.gmra.mrb[0].mxu0 %v1762
          %v1909 = vpop.f32.mrb[0].mxu0
          %v1910 = vadd.f32 0.0, %v1909
          %v1911 = vpop.f32.mrb[0].mxu0
          %v1912 = vpop.f32.mrb[0].mxu0
          %v1913 = vadd.f32 0.0, %v1912
          %v1914 = vpop.f32.mrb[0].mxu0
          %1915 = vmatprep.mubr.bf16.mxu0 0
          %1916 = vmatmul.mubr.bf16.gmra.mrb[0].mxu0 %v1770
          %v1917 = vpop.f32.mrb[0].mxu0
          %v1918 = vadd.f32 0.0, %v1917
          %v1919 = vpop.f32.mrb[0].mxu0
          %v1920 = vpop.f32.mrb[0].mxu0
          %v1921 = vadd.f32 0.0, %v1920
          %v1922 = vpop.f32.mrb[0].mxu0
          %1923 = vmatprep.mubr.bf16.mxu0 0
          %1924 = vmatmul.mubr.bf16.gmra.mrb[0].mxu0 %v1778
          %v1925 = vpop.f32.mrb[0].mxu0
          %v1926 = vadd.f32 0.0, %v1925
          %v1927 = vpop.f32.mrb[0].mxu0
          %v1928 = vpop.f32.mrb[0].mxu0
          %v1929 = vadd.f32 0.0, %v1928
          %v1930 = vpop.f32.mrb[0].mxu0
          %1931 = vmatprep.mubr.bf16.mxu0 0
          %1932 = vmatmul.mubr.bf16.gmra.mrb[0].mxu0 %v1786
          %v1933 = vpop.f32.mrb[0].mxu0
          %v1934 = vadd.f32 0.0, %v1933
          %v1935 = vpop.f32.mrb[0].mxu0
          %v1936 = vpop.f32.mrb[0].mxu0
          %v1937 = vadd.f32 0.0, %v1936
          %v1938 = vpop.f32.mrb[0].mxu0
          %1939 = vmatprep.mubr.bf16.mxu0 0
          %1940 = vmatmul.mubr.bf16.gmra.mrb[0].mxu0 %v1794
          %v1941 = vpop.f32.mrb[0].mxu0
          %v1942 = vadd.f32 0.0, %v1941
          %v1943 = vpop.f32.mrb[0].mxu0
          %v1944 = vpop.f32.mrb[0].mxu0
          %v1945 = vadd.f32 0.0, %v1944
          %v1946 = vpop.f32.mrb[0].mxu0
          %1947 = vmatprep.mubr.bf16.mxu0 0
          %1948 = vmatmul.mubr.bf16.gmra.mrb[0].mxu0 %v1802
          %v1949 = vpop.f32.mrb[0].mxu0
          %v1950 = vadd.f32 0.0, %v1949
          %v1951 = vpop.f32.mrb[0].mxu0
          %v1952 = vpop.f32.mrb[0].mxu0
          %v1953 = vadd.f32 0.0, %v1952
          %v1954 = vpop.f32.mrb[0].mxu0
          %1955 = vmatprep.mubr.bf16.mxu0 0
          %1956 = vmatmul.mubr.bf16.gmra.mrb[0].mxu0 %v1810
          %v1957 = vpop.f32.mrb[0].mxu0
          %v1958 = vadd.f32 0.0, %v1957
          %v1959 = vpop.f32.mrb[0].mxu0
          %v1960 = vpop.f32.mrb[0].mxu0
          %v1961 = vadd.f32 0.0, %v1960
          %v1962 = vpop.f32.mrb[0].mxu0
          %1963 = vmatprep.mubr.bf16.mxu0 0
          %1964 = vmatmul.mubr.bf16.gmra.mrb[0].mxu0 %v1818
          %v1965 = vpop.f32.mrb[0].mxu0
          %v1966 = vadd.f32 0.0, %v1965
          %v1967 = vpop.f32.mrb[0].mxu0
          %v1968 = vpop.f32.mrb[0].mxu0
          %v1969 = vadd.f32 0.0, %v1968
          %v1970 = vpop.f32.mrb[0].mxu0
          %1971 = vdwg.mxu0
          %v1972 = vadd.f32 %v1705, %v1910
          %v1973 = vadd.f32 %v1706, %v1913
          %v1974 = vadd.f32 %v1707, %v1918
          %v1975 = vadd.f32 %v1708, %v1921
          %v1976 = vadd.f32 %v1709, %v1926
          %v1977 = vadd.f32 %v1710, %v1929
          %v1978 = vadd.f32 %v1711, %v1934
          %v1979 = vadd.f32 %v1712, %v1937
          %v1980 = vadd.f32 %v1713, %v1942
          %v1981 = vadd.f32 %v1714, %v1945
          %v1982 = vadd.f32 %v1715, %v1950
          %v1983 = vadd.f32 %v1716, %v1953
          %v1984 = vadd.f32 %v1717, %v1958
          %v1985 = vadd.f32 %v1718, %v1961
          %v1986 = vadd.f32 %v1719, %v1966
          %v1987 = vadd.f32 %v1720, %v1969
          %v1988 = vld [vmem:[%s585 + $0x18] sm:$0xff]
          %v1989 = vld [vmem:[%s585 + $0x20] sm:$0xff]
          %v1990 = vld [vmem:[%s585 + $0x28] sm:$0xff]
          %v1991 = vld [vmem:[%s585 + $0x30] sm:$0xff]
          %v1992 = vld [vmem:[%s585 + $0x38] sm:$0xff]
          %v1993 = vld [vmem:[%s585 + $0x40] sm:$0xff]
          %v1994 = vld [vmem:[%s585 + $0x48] sm:$0xff]
          %v1995 = vld [vmem:[%s585 + $0x50] sm:$0xff]
          %v1996 = vld [vmem:[%s585 + $0x58] sm:$0x1]
          %s1997 = sadd.s32 %s595, 6
          %s1998 = smul.u32 %s1997, 16
          %s1999 = smul.addr %s1998, 4
          %s2000 = scalar_lea.vmem [#allocation4], %s1999
          %v2001 = vld [vmem:[%s2000] sm:$0xf]
          %v2002 = vld [vmem:[%s2000 + $0x4] sm:$0xf]
          %v2003 = vld [vmem:[%s2000 + $0x8] sm:$0xf]
          %v2004 = vld [vmem:[%s2000 + $0xc] sm:$0xf]
          %v2005 = vld [vmem:[%s2000 + $0x10] sm:$0xf]
          %v2006 = vld [vmem:[%s2000 + $0x14] sm:$0xf]
          %v2007 = vld [vmem:[%s2000 + $0x18] sm:$0xf]
          %v2008 = vld [vmem:[%s2000 + $0x1c] sm:$0xf]
          %v2009 = vld [vmem:[%s2000 + $0x20] sm:$0xf]
          %v2010 = vld [vmem:[%s2000 + $0x24] sm:$0xf]
          %v2011 = vld [vmem:[%s2000 + $0x28] sm:$0xf]
          %v2012 = vld [vmem:[%s2000 + $0x2c] sm:$0xf]
          %v2013 = vld [vmem:[%s2000 + $0x30] sm:$0xf]
          %v2014 = vld [vmem:[%s2000 + $0x34] sm:$0xf]
          %v2015 = vld [vmem:[%s2000 + $0x38] sm:$0xf]
          %v2016 = vld [vmem:[%s2000 + $0x3c] sm:$0xf]
          %v2018 = vshrl.u32 %v1988, 16
          %v2020 = vshll.u32 %v1988, 16
          %v2022 = vrot.slane %v2020, 1
          %v2023 = vor.u32 %v2018, %v2022
          %v2025 = vshll.u32 %v1989, 16
          %v2027 = vrot.slane %v2025, 1
          %v2028 = vsel %vm1750, %v2023, %v2027
          %v2029 = vshrl.u32 %v1989, 16
          %v2031 = vor.u32 %v2029, %v2027
          %v2033 = vshll.u32 %v1990, 16
          %v2035 = vrot.slane %v2033, 1
          %v2036 = vsel %vm1750, %v2031, %v2035
          %v2037 = vshrl.u32 %v1990, 16
          %v2039 = vor.u32 %v2037, %v2035
          %v2041 = vshll.u32 %v1991, 16
          %v2043 = vrot.slane %v2041, 1
          %v2044 = vsel %vm1750, %v2039, %v2043
          %v2045 = vshrl.u32 %v1991, 16
          %v2047 = vor.u32 %v2045, %v2043
          %v2049 = vshll.u32 %v1992, 16
          %v2051 = vrot.slane %v2049, 1
          %v2052 = vsel %vm1750, %v2047, %v2051
          %v2053 = vshrl.u32 %v1992, 16
          %v2055 = vor.u32 %v2053, %v2051
          %v2057 = vshll.u32 %v1993, 16
          %v2059 = vrot.slane %v2057, 1
          %v2060 = vsel %vm1750, %v2055, %v2059
          %v2061 = vshrl.u32 %v1993, 16
          %v2063 = vor.u32 %v2061, %v2059
          %v2065 = vshll.u32 %v1994, 16
          %v2067 = vrot.slane %v2065, 1
          %v2068 = vsel %vm1750, %v2063, %v2067
          %v2069 = vshrl.u32 %v1994, 16
          %v2071 = vor.u32 %v2069, %v2067
          %v2073 = vshll.u32 %v1995, 16
          %v2075 = vrot.slane %v2073, 1
          %v2076 = vsel %vm1750, %v2071, %v2075
          %v2077 = vshrl.u32 %v1995, 16
          %v2079 = vor.u32 %v2077, %v2075
          %v2081 = vshll.u32 %v1996, 16
          %v2083 = vrot.slane %v2081, 1
          %v2084 = vsel %vm1750, %v2079, %v2083
          %v2109 = vunpack.c.l.b16 %v2001
          %v2110 = vunpack.c.l.b16 %v2002
          %v2111 = vunpack.c.l.b16 %v2003
          %v2112 = vunpack.c.l.b16 %v2004
          %v2113 = vunpack.c.l.b16 %v2005
          %v2114 = vunpack.c.l.b16 %v2006
          %v2115 = vunpack.c.l.b16 %v2007
          %v2116 = vunpack.c.l.b16 %v2008
          %v2117 = vunpack.c.l.b16 %v2009
          %v2118 = vunpack.c.l.b16 %v2010
          %v2119 = vunpack.c.l.b16 %v2011
          %v2120 = vunpack.c.l.b16 %v2012
          %v2121 = vunpack.c.l.b16 %v2013
          %v2122 = vunpack.c.l.b16 %v2014
          %v2123 = vunpack.c.l.b16 %v2015
          %v2124 = vunpack.c.l.b16 %v2016
          %v2125 = vpack.c.b16 %v2110, %v2109
          %v2126 = vpack.c.b16 %v2112, %v2111
          %v2127 = vpack.c.b16 %v2114, %v2113
          %v2128 = vpack.c.b16 %v2116, %v2115
          %v2129 = vpack.c.b16 %v2118, %v2117
          %v2130 = vpack.c.b16 %v2120, %v2119
          %v2131 = vpack.c.b16 %v2122, %v2121
          %v2132 = vpack.c.b16 %v2124, %v2123
          %2141 = vmatprep.subr.bf16.mxu0 0
          %2142 = vmatpush1.bf16.msra.mxu0 %v2125
          %2143 = vmatprep.subr.bf16.mxu0 0
          %2144 = vmatpush1.bf16.msra.mxu0 %v2126
          %2145 = vmatprep.subr.bf16.mxu0 0
          %2146 = vmatpush1.bf16.msra.mxu0 %v2127
          %2147 = vmatprep.subr.bf16.mxu0 0
          %2148 = vmatpush1.bf16.msra.mxu0 %v2128
          %2149 = vmatprep.subr.bf16.mxu0 0
          %2150 = vmatpush1.bf16.msra.mxu0 %v2129
          %2151 = vmatprep.subr.bf16.mxu0 0
          %2152 = vmatpush1.bf16.msra.mxu0 %v2130
          %2153 = vmatprep.subr.bf16.mxu0 0
          %2154 = vmatpush1.bf16.msra.mxu0 %v2131
          %2155 = vmatprep.subr.bf16.mxu0 0
          %2156 = vmatpush1.bf16.msra.mxu0 %v2132
          %2157 = vmatprep.subr.bf16.mxu0 0
          %2158 = vmatpush1.bf16.msra.mxu0 0
          %2159 = vmatprep.subr.bf16.mxu0 0
          %2160 = vmatpush1.bf16.msra.mxu0 0
          %2161 = vmatprep.subr.bf16.mxu0 0
          %2162 = vmatpush1.bf16.msra.mxu0 0
          %2163 = vmatprep.subr.bf16.mxu0 0
          %2164 = vmatpush1.bf16.msra.mxu0 0
          %2165 = vmatprep.subr.bf16.mxu0 0
          %2166 = vmatpush1.bf16.msra.mxu0 0
          %2167 = vmatprep.subr.bf16.mxu0 0
          %2168 = vmatpush1.bf16.msra.mxu0 0
          %2169 = vmatprep.subr.bf16.mxu0 0
          %2170 = vmatpush1.bf16.msra.mxu0 0
          %2171 = vmatprep.subr.bf16.mxu0 0
          %2172 = vmatpush1.bf16.msra.mxu0 0
          %2173 = vmatprep.mubr.bf16.mxu0 0
          %2174 = vmatmul.mubr.bf16.gmra.mrb[0].mxu0 %v2028
          %v2175 = vpop.f32.mrb[0].mxu0
          %v2176 = vadd.f32 0.0, %v2175
          %v2177 = vpop.f32.mrb[0].mxu0
          %v2178 = vpop.f32.mrb[0].mxu0
          %v2179 = vadd.f32 0.0, %v2178
          %v2180 = vpop.f32.mrb[0].mxu0
          %2181 = vmatprep.mubr.bf16.mxu0 0
          %2182 = vmatmul.mubr.bf16.gmra.mrb[0].mxu0 %v2036
          %v2183 = vpop.f32.mrb[0].mxu0
          %v2184 = vadd.f32 0.0, %v2183
          %v2185 = vpop.f32.mrb[0].mxu0
          %v2186 = vpop.f32.mrb[0].mxu0
          %v2187 = vadd.f32 0.0, %v2186
          %v2188 = vpop.f32.mrb[0].mxu0
          %2189 = vmatprep.mubr.bf16.mxu0 0
          %2190 = vmatmul.mubr.bf16.gmra.mrb[0].mxu0 %v2044
          %v2191 = vpop.f32.mrb[0].mxu0
          %v2192 = vadd.f32 0.0, %v2191
          %v2193 = vpop.f32.mrb[0].mxu0
          %v2194 = vpop.f32.mrb[0].mxu0
          %v2195 = vadd.f32 0.0, %v2194
          %v2196 = vpop.f32.mrb[0].mxu0
          %2197 = vmatprep.mubr.bf16.mxu0 0
          %2198 = vmatmul.mubr.bf16.gmra.mrb[0].mxu0 %v2052
          %v2199 = vpop.f32.mrb[0].mxu0
          %v2200 = vadd.f32 0.0, %v2199
          %v2201 = vpop.f32.mrb[0].mxu0
          %v2202 = vpop.f32.mrb[0].mxu0
          %v2203 = vadd.f32 0.0, %v2202
          %v2204 = vpop.f32.mrb[0].mxu0
          %2205 = vmatprep.mubr.bf16.mxu0 0
          %2206 = vmatmul.mubr.bf16.gmra.mrb[0].mxu0 %v2060
          %v2207 = vpop.f32.mrb[0].mxu0
          %v2208 = vadd.f32 0.0, %v2207
          %v2209 = vpop.f32.mrb[0].mxu0
          %v2210 = vpop.f32.mrb[0].mxu0
          %v2211 = vadd.f32 0.0, %v2210
          %v2212 = vpop.f32.mrb[0].mxu0
          %2213 = vmatprep.mubr.bf16.mxu0 0
          %2214 = vmatmul.mubr.bf16.gmra.mrb[0].mxu0 %v2068
          %v2215 = vpop.f32.mrb[0].mxu0
          %v2216 = vadd.f32 0.0, %v2215
          %v2217 = vpop.f32.mrb[0].mxu0
          %v2218 = vpop.f32.mrb[0].mxu0
          %v2219 = vadd.f32 0.0, %v2218
          %v2220 = vpop.f32.mrb[0].mxu0
          %2221 = vmatprep.mubr.bf16.mxu0 0
          %2222 = vmatmul.mubr.bf16.gmra.mrb[0].mxu0 %v2076
          %v2223 = vpop.f32.mrb[0].mxu0
          %v2224 = vadd.f32 0.0, %v2223
          %v2225 = vpop.f32.mrb[0].mxu0
          %v2226 = vpop.f32.mrb[0].mxu0
          %v2227 = vadd.f32 0.0, %v2226
          %v2228 = vpop.f32.mrb[0].mxu0
          %2229 = vmatprep.mubr.bf16.mxu0 0
          %2230 = vmatmul.mubr.bf16.gmra.mrb[0].mxu0 %v2084
          %v2231 = vpop.f32.mrb[0].mxu0
          %v2232 = vadd.f32 0.0, %v2231
          %v2233 = vpop.f32.mrb[0].mxu0
          %v2234 = vpop.f32.mrb[0].mxu0
          %v2235 = vadd.f32 0.0, %v2234
          %v2236 = vpop.f32.mrb[0].mxu0
          %2237 = vdwg.mxu0
          %v2238 = vadd.f32 %v1972, %v2176
          %v2239 = vadd.f32 %v1973, %v2179
          %v2240 = vadd.f32 %v1974, %v2184
          %v2241 = vadd.f32 %v1975, %v2187
          %v2242 = vadd.f32 %v1976, %v2192
          %v2243 = vadd.f32 %v1977, %v2195
          %v2244 = vadd.f32 %v1978, %v2200
          %v2245 = vadd.f32 %v1979, %v2203
          %v2246 = vadd.f32 %v1980, %v2208
          %v2247 = vadd.f32 %v1981, %v2211
          %v2248 = vadd.f32 %v1982, %v2216
          %v2249 = vadd.f32 %v1983, %v2219
          %v2250 = vadd.f32 %v1984, %v2224
          %v2251 = vadd.f32 %v1985, %v2227
          %v2252 = vadd.f32 %v1986, %v2232
          %v2253 = vadd.f32 %v1987, %v2235
          %v2254 = vld [vmem:[%s585 + $0x18] sm:$0xfe]
          %s2255 = sadd.s32 %s595, 7
          %s2256 = smul.u32 %s2255, 16
          %s2257 = smul.addr %s2256, 4
          %s2258 = scalar_lea.vmem [#allocation4], %s2257
          %v2259 = vld [vmem:[%s2258] sm:$0xf]
          %v2260 = vld [vmem:[%s2258 + $0x4] sm:$0xf]
          %v2261 = vld [vmem:[%s2258 + $0x8] sm:$0xf]
          %v2262 = vld [vmem:[%s2258 + $0xc] sm:$0xf]
          %v2263 = vld [vmem:[%s2258 + $0x10] sm:$0xf]
          %v2264 = vld [vmem:[%s2258 + $0x14] sm:$0xf]
          %v2265 = vld [vmem:[%s2258 + $0x18] sm:$0xf]
          %v2266 = vld [vmem:[%s2258 + $0x1c] sm:$0xf]
          %v2267 = vld [vmem:[%s2258 + $0x20] sm:$0xf]
          %v2268 = vld [vmem:[%s2258 + $0x24] sm:$0xf]
          %v2269 = vld [vmem:[%s2258 + $0x28] sm:$0xf]
          %v2270 = vld [vmem:[%s2258 + $0x2c] sm:$0xf]
          %v2271 = vld [vmem:[%s2258 + $0x30] sm:$0xf]
          %v2272 = vld [vmem:[%s2258 + $0x34] sm:$0xf]
          %v2273 = vld [vmem:[%s2258 + $0x38] sm:$0xf]
          %v2274 = vld [vmem:[%s2258 + $0x3c] sm:$0xf]
          %vm2284 = vcmask 1046528
          %v2285 = vrot.slane %v2254, 1
          %v2286 = vrot.slane %v1989, 1
          %v2287 = vsel %vm2284, %v2285, %v2286
          %v2288 = vrot.slane %v1990, 1
          %v2289 = vsel %vm2284, %v2286, %v2288
          %v2290 = vrot.slane %v1991, 1
          %v2291 = vsel %vm2284, %v2288, %v2290
          %v2292 = vrot.slane %v1992, 1
          %v2293 = vsel %vm2284, %v2290, %v2292
          %v2294 = vrot.slane %v1993, 1
          %v2295 = vsel %vm2284, %v2292, %v2294
          %v2296 = vrot.slane %v1994, 1
          %v2297 = vsel %vm2284, %v2294, %v2296
          %v2298 = vrot.slane %v1995, 1
          %v2299 = vsel %vm2284, %v2296, %v2298
          %v2300 = vrot.slane %v1996, 1
          %v2301 = vsel %vm2284, %v2298, %v2300
          %v2326 = vunpack.c.l.b16 %v2259
          %v2327 = vunpack.c.l.b16 %v2260
          %v2328 = vunpack.c.l.b16 %v2261
          %v2329 = vunpack.c.l.b16 %v2262
          %v2330 = vunpack.c.l.b16 %v2263
          %v2331 = vunpack.c.l.b16 %v2264
          %v2332 = vunpack.c.l.b16 %v2265
          %v2333 = vunpack.c.l.b16 %v2266
          %v2334 = vunpack.c.l.b16 %v2267
          %v2335 = vunpack.c.l.b16 %v2268
          %v2336 = vunpack.c.l.b16 %v2269
          %v2337 = vunpack.c.l.b16 %v2270
          %v2338 = vunpack.c.l.b16 %v2271
          %v2339 = vunpack.c.l.b16 %v2272
          %v2340 = vunpack.c.l.b16 %v2273
          %v2341 = vunpack.c.l.b16 %v2274
          %v2342 = vpack.c.b16 %v2327, %v2326
          %v2343 = vpack.c.b16 %v2329, %v2328
          %v2344 = vpack.c.b16 %v2331, %v2330
          %v2345 = vpack.c.b16 %v2333, %v2332
          %v2346 = vpack.c.b16 %v2335, %v2334
          %v2347 = vpack.c.b16 %v2337, %v2336
          %v2348 = vpack.c.b16 %v2339, %v2338
          %v2349 = vpack.c.b16 %v2341, %v2340
          %2358 = vmatprep.subr.bf16.mxu0 0
          %2359 = vmatpush1.bf16.msra.mxu0 %v2342
          %2360 = vmatprep.subr.bf16.mxu0 0
          %2361 = vmatpush1.bf16.msra.mxu0 %v2343
          %2362 = vmatprep.subr.bf16.mxu0 0
          %2363 = vmatpush1.bf16.msra.mxu0 %v2344
          %2364 = vmatprep.subr.bf16.mxu0 0
          %2365 = vmatpush1.bf16.msra.mxu0 %v2345
          %2366 = vmatprep.subr.bf16.mxu0 0
          %2367 = vmatpush1.bf16.msra.mxu0 %v2346
          %2368 = vmatprep.subr.bf16.mxu0 0
          %2369 = vmatpush1.bf16.msra.mxu0 %v2347
          %2370 = vmatprep.subr.bf16.mxu0 0
          %2371 = vmatpush1.bf16.msra.mxu0 %v2348
          %2372 = vmatprep.subr.bf16.mxu0 0
          %2373 = vmatpush1.bf16.msra.mxu0 %v2349
          %2374 = vmatprep.subr.bf16.mxu0 0
          %2375 = vmatpush1.bf16.msra.mxu0 0
          %2376 = vmatprep.subr.bf16.mxu0 0
          %2377 = vmatpush1.bf16.msra.mxu0 0
          %2378 = vmatprep.subr.bf16.mxu0 0
          %2379 = vmatpush1.bf16.msra.mxu0 0
          %2380 = vmatprep.subr.bf16.mxu0 0
          %2381 = vmatpush1.bf16.msra.mxu0 0
          %2382 = vmatprep.subr.bf16.mxu0 0
          %2383 = vmatpush1.bf16.msra.mxu0 0
          %2384 = vmatprep.subr.bf16.mxu0 0
          %2385 = vmatpush1.bf16.msra.mxu0 0
          %2386 = vmatprep.subr.bf16.mxu0 0
          %2387 = vmatpush1.bf16.msra.mxu0 0
          %2388 = vmatprep.subr.bf16.mxu0 0
          %2389 = vmatpush1.bf16.msra.mxu0 0
          %2390 = vmatprep.mubr.bf16.mxu0 0
          %2391 = vmatmul.mubr.bf16.gmra.mrb[0].mxu0 %v2287
          %v2392 = vpop.f32.mrb[0].mxu0
          %v2393 = vadd.f32 0.0, %v2392
          %v2394 = vpop.f32.mrb[0].mxu0
          %v2395 = vpop.f32.mrb[0].mxu0
          %v2396 = vadd.f32 0.0, %v2395
          %v2397 = vpop.f32.mrb[0].mxu0
          %2398 = vmatprep.mubr.bf16.mxu0 0
          %2399 = vmatmul.mubr.bf16.gmra.mrb[0].mxu0 %v2289
          %v2400 = vpop.f32.mrb[0].mxu0
          %v2401 = vadd.f32 0.0, %v2400
          %v2402 = vpop.f32.mrb[0].mxu0
          %v2403 = vpop.f32.mrb[0].mxu0
          %v2404 = vadd.f32 0.0, %v2403
          %v2405 = vpop.f32.mrb[0].mxu0
          %2406 = vmatprep.mubr.bf16.mxu0 0
          %2407 = vmatmul.mubr.bf16.gmra.mrb[0].mxu0 %v2291
          %v2408 = vpop.f32.mrb[0].mxu0
          %v2409 = vadd.f32 0.0, %v2408
          %v2410 = vpop.f32.mrb[0].mxu0
          %v2411 = vpop.f32.mrb[0].mxu0
          %v2412 = vadd.f32 0.0, %v2411
          %v2413 = vpop.f32.mrb[0].mxu0
          %2414 = vmatprep.mubr.bf16.mxu0 0
          %2415 = vmatmul.mubr.bf16.gmra.mrb[0].mxu0 %v2293
          %v2416 = vpop.f32.mrb[0].mxu0
          %v2417 = vadd.f32 0.0, %v2416
          %v2418 = vpop.f32.mrb[0].mxu0
          %v2419 = vpop.f32.mrb[0].mxu0
          %v2420 = vadd.f32 0.0, %v2419
          %v2421 = vpop.f32.mrb[0].mxu0
          %2422 = vmatprep.mubr.bf16.mxu0 0
          %2423 = vmatmul.mubr.bf16.gmra.mrb[0].mxu0 %v2295
          %v2424 = vpop.f32.mrb[0].mxu0
          %v2425 = vadd.f32 0.0, %v2424
          %v2426 = vpop.f32.mrb[0].mxu0
          %v2427 = vpop.f32.mrb[0].mxu0
          %v2428 = vadd.f32 0.0, %v2427
          %v2429 = vpop.f32.mrb[0].mxu0
          %2430 = vmatprep.mubr.bf16.mxu0 0
          %2431 = vmatmul.mubr.bf16.gmra.mrb[0].mxu0 %v2297
          %v2432 = vpop.f32.mrb[0].mxu0
          %v2433 = vadd.f32 0.0, %v2432
          %v2434 = vpop.f32.mrb[0].mxu0
          %v2435 = vpop.f32.mrb[0].mxu0
          %v2436 = vadd.f32 0.0, %v2435
          %v2437 = vpop.f32.mrb[0].mxu0
          %2438 = vmatprep.mubr.bf16.mxu0 0
          %2439 = vmatmul.mubr.bf16.gmra.mrb[0].mxu0 %v2299
          %v2440 = vpop.f32.mrb[0].mxu0
          %v2441 = vadd.f32 0.0, %v2440
          %v2442 = vpop.f32.mrb[0].mxu0
          %v2443 = vpop.f32.mrb[0].mxu0
          %v2444 = vadd.f32 0.0, %v2443
          %v2445 = vpop.f32.mrb[0].mxu0
          %2446 = vmatprep.mubr.bf16.mxu0 0
          %2447 = vmatmul.mubr.bf16.gmra.mrb[0].mxu0 %v2301
          %v2448 = vpop.f32.mrb[0].mxu0
          %v2449 = vadd.f32 0.0, %v2448
          %v2450 = vpop.f32.mrb[0].mxu0
          %v2451 = vpop.f32.mrb[0].mxu0
          %v2452 = vadd.f32 0.0, %v2451
          %v2453 = vpop.f32.mrb[0].mxu0
          %2454 = vdwg.mxu0
          %v2455 = vadd.f32 %v2238, %v2393
          %v2456 = vadd.f32 %v2239, %v2396
          %v2457 = vadd.f32 %v2240, %v2401
          %v2458 = vadd.f32 %v2241, %v2404
          %v2459 = vadd.f32 %v2242, %v2409
          %v2460 = vadd.f32 %v2243, %v2412
          %v2461 = vadd.f32 %v2244, %v2417
          %v2462 = vadd.f32 %v2245, %v2420
          %v2463 = vadd.f32 %v2246, %v2425
          %v2464 = vadd.f32 %v2247, %v2428
          %v2465 = vadd.f32 %v2248, %v2433
          %v2466 = vadd.f32 %v2249, %v2436
          %v2467 = vadd.f32 %v2250, %v2441
          %v2468 = vadd.f32 %v2251, %v2444
          %v2469 = vadd.f32 %v2252, %v2449
          %v2470 = vadd.f32 %v2253, %v2452
          %v2471 = vld [vmem:[%s585 + $0x58] sm:$0x3]
          %s2472 = sadd.s32 %s595, 8
          %s2473 = smul.u32 %s2472, 16
          %s2474 = smul.addr %s2473, 4
          %s2475 = scalar_lea.vmem [#allocation4], %s2474
          %v2476 = vld [vmem:[%s2475] sm:$0xf]
          %v2477 = vld [vmem:[%s2475 + $0x4] sm:$0xf]
          %v2478 = vld [vmem:[%s2475 + $0x8] sm:$0xf]
          %v2479 = vld [vmem:[%s2475 + $0xc] sm:$0xf]
          %v2480 = vld [vmem:[%s2475 + $0x10] sm:$0xf]
          %v2481 = vld [vmem:[%s2475 + $0x14] sm:$0xf]
          %v2482 = vld [vmem:[%s2475 + $0x18] sm:$0xf]
          %v2483 = vld [vmem:[%s2475 + $0x1c] sm:$0xf]
          %v2484 = vld [vmem:[%s2475 + $0x20] sm:$0xf]
          %v2485 = vld [vmem:[%s2475 + $0x24] sm:$0xf]
          %v2486 = vld [vmem:[%s2475 + $0x28] sm:$0xf]
          %v2487 = vld [vmem:[%s2475 + $0x2c] sm:$0xf]
          %v2488 = vld [vmem:[%s2475 + $0x30] sm:$0xf]
          %v2489 = vld [vmem:[%s2475 + $0x34] sm:$0xf]
          %v2490 = vld [vmem:[%s2475 + $0x38] sm:$0xf]
          %v2491 = vld [vmem:[%s2475 + $0x3c] sm:$0xf]
          %vm2492 = vsmask.f32 6400
          %v2494 = vshrl.u32 %v2254, 16
          %v2496 = vrot.slane %v2494, 1
          %v2497 = vshll.u32 %v2254, 16
          %v2499 = vrot.slane %v2497, 2
          %v2500 = vor.u32 %v2496, %v2499
          %v2501 = vrot.slane %v2029, 1
          %v2502 = vrot.slane %v2025, 2
          %v2503 = vor.u32 %v2501, %v2502
          %v2504 = vsel %vm2492, %v2500, %v2503
          %v2505 = vrot.slane %v2037, 1
          %v2506 = vrot.slane %v2033, 2
          %v2507 = vor.u32 %v2505, %v2506
          %v2508 = vsel %vm2492, %v2503, %v2507
          %v2509 = vrot.slane %v2045, 1
          %v2510 = vrot.slane %v2041, 2
          %v2511 = vor.u32 %v2509, %v2510
          %v2512 = vsel %vm2492, %v2507, %v2511
          %v2513 = vrot.slane %v2053, 1
          %v2514 = vrot.slane %v2049, 2
          %v2515 = vor.u32 %v2513, %v2514
          %v2516 = vsel %vm2492, %v2511, %v2515
          %v2517 = vrot.slane %v2061, 1
          %v2518 = vrot.slane %v2057, 2
          %v2519 = vor.u32 %v2517, %v2518
          %v2520 = vsel %vm2492, %v2515, %v2519
          %v2521 = vrot.slane %v2069, 1
          %v2522 = vrot.slane %v2065, 2
          %v2523 = vor.u32 %v2521, %v2522
          %v2524 = vsel %vm2492, %v2519, %v2523
          %v2525 = vrot.slane %v2077, 1
          %v2526 = vrot.slane %v2073, 2
          %v2527 = vor.u32 %v2525, %v2526
          %v2528 = vsel %vm2492, %v2523, %v2527
          %v2530 = vshrl.u32 %v2471, 16
          %v2532 = vrot.slane %v2530, 1
          %v2533 = vshll.u32 %v2471, 16
          %v2535 = vrot.slane %v2533, 2
          %v2536 = vor.u32 %v2532, %v2535
          %v2537 = vsel %vm2492, %v2527, %v2536
          %v2562 = vunpack.c.l.b16 %v2476
          %v2563 = vunpack.c.l.b16 %v2477
          %v2564 = vunpack.c.l.b16 %v2478
          %v2565 = vunpack.c.l.b16 %v2479
          %v2566 = vunpack.c.l.b16 %v2480
          %v2567 = vunpack.c.l.b16 %v2481
          %v2568 = vunpack.c.l.b16 %v2482
          %v2569 = vunpack.c.l.b16 %v2483
          %v2570 = vunpack.c.l.b16 %v2484
          %v2571 = vunpack.c.l.b16 %v2485
          %v2572 = vunpack.c.l.b16 %v2486
          %v2573 = vunpack.c.l.b16 %v2487
          %v2574 = vunpack.c.l.b16 %v2488
          %v2575 = vunpack.c.l.b16 %v2489
          %v2576 = vunpack.c.l.b16 %v2490
          %v2577 = vunpack.c.l.b16 %v2491
          %v2578 = vpack.c.b16 %v2563, %v2562
          %v2579 = vpack.c.b16 %v2565, %v2564
          %v2580 = vpack.c.b16 %v2567, %v2566
          %v2581 = vpack.c.b16 %v2569, %v2568
          %v2582 = vpack.c.b16 %v2571, %v2570
          %v2583 = vpack.c.b16 %v2573, %v2572
          %v2584 = vpack.c.b16 %v2575, %v2574
          %v2585 = vpack.c.b16 %v2577, %v2576
          %2594 = vmatprep.subr.bf16.mxu0 0
          %2595 = vmatpush1.bf16.msra.mxu0 %v2578
          %2596 = vmatprep.subr.bf16.mxu0 0
          %2597 = vmatpush1.bf16.msra.mxu0 %v2579
          %2598 = vmatprep.subr.bf16.mxu0 0
          %2599 = vmatpush1.bf16.msra.mxu0 %v2580
          %2600 = vmatprep.subr.bf16.mxu0 0
          %2601 = vmatpush1.bf16.msra.mxu0 %v2581
          %2602 = vmatprep.subr.bf16.mxu0 0
          %2603 = vmatpush1.bf16.msra.mxu0 %v2582
          %2604 = vmatprep.subr.bf16.mxu0 0
          %2605 = vmatpush1.bf16.msra.mxu0 %v2583
          %2606 = vmatprep.subr.bf16.mxu0 0
          %2607 = vmatpush1.bf16.msra.mxu0 %v2584
          %2608 = vmatprep.subr.bf16.mxu0 0
          %2609 = vmatpush1.bf16.msra.mxu0 %v2585
          %2610 = vmatprep.subr.bf16.mxu0 0
          %2611 = vmatpush1.bf16.msra.mxu0 0
          %2612 = vmatprep.subr.bf16.mxu0 0
          %2613 = vmatpush1.bf16.msra.mxu0 0
          %2614 = vmatprep.subr.bf16.mxu0 0
          %2615 = vmatpush1.bf16.msra.mxu0 0
          %2616 = vmatprep.subr.bf16.mxu0 0
          %2617 = vmatpush1.bf16.msra.mxu0 0
          %2618 = vmatprep.subr.bf16.mxu0 0
          %2619 = vmatpush1.bf16.msra.mxu0 0
          %2620 = vmatprep.subr.bf16.mxu0 0
          %2621 = vmatpush1.bf16.msra.mxu0 0
          %2622 = vmatprep.subr.bf16.mxu0 0
          %2623 = vmatpush1.bf16.msra.mxu0 0
          %2624 = vmatprep.subr.bf16.mxu0 0
          %2625 = vmatpush1.bf16.msra.mxu0 0
          %2626 = vmatprep.mubr.bf16.mxu0 0
          %2627 = vmatmul.mubr.bf16.gmra.mrb[0].mxu0 %v2504
          %v2628 = vpop.f32.mrb[0].mxu0
          %v2629 = vadd.f32 0.0, %v2628
          %v2630 = vpop.f32.mrb[0].mxu0
          %v2631 = vpop.f32.mrb[0].mxu0
          %v2632 = vadd.f32 0.0, %v2631
          %v2633 = vpop.f32.mrb[0].mxu0
          %2634 = vmatprep.mubr.bf16.mxu0 0
          %2635 = vmatmul.mubr.bf16.gmra.mrb[0].mxu0 %v2508
          %v2636 = vpop.f32.mrb[0].mxu0
          %v2637 = vadd.f32 0.0, %v2636
          %v2638 = vpop.f32.mrb[0].mxu0
          %v2639 = vpop.f32.mrb[0].mxu0
          %v2640 = vadd.f32 0.0, %v2639
          %v2641 = vpop.f32.mrb[0].mxu0
          %2642 = vmatprep.mubr.bf16.mxu0 0
          %2643 = vmatmul.mubr.bf16.gmra.mrb[0].mxu0 %v2512
          %v2644 = vpop.f32.mrb[0].mxu0
          %v2645 = vadd.f32 0.0, %v2644
          %v2646 = vpop.f32.mrb[0].mxu0
          %v2647 = vpop.f32.mrb[0].mxu0
          %v2648 = vadd.f32 0.0, %v2647
          %v2649 = vpop.f32.mrb[0].mxu0
          %2650 = vmatprep.mubr.bf16.mxu0 0
          %2651 = vmatmul.mubr.bf16.gmra.mrb[0].mxu0 %v2516
          %v2652 = vpop.f32.mrb[0].mxu0
          %v2653 = vadd.f32 0.0, %v2652
          %v2654 = vpop.f32.mrb[0].mxu0
          %v2655 = vpop.f32.mrb[0].mxu0
          %v2656 = vadd.f32 0.0, %v2655
          %v2657 = vpop.f32.mrb[0].mxu0
          %2658 = vmatprep.mubr.bf16.mxu0 0
          %2659 = vmatmul.mubr.bf16.gmra.mrb[0].mxu0 %v2520
          %v2660 = vpop.f32.mrb[0].mxu0
          %v2661 = vadd.f32 0.0, %v2660
          %v2662 = vpop.f32.mrb[0].mxu0
          %v2663 = vpop.f32.mrb[0].mxu0
          %v2664 = vadd.f32 0.0, %v2663
          %v2665 = vpop.f32.mrb[0].mxu0
          %2666 = vmatprep.mubr.bf16.mxu0 0
          %2667 = vmatmul.mubr.bf16.gmra.mrb[0].mxu0 %v2524
          %v2668 = vpop.f32.mrb[0].mxu0
          %v2669 = vadd.f32 0.0, %v2668
          %v2670 = vpop.f32.mrb[0].mxu0
          %v2671 = vpop.f32.mrb[0].mxu0
          %v2672 = vadd.f32 0.0, %v2671
          %v2673 = vpop.f32.mrb[0].mxu0
          %2674 = vmatprep.mubr.bf16.mxu0 0
          %2675 = vmatmul.mubr.bf16.gmra.mrb[0].mxu0 %v2528
          %v2676 = vpop.f32.mrb[0].mxu0
          %v2677 = vadd.f32 0.0, %v2676
          %v2678 = vpop.f32.mrb[0].mxu0
          %v2679 = vpop.f32.mrb[0].mxu0
          %v2680 = vadd.f32 0.0, %v2679
          %v2681 = vpop.f32.mrb[0].mxu0
          %2682 = vmatprep.mubr.bf16.mxu0 0
          %2683 = vmatmul.mubr.bf16.gmra.mrb[0].mxu0 %v2537
          %v2684 = vpop.f32.mrb[0].mxu0
          %v2685 = vadd.f32 0.0, %v2684
          %v2686 = vpop.f32.mrb[0].mxu0
          %v2687 = vpop.f32.mrb[0].mxu0
          %v2688 = vadd.f32 0.0, %v2687
          %v2689 = vpop.f32.mrb[0].mxu0
          %2690 = vdwg.mxu0
          %v2691 = vadd.f32 %v2455, %v2629
          %v2692 = vadd.f32 %v2456, %v2632
          %v2693 = vadd.f32 %v2457, %v2637
          %v2694 = vadd.f32 %v2458, %v2640
          %v2695 = vadd.f32 %v2459, %v2645
          %v2696 = vadd.f32 %v2460, %v2648
          %v2697 = vadd.f32 %v2461, %v2653
          %v2698 = vadd.f32 %v2462, %v2656
          %v2699 = vadd.f32 %v2463, %v2661
          %v2700 = vadd.f32 %v2464, %v2664
          %v2701 = vadd.f32 %v2465, %v2669
          %v2702 = vadd.f32 %v2466, %v2672
          %v2703 = vadd.f32 %v2467, %v2677
          %v2704 = vadd.f32 %v2468, %v2680
          %v2705 = vadd.f32 %v2469, %v2685
          %v2706 = vadd.f32 %v2470, %v2688
          %v2708 = vlaneseq
          %v2709 = vshrl.u32 %v2708, 7
          %v2710 = vsub.s32 0, %v2709
          %v2711 = vrot.slane %v580, %v2710
          %v2713 = vmul.f32 %v2691, %v2711
          %v2714 = vmul.f32 %v2692, %v2711
          %v2715 = vmul.f32 %v2693, %v2711
          %v2716 = vmul.f32 %v2694, %v2711
          %v2717 = vmul.f32 %v2695, %v2711
          %v2718 = vmul.f32 %v2696, %v2711
          %v2719 = vmul.f32 %v2697, %v2711
          %v2720 = vmul.f32 %v2698, %v2711
          %v2721 = vmul.f32 %v2699, %v2711
          %v2722 = vmul.f32 %v2700, %v2711
          %v2723 = vmul.f32 %v2701, %v2711
          %v2724 = vmul.f32 %v2702, %v2711
          %v2725 = vmul.f32 %v2703, %v2711
          %v2726 = vmul.f32 %v2704, %v2711
          %v2727 = vmul.f32 %v2705, %v2711
          %v2728 = vmul.f32 %v2706, %v2711
          %v2730 = vlaneseq
          %v2731 = vshrl.u32 %v2730, 7
          %v2732 = vsub.s32 0, %v2731
          %v2733 = vrot.slane %v582, %v2732
          %v2735 = vadd.f32 %v2713, %v2733
          %v2736 = vadd.f32 %v2714, %v2733
          %v2737 = vadd.f32 %v2715, %v2733
          %v2738 = vadd.f32 %v2716, %v2733
          %v2739 = vadd.f32 %v2717, %v2733
          %v2740 = vadd.f32 %v2718, %v2733
          %v2741 = vadd.f32 %v2719, %v2733
          %v2742 = vadd.f32 %v2720, %v2733
          %v2743 = vadd.f32 %v2721, %v2733
          %v2744 = vadd.f32 %v2722, %v2733
          %v2745 = vadd.f32 %v2723, %v2733
          %v2746 = vadd.f32 %v2724, %v2733
          %v2747 = vadd.f32 %v2725, %v2733
          %v2748 = vadd.f32 %v2726, %v2733
          %v2749 = vadd.f32 %v2727, %v2733
          %v2750 = vadd.f32 %v2728, %v2733
          %v2751 = vld [vmem:[#allocation3] sm:$0xff]
          %v2752 = vld [vmem:[#allocation3 + $0x8] sm:$0xff]
          %v2753 = vld [vmem:[#allocation3 + $0x10] sm:$0xff]
          %v2754 = vld [vmem:[#allocation3 + $0x18] sm:$0xff]
          %v2755 = vld [vmem:[#allocation3 + $0x20] sm:$0xff]
          %v2756 = vld [vmem:[#allocation3 + $0x28] sm:$0xff]
          %v2757 = vld [vmem:[#allocation3 + $0x30] sm:$0xff]
          %v2758 = vld [vmem:[#allocation3 + $0x38] sm:$0xff]
          %v2759 = vld [vmem:[#allocation3 + $0x40] sm:$0xff]
          %v2760 = vld [vmem:[#allocation3 + $0x48] sm:$0xff]
          %v2761 = vld [vmem:[#allocation3 + $0x50] sm:$0xff]
          %v2762 = vld [vmem:[#allocation3 + $0x58] sm:$0xff]
          %v2763 = vld [vmem:[#allocation3 + $0x60] sm:$0xff]
          %v2764 = vld [vmem:[#allocation3 + $0x68] sm:$0xff]
          %v2765 = vld [vmem:[#allocation3 + $0x70] sm:$0xff]
          %v2766 = vld [vmem:[#allocation3 + $0x78] sm:$0xff]
          %s2767 = scalar_select %p572, 1, 0
          %v2768 = vstv %s2767
          %vm2769 = vcmp.eq.s32.totalorder %v2768, 1
          %v2770 = vsel %vm2769, %v2751, 0.0
          %v2771 = vsel %vm2769, %v2752, 0.0
          %v2772 = vsel %vm2769, %v2753, 0.0
          %v2773 = vsel %vm2769, %v2754, 0.0
          %v2774 = vsel %vm2769, %v2755, 0.0
          %v2775 = vsel %vm2769, %v2756, 0.0
          %v2776 = vsel %vm2769, %v2757, 0.0
          %v2777 = vsel %vm2769, %v2758, 0.0
          %v2778 = vsel %vm2769, %v2759, 0.0
          %v2779 = vsel %vm2769, %v2760, 0.0
          %v2780 = vsel %vm2769, %v2761, 0.0
          %v2781 = vsel %vm2769, %v2762, 0.0
          %v2782 = vsel %vm2769, %v2763, 0.0
          %v2783 = vsel %vm2769, %v2764, 0.0
          %v2784 = vsel %vm2769, %v2765, 0.0
          %v2785 = vsel %vm2769, %v2766, 0.0
          %v2786 = vadd.f32 %v2735, %v2770
          %v2787 = vadd.f32 %v2736, %v2771
          %v2788 = vadd.f32 %v2737, %v2772
          %v2789 = vadd.f32 %v2738, %v2773
          %v2790 = vadd.f32 %v2739, %v2774
          %v2791 = vadd.f32 %v2740, %v2775
          %v2792 = vadd.f32 %v2741, %v2776
          %v2793 = vadd.f32 %v2742, %v2777
          %v2794 = vadd.f32 %v2743, %v2778
          %v2795 = vadd.f32 %v2744, %v2779
          %v2796 = vadd.f32 %v2745, %v2780
          %v2797 = vadd.f32 %v2746, %v2781
          %v2798 = vadd.f32 %v2747, %v2782
          %v2799 = vadd.f32 %v2748, %v2783
          %v2800 = vadd.f32 %v2749, %v2784
          %v2801 = vadd.f32 %v2750, %v2785
          %v2802 = vstv %s578
          %v2803 = vmax.f32 %v2786, %v2802
          %v2804 = vmax.f32 %v2787, %v2802
          %v2805 = vmax.f32 %v2788, %v2802
          %v2806 = vmax.f32 %v2789, %v2802
          %v2807 = vmax.f32 %v2790, %v2802
          %v2808 = vmax.f32 %v2791, %v2802
          %v2809 = vmax.f32 %v2792, %v2802
          %v2810 = vmax.f32 %v2793, %v2802
          %v2811 = vmax.f32 %v2794, %v2802
          %v2812 = vmax.f32 %v2795, %v2802
          %v2813 = vmax.f32 %v2796, %v2802
          %v2814 = vmax.f32 %v2797, %v2802
          %v2815 = vmax.f32 %v2798, %v2802
          %v2816 = vmax.f32 %v2799, %v2802
          %v2817 = vmax.f32 %v2800, %v2802
          %v2818 = vmax.f32 %v2801, %v2802
          %v2819 = vld [vmem:[%s1] sm:$0xf]
          %v2820 = vld [vmem:[%s1 + $0x4] sm:$0xf]
          %v2821 = vld [vmem:[%s1 + $0x8] sm:$0xf]
          %v2822 = vld [vmem:[%s1 + $0xc] sm:$0xf]
          %v2823 = vld [vmem:[%s1 + $0x10] sm:$0xf]
          %v2824 = vld [vmem:[%s1 + $0x14] sm:$0xf]
          %v2825 = vld [vmem:[%s1 + $0x18] sm:$0xf]
          %v2826 = vld [vmem:[%s1 + $0x1c] sm:$0xf]
          %v2827 = vld [vmem:[%s1 + $0x20] sm:$0xf]
          %v2828 = vld [vmem:[%s1 + $0x24] sm:$0xf]
          %v2829 = vld [vmem:[%s1 + $0x28] sm:$0xf]
          %v2830 = vld [vmem:[%s1 + $0x2c] sm:$0xf]
          %v2831 = vld [vmem:[%s1 + $0x30] sm:$0xf]
          %v2832 = vld [vmem:[%s1 + $0x34] sm:$0xf]
          %v2833 = vld [vmem:[%s1 + $0x38] sm:$0xf]
          %v2834 = vld [vmem:[%s1 + $0x3c] sm:$0xf]
          %vm2835 = vcmp.gt.bf16.partialorder %v2819, 0
          %vm2836 = vcmp.gt.bf16.partialorder %v2820, 0
          %vm2837 = vcmp.gt.bf16.partialorder %v2821, 0
          %vm2838 = vcmp.gt.bf16.partialorder %v2822, 0
          %vm2839 = vcmp.gt.bf16.partialorder %v2823, 0
          %vm2840 = vcmp.gt.bf16.partialorder %v2824, 0
          %vm2841 = vcmp.gt.bf16.partialorder %v2825, 0
          %vm2842 = vcmp.gt.bf16.partialorder %v2826, 0
          %vm2843 = vcmp.gt.bf16.partialorder %v2827, 0
          %vm2844 = vcmp.gt.bf16.partialorder %v2828, 0
          %vm2845 = vcmp.gt.bf16.partialorder %v2829, 0
          %vm2846 = vcmp.gt.bf16.partialorder %v2830, 0
          %vm2847 = vcmp.gt.bf16.partialorder %v2831, 0
          %vm2848 = vcmp.gt.bf16.partialorder %v2832, 0
          %vm2849 = vcmp.gt.bf16.partialorder %v2833, 0
          %vm2850 = vcmp.gt.bf16.partialorder %v2834, 0
          %v2851 = vpack.c.bf16 %v2804, %v2803
          %v2852 = vpack.c.bf16 %v2806, %v2805
          %v2853 = vpack.c.bf16 %v2808, %v2807
          %v2854 = vpack.c.bf16 %v2810, %v2809
          %v2855 = vpack.c.bf16 %v2812, %v2811
          %v2856 = vpack.c.bf16 %v2814, %v2813
          %v2857 = vpack.c.bf16 %v2816, %v2815
          %v2858 = vpack.c.bf16 %v2818, %v2817
          %v2867 = vunpack.c.l.b16 %v2851
          %v2868 = vunpack.c.h.b16 %v2851
          %v2869 = vunpack.c.l.b16 %v2852
          %v2870 = vunpack.c.h.b16 %v2852
          %v2871 = vunpack.c.l.b16 %v2853
          %v2872 = vunpack.c.h.b16 %v2853
          %v2873 = vunpack.c.l.b16 %v2854
          %v2874 = vunpack.c.h.b16 %v2854
          %v2875 = vunpack.c.l.b16 %v2855
          %v2876 = vunpack.c.h.b16 %v2855
          %v2877 = vunpack.c.l.b16 %v2856
          %v2878 = vunpack.c.h.b16 %v2856
          %v2879 = vunpack.c.l.b16 %v2857
          %v2880 = vunpack.c.h.b16 %v2857
          %v2881 = vunpack.c.l.b16 %v2858
          %v2882 = vunpack.c.h.b16 %v2858
          %v2883 = vpack.c.b16 %v2867, %v2867
          %v2884 = vpack.c.b16 %v2868, %v2868
          %v2885 = vpack.c.b16 %v2869, %v2869
          %v2886 = vpack.c.b16 %v2870, %v2870
          %v2887 = vpack.c.b16 %v2871, %v2871
          %v2888 = vpack.c.b16 %v2872, %v2872
          %v2889 = vpack.c.b16 %v2873, %v2873
          %v2890 = vpack.c.b16 %v2874, %v2874
          %v2891 = vpack.c.b16 %v2875, %v2875
          %v2892 = vpack.c.b16 %v2876, %v2876
          %v2893 = vpack.c.b16 %v2877, %v2877
          %v2894 = vpack.c.b16 %v2878, %v2878
          %v2895 = vpack.c.b16 %v2879, %v2879
          %v2896 = vpack.c.b16 %v2880, %v2880
          %v2897 = vpack.c.b16 %v2881, %v2881
          %v2898 = vpack.c.b16 %v2882, %v2882
          %v2915 = vsel %vm2835, %v2883, 0
          %v2916 = vsel %vm2836, %v2884, 0
          %v2917 = vsel %vm2837, %v2885, 0
          %v2918 = vsel %vm2838, %v2886, 0
          %v2919 = vsel %vm2839, %v2887, 0
          %v2920 = vsel %vm2840, %v2888, 0
          %v2921 = vsel %vm2841, %v2889, 0
          %v2922 = vsel %vm2842, %v2890, 0
          %v2923 = vsel %vm2843, %v2891, 0
          %v2924 = vsel %vm2844, %v2892, 0
          %v2925 = vsel %vm2845, %v2893, 0
          %v2926 = vsel %vm2846, %v2894, 0
          %v2927 = vsel %vm2847, %v2895, 0
          %v2928 = vsel %vm2848, %v2896, 0
          %v2929 = vsel %vm2849, %v2897, 0
          %v2930 = vsel %vm2850, %v2898, 0
          %v2947 = vunpack.c.l.b16 %v2915
          %v2948 = vunpack.c.l.b16 %v2916
          %v2949 = vunpack.c.l.b16 %v2917
          %v2950 = vunpack.c.l.b16 %v2918
          %v2951 = vunpack.c.l.b16 %v2919
          %v2952 = vunpack.c.l.b16 %v2920
          %v2953 = vunpack.c.l.b16 %v2921
          %v2954 = vunpack.c.l.b16 %v2922
          %v2955 = vunpack.c.l.b16 %v2923
          %v2956 = vunpack.c.l.b16 %v2924
          %v2957 = vunpack.c.l.b16 %v2925
          %v2958 = vunpack.c.l.b16 %v2926
          %v2959 = vunpack.c.l.b16 %v2927
          %v2960 = vunpack.c.l.b16 %v2928
          %v2961 = vunpack.c.l.b16 %v2929
          %v2962 = vunpack.c.l.b16 %v2930
          %v2963 = vpack.c.b16 %v2948, %v2947
          %v2964 = vpack.c.b16 %v2950, %v2949
          %v2965 = vpack.c.b16 %v2952, %v2951
          %v2966 = vpack.c.b16 %v2954, %v2953
          %v2967 = vpack.c.b16 %v2956, %v2955
          %v2968 = vpack.c.b16 %v2958, %v2957
          %v2969 = vpack.c.b16 %v2960, %v2959
          %v2970 = vpack.c.b16 %v2962, %v2961
          %s2979 = smul.u32 %s561, 28
          %s2980 = smul.addr %s2979, 8
          %s2981 = scalar_lea.vmem [#allocation2], %s2980
          %2982 = vst [vmem:[%s2981 + $0x10] sm:$0xff] %v2963
          %2983 = vst [vmem:[%s2981 + $0x18] sm:$0xff] %v2964
          %2984 = vst [vmem:[%s2981 + $0x20] sm:$0xff] %v2965
          %2985 = vst [vmem:[%s2981 + $0x28] sm:$0xff] %v2966
          %2986 = vst [vmem:[%s2981 + $0x30] sm:$0xff] %v2967
          %2987 = vst [vmem:[%s2981 + $0x38] sm:$0xff] %v2968
          %2988 = vst [vmem:[%s2981 + $0x40] sm:$0xff] %v2969
          %2989 = vst [vmem:[%s2981 + $0x48] sm:$0xff] %v2970
          // Predicated region
          $region60: #{noise_resnet.1} parent=56 // pred_check
            _
          $region61: #{noise_resnet.1} parent=56 // pred_check_branch
            %2991 = sbr.rel (%p576) target = $region63
          $region62: #{noise_resnet.1} parent=56 // pred_region
            %2992 = vst [vmem:[#allocation3] sm:$0xff] %v2803
            %2993 = vst [vmem:[#allocation3 + $0x8] sm:$0xff] %v2804
            %2994 = vst [vmem:[#allocation3 + $0x10] sm:$0xff] %v2805
            %2995 = vst [vmem:[#allocation3 + $0x18] sm:$0xff] %v2806
            %2996 = vst [vmem:[#allocation3 + $0x20] sm:$0xff] %v2807
            %2997 = vst [vmem:[#allocation3 + $0x28] sm:$0xff] %v2808
            %2998 = vst [vmem:[#allocation3 + $0x30] sm:$0xff] %v2809
            %2999 = vst [vmem:[#allocation3 + $0x38] sm:$0xff] %v2810
            %3000 = vst [vmem:[#allocation3 + $0x40] sm:$0xff] %v2811
            %3001 = vst [vmem:[#allocation3 + $0x48] sm:$0xff] %v2812
            %3002 = vst [vmem:[#allocation3 + $0x50] sm:$0xff] %v2813
            %3003 = vst [vmem:[#allocation3 + $0x58] sm:$0xff] %v2814
            %3004 = vst [vmem:[#allocation3 + $0x60] sm:$0xff] %v2815
            %3005 = vst [vmem:[#allocation3 + $0x68] sm:$0xff] %v2816
            %3006 = vst [vmem:[#allocation3 + $0x70] sm:$0xff] %v2817
            %3007 = vst [vmem:[#allocation3 + $0x78] sm:$0xff] %v2818
          $region63: #{noise_resnet.1} parent=56 // pred_fallthru
            _
          %p3008 = scmp.eq.s32.totalorder %s544, 15
          // Predicated region
          $region64: #{noise_resnet.1} parent=56 // pred_check
            %p3009 = pneg %p3008
          $region65: #{noise_resnet.1} parent=56 // pred_check_branch
            %3011 = sbr.rel (%p3009) target = $region67
          $region66: #{noise_resnet.1} parent=56 // pred_region
            %3012 = vst [vmem:[%s268] sm:$0xff] %v2803
            %3013 = vst [vmem:[%s268 + $0x8] sm:$0xff] %v2804
            %3014 = vst [vmem:[%s268 + $0x10] sm:$0xff] %v2805
            %3015 = vst [vmem:[%s268 + $0x18] sm:$0xff] %v2806
            %3016 = vst [vmem:[%s268 + $0x20] sm:$0xff] %v2807
            %3017 = vst [vmem:[%s268 + $0x28] sm:$0xff] %v2808
            %3018 = vst [vmem:[%s268 + $0x30] sm:$0xff] %v2809
            %3019 = vst [vmem:[%s268 + $0x38] sm:$0xff] %v2810
            %3020 = vst [vmem:[%s268 + $0x40] sm:$0xff] %v2811
            %3021 = vst [vmem:[%s268 + $0x48] sm:$0xff] %v2812
            %3022 = vst [vmem:[%s268 + $0x50] sm:$0xff] %v2813
            %3023 = vst [vmem:[%s268 + $0x58] sm:$0xff] %v2814
            %3024 = vst [vmem:[%s268 + $0x60] sm:$0xff] %v2815
            %3025 = vst [vmem:[%s268 + $0x68] sm:$0xff] %v2816
            %3026 = vst [vmem:[%s268 + $0x70] sm:$0xff] %v2817
            %3027 = vst [vmem:[%s268 + $0x78] sm:$0xff] %v2818
          $region67: #{noise_resnet.1} parent=56 // pred_fallthru
            _
          %v3028 = vld [vmem:[%s585 + $0x40] sm:$0xc0]
          %v3029 = vld [vmem:[%s585 + $0x48] sm:$0xff]
          %v3030 = vld [vmem:[%s585 + $0x50] sm:$0xff]
          %v3031 = vld [vmem:[%s585 + $0x58] sm:$0xff]
          %v3032 = vld [vmem:[%s585 + $0x60] sm:$0xff]
          %v3033 = vld [vmem:[%s585 + $0x68] sm:$0xff]
          %v3034 = vld [vmem:[%s585 + $0x70] sm:$0xff]
          %v3035 = vld [vmem:[%s585 + $0x78] sm:$0xff]
          %v3036 = vld [vmem:[%s585 + $0x80] sm:$0x7f]
          %v3037 = vld [vmem:[%s598] sm:$0xf]
          %v3038 = vld [vmem:[%s598 + $0x4] sm:$0xf]
          %v3039 = vld [vmem:[%s598 + $0x8] sm:$0xf]
          %v3040 = vld [vmem:[%s598 + $0xc] sm:$0xf]
          %v3041 = vld [vmem:[%s598 + $0x10] sm:$0xf]
          %v3042 = vld [vmem:[%s598 + $0x14] sm:$0xf]
          %v3043 = vld [vmem:[%s598 + $0x18] sm:$0xf]
          %v3044 = vld [vmem:[%s598 + $0x1c] sm:$0xf]
          %v3045 = vld [vmem:[%s598 + $0x20] sm:$0xf]
          %v3046 = vld [vmem:[%s598 + $0x24] sm:$0xf]
          %v3047 = vld [vmem:[%s598 + $0x28] sm:$0xf]
          %v3048 = vld [vmem:[%s598 + $0x2c] sm:$0xf]
          %v3049 = vld [vmem:[%s598 + $0x30] sm:$0xf]
          %v3050 = vld [vmem:[%s598 + $0x34] sm:$0xf]
          %v3051 = vld [vmem:[%s598 + $0x38] sm:$0xf]
          %v3052 = vld [vmem:[%s598 + $0x3c] sm:$0xf]
          %v3053 = vld [vmem:[%s585 + $0x40] sm:$0x80]
          %v3054 = vld [vmem:[%s619] sm:$0xf]
          %v3055 = vld [vmem:[%s619 + $0x4] sm:$0xf]
          %v3056 = vld [vmem:[%s619 + $0x8] sm:$0xf]
          %v3057 = vld [vmem:[%s619 + $0xc] sm:$0xf]
          %v3058 = vld [vmem:[%s619 + $0x10] sm:$0xf]
          %v3059 = vld [vmem:[%s619 + $0x14] sm:$0xf]
          %v3060 = vld [vmem:[%s619 + $0x18] sm:$0xf]
          %v3061 = vld [vmem:[%s619 + $0x1c] sm:$0xf]
          %v3062 = vld [vmem:[%s619 + $0x20] sm:$0xf]
          %v3063 = vld [vmem:[%s619 + $0x24] sm:$0xf]
          %v3064 = vld [vmem:[%s619 + $0x28] sm:$0xf]
          %v3065 = vld [vmem:[%s619 + $0x2c] sm:$0xf]
          %v3066 = vld [vmem:[%s619 + $0x30] sm:$0xf]
          %v3067 = vld [vmem:[%s619 + $0x34] sm:$0xf]
          %v3068 = vld [vmem:[%s619 + $0x38] sm:$0xf]
          %v3069 = vld [vmem:[%s619 + $0x3c] sm:$0xf]
          %v3079 = vrot.slane %v3053, 7
          %v3080 = vrot.slane %v3029, 7
          %v3081 = vsel %vm645, %v3079, %v3080
          %v3082 = vrot.slane %v3030, 7
          %v3083 = vsel %vm645, %v3080, %v3082
          %v3084 = vrot.slane %v3031, 7
          %v3085 = vsel %vm645, %v3082, %v3084
          %v3086 = vrot.slane %v3032, 7
          %v3087 = vsel %vm645, %v3084, %v3086
          %v3088 = vrot.slane %v3033, 7
          %v3089 = vsel %vm645, %v3086, %v3088
          %v3090 = vrot.slane %v3034, 7
          %v3091 = vsel %vm645, %v3088, %v3090
          %v3092 = vrot.slane %v3035, 7
          %v3093 = vsel %vm645, %v3090, %v3092
          %v3094 = vrot.slane %v3036, 7
          %v3095 = vsel %vm645, %v3092, %v3094
          %v3120 = vunpack.c.l.b16 %v3054
          %v3121 = vunpack.c.l.b16 %v3055
          %v3122 = vunpack.c.l.b16 %v3056
          %v3123 = vunpack.c.l.b16 %v3057
          %v3124 = vunpack.c.l.b16 %v3058
          %v3125 = vunpack.c.l.b16 %v3059
          %v3126 = vunpack.c.l.b16 %v3060
          %v3127 = vunpack.c.l.b16 %v3061
          %v3128 = vunpack.c.l.b16 %v3062
          %v3129 = vunpack.c.l.b16 %v3063
          %v3130 = vunpack.c.l.b16 %v3064
          %v3131 = vunpack.c.l.b16 %v3065
          %v3132 = vunpack.c.l.b16 %v3066
          %v3133 = vunpack.c.l.b16 %v3067
          %v3134 = vunpack.c.l.b16 %v3068
          %v3135 = vunpack.c.l.b16 %v3069
          %v3136 = vpack.c.b16 %v3121, %v3120
          %v3137 = vpack.c.b16 %v3123, %v3122
          %v3138 = vpack.c.b16 %v3125, %v3124
          %v3139 = vpack.c.b16 %v3127, %v3126
          %v3140 = vpack.c.b16 %v3129, %v3128
          %v3141 = vpack.c.b16 %v3131, %v3130
          %v3142 = vpack.c.b16 %v3133, %v3132
          %v3143 = vpack.c.b16 %v3135, %v3134
          %3152 = vmatprep.subr.bf16.mxu0 0
          %3153 = vmatpush1.bf16.msra.mxu0 %v3136
          %3154 = vmatprep.subr.bf16.mxu0 0
          %3155 = vmatpush1.bf16.msra.mxu0 %v3137
          %3156 = vmatprep.subr.bf16.mxu0 0
          %3157 = vmatpush1.bf16.msra.mxu0 %v3138
          %3158 = vmatprep.subr.bf16.mxu0 0
          %3159 = vmatpush1.bf16.msra.mxu0 %v3139
          %3160 = vmatprep.subr.bf16.mxu0 0
          %3161 = vmatpush1.bf16.msra.mxu0 %v3140
          %3162 = vmatprep.subr.bf16.mxu0 0
          %3163 = vmatpush1.bf16.msra.mxu0 %v3141
          %3164 = vmatprep.subr.bf16.mxu0 0
          %3165 = vmatpush1.bf16.msra.mxu0 %v3142
          %3166 = vmatprep.subr.bf16.mxu0 0
          %3167 = vmatpush1.bf16.msra.mxu0 %v3143
          %3168 = vmatprep.subr.bf16.mxu0 0
          %3169 = vmatpush1.bf16.msra.mxu0 0
          %3170 = vmatprep.subr.bf16.mxu0 0
          %3171 = vmatpush1.bf16.msra.mxu0 0
          %3172 = vmatprep.subr.bf16.mxu0 0
          %3173 = vmatpush1.bf16.msra.mxu0 0
          %3174 = vmatprep.subr.bf16.mxu0 0
          %3175 = vmatpush1.bf16.msra.mxu0 0
          %3176 = vmatprep.subr.bf16.mxu0 0
          %3177 = vmatpush1.bf16.msra.mxu0 0
          %3178 = vmatprep.subr.bf16.mxu0 0
          %3179 = vmatpush1.bf16.msra.mxu0 0
          %3180 = vmatprep.subr.bf16.mxu0 0
          %3181 = vmatpush1.bf16.msra.mxu0 0
          %3182 = vmatprep.subr.bf16.mxu0 0
          %3183 = vmatpush1.bf16.msra.mxu0 0
          %3184 = vmatprep.mubr.bf16.mxu0 0
          %3185 = vmatmul.mubr.bf16.gmra.mrb[0].mxu0 %v3081
          %v3186 = vpop.f32.mrb[0].mxu0
          %v3187 = vadd.f32 0.0, %v3186
          %v3188 = vpop.f32.mrb[0].mxu0
          %v3189 = vpop.f32.mrb[0].mxu0
          %v3190 = vadd.f32 0.0, %v3189
          %v3191 = vpop.f32.mrb[0].mxu0
          %3192 = vmatprep.mubr.bf16.mxu0 0
          %3193 = vmatmul.mubr.bf16.gmra.mrb[0].mxu0 %v3083
          %v3194 = vpop.f32.mrb[0].mxu0
          %v3195 = vadd.f32 0.0, %v3194
          %v3196 = vpop.f32.mrb[0].mxu0
          %v3197 = vpop.f32.mrb[0].mxu0
          %v3198 = vadd.f32 0.0, %v3197
          %v3199 = vpop.f32.mrb[0].mxu0
          %3200 = vmatprep.mubr.bf16.mxu0 0
          %3201 = vmatmul.mubr.bf16.gmra.mrb[0].mxu0 %v3085
          %v3202 = vpop.f32.mrb[0].mxu0
          %v3203 = vadd.f32 0.0, %v3202
          %v3204 = vpop.f32.mrb[0].mxu0
          %v3205 = vpop.f32.mrb[0].mxu0
          %v3206 = vadd.f32 0.0, %v3205
          %v3207 = vpop.f32.mrb[0].mxu0
          %3208 = vmatprep.mubr.bf16.mxu0 0
          %3209 = vmatmul.mubr.bf16.gmra.mrb[0].mxu0 %v3087
          %v3210 = vpop.f32.mrb[0].mxu0
          %v3211 = vadd.f32 0.0, %v3210
          %v3212 = vpop.f32.mrb[0].mxu0
          %v3213 = vpop.f32.mrb[0].mxu0
          %v3214 = vadd.f32 0.0, %v3213
          %v3215 = vpop.f32.mrb[0].mxu0
          %3216 = vmatprep.mubr.bf16.mxu0 0
          %3217 = vmatmul.mubr.bf16.gmra.mrb[0].mxu0 %v3089
          %v3218 = vpop.f32.mrb[0].mxu0
          %v3219 = vadd.f32 0.0, %v3218
          %v3220 = vpop.f32.mrb[0].mxu0
          %v3221 = vpop.f32.mrb[0].mxu0
          %v3222 = vadd.f32 0.0, %v3221
          %v3223 = vpop.f32.mrb[0].mxu0
          %3224 = vmatprep.mubr.bf16.mxu0 0
          %3225 = vmatmul.mubr.bf16.gmra.mrb[0].mxu0 %v3091
          %v3226 = vpop.f32.mrb[0].mxu0
          %v3227 = vadd.f32 0.0, %v3226
          %v3228 = vpop.f32.mrb[0].mxu0
          %v3229 = vpop.f32.mrb[0].mxu0
          %v3230 = vadd.f32 0.0, %v3229
          %v3231 = vpop.f32.mrb[0].mxu0
          %3232 = vmatprep.mubr.bf16.mxu0 0
          %3233 = vmatmul.mubr.bf16.gmra.mrb[0].mxu0 %v3093
          %v3234 = vpop.f32.mrb[0].mxu0
          %v3235 = vadd.f32 0.0, %v3234
          %v3236 = vpop.f32.mrb[0].mxu0
          %v3237 = vpop.f32.mrb[0].mxu0
          %v3238 = vadd.f32 0.0, %v3237
          %v3239 = vpop.f32.mrb[0].mxu0
          %3240 = vmatprep.mubr.bf16.mxu0 0
          %3241 = vmatmul.mubr.bf16.gmra.mrb[0].mxu0 %v3095
          %v3242 = vpop.f32.mrb[0].mxu0
          %v3243 = vadd.f32 0.0, %v3242
          %v3244 = vpop.f32.mrb[0].mxu0
          %v3245 = vpop.f32.mrb[0].mxu0
          %v3246 = vadd.f32 0.0, %v3245
          %v3247 = vpop.f32.mrb[0].mxu0
          %3248 = vdwg.mxu0
          %v3250 = vshrl.u32 %v3028, 16
          %v3252 = vrot.slane %v3250, 6
          %v3253 = vshll.u32 %v3028, 16
          %v3255 = vrot.slane %v3253, 7
          %v3256 = vor.u32 %v3252, %v3255
          %v3258 = vshrl.u32 %v3029, 16
          %v3260 = vrot.slane %v3258, 6
          %v3261 = vshll.u32 %v3029, 16
          %v3263 = vrot.slane %v3261, 7
          %v3264 = vor.u32 %v3260, %v3263
          %v3265 = vsel %vm816, %v3256, %v3264
          %v3267 = vshrl.u32 %v3030, 16
          %v3269 = vrot.slane %v3267, 6
          %v3270 = vshll.u32 %v3030, 16
          %v3272 = vrot.slane %v3270, 7
          %v3273 = vor.u32 %v3269, %v3272
          %v3274 = vsel %vm816, %v3264, %v3273
          %v3276 = vshrl.u32 %v3031, 16
          %v3278 = vrot.slane %v3276, 6
          %v3279 = vshll.u32 %v3031, 16
          %v3281 = vrot.slane %v3279, 7
          %v3282 = vor.u32 %v3278, %v3281
          %v3283 = vsel %vm816, %v3273, %v3282
          %v3285 = vshrl.u32 %v3032, 16
          %v3287 = vrot.slane %v3285, 6
          %v3288 = vshll.u32 %v3032, 16
          %v3290 = vrot.slane %v3288, 7
          %v3291 = vor.u32 %v3287, %v3290
          %v3292 = vsel %vm816, %v3282, %v3291
          %v3294 = vshrl.u32 %v3033, 16
          %v3296 = vrot.slane %v3294, 6
          %v3297 = vshll.u32 %v3033, 16
          %v3299 = vrot.slane %v3297, 7
          %v3300 = vor.u32 %v3296, %v3299
          %v3301 = vsel %vm816, %v3291, %v3300
          %v3303 = vshrl.u32 %v3034, 16
          %v3305 = vrot.slane %v3303, 6
          %v3306 = vshll.u32 %v3034, 16
          %v3308 = vrot.slane %v3306, 7
          %v3309 = vor.u32 %v3305, %v3308
          %v3310 = vsel %vm816, %v3300, %v3309
          %v3312 = vshrl.u32 %v3035, 16
          %v3314 = vrot.slane %v3312, 6
          %v3315 = vshll.u32 %v3035, 16
          %v3317 = vrot.slane %v3315, 7
          %v3318 = vor.u32 %v3314, %v3317
          %v3319 = vsel %vm816, %v3309, %v3318
          %v3321 = vshrl.u32 %v3036, 16
          %v3323 = vrot.slane %v3321, 6
          %v3324 = vshll.u32 %v3036, 16
          %v3326 = vrot.slane %v3324, 7
          %v3327 = vor.u32 %v3323, %v3326
          %v3328 = vsel %vm816, %v3318, %v3327
          %v3353 = vunpack.c.l.b16 %v3037
          %v3354 = vunpack.c.l.b16 %v3038
          %v3355 = vunpack.c.l.b16 %v3039
          %v3356 = vunpack.c.l.b16 %v3040
          %v3357 = vunpack.c.l.b16 %v3041
          %v3358 = vunpack.c.l.b16 %v3042
          %v3359 = vunpack.c.l.b16 %v3043
          %v3360 = vunpack.c.l.b16 %v3044
          %v3361 = vunpack.c.l.b16 %v3045
          %v3362 = vunpack.c.l.b16 %v3046
          %v3363 = vunpack.c.l.b16 %v3047
          %v3364 = vunpack.c.l.b16 %v3048
          %v3365 = vunpack.c.l.b16 %v3049
          %v3366 = vunpack.c.l.b16 %v3050
          %v3367 = vunpack.c.l.b16 %v3051
          %v3368 = vunpack.c.l.b16 %v3052
          %v3369 = vpack.c.b16 %v3354, %v3353
          %v3370 = vpack.c.b16 %v3356, %v3355
          %v3371 = vpack.c.b16 %v3358, %v3357
          %v3372 = vpack.c.b16 %v3360, %v3359
          %v3373 = vpack.c.b16 %v3362, %v3361
          %v3374 = vpack.c.b16 %v3364, %v3363
          %v3375 = vpack.c.b16 %v3366, %v3365
          %v3376 = vpack.c.b16 %v3368, %v3367
          %3385 = vmatprep.subr.bf16.mxu0 0
          %3386 = vmatpush1.bf16.msra.mxu0 %v3369
          %3387 = vmatprep.subr.bf16.mxu0 0
          %3388 = vmatpush1.bf16.msra.mxu0 %v3370
          %3389 = vmatprep.subr.bf16.mxu0 0
          %3390 = vmatpush1.bf16.msra.mxu0 %v3371
          %3391 = vmatprep.subr.bf16.mxu0 0
          %3392 = vmatpush1.bf16.msra.mxu0 %v3372
          %3393 = vmatprep.subr.bf16.mxu0 0
          %3394 = vmatpush1.bf16.msra.mxu0 %v3373
          %3395 = vmatprep.subr.bf16.mxu0 0
          %3396 = vmatpush1.bf16.msra.mxu0 %v3374
          %3397 = vmatprep.subr.bf16.mxu0 0
          %3398 = vmatpush1.bf16.msra.mxu0 %v3375
          %3399 = vmatprep.subr.bf16.mxu0 0
          %3400 = vmatpush1.bf16.msra.mxu0 %v3376
          %3401 = vmatprep.subr.bf16.mxu0 0
          %3402 = vmatpush1.bf16.msra.mxu0 0
          %3403 = vmatprep.subr.bf16.mxu0 0
          %3404 = vmatpush1.bf16.msra.mxu0 0
          %3405 = vmatprep.subr.bf16.mxu0 0
          %3406 = vmatpush1.bf16.msra.mxu0 0
          %3407 = vmatprep.subr.bf16.mxu0 0
          %3408 = vmatpush1.bf16.msra.mxu0 0
          %3409 = vmatprep.subr.bf16.mxu0 0
          %3410 = vmatpush1.bf16.msra.mxu0 0
          %3411 = vmatprep.subr.bf16.mxu0 0
          %3412 = vmatpush1.bf16.msra.mxu0 0
          %3413 = vmatprep.subr.bf16.mxu0 0
          %3414 = vmatpush1.bf16.msra.mxu0 0
          %3415 = vmatprep.subr.bf16.mxu0 0
          %3416 = vmatpush1.bf16.msra.mxu0 0
          %3417 = vmatprep.mubr.bf16.mxu0 0
          %3418 = vmatmul.mubr.bf16.gmra.mrb[0].mxu0 %v3265
          %v3419 = vpop.f32.mrb[0].mxu0
          %v3420 = vadd.f32 %v3187, %v3419
          %v3421 = vpop.f32.mrb[0].mxu0
          %v3422 = vpop.f32.mrb[0].mxu0
          %v3423 = vadd.f32 %v3190, %v3422
          %v3424 = vpop.f32.mrb[0].mxu0
          %3425 = vmatprep.mubr.bf16.mxu0 0
          %3426 = vmatmul.mubr.bf16.gmra.mrb[0].mxu0 %v3274
          %v3427 = vpop.f32.mrb[0].mxu0
          %v3428 = vadd.f32 %v3195, %v3427
          %v3429 = vpop.f32.mrb[0].mxu0
          %v3430 = vpop.f32.mrb[0].mxu0
          %v3431 = vadd.f32 %v3198, %v3430
          %v3432 = vpop.f32.mrb[0].mxu0
          %3433 = vmatprep.mubr.bf16.mxu0 0
          %3434 = vmatmul.mubr.bf16.gmra.mrb[0].mxu0 %v3283
          %v3435 = vpop.f32.mrb[0].mxu0
          %v3436 = vadd.f32 %v3203, %v3435
          %v3437 = vpop.f32.mrb[0].mxu0
          %v3438 = vpop.f32.mrb[0].mxu0
          %v3439 = vadd.f32 %v3206, %v3438
          %v3440 = vpop.f32.mrb[0].mxu0
          %3441 = vmatprep.mubr.bf16.mxu0 0
          %3442 = vmatmul.mubr.bf16.gmra.mrb[0].mxu0 %v3292
          %v3443 = vpop.f32.mrb[0].mxu0
          %v3444 = vadd.f32 %v3211, %v3443
          %v3445 = vpop.f32.mrb[0].mxu0
          %v3446 = vpop.f32.mrb[0].mxu0
          %v3447 = vadd.f32 %v3214, %v3446
          %v3448 = vpop.f32.mrb[0].mxu0
          %3449 = vmatprep.mubr.bf16.mxu0 0
          %3450 = vmatmul.mubr.bf16.gmra.mrb[0].mxu0 %v3301
          %v3451 = vpop.f32.mrb[0].mxu0
          %v3452 = vadd.f32 %v3219, %v3451
          %v3453 = vpop.f32.mrb[0].mxu0
          %v3454 = vpop.f32.mrb[0].mxu0
          %v3455 = vadd.f32 %v3222, %v3454
          %v3456 = vpop.f32.mrb[0].mxu0
          %3457 = vmatprep.mubr.bf16.mxu0 0
          %3458 = vmatmul.mubr.bf16.gmra.mrb[0].mxu0 %v3310
          %v3459 = vpop.f32.mrb[0].mxu0
          %v3460 = vadd.f32 %v3227, %v3459
          %v3461 = vpop.f32.mrb[0].mxu0
          %v3462 = vpop.f32.mrb[0].mxu0
          %v3463 = vadd.f32 %v3230, %v3462
          %v3464 = vpop.f32.mrb[0].mxu0
          %3465 = vmatprep.mubr.bf16.mxu0 0
          %3466 = vmatmul.mubr.bf16.gmra.mrb[0].mxu0 %v3319
          %v3467 = vpop.f32.mrb[0].mxu0
          %v3468 = vadd.f32 %v3235, %v3467
          %v3469 = vpop.f32.mrb[0].mxu0
          %v3470 = vpop.f32.mrb[0].mxu0
          %v3471 = vadd.f32 %v3238, %v3470
          %v3472 = vpop.f32.mrb[0].mxu0
          %3473 = vmatprep.mubr.bf16.mxu0 0
          %3474 = vmatmul.mubr.bf16.gmra.mrb[0].mxu0 %v3328
          %v3475 = vpop.f32.mrb[0].mxu0
          %v3476 = vadd.f32 %v3243, %v3475
          %v3477 = vpop.f32.mrb[0].mxu0
          %v3478 = vpop.f32.mrb[0].mxu0
          %v3479 = vadd.f32 %v3246, %v3478
          %v3480 = vpop.f32.mrb[0].mxu0
          %3481 = vdwg.mxu0
          %v3482 = vld [vmem:[%s585 + $0x80] sm:$0xff]
          %v3483 = vld [vmem:[%s1054] sm:$0xf]
          %v3484 = vld [vmem:[%s1054 + $0x4] sm:$0xf]
          %v3485 = vld [vmem:[%s1054 + $0x8] sm:$0xf]
          %v3486 = vld [vmem:[%s1054 + $0xc] sm:$0xf]
          %v3487 = vld [vmem:[%s1054 + $0x10] sm:$0xf]
          %v3488 = vld [vmem:[%s1054 + $0x14] sm:$0xf]
          %v3489 = vld [vmem:[%s1054 + $0x18] sm:$0xf]
          %v3490 = vld [vmem:[%s1054 + $0x1c] sm:$0xf]
          %v3491 = vld [vmem:[%s1054 + $0x20] sm:$0xf]
          %v3492 = vld [vmem:[%s1054 + $0x24] sm:$0xf]
          %v3493 = vld [vmem:[%s1054 + $0x28] sm:$0xf]
          %v3494 = vld [vmem:[%s1054 + $0x2c] sm:$0xf]
          %v3495 = vld [vmem:[%s1054 + $0x30] sm:$0xf]
          %v3496 = vld [vmem:[%s1054 + $0x34] sm:$0xf]
          %v3497 = vld [vmem:[%s1054 + $0x38] sm:$0xf]
          %v3498 = vld [vmem:[%s1054 + $0x3c] sm:$0xf]
          %v3500 = vshrl.u32 %v3053, 16
          %v3502 = vrot.slane %v3500, 7
          %v3503 = vrot.slane %v3258, 7
          %v3504 = vor.u32 %v3503, %v3261
          %v3505 = vsel %vm1071, %v3502, %v3504
          %v3506 = vrot.slane %v3267, 7
          %v3507 = vor.u32 %v3506, %v3270
          %v3508 = vsel %vm1071, %v3503, %v3507
          %v3509 = vrot.slane %v3276, 7
          %v3510 = vor.u32 %v3509, %v3279
          %v3511 = vsel %vm1071, %v3506, %v3510
          %v3512 = vrot.slane %v3285, 7
          %v3513 = vor.u32 %v3512, %v3288
          %v3514 = vsel %vm1071, %v3509, %v3513
          %v3515 = vrot.slane %v3294, 7
          %v3516 = vor.u32 %v3515, %v3297
          %v3517 = vsel %vm1071, %v3512, %v3516
          %v3518 = vrot.slane %v3303, 7
          %v3519 = vor.u32 %v3518, %v3306
          %v3520 = vsel %vm1071, %v3515, %v3519
          %v3521 = vrot.slane %v3312, 7
          %v3522 = vor.u32 %v3521, %v3315
          %v3523 = vsel %vm1071, %v3518, %v3522
          %v3525 = vshrl.u32 %v3482, 16
          %v3527 = vrot.slane %v3525, 7
          %v3528 = vshll.u32 %v3482, 16
          %v3530 = vor.u32 %v3527, %v3528
          %v3531 = vsel %vm1071, %v3521, %v3530
          %v3556 = vunpack.c.l.b16 %v3483
          %v3557 = vunpack.c.l.b16 %v3484
          %v3558 = vunpack.c.l.b16 %v3485
          %v3559 = vunpack.c.l.b16 %v3486
          %v3560 = vunpack.c.l.b16 %v3487
          %v3561 = vunpack.c.l.b16 %v3488
          %v3562 = vunpack.c.l.b16 %v3489
          %v3563 = vunpack.c.l.b16 %v3490
          %v3564 = vunpack.c.l.b16 %v3491
          %v3565 = vunpack.c.l.b16 %v3492
          %v3566 = vunpack.c.l.b16 %v3493
          %v3567 = vunpack.c.l.b16 %v3494
          %v3568 = vunpack.c.l.b16 %v3495
          %v3569 = vunpack.c.l.b16 %v3496
          %v3570 = vunpack.c.l.b16 %v3497
          %v3571 = vunpack.c.l.b16 %v3498
          %v3572 = vpack.c.b16 %v3557, %v3556
          %v3573 = vpack.c.b16 %v3559, %v3558
          %v3574 = vpack.c.b16 %v3561, %v3560
          %v3575 = vpack.c.b16 %v3563, %v3562
          %v3576 = vpack.c.b16 %v3565, %v3564
          %v3577 = vpack.c.b16 %v3567, %v3566
          %v3578 = vpack.c.b16 %v3569, %v3568
          %v3579 = vpack.c.b16 %v3571, %v3570
          %3588 = vmatprep.subr.bf16.mxu0 0
          %3589 = vmatpush1.bf16.msra.mxu0 %v3572
          %3590 = vmatprep.subr.bf16.mxu0 0
          %3591 = vmatpush1.bf16.msra.mxu0 %v3573
          %3592 = vmatprep.subr.bf16.mxu0 0
          %3593 = vmatpush1.bf16.msra.mxu0 %v3574
          %3594 = vmatprep.subr.bf16.mxu0 0
          %3595 = vmatpush1.bf16.msra.mxu0 %v3575
          %3596 = vmatprep.subr.bf16.mxu0 0
          %3597 = vmatpush1.bf16.msra.mxu0 %v3576
          %3598 = vmatprep.subr.bf16.mxu0 0
          %3599 = vmatpush1.bf16.msra.mxu0 %v3577
          %3600 = vmatprep.subr.bf16.mxu0 0
          %3601 = vmatpush1.bf16.msra.mxu0 %v3578
          %3602 = vmatprep.subr.bf16.mxu0 0
          %3603 = vmatpush1.bf16.msra.mxu0 %v3579
          %3604 = vmatprep.subr.bf16.mxu0 0
          %3605 = vmatpush1.bf16.msra.mxu0 0
          %3606 = vmatprep.subr.bf16.mxu0 0
          %3607 = vmatpush1.bf16.msra.mxu0 0
          %3608 = vmatprep.subr.bf16.mxu0 0
          %3609 = vmatpush1.bf16.msra.mxu0 0
          %3610 = vmatprep.subr.bf16.mxu0 0
          %3611 = vmatpush1.bf16.msra.mxu0 0
          %3612 = vmatprep.subr.bf16.mxu0 0
          %3613 = vmatpush1.bf16.msra.mxu0 0
          %3614 = vmatprep.subr.bf16.mxu0 0
          %3615 = vmatpush1.bf16.msra.mxu0 0
          %3616 = vmatprep.subr.bf16.mxu0 0
          %3617 = vmatpush1.bf16.msra.mxu0 0
          %3618 = vmatprep.subr.bf16.mxu0 0
          %3619 = vmatpush1.bf16.msra.mxu0 0
          %3620 = vmatprep.mubr.bf16.mxu0 0
          %3621 = vmatmul.mubr.bf16.gmra.mrb[0].mxu0 %v3505
          %v3622 = vpop.f32.mrb[0].mxu0
          %v3623 = vadd.f32 0.0, %v3622
          %v3624 = vpop.f32.mrb[0].mxu0
          %v3625 = vpop.f32.mrb[0].mxu0
          %v3626 = vadd.f32 0.0, %v3625
          %v3627 = vpop.f32.mrb[0].mxu0
          %3628 = vmatprep.mubr.bf16.mxu0 0
          %3629 = vmatmul.mubr.bf16.gmra.mrb[0].mxu0 %v3508
          %v3630 = vpop.f32.mrb[0].mxu0
          %v3631 = vadd.f32 0.0, %v3630
          %v3632 = vpop.f32.mrb[0].mxu0
          %v3633 = vpop.f32.mrb[0].mxu0
          %v3634 = vadd.f32 0.0, %v3633
          %v3635 = vpop.f32.mrb[0].mxu0
          %3636 = vmatprep.mubr.bf16.mxu0 0
          %3637 = vmatmul.mubr.bf16.gmra.mrb[0].mxu0 %v3511
          %v3638 = vpop.f32.mrb[0].mxu0
          %v3639 = vadd.f32 0.0, %v3638
          %v3640 = vpop.f32.mrb[0].mxu0
          %v3641 = vpop.f32.mrb[0].mxu0
          %v3642 = vadd.f32 0.0, %v3641
          %v3643 = vpop.f32.mrb[0].mxu0
          %3644 = vmatprep.mubr.bf16.mxu0 0
          %3645 = vmatmul.mubr.bf16.gmra.mrb[0].mxu0 %v3514
          %v3646 = vpop.f32.mrb[0].mxu0
          %v3647 = vadd.f32 0.0, %v3646
          %v3648 = vpop.f32.mrb[0].mxu0
          %v3649 = vpop.f32.mrb[0].mxu0
          %v3650 = vadd.f32 0.0, %v3649
          %v3651 = vpop.f32.mrb[0].mxu0
          %3652 = vmatprep.mubr.bf16.mxu0 0
          %3653 = vmatmul.mubr.bf16.gmra.mrb[0].mxu0 %v3517
          %v3654 = vpop.f32.mrb[0].mxu0
          %v3655 = vadd.f32 0.0, %v3654
          %v3656 = vpop.f32.mrb[0].mxu0
          %v3657 = vpop.f32.mrb[0].mxu0
          %v3658 = vadd.f32 0.0, %v3657
          %v3659 = vpop.f32.mrb[0].mxu0
          %3660 = vmatprep.mubr.bf16.mxu0 0
          %3661 = vmatmul.mubr.bf16.gmra.mrb[0].mxu0 %v3520
          %v3662 = vpop.f32.mrb[0].mxu0
          %v3663 = vadd.f32 0.0, %v3662
          %v3664 = vpop.f32.mrb[0].mxu0
          %v3665 = vpop.f32.mrb[0].mxu0
          %v3666 = vadd.f32 0.0, %v3665
          %v3667 = vpop.f32.mrb[0].mxu0
          %3668 = vmatprep.mubr.bf16.mxu0 0
          %3669 = vmatmul.mubr.bf16.gmra.mrb[0].mxu0 %v3523
          %v3670 = vpop.f32.mrb[0].mxu0
          %v3671 = vadd.f32 0.0, %v3670
          %v3672 = vpop.f32.mrb[0].mxu0
          %v3673 = vpop.f32.mrb[0].mxu0
          %v3674 = vadd.f32 0.0, %v3673
          %v3675 = vpop.f32.mrb[0].mxu0
          %3676 = vmatprep.mubr.bf16.mxu0 0
          %3677 = vmatmul.mubr.bf16.gmra.mrb[0].mxu0 %v3531
          %v3678 = vpop.f32.mrb[0].mxu0
          %v3679 = vadd.f32 0.0, %v3678
          %v3680 = vpop.f32.mrb[0].mxu0
          %v3681 = vpop.f32.mrb[0].mxu0
          %v3682 = vadd.f32 0.0, %v3681
          %v3683 = vpop.f32.mrb[0].mxu0
          %3684 = vdwg.mxu0
          %v3685 = vadd.f32 %v3420, %v3623
          %v3686 = vadd.f32 %v3423, %v3626
          %v3687 = vadd.f32 %v3428, %v3631
          %v3688 = vadd.f32 %v3431, %v3634
          %v3689 = vadd.f32 %v3436, %v3639
          %v3690 = vadd.f32 %v3439, %v3642
          %v3691 = vadd.f32 %v3444, %v3647
          %v3692 = vadd.f32 %v3447, %v3650
          %v3693 = vadd.f32 %v3452, %v3655
          %v3694 = vadd.f32 %v3455, %v3658
          %v3695 = vadd.f32 %v3460, %v3663
          %v3696 = vadd.f32 %v3463, %v3666
          %v3697 = vadd.f32 %v3468, %v3671
          %v3698 = vadd.f32 %v3471, %v3674
          %v3699 = vadd.f32 %v3476, %v3679
          %v3700 = vadd.f32 %v3479, %v3682
          %v3701 = vld [vmem:[%s585 + $0x48] sm:$0x80]
          %v3702 = vld [vmem:[%s585 + $0x50] sm:$0xff]
          %v3703 = vld [vmem:[%s585 + $0x58] sm:$0xff]
          %v3704 = vld [vmem:[%s585 + $0x60] sm:$0xff]
          %v3705 = vld [vmem:[%s585 + $0x68] sm:$0xff]
          %v3706 = vld [vmem:[%s585 + $0x70] sm:$0xff]
          %v3707 = vld [vmem:[%s585 + $0x78] sm:$0xff]
          %v3708 = vld [vmem:[%s585 + $0x80] sm:$0xff]
          %v3709 = vld [vmem:[%s585 + $0x88] sm:$0xff]
          %v3710 = vld [vmem:[%s1286] sm:$0xf]
          %v3711 = vld [vmem:[%s1286 + $0x4] sm:$0xf]
          %v3712 = vld [vmem:[%s1286 + $0x8] sm:$0xf]
          %v3713 = vld [vmem:[%s1286 + $0xc] sm:$0xf]
          %v3714 = vld [vmem:[%s1286 + $0x10] sm:$0xf]
          %v3715 = vld [vmem:[%s1286 + $0x14] sm:$0xf]
          %v3716 = vld [vmem:[%s1286 + $0x18] sm:$0xf]
          %v3717 = vld [vmem:[%s1286 + $0x1c] sm:$0xf]
          %v3718 = vld [vmem:[%s1286 + $0x20] sm:$0xf]
          %v3719 = vld [vmem:[%s1286 + $0x24] sm:$0xf]
          %v3720 = vld [vmem:[%s1286 + $0x28] sm:$0xf]
          %v3721 = vld [vmem:[%s1286 + $0x2c] sm:$0xf]
          %v3722 = vld [vmem:[%s1286 + $0x30] sm:$0xf]
          %v3723 = vld [vmem:[%s1286 + $0x34] sm:$0xf]
          %v3724 = vld [vmem:[%s1286 + $0x38] sm:$0xf]
          %v3725 = vld [vmem:[%s1286 + $0x3c] sm:$0xf]
          %v3727 = vshrl.u32 %v3701, 16
          %v3729 = vrot.slane %v3727, 7
          %v3731 = vshrl.u32 %v3702, 16
          %v3733 = vrot.slane %v3731, 7
          %v3734 = vshll.u32 %v3702, 16
          %v3736 = vor.u32 %v3733, %v3734
          %v3737 = vsel %vm1071, %v3729, %v3736
          %v3739 = vshrl.u32 %v3703, 16
          %v3741 = vrot.slane %v3739, 7
          %v3742 = vshll.u32 %v3703, 16
          %v3744 = vor.u32 %v3741, %v3742
          %v3745 = vsel %vm1071, %v3733, %v3744
          %v3747 = vshrl.u32 %v3704, 16
          %v3749 = vrot.slane %v3747, 7
          %v3750 = vshll.u32 %v3704, 16
          %v3752 = vor.u32 %v3749, %v3750
          %v3753 = vsel %vm1071, %v3741, %v3752
          %v3755 = vshrl.u32 %v3705, 16
          %v3757 = vrot.slane %v3755, 7
          %v3758 = vshll.u32 %v3705, 16
          %v3760 = vor.u32 %v3757, %v3758
          %v3761 = vsel %vm1071, %v3749, %v3760
          %v3763 = vshrl.u32 %v3706, 16
          %v3765 = vrot.slane %v3763, 7
          %v3766 = vshll.u32 %v3706, 16
          %v3768 = vor.u32 %v3765, %v3766
          %v3769 = vsel %vm1071, %v3757, %v3768
          %v3771 = vshrl.u32 %v3707, 16
          %v3773 = vrot.slane %v3771, 7
          %v3774 = vshll.u32 %v3707, 16
          %v3776 = vor.u32 %v3773, %v3774
          %v3777 = vsel %vm1071, %v3765, %v3776
          %v3779 = vshrl.u32 %v3708, 16
          %v3781 = vrot.slane %v3779, 7
          %v3782 = vshll.u32 %v3708, 16
          %v3784 = vor.u32 %v3781, %v3782
          %v3785 = vsel %vm1071, %v3773, %v3784
          %v3787 = vshrl.u32 %v3709, 16
          %v3789 = vrot.slane %v3787, 7
          %v3790 = vshll.u32 %v3709, 16
          %v3792 = vor.u32 %v3789, %v3790
          %v3793 = vsel %vm1071, %v3781, %v3792
          %v3818 = vunpack.c.l.b16 %v3710
          %v3819 = vunpack.c.l.b16 %v3711
          %v3820 = vunpack.c.l.b16 %v3712
          %v3821 = vunpack.c.l.b16 %v3713
          %v3822 = vunpack.c.l.b16 %v3714
          %v3823 = vunpack.c.l.b16 %v3715
          %v3824 = vunpack.c.l.b16 %v3716
          %v3825 = vunpack.c.l.b16 %v3717
          %v3826 = vunpack.c.l.b16 %v3718
          %v3827 = vunpack.c.l.b16 %v3719
          %v3828 = vunpack.c.l.b16 %v3720
          %v3829 = vunpack.c.l.b16 %v3721
          %v3830 = vunpack.c.l.b16 %v3722
          %v3831 = vunpack.c.l.b16 %v3723
          %v3832 = vunpack.c.l.b16 %v3724
          %v3833 = vunpack.c.l.b16 %v3725
          %v3834 = vpack.c.b16 %v3819, %v3818
          %v3835 = vpack.c.b16 %v3821, %v3820
          %v3836 = vpack.c.b16 %v3823, %v3822
          %v3837 = vpack.c.b16 %v3825, %v3824
          %v3838 = vpack.c.b16 %v3827, %v3826
          %v3839 = vpack.c.b16 %v3829, %v3828
          %v3840 = vpack.c.b16 %v3831, %v3830
          %v3841 = vpack.c.b16 %v3833, %v3832
          %3850 = vmatprep.subr.bf16.mxu0 0
          %3851 = vmatpush1.bf16.msra.mxu0 %v3834
          %3852 = vmatprep.subr.bf16.mxu0 0
          %3853 = vmatpush1.bf16.msra.mxu0 %v3835
          %3854 = vmatprep.subr.bf16.mxu0 0
          %3855 = vmatpush1.bf16.msra.mxu0 %v3836
          %3856 = vmatprep.subr.bf16.mxu0 0
          %3857 = vmatpush1.bf16.msra.mxu0 %v3837
          %3858 = vmatprep.subr.bf16.mxu0 0
          %3859 = vmatpush1.bf16.msra.mxu0 %v3838
          %3860 = vmatprep.subr.bf16.mxu0 0
          %3861 = vmatpush1.bf16.msra.mxu0 %v3839
          %3862 = vmatprep.subr.bf16.mxu0 0
          %3863 = vmatpush1.bf16.msra.mxu0 %v3840
          %3864 = vmatprep.subr.bf16.mxu0 0
          %3865 = vmatpush1.bf16.msra.mxu0 %v3841
          %3866 = vmatprep.subr.bf16.mxu0 0
          %3867 = vmatpush1.bf16.msra.mxu0 0
          %3868 = vmatprep.subr.bf16.mxu0 0
          %3869 = vmatpush1.bf16.msra.mxu0 0
          %3870 = vmatprep.subr.bf16.mxu0 0
          %3871 = vmatpush1.bf16.msra.mxu0 0
          %3872 = vmatprep.subr.bf16.mxu0 0
          %3873 = vmatpush1.bf16.msra.mxu0 0
          %3874 = vmatprep.subr.bf16.mxu0 0
          %3875 = vmatpush1.bf16.msra.mxu0 0
          %3876 = vmatprep.subr.bf16.mxu0 0
          %3877 = vmatpush1.bf16.msra.mxu0 0
          %3878 = vmatprep.subr.bf16.mxu0 0
          %3879 = vmatpush1.bf16.msra.mxu0 0
          %3880 = vmatprep.subr.bf16.mxu0 0
          %3881 = vmatpush1.bf16.msra.mxu0 0
          %3882 = vmatprep.mubr.bf16.mxu0 0
          %3883 = vmatmul.mubr.bf16.gmra.mrb[0].mxu0 %v3737
          %v3884 = vpop.f32.mrb[0].mxu0
          %v3885 = vadd.f32 0.0, %v3884
          %v3886 = vpop.f32.mrb[0].mxu0
          %v3887 = vpop.f32.mrb[0].mxu0
          %v3888 = vadd.f32 0.0, %v3887
          %v3889 = vpop.f32.mrb[0].mxu0
          %3890 = vmatprep.mubr.bf16.mxu0 0
          %3891 = vmatmul.mubr.bf16.gmra.mrb[0].mxu0 %v3745
          %v3892 = vpop.f32.mrb[0].mxu0
          %v3893 = vadd.f32 0.0, %v3892
          %v3894 = vpop.f32.mrb[0].mxu0
          %v3895 = vpop.f32.mrb[0].mxu0
          %v3896 = vadd.f32 0.0, %v3895
          %v3897 = vpop.f32.mrb[0].mxu0
          %3898 = vmatprep.mubr.bf16.mxu0 0
          %3899 = vmatmul.mubr.bf16.gmra.mrb[0].mxu0 %v3753
          %v3900 = vpop.f32.mrb[0].mxu0
          %v3901 = vadd.f32 0.0, %v3900
          %v3902 = vpop.f32.mrb[0].mxu0
          %v3903 = vpop.f32.mrb[0].mxu0
          %v3904 = vadd.f32 0.0, %v3903
          %v3905 = vpop.f32.mrb[0].mxu0
          %3906 = vmatprep.mubr.bf16.mxu0 0
          %3907 = vmatmul.mubr.bf16.gmra.mrb[0].mxu0 %v3761
          %v3908 = vpop.f32.mrb[0].mxu0
          %v3909 = vadd.f32 0.0, %v3908
          %v3910 = vpop.f32.mrb[0].mxu0
          %v3911 = vpop.f32.mrb[0].mxu0
          %v3912 = vadd.f32 0.0, %v3911
          %v3913 = vpop.f32.mrb[0].mxu0
          %3914 = vmatprep.mubr.bf16.mxu0 0
          %3915 = vmatmul.mubr.bf16.gmra.mrb[0].mxu0 %v3769
          %v3916 = vpop.f32.mrb[0].mxu0
          %v3917 = vadd.f32 0.0, %v3916
          %v3918 = vpop.f32.mrb[0].mxu0
          %v3919 = vpop.f32.mrb[0].mxu0
          %v3920 = vadd.f32 0.0, %v3919
          %v3921 = vpop.f32.mrb[0].mxu0
          %3922 = vmatprep.mubr.bf16.mxu0 0
          %3923 = vmatmul.mubr.bf16.gmra.mrb[0].mxu0 %v3777
          %v3924 = vpop.f32.mrb[0].mxu0
          %v3925 = vadd.f32 0.0, %v3924
          %v3926 = vpop.f32.mrb[0].mxu0
          %v3927 = vpop.f32.mrb[0].mxu0
          %v3928 = vadd.f32 0.0, %v3927
          %v3929 = vpop.f32.mrb[0].mxu0
          %3930 = vmatprep.mubr.bf16.mxu0 0
          %3931 = vmatmul.mubr.bf16.gmra.mrb[0].mxu0 %v3785
          %v3932 = vpop.f32.mrb[0].mxu0
          %v3933 = vadd.f32 0.0, %v3932
          %v3934 = vpop.f32.mrb[0].mxu0
          %v3935 = vpop.f32.mrb[0].mxu0
          %v3936 = vadd.f32 0.0, %v3935
          %v3937 = vpop.f32.mrb[0].mxu0
          %3938 = vmatprep.mubr.bf16.mxu0 0
          %3939 = vmatmul.mubr.bf16.gmra.mrb[0].mxu0 %v3793
          %v3940 = vpop.f32.mrb[0].mxu0
          %v3941 = vadd.f32 0.0, %v3940
          %v3942 = vpop.f32.mrb[0].mxu0
          %v3943 = vpop.f32.mrb[0].mxu0
          %v3944 = vadd.f32 0.0, %v3943
          %v3945 = vpop.f32.mrb[0].mxu0
          %3946 = vdwg.mxu0
          %v3947 = vadd.f32 %v3685, %v3885
          %v3948 = vadd.f32 %v3686, %v3888
          %v3949 = vadd.f32 %v3687, %v3893
          %v3950 = vadd.f32 %v3688, %v3896
          %v3951 = vadd.f32 %v3689, %v3901
          %v3952 = vadd.f32 %v3690, %v3904
          %v3953 = vadd.f32 %v3691, %v3909
          %v3954 = vadd.f32 %v3692, %v3912
          %v3955 = vadd.f32 %v3693, %v3917
          %v3956 = vadd.f32 %v3694, %v3920
          %v3957 = vadd.f32 %v3695, %v3925
          %v3958 = vadd.f32 %v3696, %v3928
          %v3959 = vadd.f32 %v3697, %v3933
          %v3960 = vadd.f32 %v3698, %v3936
          %v3961 = vadd.f32 %v3699, %v3941
          %v3962 = vadd.f32 %v3700, %v3944
          %v3963 = vld [vmem:[%s1543] sm:$0xf]
          %v3964 = vld [vmem:[%s1543 + $0x4] sm:$0xf]
          %v3965 = vld [vmem:[%s1543 + $0x8] sm:$0xf]
          %v3966 = vld [vmem:[%s1543 + $0xc] sm:$0xf]
          %v3967 = vld [vmem:[%s1543 + $0x10] sm:$0xf]
          %v3968 = vld [vmem:[%s1543 + $0x14] sm:$0xf]
          %v3969 = vld [vmem:[%s1543 + $0x18] sm:$0xf]
          %v3970 = vld [vmem:[%s1543 + $0x1c] sm:$0xf]
          %v3971 = vld [vmem:[%s1543 + $0x20] sm:$0xf]
          %v3972 = vld [vmem:[%s1543 + $0x24] sm:$0xf]
          %v3973 = vld [vmem:[%s1543 + $0x28] sm:$0xf]
          %v3974 = vld [vmem:[%s1543 + $0x2c] sm:$0xf]
          %v3975 = vld [vmem:[%s1543 + $0x30] sm:$0xf]
          %v3976 = vld [vmem:[%s1543 + $0x34] sm:$0xf]
          %v3977 = vld [vmem:[%s1543 + $0x38] sm:$0xf]
          %v3978 = vld [vmem:[%s1543 + $0x3c] sm:$0xf]
          %v3995 = vunpack.c.l.b16 %v3963
          %v3996 = vunpack.c.l.b16 %v3964
          %v3997 = vunpack.c.l.b16 %v3965
          %v3998 = vunpack.c.l.b16 %v3966
          %v3999 = vunpack.c.l.b16 %v3967
          %v4000 = vunpack.c.l.b16 %v3968
          %v4001 = vunpack.c.l.b16 %v3969
          %v4002 = vunpack.c.l.b16 %v3970
          %v4003 = vunpack.c.l.b16 %v3971
          %v4004 = vunpack.c.l.b16 %v3972
          %v4005 = vunpack.c.l.b16 %v3973
          %v4006 = vunpack.c.l.b16 %v3974
          %v4007 = vunpack.c.l.b16 %v3975
          %v4008 = vunpack.c.l.b16 %v3976
          %v4009 = vunpack.c.l.b16 %v3977
          %v4010 = vunpack.c.l.b16 %v3978
          %v4011 = vpack.c.b16 %v3996, %v3995
          %v4012 = vpack.c.b16 %v3998, %v3997
          %v4013 = vpack.c.b16 %v4000, %v3999
          %v4014 = vpack.c.b16 %v4002, %v4001
          %v4015 = vpack.c.b16 %v4004, %v4003
          %v4016 = vpack.c.b16 %v4006, %v4005
          %v4017 = vpack.c.b16 %v4008, %v4007
          %v4018 = vpack.c.b16 %v4010, %v4009
          %4027 = vmatprep.subr.bf16.mxu0 0
          %4028 = vmatpush1.bf16.msra.mxu0 %v4011
          %4029 = vmatprep.subr.bf16.mxu0 0
          %4030 = vmatpush1.bf16.msra.mxu0 %v4012
          %4031 = vmatprep.subr.bf16.mxu0 0
          %4032 = vmatpush1.bf16.msra.mxu0 %v4013
          %4033 = vmatprep.subr.bf16.mxu0 0
          %4034 = vmatpush1.bf16.msra.mxu0 %v4014
          %4035 = vmatprep.subr.bf16.mxu0 0
          %4036 = vmatpush1.bf16.msra.mxu0 %v4015
          %4037 = vmatprep.subr.bf16.mxu0 0
          %4038 = vmatpush1.bf16.msra.mxu0 %v4016
          %4039 = vmatprep.subr.bf16.mxu0 0
          %4040 = vmatpush1.bf16.msra.mxu0 %v4017
          %4041 = vmatprep.subr.bf16.mxu0 0
          %4042 = vmatpush1.bf16.msra.mxu0 %v4018
          %4043 = vmatprep.subr.bf16.mxu0 0
          %4044 = vmatpush1.bf16.msra.mxu0 0
          %4045 = vmatprep.subr.bf16.mxu0 0
          %4046 = vmatpush1.bf16.msra.mxu0 0
          %4047 = vmatprep.subr.bf16.mxu0 0
          %4048 = vmatpush1.bf16.msra.mxu0 0
          %4049 = vmatprep.subr.bf16.mxu0 0
          %4050 = vmatpush1.bf16.msra.mxu0 0
          %4051 = vmatprep.subr.bf16.mxu0 0
          %4052 = vmatpush1.bf16.msra.mxu0 0
          %4053 = vmatprep.subr.bf16.mxu0 0
          %4054 = vmatpush1.bf16.msra.mxu0 0
          %4055 = vmatprep.subr.bf16.mxu0 0
          %4056 = vmatpush1.bf16.msra.mxu0 0
          %4057 = vmatprep.subr.bf16.mxu0 0
          %4058 = vmatpush1.bf16.msra.mxu0 0
          %4059 = vmatprep.mubr.bf16.mxu0 0
          %4060 = vmatmul.mubr.bf16.gmra.mrb[0].mxu0 %v3702
          %v4061 = vpop.f32.mrb[0].mxu0
          %v4062 = vadd.f32 0.0, %v4061
          %v4063 = vpop.f32.mrb[0].mxu0
          %v4064 = vpop.f32.mrb[0].mxu0
          %v4065 = vadd.f32 0.0, %v4064
          %v4066 = vpop.f32.mrb[0].mxu0
          %4067 = vmatprep.mubr.bf16.mxu0 0
          %4068 = vmatmul.mubr.bf16.gmra.mrb[0].mxu0 %v3703
          %v4069 = vpop.f32.mrb[0].mxu0
          %v4070 = vadd.f32 0.0, %v4069
          %v4071 = vpop.f32.mrb[0].mxu0
          %v4072 = vpop.f32.mrb[0].mxu0
          %v4073 = vadd.f32 0.0, %v4072
          %v4074 = vpop.f32.mrb[0].mxu0
          %4075 = vmatprep.mubr.bf16.mxu0 0
          %4076 = vmatmul.mubr.bf16.gmra.mrb[0].mxu0 %v3704
          %v4077 = vpop.f32.mrb[0].mxu0
          %v4078 = vadd.f32 0.0, %v4077
          %v4079 = vpop.f32.mrb[0].mxu0
          %v4080 = vpop.f32.mrb[0].mxu0
          %v4081 = vadd.f32 0.0, %v4080
          %v4082 = vpop.f32.mrb[0].mxu0
          %4083 = vmatprep.mubr.bf16.mxu0 0
          %4084 = vmatmul.mubr.bf16.gmra.mrb[0].mxu0 %v3705
          %v4085 = vpop.f32.mrb[0].mxu0
          %v4086 = vadd.f32 0.0, %v4085
          %v4087 = vpop.f32.mrb[0].mxu0
          %v4088 = vpop.f32.mrb[0].mxu0
          %v4089 = vadd.f32 0.0, %v4088
          %v4090 = vpop.f32.mrb[0].mxu0
          %4091 = vmatprep.mubr.bf16.mxu0 0
          %4092 = vmatmul.mubr.bf16.gmra.mrb[0].mxu0 %v3706
          %v4093 = vpop.f32.mrb[0].mxu0
          %v4094 = vadd.f32 0.0, %v4093
          %v4095 = vpop.f32.mrb[0].mxu0
          %v4096 = vpop.f32.mrb[0].mxu0
          %v4097 = vadd.f32 0.0, %v4096
          %v4098 = vpop.f32.mrb[0].mxu0
          %4099 = vmatprep.mubr.bf16.mxu0 0
          %4100 = vmatmul.mubr.bf16.gmra.mrb[0].mxu0 %v3707
          %v4101 = vpop.f32.mrb[0].mxu0
          %v4102 = vadd.f32 0.0, %v4101
          %v4103 = vpop.f32.mrb[0].mxu0
          %v4104 = vpop.f32.mrb[0].mxu0
          %v4105 = vadd.f32 0.0, %v4104
          %v4106 = vpop.f32.mrb[0].mxu0
          %4107 = vmatprep.mubr.bf16.mxu0 0
          %4108 = vmatmul.mubr.bf16.gmra.mrb[0].mxu0 %v3708
          %v4109 = vpop.f32.mrb[0].mxu0
          %v4110 = vadd.f32 0.0, %v4109
          %v4111 = vpop.f32.mrb[0].mxu0
          %v4112 = vpop.f32.mrb[0].mxu0
          %v4113 = vadd.f32 0.0, %v4112
          %v4114 = vpop.f32.mrb[0].mxu0
          %4115 = vmatprep.mubr.bf16.mxu0 0
          %4116 = vmatmul.mubr.bf16.gmra.mrb[0].mxu0 %v3709
          %v4117 = vpop.f32.mrb[0].mxu0
          %v4118 = vadd.f32 0.0, %v4117
          %v4119 = vpop.f32.mrb[0].mxu0
          %v4120 = vpop.f32.mrb[0].mxu0
          %v4121 = vadd.f32 0.0, %v4120
          %v4122 = vpop.f32.mrb[0].mxu0
          %4123 = vdwg.mxu0
          %v4124 = vadd.f32 %v3947, %v4062
          %v4125 = vadd.f32 %v3948, %v4065
          %v4126 = vadd.f32 %v3949, %v4070
          %v4127 = vadd.f32 %v3950, %v4073
          %v4128 = vadd.f32 %v3951, %v4078
          %v4129 = vadd.f32 %v3952, %v4081
          %v4130 = vadd.f32 %v3953, %v4086
          %v4131 = vadd.f32 %v3954, %v4089
          %v4132 = vadd.f32 %v3955, %v4094
          %v4133 = vadd.f32 %v3956, %v4097
          %v4134 = vadd.f32 %v3957, %v4102
          %v4135 = vadd.f32 %v3958, %v4105
          %v4136 = vadd.f32 %v3959, %v4110
          %v4137 = vadd.f32 %v3960, %v4113
          %v4138 = vadd.f32 %v3961, %v4118
          %v4139 = vadd.f32 %v3962, %v4121
          %v4140 = vld [vmem:[%s585 + $0x50] sm:$0xff]
          %v4141 = vld [vmem:[%s585 + $0x58] sm:$0xff]
          %v4142 = vld [vmem:[%s585 + $0x60] sm:$0xff]
          %v4143 = vld [vmem:[%s585 + $0x68] sm:$0xff]
          %v4144 = vld [vmem:[%s585 + $0x70] sm:$0xff]
          %v4145 = vld [vmem:[%s585 + $0x78] sm:$0xff]
          %v4146 = vld [vmem:[%s585 + $0x80] sm:$0xff]
          %v4147 = vld [vmem:[%s585 + $0x88] sm:$0xff]
          %v4148 = vld [vmem:[%s585 + $0x90] sm:$0x1]
          %v4149 = vld [vmem:[%s1733] sm:$0xf]
          %v4150 = vld [vmem:[%s1733 + $0x4] sm:$0xf]
          %v4151 = vld [vmem:[%s1733 + $0x8] sm:$0xf]
          %v4152 = vld [vmem:[%s1733 + $0xc] sm:$0xf]
          %v4153 = vld [vmem:[%s1733 + $0x10] sm:$0xf]
          %v4154 = vld [vmem:[%s1733 + $0x14] sm:$0xf]
          %v4155 = vld [vmem:[%s1733 + $0x18] sm:$0xf]
          %v4156 = vld [vmem:[%s1733 + $0x1c] sm:$0xf]
          %v4157 = vld [vmem:[%s1733 + $0x20] sm:$0xf]
          %v4158 = vld [vmem:[%s1733 + $0x24] sm:$0xf]
          %v4159 = vld [vmem:[%s1733 + $0x28] sm:$0xf]
          %v4160 = vld [vmem:[%s1733 + $0x2c] sm:$0xf]
          %v4161 = vld [vmem:[%s1733 + $0x30] sm:$0xf]
          %v4162 = vld [vmem:[%s1733 + $0x34] sm:$0xf]
          %v4163 = vld [vmem:[%s1733 + $0x38] sm:$0xf]
          %v4164 = vld [vmem:[%s1733 + $0x3c] sm:$0xf]
          %v4166 = vshrl.u32 %v4140, 16
          %v4168 = vshll.u32 %v4140, 16
          %v4170 = vrot.slane %v4168, 1
          %v4171 = vor.u32 %v4166, %v4170
          %v4173 = vshll.u32 %v4141, 16
          %v4175 = vrot.slane %v4173, 1
          %v4176 = vsel %vm1750, %v4171, %v4175
          %v4177 = vshrl.u32 %v4141, 16
          %v4179 = vor.u32 %v4177, %v4175
          %v4181 = vshll.u32 %v4142, 16
          %v4183 = vrot.slane %v4181, 1
          %v4184 = vsel %vm1750, %v4179, %v4183
          %v4185 = vshrl.u32 %v4142, 16
          %v4187 = vor.u32 %v4185, %v4183
          %v4189 = vshll.u32 %v4143, 16
          %v4191 = vrot.slane %v4189, 1
          %v4192 = vsel %vm1750, %v4187, %v4191
          %v4193 = vshrl.u32 %v4143, 16
          %v4195 = vor.u32 %v4193, %v4191
          %v4197 = vshll.u32 %v4144, 16
          %v4199 = vrot.slane %v4197, 1
          %v4200 = vsel %vm1750, %v4195, %v4199
          %v4201 = vshrl.u32 %v4144, 16
          %v4203 = vor.u32 %v4201, %v4199
          %v4205 = vshll.u32 %v4145, 16
          %v4207 = vrot.slane %v4205, 1
          %v4208 = vsel %vm1750, %v4203, %v4207
          %v4209 = vshrl.u32 %v4145, 16
          %v4211 = vor.u32 %v4209, %v4207
          %v4213 = vshll.u32 %v4146, 16
          %v4215 = vrot.slane %v4213, 1
          %v4216 = vsel %vm1750, %v4211, %v4215
          %v4217 = vshrl.u32 %v4146, 16
          %v4219 = vor.u32 %v4217, %v4215
          %v4221 = vshll.u32 %v4147, 16
          %v4223 = vrot.slane %v4221, 1
          %v4224 = vsel %vm1750, %v4219, %v4223
          %v4225 = vshrl.u32 %v4147, 16
          %v4227 = vor.u32 %v4225, %v4223
          %v4229 = vshll.u32 %v4148, 16
          %v4231 = vrot.slane %v4229, 1
          %v4232 = vsel %vm1750, %v4227, %v4231
          %v4257 = vunpack.c.l.b16 %v4149
          %v4258 = vunpack.c.l.b16 %v4150
          %v4259 = vunpack.c.l.b16 %v4151
          %v4260 = vunpack.c.l.b16 %v4152
          %v4261 = vunpack.c.l.b16 %v4153
          %v4262 = vunpack.c.l.b16 %v4154
          %v4263 = vunpack.c.l.b16 %v4155
          %v4264 = vunpack.c.l.b16 %v4156
          %v4265 = vunpack.c.l.b16 %v4157
          %v4266 = vunpack.c.l.b16 %v4158
          %v4267 = vunpack.c.l.b16 %v4159
          %v4268 = vunpack.c.l.b16 %v4160
          %v4269 = vunpack.c.l.b16 %v4161
          %v4270 = vunpack.c.l.b16 %v4162
          %v4271 = vunpack.c.l.b16 %v4163
          %v4272 = vunpack.c.l.b16 %v4164
          %v4273 = vpack.c.b16 %v4258, %v4257
          %v4274 = vpack.c.b16 %v4260, %v4259
          %v4275 = vpack.c.b16 %v4262, %v4261
          %v4276 = vpack.c.b16 %v4264, %v4263
          %v4277 = vpack.c.b16 %v4266, %v4265
          %v4278 = vpack.c.b16 %v4268, %v4267
          %v4279 = vpack.c.b16 %v4270, %v4269
          %v4280 = vpack.c.b16 %v4272, %v4271
          %4289 = vmatprep.subr.bf16.mxu0 0
          %4290 = vmatpush1.bf16.msra.mxu0 %v4273
          %4291 = vmatprep.subr.bf16.mxu0 0
          %4292 = vmatpush1.bf16.msra.mxu0 %v4274
          %4293 = vmatprep.subr.bf16.mxu0 0
          %4294 = vmatpush1.bf16.msra.mxu0 %v4275
          %4295 = vmatprep.subr.bf16.mxu0 0
          %4296 = vmatpush1.bf16.msra.mxu0 %v4276
          %4297 = vmatprep.subr.bf16.mxu0 0
          %4298 = vmatpush1.bf16.msra.mxu0 %v4277
          %4299 = vmatprep.subr.bf16.mxu0 0
          %4300 = vmatpush1.bf16.msra.mxu0 %v4278
          %4301 = vmatprep.subr.bf16.mxu0 0
          %4302 = vmatpush1.bf16.msra.mxu0 %v4279
          %4303 = vmatprep.subr.bf16.mxu0 0
          %4304 = vmatpush1.bf16.msra.mxu0 %v4280
          %4305 = vmatprep.subr.bf16.mxu0 0
          %4306 = vmatpush1.bf16.msra.mxu0 0
          %4307 = vmatprep.subr.bf16.mxu0 0
          %4308 = vmatpush1.bf16.msra.mxu0 0
          %4309 = vmatprep.subr.bf16.mxu0 0
          %4310 = vmatpush1.bf16.msra.mxu0 0
          %4311 = vmatprep.subr.bf16.mxu0 0
          %4312 = vmatpush1.bf16.msra.mxu0 0
          %4313 = vmatprep.subr.bf16.mxu0 0
          %4314 = vmatpush1.bf16.msra.mxu0 0
          %4315 = vmatprep.subr.bf16.mxu0 0
          %4316 = vmatpush1.bf16.msra.mxu0 0
          %4317 = vmatprep.subr.bf16.mxu0 0
          %4318 = vmatpush1.bf16.msra.mxu0 0
          %4319 = vmatprep.subr.bf16.mxu0 0
          %4320 = vmatpush1.bf16.msra.mxu0 0
          %4321 = vmatprep.mubr.bf16.mxu0 0
          %4322 = vmatmul.mubr.bf16.gmra.mrb[0].mxu0 %v4176
          %v4323 = vpop.f32.mrb[0].mxu0
          %v4324 = vadd.f32 0.0, %v4323
          %v4325 = vpop.f32.mrb[0].mxu0
          %v4326 = vpop.f32.mrb[0].mxu0
          %v4327 = vadd.f32 0.0, %v4326
          %v4328 = vpop.f32.mrb[0].mxu0
          %4329 = vmatprep.mubr.bf16.mxu0 0
          %4330 = vmatmul.mubr.bf16.gmra.mrb[0].mxu0 %v4184
          %v4331 = vpop.f32.mrb[0].mxu0
          %v4332 = vadd.f32 0.0, %v4331
          %v4333 = vpop.f32.mrb[0].mxu0
          %v4334 = vpop.f32.mrb[0].mxu0
          %v4335 = vadd.f32 0.0, %v4334
          %v4336 = vpop.f32.mrb[0].mxu0
          %4337 = vmatprep.mubr.bf16.mxu0 0
          %4338 = vmatmul.mubr.bf16.gmra.mrb[0].mxu0 %v4192
          %v4339 = vpop.f32.mrb[0].mxu0
          %v4340 = vadd.f32 0.0, %v4339
          %v4341 = vpop.f32.mrb[0].mxu0
          %v4342 = vpop.f32.mrb[0].mxu0
          %v4343 = vadd.f32 0.0, %v4342
          %v4344 = vpop.f32.mrb[0].mxu0
          %4345 = vmatprep.mubr.bf16.mxu0 0
          %4346 = vmatmul.mubr.bf16.gmra.mrb[0].mxu0 %v4200
          %v4347 = vpop.f32.mrb[0].mxu0
          %v4348 = vadd.f32 0.0, %v4347
          %v4349 = vpop.f32.mrb[0].mxu0
          %v4350 = vpop.f32.mrb[0].mxu0
          %v4351 = vadd.f32 0.0, %v4350
          %v4352 = vpop.f32.mrb[0].mxu0
          %4353 = vmatprep.mubr.bf16.mxu0 0
          %4354 = vmatmul.mubr.bf16.gmra.mrb[0].mxu0 %v4208
          %v4355 = vpop.f32.mrb[0].mxu0
          %v4356 = vadd.f32 0.0, %v4355
          %v4357 = vpop.f32.mrb[0].mxu0
          %v4358 = vpop.f32.mrb[0].mxu0
          %v4359 = vadd.f32 0.0, %v4358
          %v4360 = vpop.f32.mrb[0].mxu0
          %4361 = vmatprep.mubr.bf16.mxu0 0
          %4362 = vmatmul.mubr.bf16.gmra.mrb[0].mxu0 %v4216
          %v4363 = vpop.f32.mrb[0].mxu0
          %v4364 = vadd.f32 0.0, %v4363
          %v4365 = vpop.f32.mrb[0].mxu0
          %v4366 = vpop.f32.mrb[0].mxu0
          %v4367 = vadd.f32 0.0, %v4366
          %v4368 = vpop.f32.mrb[0].mxu0
          %4369 = vmatprep.mubr.bf16.mxu0 0
          %4370 = vmatmul.mubr.bf16.gmra.mrb[0].mxu0 %v4224
          %v4371 = vpop.f32.mrb[0].mxu0
          %v4372 = vadd.f32 0.0, %v4371
          %v4373 = vpop.f32.mrb[0].mxu0
          %v4374 = vpop.f32.mrb[0].mxu0
          %v4375 = vadd.f32 0.0, %v4374
          %v4376 = vpop.f32.mrb[0].mxu0
          %4377 = vmatprep.mubr.bf16.mxu0 0
          %4378 = vmatmul.mubr.bf16.gmra.mrb[0].mxu0 %v4232
          %v4379 = vpop.f32.mrb[0].mxu0
          %v4380 = vadd.f32 0.0, %v4379
          %v4381 = vpop.f32.mrb[0].mxu0
          %v4382 = vpop.f32.mrb[0].mxu0
          %v4383 = vadd.f32 0.0, %v4382
          %v4384 = vpop.f32.mrb[0].mxu0
          %4385 = vdwg.mxu0
          %v4386 = vadd.f32 %v4124, %v4324
          %v4387 = vadd.f32 %v4125, %v4327
          %v4388 = vadd.f32 %v4126, %v4332
          %v4389 = vadd.f32 %v4127, %v4335
          %v4390 = vadd.f32 %v4128, %v4340
          %v4391 = vadd.f32 %v4129, %v4343
          %v4392 = vadd.f32 %v4130, %v4348
          %v4393 = vadd.f32 %v4131, %v4351
          %v4394 = vadd.f32 %v4132, %v4356
          %v4395 = vadd.f32 %v4133, %v4359
          %v4396 = vadd.f32 %v4134, %v4364
          %v4397 = vadd.f32 %v4135, %v4367
          %v4398 = vadd.f32 %v4136, %v4372
          %v4399 = vadd.f32 %v4137, %v4375
          %v4400 = vadd.f32 %v4138, %v4380
          %v4401 = vadd.f32 %v4139, %v4383
          %v4402 = vld [vmem:[%s585 + $0x58] sm:$0xff]
          %v4403 = vld [vmem:[%s585 + $0x60] sm:$0xff]
          %v4404 = vld [vmem:[%s585 + $0x68] sm:$0xff]
          %v4405 = vld [vmem:[%s585 + $0x70] sm:$0xff]
          %v4406 = vld [vmem:[%s585 + $0x78] sm:$0xff]
          %v4407 = vld [vmem:[%s585 + $0x80] sm:$0xff]
          %v4408 = vld [vmem:[%s585 + $0x88] sm:$0xff]
          %v4409 = vld [vmem:[%s585 + $0x90] sm:$0xff]
          %v4410 = vld [vmem:[%s585 + $0x98] sm:$0x1]
          %v4411 = vld [vmem:[%s2000] sm:$0xf]
          %v4412 = vld [vmem:[%s2000 + $0x4] sm:$0xf]
          %v4413 = vld [vmem:[%s2000 + $0x8] sm:$0xf]
          %v4414 = vld [vmem:[%s2000 + $0xc] sm:$0xf]
          %v4415 = vld [vmem:[%s2000 + $0x10] sm:$0xf]
          %v4416 = vld [vmem:[%s2000 + $0x14] sm:$0xf]
          %v4417 = vld [vmem:[%s2000 + $0x18] sm:$0xf]
          %v4418 = vld [vmem:[%s2000 + $0x1c] sm:$0xf]
          %v4419 = vld [vmem:[%s2000 + $0x20] sm:$0xf]
          %v4420 = vld [vmem:[%s2000 + $0x24] sm:$0xf]
          %v4421 = vld [vmem:[%s2000 + $0x28] sm:$0xf]
          %v4422 = vld [vmem:[%s2000 + $0x2c] sm:$0xf]
          %v4423 = vld [vmem:[%s2000 + $0x30] sm:$0xf]
          %v4424 = vld [vmem:[%s2000 + $0x34] sm:$0xf]
          %v4425 = vld [vmem:[%s2000 + $0x38] sm:$0xf]
          %v4426 = vld [vmem:[%s2000 + $0x3c] sm:$0xf]
          %v4428 = vshrl.u32 %v4402, 16
          %v4430 = vshll.u32 %v4402, 16
          %v4432 = vrot.slane %v4430, 1
          %v4433 = vor.u32 %v4428, %v4432
          %v4435 = vshll.u32 %v4403, 16
          %v4437 = vrot.slane %v4435, 1
          %v4438 = vsel %vm1750, %v4433, %v4437
          %v4439 = vshrl.u32 %v4403, 16
          %v4441 = vor.u32 %v4439, %v4437
          %v4443 = vshll.u32 %v4404, 16
          %v4445 = vrot.slane %v4443, 1
          %v4446 = vsel %vm1750, %v4441, %v4445
          %v4447 = vshrl.u32 %v4404, 16
          %v4449 = vor.u32 %v4447, %v4445
          %v4451 = vshll.u32 %v4405, 16
          %v4453 = vrot.slane %v4451, 1
          %v4454 = vsel %vm1750, %v4449, %v4453
          %v4455 = vshrl.u32 %v4405, 16
          %v4457 = vor.u32 %v4455, %v4453
          %v4459 = vshll.u32 %v4406, 16
          %v4461 = vrot.slane %v4459, 1
          %v4462 = vsel %vm1750, %v4457, %v4461
          %v4463 = vshrl.u32 %v4406, 16
          %v4465 = vor.u32 %v4463, %v4461
          %v4467 = vshll.u32 %v4407, 16
          %v4469 = vrot.slane %v4467, 1
          %v4470 = vsel %vm1750, %v4465, %v4469
          %v4471 = vshrl.u32 %v4407, 16
          %v4473 = vor.u32 %v4471, %v4469
          %v4475 = vshll.u32 %v4408, 16
          %v4477 = vrot.slane %v4475, 1
          %v4478 = vsel %vm1750, %v4473, %v4477
          %v4479 = vshrl.u32 %v4408, 16
          %v4481 = vor.u32 %v4479, %v4477
          %v4483 = vshll.u32 %v4409, 16
          %v4485 = vrot.slane %v4483, 1
          %v4486 = vsel %vm1750, %v4481, %v4485
          %v4487 = vshrl.u32 %v4409, 16
          %v4489 = vor.u32 %v4487, %v4485
          %v4491 = vshll.u32 %v4410, 16
          %v4493 = vrot.slane %v4491, 1
          %v4494 = vsel %vm1750, %v4489, %v4493
          %v4519 = vunpack.c.l.b16 %v4411
          %v4520 = vunpack.c.l.b16 %v4412
          %v4521 = vunpack.c.l.b16 %v4413
          %v4522 = vunpack.c.l.b16 %v4414
          %v4523 = vunpack.c.l.b16 %v4415
          %v4524 = vunpack.c.l.b16 %v4416
          %v4525 = vunpack.c.l.b16 %v4417
          %v4526 = vunpack.c.l.b16 %v4418
          %v4527 = vunpack.c.l.b16 %v4419
          %v4528 = vunpack.c.l.b16 %v4420
          %v4529 = vunpack.c.l.b16 %v4421
          %v4530 = vunpack.c.l.b16 %v4422
          %v4531 = vunpack.c.l.b16 %v4423
          %v4532 = vunpack.c.l.b16 %v4424
          %v4533 = vunpack.c.l.b16 %v4425
          %v4534 = vunpack.c.l.b16 %v4426
          %v4535 = vpack.c.b16 %v4520, %v4519
          %v4536 = vpack.c.b16 %v4522, %v4521
          %v4537 = vpack.c.b16 %v4524, %v4523
          %v4538 = vpack.c.b16 %v4526, %v4525
          %v4539 = vpack.c.b16 %v4528, %v4527
          %v4540 = vpack.c.b16 %v4530, %v4529
          %v4541 = vpack.c.b16 %v4532, %v4531
          %v4542 = vpack.c.b16 %v4534, %v4533
          %4551 = vmatprep.subr.bf16.mxu0 0
          %4552 = vmatpush1.bf16.msra.mxu0 %v4535
          %4553 = vmatprep.subr.bf16.mxu0 0
          %4554 = vmatpush1.bf16.msra.mxu0 %v4536
          %4555 = vmatprep.subr.bf16.mxu0 0
          %4556 = vmatpush1.bf16.msra.mxu0 %v4537
          %4557 = vmatprep.subr.bf16.mxu0 0
          %4558 = vmatpush1.bf16.msra.mxu0 %v4538
          %4559 = vmatprep.subr.bf16.mxu0 0
          %4560 = vmatpush1.bf16.msra.mxu0 %v4539
          %4561 = vmatprep.subr.bf16.mxu0 0
          %4562 = vmatpush1.bf16.msra.mxu0 %v4540
          %4563 = vmatprep.subr.bf16.mxu0 0
          %4564 = vmatpush1.bf16.msra.mxu0 %v4541
          %4565 = vmatprep.subr.bf16.mxu0 0
          %4566 = vmatpush1.bf16.msra.mxu0 %v4542
          %4567 = vmatprep.subr.bf16.mxu0 0
          %4568 = vmatpush1.bf16.msra.mxu0 0
          %4569 = vmatprep.subr.bf16.mxu0 0
          %4570 = vmatpush1.bf16.msra.mxu0 0
          %4571 = vmatprep.subr.bf16.mxu0 0
          %4572 = vmatpush1.bf16.msra.mxu0 0
          %4573 = vmatprep.subr.bf16.mxu0 0
          %4574 = vmatpush1.bf16.msra.mxu0 0
          %4575 = vmatprep.subr.bf16.mxu0 0
          %4576 = vmatpush1.bf16.msra.mxu0 0
          %4577 = vmatprep.subr.bf16.mxu0 0
          %4578 = vmatpush1.bf16.msra.mxu0 0
          %4579 = vmatprep.subr.bf16.mxu0 0
          %4580 = vmatpush1.bf16.msra.mxu0 0
          %4581 = vmatprep.subr.bf16.mxu0 0
          %4582 = vmatpush1.bf16.msra.mxu0 0
          %4583 = vmatprep.mubr.bf16.mxu0 0
          %4584 = vmatmul.mubr.bf16.gmra.mrb[0].mxu0 %v4438
          %v4585 = vpop.f32.mrb[0].mxu0
          %v4586 = vadd.f32 0.0, %v4585
          %v4587 = vpop.f32.mrb[0].mxu0
          %v4588 = vpop.f32.mrb[0].mxu0
          %v4589 = vadd.f32 0.0, %v4588
          %v4590 = vpop.f32.mrb[0].mxu0
          %4591 = vmatprep.mubr.bf16.mxu0 0
          %4592 = vmatmul.mubr.bf16.gmra.mrb[0].mxu0 %v4446
          %v4593 = vpop.f32.mrb[0].mxu0
          %v4594 = vadd.f32 0.0, %v4593
          %v4595 = vpop.f32.mrb[0].mxu0
          %v4596 = vpop.f32.mrb[0].mxu0
          %v4597 = vadd.f32 0.0, %v4596
          %v4598 = vpop.f32.mrb[0].mxu0
          %4599 = vmatprep.mubr.bf16.mxu0 0
          %4600 = vmatmul.mubr.bf16.gmra.mrb[0].mxu0 %v4454
          %v4601 = vpop.f32.mrb[0].mxu0
          %v4602 = vadd.f32 0.0, %v4601
          %v4603 = vpop.f32.mrb[0].mxu0
          %v4604 = vpop.f32.mrb[0].mxu0
          %v4605 = vadd.f32 0.0, %v4604
          %v4606 = vpop.f32.mrb[0].mxu0
          %4607 = vmatprep.mubr.bf16.mxu0 0
          %4608 = vmatmul.mubr.bf16.gmra.mrb[0].mxu0 %v4462
          %v4609 = vpop.f32.mrb[0].mxu0
          %v4610 = vadd.f32 0.0, %v4609
          %v4611 = vpop.f32.mrb[0].mxu0
          %v4612 = vpop.f32.mrb[0].mxu0
          %v4613 = vadd.f32 0.0, %v4612
          %v4614 = vpop.f32.mrb[0].mxu0
          %4615 = vmatprep.mubr.bf16.mxu0 0
          %4616 = vmatmul.mubr.bf16.gmra.mrb[0].mxu0 %v4470
          %v4617 = vpop.f32.mrb[0].mxu0
          %v4618 = vadd.f32 0.0, %v4617
          %v4619 = vpop.f32.mrb[0].mxu0
          %v4620 = vpop.f32.mrb[0].mxu0
          %v4621 = vadd.f32 0.0, %v4620
          %v4622 = vpop.f32.mrb[0].mxu0
          %4623 = vmatprep.mubr.bf16.mxu0 0
          %4624 = vmatmul.mubr.bf16.gmra.mrb[0].mxu0 %v4478
          %v4625 = vpop.f32.mrb[0].mxu0
          %v4626 = vadd.f32 0.0, %v4625
          %v4627 = vpop.f32.mrb[0].mxu0
          %v4628 = vpop.f32.mrb[0].mxu0
          %v4629 = vadd.f32 0.0, %v4628
          %v4630 = vpop.f32.mrb[0].mxu0
          %4631 = vmatprep.mubr.bf16.mxu0 0
          %4632 = vmatmul.mubr.bf16.gmra.mrb[0].mxu0 %v4486
          %v4633 = vpop.f32.mrb[0].mxu0
          %v4634 = vadd.f32 0.0, %v4633
          %v4635 = vpop.f32.mrb[0].mxu0
          %v4636 = vpop.f32.mrb[0].mxu0
          %v4637 = vadd.f32 0.0, %v4636
          %v4638 = vpop.f32.mrb[0].mxu0
          %4639 = vmatprep.mubr.bf16.mxu0 0
          %4640 = vmatmul.mubr.bf16.gmra.mrb[0].mxu0 %v4494
          %v4641 = vpop.f32.mrb[0].mxu0
          %v4642 = vadd.f32 0.0, %v4641
          %v4643 = vpop.f32.mrb[0].mxu0
          %v4644 = vpop.f32.mrb[0].mxu0
          %v4645 = vadd.f32 0.0, %v4644
          %v4646 = vpop.f32.mrb[0].mxu0
          %4647 = vdwg.mxu0
          %v4648 = vadd.f32 %v4386, %v4586
          %v4649 = vadd.f32 %v4387, %v4589
          %v4650 = vadd.f32 %v4388, %v4594
          %v4651 = vadd.f32 %v4389, %v4597
          %v4652 = vadd.f32 %v4390, %v4602
          %v4653 = vadd.f32 %v4391, %v4605
          %v4654 = vadd.f32 %v4392, %v4610
          %v4655 = vadd.f32 %v4393, %v4613
          %v4656 = vadd.f32 %v4394, %v4618
          %v4657 = vadd.f32 %v4395, %v4621
          %v4658 = vadd.f32 %v4396, %v4626
          %v4659 = vadd.f32 %v4397, %v4629
          %v4660 = vadd.f32 %v4398, %v4634
          %v4661 = vadd.f32 %v4399, %v4637
          %v4662 = vadd.f32 %v4400, %v4642
          %v4663 = vadd.f32 %v4401, %v4645
          %v4664 = vld [vmem:[%s585 + $0x58] sm:$0xfe]
          %v4665 = vld [vmem:[%s2258] sm:$0xf]
          %v4666 = vld [vmem:[%s2258 + $0x4] sm:$0xf]
          %v4667 = vld [vmem:[%s2258 + $0x8] sm:$0xf]
          %v4668 = vld [vmem:[%s2258 + $0xc] sm:$0xf]
          %v4669 = vld [vmem:[%s2258 + $0x10] sm:$0xf]
          %v4670 = vld [vmem:[%s2258 + $0x14] sm:$0xf]
          %v4671 = vld [vmem:[%s2258 + $0x18] sm:$0xf]
          %v4672 = vld [vmem:[%s2258 + $0x1c] sm:$0xf]
          %v4673 = vld [vmem:[%s2258 + $0x20] sm:$0xf]
          %v4674 = vld [vmem:[%s2258 + $0x24] sm:$0xf]
          %v4675 = vld [vmem:[%s2258 + $0x28] sm:$0xf]
          %v4676 = vld [vmem:[%s2258 + $0x2c] sm:$0xf]
          %v4677 = vld [vmem:[%s2258 + $0x30] sm:$0xf]
          %v4678 = vld [vmem:[%s2258 + $0x34] sm:$0xf]
          %v4679 = vld [vmem:[%s2258 + $0x38] sm:$0xf]
          %v4680 = vld [vmem:[%s2258 + $0x3c] sm:$0xf]
          %v4690 = vrot.slane %v4664, 1
          %v4691 = vrot.slane %v4403, 1
          %v4692 = vsel %vm2284, %v4690, %v4691
          %v4693 = vrot.slane %v4404, 1
          %v4694 = vsel %vm2284, %v4691, %v4693
          %v4695 = vrot.slane %v4405, 1
          %v4696 = vsel %vm2284, %v4693, %v4695
          %v4697 = vrot.slane %v4406, 1
          %v4698 = vsel %vm2284, %v4695, %v4697
          %v4699 = vrot.slane %v4407, 1
          %v4700 = vsel %vm2284, %v4697, %v4699
          %v4701 = vrot.slane %v4408, 1
          %v4702 = vsel %vm2284, %v4699, %v4701
          %v4703 = vrot.slane %v4409, 1
          %v4704 = vsel %vm2284, %v4701, %v4703
          %v4705 = vrot.slane %v4410, 1
          %v4706 = vsel %vm2284, %v4703, %v4705
          %v4731 = vunpack.c.l.b16 %v4665
          %v4732 = vunpack.c.l.b16 %v4666
          %v4733 = vunpack.c.l.b16 %v4667
          %v4734 = vunpack.c.l.b16 %v4668
          %v4735 = vunpack.c.l.b16 %v4669
          %v4736 = vunpack.c.l.b16 %v4670
          %v4737 = vunpack.c.l.b16 %v4671
          %v4738 = vunpack.c.l.b16 %v4672
          %v4739 = vunpack.c.l.b16 %v4673
          %v4740 = vunpack.c.l.b16 %v4674
          %v4741 = vunpack.c.l.b16 %v4675
          %v4742 = vunpack.c.l.b16 %v4676
          %v4743 = vunpack.c.l.b16 %v4677
          %v4744 = vunpack.c.l.b16 %v4678
          %v4745 = vunpack.c.l.b16 %v4679
          %v4746 = vunpack.c.l.b16 %v4680
          %v4747 = vpack.c.b16 %v4732, %v4731
          %v4748 = vpack.c.b16 %v4734, %v4733
          %v4749 = vpack.c.b16 %v4736, %v4735
          %v4750 = vpack.c.b16 %v4738, %v4737
          %v4751 = vpack.c.b16 %v4740, %v4739
          %v4752 = vpack.c.b16 %v4742, %v4741
          %v4753 = vpack.c.b16 %v4744, %v4743
          %v4754 = vpack.c.b16 %v4746, %v4745
          %4763 = vmatprep.subr.bf16.mxu0 0
          %4764 = vmatpush1.bf16.msra.mxu0 %v4747
          %4765 = vmatprep.subr.bf16.mxu0 0
          %4766 = vmatpush1.bf16.msra.mxu0 %v4748
          %4767 = vmatprep.subr.bf16.mxu0 0
          %4768 = vmatpush1.bf16.msra.mxu0 %v4749
          %4769 = vmatprep.subr.bf16.mxu0 0
          %4770 = vmatpush1.bf16.msra.mxu0 %v4750
          %4771 = vmatprep.subr.bf16.mxu0 0
          %4772 = vmatpush1.bf16.msra.mxu0 %v4751
          %4773 = vmatprep.subr.bf16.mxu0 0
          %4774 = vmatpush1.bf16.msra.mxu0 %v4752
          %4775 = vmatprep.subr.bf16.mxu0 0
          %4776 = vmatpush1.bf16.msra.mxu0 %v4753
          %4777 = vmatprep.subr.bf16.mxu0 0
          %4778 = vmatpush1.bf16.msra.mxu0 %v4754
          %4779 = vmatprep.subr.bf16.mxu0 0
          %4780 = vmatpush1.bf16.msra.mxu0 0
          %4781 = vmatprep.subr.bf16.mxu0 0
          %4782 = vmatpush1.bf16.msra.mxu0 0
          %4783 = vmatprep.subr.bf16.mxu0 0
          %4784 = vmatpush1.bf16.msra.mxu0 0
          %4785 = vmatprep.subr.bf16.mxu0 0
          %4786 = vmatpush1.bf16.msra.mxu0 0
          %4787 = vmatprep.subr.bf16.mxu0 0
          %4788 = vmatpush1.bf16.msra.mxu0 0
          %4789 = vmatprep.subr.bf16.mxu0 0
          %4790 = vmatpush1.bf16.msra.mxu0 0
          %4791 = vmatprep.subr.bf16.mxu0 0
          %4792 = vmatpush1.bf16.msra.mxu0 0
          %4793 = vmatprep.subr.bf16.mxu0 0
          %4794 = vmatpush1.bf16.msra.mxu0 0
          %4795 = vmatprep.mubr.bf16.mxu0 0
          %4796 = vmatmul.mubr.bf16.gmra.mrb[0].mxu0 %v4692
          %v4797 = vpop.f32.mrb[0].mxu0
          %v4798 = vadd.f32 0.0, %v4797
          %v4799 = vpop.f32.mrb[0].mxu0
          %v4800 = vpop.f32.mrb[0].mxu0
          %v4801 = vadd.f32 0.0, %v4800
          %v4802 = vpop.f32.mrb[0].mxu0
          %4803 = vmatprep.mubr.bf16.mxu0 0
          %4804 = vmatmul.mubr.bf16.gmra.mrb[0].mxu0 %v4694
          %v4805 = vpop.f32.mrb[0].mxu0
          %v4806 = vadd.f32 0.0, %v4805
          %v4807 = vpop.f32.mrb[0].mxu0
          %v4808 = vpop.f32.mrb[0].mxu0
          %v4809 = vadd.f32 0.0, %v4808
          %v4810 = vpop.f32.mrb[0].mxu0
          %4811 = vmatprep.mubr.bf16.mxu0 0
          %4812 = vmatmul.mubr.bf16.gmra.mrb[0].mxu0 %v4696
          %v4813 = vpop.f32.mrb[0].mxu0
          %v4814 = vadd.f32 0.0, %v4813
          %v4815 = vpop.f32.mrb[0].mxu0
          %v4816 = vpop.f32.mrb[0].mxu0
          %v4817 = vadd.f32 0.0, %v4816
          %v4818 = vpop.f32.mrb[0].mxu0
          %4819 = vmatprep.mubr.bf16.mxu0 0
          %4820 = vmatmul.mubr.bf16.gmra.mrb[0].mxu0 %v4698
          %v4821 = vpop.f32.mrb[0].mxu0
          %v4822 = vadd.f32 0.0, %v4821
          %v4823 = vpop.f32.mrb[0].mxu0
          %v4824 = vpop.f32.mrb[0].mxu0
          %v4825 = vadd.f32 0.0, %v4824
          %v4826 = vpop.f32.mrb[0].mxu0
          %4827 = vmatprep.mubr.bf16.mxu0 0
          %4828 = vmatmul.mubr.bf16.gmra.mrb[0].mxu0 %v4700
          %v4829 = vpop.f32.mrb[0].mxu0
          %v4830 = vadd.f32 0.0, %v4829
          %v4831 = vpop.f32.mrb[0].mxu0
          %v4832 = vpop.f32.mrb[0].mxu0
          %v4833 = vadd.f32 0.0, %v4832
          %v4834 = vpop.f32.mrb[0].mxu0
          %4835 = vmatprep.mubr.bf16.mxu0 0
          %4836 = vmatmul.mubr.bf16.gmra.mrb[0].mxu0 %v4702
          %v4837 = vpop.f32.mrb[0].mxu0
          %v4838 = vadd.f32 0.0, %v4837
          %v4839 = vpop.f32.mrb[0].mxu0
          %v4840 = vpop.f32.mrb[0].mxu0
          %v4841 = vadd.f32 0.0, %v4840
          %v4842 = vpop.f32.mrb[0].mxu0
          %4843 = vmatprep.mubr.bf16.mxu0 0
          %4844 = vmatmul.mubr.bf16.gmra.mrb[0].mxu0 %v4704
          %v4845 = vpop.f32.mrb[0].mxu0
          %v4846 = vadd.f32 0.0, %v4845
          %v4847 = vpop.f32.mrb[0].mxu0
          %v4848 = vpop.f32.mrb[0].mxu0
          %v4849 = vadd.f32 0.0, %v4848
          %v4850 = vpop.f32.mrb[0].mxu0
          %4851 = vmatprep.mubr.bf16.mxu0 0
          %4852 = vmatmul.mubr.bf16.gmra.mrb[0].mxu0 %v4706
          %v4853 = vpop.f32.mrb[0].mxu0
          %v4854 = vadd.f32 0.0, %v4853
          %v4855 = vpop.f32.mrb[0].mxu0
          %v4856 = vpop.f32.mrb[0].mxu0
          %v4857 = vadd.f32 0.0, %v4856
          %v4858 = vpop.f32.mrb[0].mxu0
          %4859 = vdwg.mxu0
          %v4860 = vadd.f32 %v4648, %v4798
          %v4861 = vadd.f32 %v4649, %v4801
          %v4862 = vadd.f32 %v4650, %v4806
          %v4863 = vadd.f32 %v4651, %v4809
          %v4864 = vadd.f32 %v4652, %v4814
          %v4865 = vadd.f32 %v4653, %v4817
          %v4866 = vadd.f32 %v4654, %v4822
          %v4867 = vadd.f32 %v4655, %v4825
          %v4868 = vadd.f32 %v4656, %v4830
          %v4869 = vadd.f32 %v4657, %v4833
          %v4870 = vadd.f32 %v4658, %v4838
          %v4871 = vadd.f32 %v4659, %v4841
          %v4872 = vadd.f32 %v4660, %v4846
          %v4873 = vadd.f32 %v4661, %v4849
          %v4874 = vadd.f32 %v4662, %v4854
          %v4875 = vadd.f32 %v4663, %v4857
          %v4876 = vld [vmem:[%s585 + $0x98] sm:$0x3]
          %v4877 = vld [vmem:[%s2475] sm:$0xf]
          %v4878 = vld [vmem:[%s2475 + $0x4] sm:$0xf]
          %v4879 = vld [vmem:[%s2475 + $0x8] sm:$0xf]
          %v4880 = vld [vmem:[%s2475 + $0xc] sm:$0xf]
          %v4881 = vld [vmem:[%s2475 + $0x10] sm:$0xf]
          %v4882 = vld [vmem:[%s2475 + $0x14] sm:$0xf]
          %v4883 = vld [vmem:[%s2475 + $0x18] sm:$0xf]
          %v4884 = vld [vmem:[%s2475 + $0x1c] sm:$0xf]
          %v4885 = vld [vmem:[%s2475 + $0x20] sm:$0xf]
          %v4886 = vld [vmem:[%s2475 + $0x24] sm:$0xf]
          %v4887 = vld [vmem:[%s2475 + $0x28] sm:$0xf]
          %v4888 = vld [vmem:[%s2475 + $0x2c] sm:$0xf]
          %v4889 = vld [vmem:[%s2475 + $0x30] sm:$0xf]
          %v4890 = vld [vmem:[%s2475 + $0x34] sm:$0xf]
          %v4891 = vld [vmem:[%s2475 + $0x38] sm:$0xf]
          %v4892 = vld [vmem:[%s2475 + $0x3c] sm:$0xf]
          %v4894 = vshrl.u32 %v4664, 16
          %v4896 = vrot.slane %v4894, 1
          %v4897 = vshll.u32 %v4664, 16
          %v4899 = vrot.slane %v4897, 2
          %v4900 = vor.u32 %v4896, %v4899
          %v4901 = vrot.slane %v4439, 1
          %v4902 = vrot.slane %v4435, 2
          %v4903 = vor.u32 %v4901, %v4902
          %v4904 = vsel %vm2492, %v4900, %v4903
          %v4905 = vrot.slane %v4447, 1
          %v4906 = vrot.slane %v4443, 2
          %v4907 = vor.u32 %v4905, %v4906
          %v4908 = vsel %vm2492, %v4903, %v4907
          %v4909 = vrot.slane %v4455, 1
          %v4910 = vrot.slane %v4451, 2
          %v4911 = vor.u32 %v4909, %v4910
          %v4912 = vsel %vm2492, %v4907, %v4911
          %v4913 = vrot.slane %v4463, 1
          %v4914 = vrot.slane %v4459, 2
          %v4915 = vor.u32 %v4913, %v4914
          %v4916 = vsel %vm2492, %v4911, %v4915
          %v4917 = vrot.slane %v4471, 1
          %v4918 = vrot.slane %v4467, 2
          %v4919 = vor.u32 %v4917, %v4918
          %v4920 = vsel %vm2492, %v4915, %v4919
          %v4921 = vrot.slane %v4479, 1
          %v4922 = vrot.slane %v4475, 2
          %v4923 = vor.u32 %v4921, %v4922
          %v4924 = vsel %vm2492, %v4919, %v4923
          %v4925 = vrot.slane %v4487, 1
          %v4926 = vrot.slane %v4483, 2
          %v4927 = vor.u32 %v4925, %v4926
          %v4928 = vsel %vm2492, %v4923, %v4927
          %v4930 = vshrl.u32 %v4876, 16
          %v4932 = vrot.slane %v4930, 1
          %v4933 = vshll.u32 %v4876, 16
          %v4935 = vrot.slane %v4933, 2
          %v4936 = vor.u32 %v4932, %v4935
          %v4937 = vsel %vm2492, %v4927, %v4936
          %v4962 = vunpack.c.l.b16 %v4877
          %v4963 = vunpack.c.l.b16 %v4878
          %v4964 = vunpack.c.l.b16 %v4879
          %v4965 = vunpack.c.l.b16 %v4880
          %v4966 = vunpack.c.l.b16 %v4881
          %v4967 = vunpack.c.l.b16 %v4882
          %v4968 = vunpack.c.l.b16 %v4883
          %v4969 = vunpack.c.l.b16 %v4884
          %v4970 = vunpack.c.l.b16 %v4885
          %v4971 = vunpack.c.l.b16 %v4886
          %v4972 = vunpack.c.l.b16 %v4887
          %v4973 = vunpack.c.l.b16 %v4888
          %v4974 = vunpack.c.l.b16 %v4889
          %v4975 = vunpack.c.l.b16 %v4890
          %v4976 = vunpack.c.l.b16 %v4891
          %v4977 = vunpack.c.l.b16 %v4892
          %v4978 = vpack.c.b16 %v4963, %v4962
          %v4979 = vpack.c.b16 %v4965, %v4964
          %v4980 = vpack.c.b16 %v4967, %v4966
          %v4981 = vpack.c.b16 %v4969, %v4968
          %v4982 = vpack.c.b16 %v4971, %v4970
          %v4983 = vpack.c.b16 %v4973, %v4972
          %v4984 = vpack.c.b16 %v4975, %v4974
          %v4985 = vpack.c.b16 %v4977, %v4976
          %4994 = vmatprep.subr.bf16.mxu0 0
          %4995 = vmatpush1.bf16.msra.mxu0 %v4978
          %4996 = vmatprep.subr.bf16.mxu0 0
          %4997 = vmatpush1.bf16.msra.mxu0 %v4979
          %4998 = vmatprep.subr.bf16.mxu0 0
          %4999 = vmatpush1.bf16.msra.mxu0 %v4980
          %5000 = vmatprep.subr.bf16.mxu0 0
          %5001 = vmatpush1.bf16.msra.mxu0 %v4981
          %5002 = vmatprep.subr.bf16.mxu0 0
          %5003 = vmatpush1.bf16.msra.mxu0 %v4982
          %5004 = vmatprep.subr.bf16.mxu0 0
          %5005 = vmatpush1.bf16.msra.mxu0 %v4983
          %5006 = vmatprep.subr.bf16.mxu0 0
          %5007 = vmatpush1.bf16.msra.mxu0 %v4984
          %5008 = vmatprep.subr.bf16.mxu0 0
          %5009 = vmatpush1.bf16.msra.mxu0 %v4985
          %5010 = vmatprep.subr.bf16.mxu0 0
          %5011 = vmatpush1.bf16.msra.mxu0 0
          %5012 = vmatprep.subr.bf16.mxu0 0
          %5013 = vmatpush1.bf16.msra.mxu0 0
          %5014 = vmatprep.subr.bf16.mxu0 0
          %5015 = vmatpush1.bf16.msra.mxu0 0
          %5016 = vmatprep.subr.bf16.mxu0 0
          %5017 = vmatpush1.bf16.msra.mxu0 0
          %5018 = vmatprep.subr.bf16.mxu0 0
          %5019 = vmatpush1.bf16.msra.mxu0 0
          %5020 = vmatprep.subr.bf16.mxu0 0
          %5021 = vmatpush1.bf16.msra.mxu0 0
          %5022 = vmatprep.subr.bf16.mxu0 0
          %5023 = vmatpush1.bf16.msra.mxu0 0
          %5024 = vmatprep.subr.bf16.mxu0 0
          %5025 = vmatpush1.bf16.msra.mxu0 0
          %5026 = vmatprep.mubr.bf16.mxu0 0
          %5027 = vmatmul.mubr.bf16.gmra.mrb[0].mxu0 %v4904
          %v5028 = vpop.f32.mrb[0].mxu0
          %v5029 = vadd.f32 0.0, %v5028
          %v5030 = vpop.f32.mrb[0].mxu0
          %v5031 = vpop.f32.mrb[0].mxu0
          %v5032 = vadd.f32 0.0, %v5031
          %v5033 = vpop.f32.mrb[0].mxu0
          %5034 = vmatprep.mubr.bf16.mxu0 0
          %5035 = vmatmul.mubr.bf16.gmra.mrb[0].mxu0 %v4908
          %v5036 = vpop.f32.mrb[0].mxu0
          %v5037 = vadd.f32 0.0, %v5036
          %v5038 = vpop.f32.mrb[0].mxu0
          %v5039 = vpop.f32.mrb[0].mxu0
          %v5040 = vadd.f32 0.0, %v5039
          %v5041 = vpop.f32.mrb[0].mxu0
          %5042 = vmatprep.mubr.bf16.mxu0 0
          %5043 = vmatmul.mubr.bf16.gmra.mrb[0].mxu0 %v4912
          %v5044 = vpop.f32.mrb[0].mxu0
          %v5045 = vadd.f32 0.0, %v5044
          %v5046 = vpop.f32.mrb[0].mxu0
          %v5047 = vpop.f32.mrb[0].mxu0
          %v5048 = vadd.f32 0.0, %v5047
          %v5049 = vpop.f32.mrb[0].mxu0
          %5050 = vmatprep.mubr.bf16.mxu0 0
          %5051 = vmatmul.mubr.bf16.gmra.mrb[0].mxu0 %v4916
          %v5052 = vpop.f32.mrb[0].mxu0
          %v5053 = vadd.f32 0.0, %v5052
          %v5054 = vpop.f32.mrb[0].mxu0
          %v5055 = vpop.f32.mrb[0].mxu0
          %v5056 = vadd.f32 0.0, %v5055
          %v5057 = vpop.f32.mrb[0].mxu0
          %5058 = vmatprep.mubr.bf16.mxu0 0
          %5059 = vmatmul.mubr.bf16.gmra.mrb[0].mxu0 %v4920
          %v5060 = vpop.f32.mrb[0].mxu0
          %v5061 = vadd.f32 0.0, %v5060
          %v5062 = vpop.f32.mrb[0].mxu0
          %v5063 = vpop.f32.mrb[0].mxu0
          %v5064 = vadd.f32 0.0, %v5063
          %v5065 = vpop.f32.mrb[0].mxu0
          %5066 = vmatprep.mubr.bf16.mxu0 0
          %5067 = vmatmul.mubr.bf16.gmra.mrb[0].mxu0 %v4924
          %v5068 = vpop.f32.mrb[0].mxu0
          %v5069 = vadd.f32 0.0, %v5068
          %v5070 = vpop.f32.mrb[0].mxu0
          %v5071 = vpop.f32.mrb[0].mxu0
          %v5072 = vadd.f32 0.0, %v5071
          %v5073 = vpop.f32.mrb[0].mxu0
          %5074 = vmatprep.mubr.bf16.mxu0 0
          %5075 = vmatmul.mubr.bf16.gmra.mrb[0].mxu0 %v4928
          %v5076 = vpop.f32.mrb[0].mxu0
          %v5077 = vadd.f32 0.0, %v5076
          %v5078 = vpop.f32.mrb[0].mxu0
          %v5079 = vpop.f32.mrb[0].mxu0
          %v5080 = vadd.f32 0.0, %v5079
          %v5081 = vpop.f32.mrb[0].mxu0
          %5082 = vmatprep.mubr.bf16.mxu0 0
          %5083 = vmatmul.mubr.bf16.gmra.mrb[0].mxu0 %v4937
          %v5084 = vpop.f32.mrb[0].mxu0
          %v5085 = vadd.f32 0.0, %v5084
          %v5086 = vpop.f32.mrb[0].mxu0
          %v5087 = vpop.f32.mrb[0].mxu0
          %v5088 = vadd.f32 0.0, %v5087
          %v5089 = vpop.f32.mrb[0].mxu0
          %5090 = vdwg.mxu0
          %v5091 = vadd.f32 %v4860, %v5029
          %v5092 = vadd.f32 %v4861, %v5032
          %v5093 = vadd.f32 %v4862, %v5037
          %v5094 = vadd.f32 %v4863, %v5040
          %v5095 = vadd.f32 %v4864, %v5045
          %v5096 = vadd.f32 %v4865, %v5048
          %v5097 = vadd.f32 %v4866, %v5053
          %v5098 = vadd.f32 %v4867, %v5056
          %v5099 = vadd.f32 %v4868, %v5061
          %v5100 = vadd.f32 %v4869, %v5064
          %v5101 = vadd.f32 %v4870, %v5069
          %v5102 = vadd.f32 %v4871, %v5072
          %v5103 = vadd.f32 %v4872, %v5077
          %v5104 = vadd.f32 %v4873, %v5080
          %v5105 = vadd.f32 %v4874, %v5085
          %v5106 = vadd.f32 %v4875, %v5088
          %v5107 = vmul.f32 %v5091, %v2711
          %v5108 = vmul.f32 %v5092, %v2711
          %v5109 = vmul.f32 %v5093, %v2711
          %v5110 = vmul.f32 %v5094, %v2711
          %v5111 = vmul.f32 %v5095, %v2711
          %v5112 = vmul.f32 %v5096, %v2711
          %v5113 = vmul.f32 %v5097, %v2711
          %v5114 = vmul.f32 %v5098, %v2711
          %v5115 = vmul.f32 %v5099, %v2711
          %v5116 = vmul.f32 %v5100, %v2711
          %v5117 = vmul.f32 %v5101, %v2711
          %v5118 = vmul.f32 %v5102, %v2711
          %v5119 = vmul.f32 %v5103, %v2711
          %v5120 = vmul.f32 %v5104, %v2711
          %v5121 = vmul.f32 %v5105, %v2711
          %v5122 = vmul.f32 %v5106, %v2711
          %v5123 = vadd.f32 %v5107, %v2733
          %v5124 = vadd.f32 %v5108, %v2733
          %v5125 = vadd.f32 %v5109, %v2733
          %v5126 = vadd.f32 %v5110, %v2733
          %v5127 = vadd.f32 %v5111, %v2733
          %v5128 = vadd.f32 %v5112, %v2733
          %v5129 = vadd.f32 %v5113, %v2733
          %v5130 = vadd.f32 %v5114, %v2733
          %v5131 = vadd.f32 %v5115, %v2733
          %v5132 = vadd.f32 %v5116, %v2733
          %v5133 = vadd.f32 %v5117, %v2733
          %v5134 = vadd.f32 %v5118, %v2733
          %v5135 = vadd.f32 %v5119, %v2733
          %v5136 = vadd.f32 %v5120, %v2733
          %v5137 = vadd.f32 %v5121, %v2733
          %v5138 = vadd.f32 %v5122, %v2733
          %v5139 = vld [vmem:[#allocation3 + $0x80] sm:$0xff]
          %v5140 = vld [vmem:[#allocation3 + $0x88] sm:$0xff]
          %v5141 = vld [vmem:[#allocation3 + $0x90] sm:$0xff]
          %v5142 = vld [vmem:[#allocation3 + $0x98] sm:$0xff]
          %v5143 = vld [vmem:[#allocation3 + $0xa0] sm:$0xff]
          %v5144 = vld [vmem:[#allocation3 + $0xa8] sm:$0xff]
          %v5145 = vld [vmem:[#allocation3 + $0xb0] sm:$0xff]
          %v5146 = vld [vmem:[#allocation3 + $0xb8] sm:$0xff]
          %v5147 = vld [vmem:[#allocation3 + $0xc0] sm:$0xff]
          %v5148 = vld [vmem:[#allocation3 + $0xc8] sm:$0xff]
          %v5149 = vld [vmem:[#allocation3 + $0xd0] sm:$0xff]
          %v5150 = vld [vmem:[#allocation3 + $0xd8] sm:$0xff]
          %v5151 = vld [vmem:[#allocation3 + $0xe0] sm:$0xff]
          %v5152 = vld [vmem:[#allocation3 + $0xe8] sm:$0xff]
          %v5153 = vld [vmem:[#allocation3 + $0xf0] sm:$0xff]
          %v5154 = vld [vmem:[#allocation3 + $0xf8] sm:$0xff]
          %v5155 = vsel %vm2769, %v5139, 0.0
          %v5156 = vsel %vm2769, %v5140, 0.0
          %v5157 = vsel %vm2769, %v5141, 0.0
          %v5158 = vsel %vm2769, %v5142, 0.0
          %v5159 = vsel %vm2769, %v5143, 0.0
          %v5160 = vsel %vm2769, %v5144, 0.0
          %v5161 = vsel %vm2769, %v5145, 0.0
          %v5162 = vsel %vm2769, %v5146, 0.0
          %v5163 = vsel %vm2769, %v5147, 0.0
          %v5164 = vsel %vm2769, %v5148, 0.0
          %v5165 = vsel %vm2769, %v5149, 0.0
          %v5166 = vsel %vm2769, %v5150, 0.0
          %v5167 = vsel %vm2769, %v5151, 0.0
          %v5168 = vsel %vm2769, %v5152, 0.0
          %v5169 = vsel %vm2769, %v5153, 0.0
          %v5170 = vsel %vm2769, %v5154, 0.0
          %v5171 = vadd.f32 %v5123, %v5155
          %v5172 = vadd.f32 %v5124, %v5156
          %v5173 = vadd.f32 %v5125, %v5157
          %v5174 = vadd.f32 %v5126, %v5158
          %v5175 = vadd.f32 %v5127, %v5159
          %v5176 = vadd.f32 %v5128, %v5160
          %v5177 = vadd.f32 %v5129, %v5161
          %v5178 = vadd.f32 %v5130, %v5162
          %v5179 = vadd.f32 %v5131, %v5163
          %v5180 = vadd.f32 %v5132, %v5164
          %v5181 = vadd.f32 %v5133, %v5165
          %v5182 = vadd.f32 %v5134, %v5166
          %v5183 = vadd.f32 %v5135, %v5167
          %v5184 = vadd.f32 %v5136, %v5168
          %v5185 = vadd.f32 %v5137, %v5169
          %v5186 = vadd.f32 %v5138, %v5170
          %v5187 = vmax.f32 %v5171, %v2802
          %v5188 = vmax.f32 %v5172, %v2802
          %v5189 = vmax.f32 %v5173, %v2802
          %v5190 = vmax.f32 %v5174, %v2802
          %v5191 = vmax.f32 %v5175, %v2802
          %v5192 = vmax.f32 %v5176, %v2802
          %v5193 = vmax.f32 %v5177, %v2802
          %v5194 = vmax.f32 %v5178, %v2802
          %v5195 = vmax.f32 %v5179, %v2802
          %v5196 = vmax.f32 %v5180, %v2802
          %v5197 = vmax.f32 %v5181, %v2802
          %v5198 = vmax.f32 %v5182, %v2802
          %v5199 = vmax.f32 %v5183, %v2802
          %v5200 = vmax.f32 %v5184, %v2802
          %v5201 = vmax.f32 %v5185, %v2802
          %v5202 = vmax.f32 %v5186, %v2802
          %v5203 = vld [vmem:[%s1 + $0x40] sm:$0xf]
          %v5204 = vld [vmem:[%s1 + $0x44] sm:$0xf]
          %v5205 = vld [vmem:[%s1 + $0x48] sm:$0xf]
          %v5206 = vld [vmem:[%s1 + $0x4c] sm:$0xf]
          %v5207 = vld [vmem:[%s1 + $0x50] sm:$0xf]
          %v5208 = vld [vmem:[%s1 + $0x54] sm:$0xf]
          %v5209 = vld [vmem:[%s1 + $0x58] sm:$0xf]
          %v5210 = vld [vmem:[%s1 + $0x5c] sm:$0xf]
          %v5211 = vld [vmem:[%s1 + $0x60] sm:$0xf]
          %v5212 = vld [vmem:[%s1 + $0x64] sm:$0xf]
          %v5213 = vld [vmem:[%s1 + $0x68] sm:$0xf]
          %v5214 = vld [vmem:[%s1 + $0x6c] sm:$0xf]
          %v5215 = vld [vmem:[%s1 + $0x70] sm:$0xf]
          %v5216 = vld [vmem:[%s1 + $0x74] sm:$0xf]
          %v5217 = vld [vmem:[%s1 + $0x78] sm:$0xf]
          %v5218 = vld [vmem:[%s1 + $0x7c] sm:$0xf]
          %vm5219 = vcmp.gt.bf16.partialorder %v5203, 0
          %vm5220 = vcmp.gt.bf16.partialorder %v5204, 0
          %vm5221 = vcmp.gt.bf16.partialorder %v5205, 0
          %vm5222 = vcmp.gt.bf16.partialorder %v5206, 0
          %vm5223 = vcmp.gt.bf16.partialorder %v5207, 0
          %vm5224 = vcmp.gt.bf16.partialorder %v5208, 0
          %vm5225 = vcmp.gt.bf16.partialorder %v5209, 0
          %vm5226 = vcmp.gt.bf16.partialorder %v5210, 0
          %vm5227 = vcmp.gt.bf16.partialorder %v5211, 0
          %vm5228 = vcmp.gt.bf16.partialorder %v5212, 0
          %vm5229 = vcmp.gt.bf16.partialorder %v5213, 0
          %vm5230 = vcmp.gt.bf16.partialorder %v5214, 0
          %vm5231 = vcmp.gt.bf16.partialorder %v5215, 0
          %vm5232 = vcmp.gt.bf16.partialorder %v5216, 0
          %vm5233 = vcmp.gt.bf16.partialorder %v5217, 0
          %vm5234 = vcmp.gt.bf16.partialorder %v5218, 0
          %v5235 = vpack.c.bf16 %v5188, %v5187
          %v5236 = vpack.c.bf16 %v5190, %v5189
          %v5237 = vpack.c.bf16 %v5192, %v5191
          %v5238 = vpack.c.bf16 %v5194, %v5193
          %v5239 = vpack.c.bf16 %v5196, %v5195
          %v5240 = vpack.c.bf16 %v5198, %v5197
          %v5241 = vpack.c.bf16 %v5200, %v5199
          %v5242 = vpack.c.bf16 %v5202, %v5201
          %v5251 = vunpack.c.l.b16 %v5235
          %v5252 = vunpack.c.h.b16 %v5235
          %v5253 = vunpack.c.l.b16 %v5236
          %v5254 = vunpack.c.h.b16 %v5236
          %v5255 = vunpack.c.l.b16 %v5237
          %v5256 = vunpack.c.h.b16 %v5237
          %v5257 = vunpack.c.l.b16 %v5238
          %v5258 = vunpack.c.h.b16 %v5238
          %v5259 = vunpack.c.l.b16 %v5239
          %v5260 = vunpack.c.h.b16 %v5239
          %v5261 = vunpack.c.l.b16 %v5240
          %v5262 = vunpack.c.h.b16 %v5240
          %v5263 = vunpack.c.l.b16 %v5241
          %v5264 = vunpack.c.h.b16 %v5241
          %v5265 = vunpack.c.l.b16 %v5242
          %v5266 = vunpack.c.h.b16 %v5242
          %v5267 = vpack.c.b16 %v5251, %v5251
          %v5268 = vpack.c.b16 %v5252, %v5252
          %v5269 = vpack.c.b16 %v5253, %v5253
          %v5270 = vpack.c.b16 %v5254, %v5254
          %v5271 = vpack.c.b16 %v5255, %v5255
          %v5272 = vpack.c.b16 %v5256, %v5256
          %v5273 = vpack.c.b16 %v5257, %v5257
          %v5274 = vpack.c.b16 %v5258, %v5258
          %v5275 = vpack.c.b16 %v5259, %v5259
          %v5276 = vpack.c.b16 %v5260, %v5260
          %v5277 = vpack.c.b16 %v5261, %v5261
          %v5278 = vpack.c.b16 %v5262, %v5262
          %v5279 = vpack.c.b16 %v5263, %v5263
          %v5280 = vpack.c.b16 %v5264, %v5264
          %v5281 = vpack.c.b16 %v5265, %v5265
          %v5282 = vpack.c.b16 %v5266, %v5266
          %v5299 = vsel %vm5219, %v5267, 0
          %v5300 = vsel %vm5220, %v5268, 0
          %v5301 = vsel %vm5221, %v5269, 0
          %v5302 = vsel %vm5222, %v5270, 0
          %v5303 = vsel %vm5223, %v5271, 0
          %v5304 = vsel %vm5224, %v5272, 0
          %v5305 = vsel %vm5225, %v5273, 0
          %v5306 = vsel %vm5226, %v5274, 0
          %v5307 = vsel %vm5227, %v5275, 0
          %v5308 = vsel %vm5228, %v5276, 0
          %v5309 = vsel %vm5229, %v5277, 0
          %v5310 = vsel %vm5230, %v5278, 0
          %v5311 = vsel %vm5231, %v5279, 0
          %v5312 = vsel %vm5232, %v5280, 0
          %v5313 = vsel %vm5233, %v5281, 0
          %v5314 = vsel %vm5234, %v5282, 0
          %v5331 = vunpack.c.l.b16 %v5299
          %v5332 = vunpack.c.l.b16 %v5300
          %v5333 = vunpack.c.l.b16 %v5301
          %v5334 = vunpack.c.l.b16 %v5302
          %v5335 = vunpack.c.l.b16 %v5303
          %v5336 = vunpack.c.l.b16 %v5304
          %v5337 = vunpack.c.l.b16 %v5305
          %v5338 = vunpack.c.l.b16 %v5306
          %v5339 = vunpack.c.l.b16 %v5307
          %v5340 = vunpack.c.l.b16 %v5308
          %v5341 = vunpack.c.l.b16 %v5309
          %v5342 = vunpack.c.l.b16 %v5310
          %v5343 = vunpack.c.l.b16 %v5311
          %v5344 = vunpack.c.l.b16 %v5312
          %v5345 = vunpack.c.l.b16 %v5313
          %v5346 = vunpack.c.l.b16 %v5314
          %v5347 = vpack.c.b16 %v5332, %v5331
          %v5348 = vpack.c.b16 %v5334, %v5333
          %v5349 = vpack.c.b16 %v5336, %v5335
          %v5350 = vpack.c.b16 %v5338, %v5337
          %v5351 = vpack.c.b16 %v5340, %v5339
          %v5352 = vpack.c.b16 %v5342, %v5341
          %v5353 = vpack.c.b16 %v5344, %v5343
          %v5354 = vpack.c.b16 %v5346, %v5345
          %5363 = vst [vmem:[%s2981 + $0x50] sm:$0xff] %v5347
          %5364 = vst [vmem:[%s2981 + $0x58] sm:$0xff] %v5348
          %5365 = vst [vmem:[%s2981 + $0x60] sm:$0xff] %v5349
          %5366 = vst [vmem:[%s2981 + $0x68] sm:$0xff] %v5350
          %5367 = vst [vmem:[%s2981 + $0x70] sm:$0xff] %v5351
          %5368 = vst [vmem:[%s2981 + $0x78] sm:$0xff] %v5352
          %5369 = vst [vmem:[%s2981 + $0x80] sm:$0xff] %v5353
          %5370 = vst [vmem:[%s2981 + $0x88] sm:$0xff] %v5354
          // Predicated region
          $region68: #{noise_resnet.1} parent=56 // pred_check
            _
          $region69: #{noise_resnet.1} parent=56 // pred_check_branch
            %5372 = sbr.rel (%p576) target = $region71
          $region70: #{noise_resnet.1} parent=56 // pred_region
            %5373 = vst [vmem:[#allocation3 + $0x80] sm:$0xff] %v5187
            %5374 = vst [vmem:[#allocation3 + $0x88] sm:$0xff] %v5188
            %5375 = vst [vmem:[#allocation3 + $0x90] sm:$0xff] %v5189
            %5376 = vst [vmem:[#allocation3 + $0x98] sm:$0xff] %v5190
            %5377 = vst [vmem:[#allocation3 + $0xa0] sm:$0xff] %v5191
            %5378 = vst [vmem:[#allocation3 + $0xa8] sm:$0xff] %v5192
            %5379 = vst [vmem:[#allocation3 + $0xb0] sm:$0xff] %v5193
            %5380 = vst [vmem:[#allocation3 + $0xb8] sm:$0xff] %v5194
            %5381 = vst [vmem:[#allocation3 + $0xc0] sm:$0xff] %v5195
            %5382 = vst [vmem:[#allocation3 + $0xc8] sm:$0xff] %v5196
            %5383 = vst [vmem:[#allocation3 + $0xd0] sm:$0xff] %v5197
            %5384 = vst [vmem:[#allocation3 + $0xd8] sm:$0xff] %v5198
            %5385 = vst [vmem:[#allocation3 + $0xe0] sm:$0xff] %v5199
            %5386 = vst [vmem:[#allocation3 + $0xe8] sm:$0xff] %v5200
            %5387 = vst [vmem:[#allocation3 + $0xf0] sm:$0xff] %v5201
            %5388 = vst [vmem:[#allocation3 + $0xf8] sm:$0xff] %v5202
          $region71: #{noise_resnet.1} parent=56 // pred_fallthru
            _
          // Predicated region
          $region72: #{noise_resnet.1} parent=56 // pred_check
            %p5389 = pneg %p3008
          $region73: #{noise_resnet.1} parent=56 // pred_check_branch
            %5391 = sbr.rel (%p5389) target = $region75
          $region74: #{noise_resnet.1} parent=56 // pred_region
            %5392 = vst [vmem:[%s268 + $0x80] sm:$0xff] %v5187
            %5393 = vst [vmem:[%s268 + $0x88] sm:$0xff] %v5188
            %5394 = vst [vmem:[%s268 + $0x90] sm:$0xff] %v5189
            %5395 = vst [vmem:[%s268 + $0x98] sm:$0xff] %v5190
            %5396 = vst [vmem:[%s268 + $0xa0] sm:$0xff] %v5191
            %5397 = vst [vmem:[%s268 + $0xa8] sm:$0xff] %v5192
            %5398 = vst [vmem:[%s268 + $0xb0] sm:$0xff] %v5193
            %5399 = vst [vmem:[%s268 + $0xb8] sm:$0xff] %v5194
            %5400 = vst [vmem:[%s268 + $0xc0] sm:$0xff] %v5195
            %5401 = vst [vmem:[%s268 + $0xc8] sm:$0xff] %v5196
            %5402 = vst [vmem:[%s268 + $0xd0] sm:$0xff] %v5197
            %5403 = vst [vmem:[%s268 + $0xd8] sm:$0xff] %v5198
            %5404 = vst [vmem:[%s268 + $0xe0] sm:$0xff] %v5199
            %5405 = vst [vmem:[%s268 + $0xe8] sm:$0xff] %v5200
            %5406 = vst [vmem:[%s268 + $0xf0] sm:$0xff] %v5201
            %5407 = vst [vmem:[%s268 + $0xf8] sm:$0xff] %v5202
          $region75: #{noise_resnet.1} parent=56 // pred_fallthru
            _
          %v5408 = vld [vmem:[%s585 + $0x80] sm:$0xc0]
          %v5409 = vld [vmem:[%s585 + $0x88] sm:$0xff]
          %v5410 = vld [vmem:[%s585 + $0x90] sm:$0xff]
          %v5411 = vld [vmem:[%s585 + $0x98] sm:$0xff]
          %v5412 = vld [vmem:[%s585 + $0xa0] sm:$0xff]
          %v5413 = vld [vmem:[%s585 + $0xa8] sm:$0xff]
          %v5414 = vld [vmem:[%s585 + $0xb0] sm:$0xff]
          %v5415 = vld [vmem:[%s585 + $0xb8] sm:$0xff]
          %v5416 = vld [vmem:[%s585 + $0xc0] sm:$0x7f]
          %v5417 = vld [vmem:[%s598] sm:$0xf]
          %v5418 = vld [vmem:[%s598 + $0x4] sm:$0xf]
          %v5419 = vld [vmem:[%s598 + $0x8] sm:$0xf]
          %v5420 = vld [vmem:[%s598 + $0xc] sm:$0xf]
          %v5421 = vld [vmem:[%s598 + $0x10] sm:$0xf]
          %v5422 = vld [vmem:[%s598 + $0x14] sm:$0xf]
          %v5423 = vld [vmem:[%s598 + $0x18] sm:$0xf]
          %v5424 = vld [vmem:[%s598 + $0x1c] sm:$0xf]
          %v5425 = vld [vmem:[%s598 + $0x20] sm:$0xf]
          %v5426 = vld [vmem:[%s598 + $0x24] sm:$0xf]
          %v5427 = vld [vmem:[%s598 + $0x28] sm:$0xf]
          %v5428 = vld [vmem:[%s598 + $0x2c] sm:$0xf]
          %v5429 = vld [vmem:[%s598 + $0x30] sm:$0xf]
          %v5430 = vld [vmem:[%s598 + $0x34] sm:$0xf]
          %v5431 = vld [vmem:[%s598 + $0x38] sm:$0xf]
          %v5432 = vld [vmem:[%s598 + $0x3c] sm:$0xf]
          %v5433 = vld [vmem:[%s585 + $0x80] sm:$0x80]
          %v5434 = vld [vmem:[%s619] sm:$0xf]
          %v5435 = vld [vmem:[%s619 + $0x4] sm:$0xf]
          %v5436 = vld [vmem:[%s619 + $0x8] sm:$0xf]
          %v5437 = vld [vmem:[%s619 + $0xc] sm:$0xf]
          %v5438 = vld [vmem:[%s619 + $0x10] sm:$0xf]
          %v5439 = vld [vmem:[%s619 + $0x14] sm:$0xf]
          %v5440 = vld [vmem:[%s619 + $0x18] sm:$0xf]
          %v5441 = vld [vmem:[%s619 + $0x1c] sm:$0xf]
          %v5442 = vld [vmem:[%s619 + $0x20] sm:$0xf]
          %v5443 = vld [vmem:[%s619 + $0x24] sm:$0xf]
          %v5444 = vld [vmem:[%s619 + $0x28] sm:$0xf]
          %v5445 = vld [vmem:[%s619 + $0x2c] sm:$0xf]
          %v5446 = vld [vmem:[%s619 + $0x30] sm:$0xf]
          %v5447 = vld [vmem:[%s619 + $0x34] sm:$0xf]
          %v5448 = vld [vmem:[%s619 + $0x38] sm:$0xf]
          %v5449 = vld [vmem:[%s619 + $0x3c] sm:$0xf]
          %v5459 = vrot.slane %v5433, 7
          %v5460 = vrot.slane %v5409, 7
          %v5461 = vsel %vm645, %v5459, %v5460
          %v5462 = vrot.slane %v5410, 7
          %v5463 = vsel %vm645, %v5460, %v5462
          %v5464 = vrot.slane %v5411, 7
          %v5465 = vsel %vm645, %v5462, %v5464
          %v5466 = vrot.slane %v5412, 7
          %v5467 = vsel %vm645, %v5464, %v5466
          %v5468 = vrot.slane %v5413, 7
          %v5469 = vsel %vm645, %v5466, %v5468
          %v5470 = vrot.slane %v5414, 7
          %v5471 = vsel %vm645, %v5468, %v5470
          %v5472 = vrot.slane %v5415, 7
          %v5473 = vsel %vm645, %v5470, %v5472
          %v5474 = vrot.slane %v5416, 7
          %v5475 = vsel %vm645, %v5472, %v5474
          %v5500 = vunpack.c.l.b16 %v5434
          %v5501 = vunpack.c.l.b16 %v5435
          %v5502 = vunpack.c.l.b16 %v5436
          %v5503 = vunpack.c.l.b16 %v5437
          %v5504 = vunpack.c.l.b16 %v5438
          %v5505 = vunpack.c.l.b16 %v5439
          %v5506 = vunpack.c.l.b16 %v5440
          %v5507 = vunpack.c.l.b16 %v5441
          %v5508 = vunpack.c.l.b16 %v5442
          %v5509 = vunpack.c.l.b16 %v5443
          %v5510 = vunpack.c.l.b16 %v5444
          %v5511 = vunpack.c.l.b16 %v5445
          %v5512 = vunpack.c.l.b16 %v5446
          %v5513 = vunpack.c.l.b16 %v5447
          %v5514 = vunpack.c.l.b16 %v5448
          %v5515 = vunpack.c.l.b16 %v5449
          %v5516 = vpack.c.b16 %v5501, %v5500
          %v5517 = vpack.c.b16 %v5503, %v5502
          %v5518 = vpack.c.b16 %v5505, %v5504
          %v5519 = vpack.c.b16 %v5507, %v5506
          %v5520 = vpack.c.b16 %v5509, %v5508
          %v5521 = vpack.c.b16 %v5511, %v5510
          %v5522 = vpack.c.b16 %v5513, %v5512
          %v5523 = vpack.c.b16 %v5515, %v5514
          %5532 = vmatprep.subr.bf16.mxu0 0
          %5533 = vmatpush1.bf16.msra.mxu0 %v5516
          %5534 = vmatprep.subr.bf16.mxu0 0
          %5535 = vmatpush1.bf16.msra.mxu0 %v5517
          %5536 = vmatprep.subr.bf16.mxu0 0
          %5537 = vmatpush1.bf16.msra.mxu0 %v5518
          %5538 = vmatprep.subr.bf16.mxu0 0
          %5539 = vmatpush1.bf16.msra.mxu0 %v5519
          %5540 = vmatprep.subr.bf16.mxu0 0
          %5541 = vmatpush1.bf16.msra.mxu0 %v5520
          %5542 = vmatprep.subr.bf16.mxu0 0
          %5543 = vmatpush1.bf16.msra.mxu0 %v5521
          %5544 = vmatprep.subr.bf16.mxu0 0
          %5545 = vmatpush1.bf16.msra.mxu0 %v5522
          %5546 = vmatprep.subr.bf16.mxu0 0
          %5547 = vmatpush1.bf16.msra.mxu0 %v5523
          %5548 = vmatprep.subr.bf16.mxu0 0
          %5549 = vmatpush1.bf16.msra.mxu0 0
          %5550 = vmatprep.subr.bf16.mxu0 0
          %5551 = vmatpush1.bf16.msra.mxu0 0
          %5552 = vmatprep.subr.bf16.mxu0 0
          %5553 = vmatpush1.bf16.msra.mxu0 0
          %5554 = vmatprep.subr.bf16.mxu0 0
          %5555 = vmatpush1.bf16.msra.mxu0 0
          %5556 = vmatprep.subr.bf16.mxu0 0
          %5557 = vmatpush1.bf16.msra.mxu0 0
          %5558 = vmatprep.subr.bf16.mxu0 0
          %5559 = vmatpush1.bf16.msra.mxu0 0
          %5560 = vmatprep.subr.bf16.mxu0 0
          %5561 = vmatpush1.bf16.msra.mxu0 0
          %5562 = vmatprep.subr.bf16.mxu0 0
          %5563 = vmatpush1.bf16.msra.mxu0 0
          %5564 = vmatprep.mubr.bf16.mxu0 0
          %5565 = vmatmul.mubr.bf16.gmra.mrb[0].mxu0 %v5461
          %v5566 = vpop.f32.mrb[0].mxu0
          %v5567 = vadd.f32 0.0, %v5566
          %v5568 = vpop.f32.mrb[0].mxu0
          %v5569 = vpop.f32.mrb[0].mxu0
          %v5570 = vadd.f32 0.0, %v5569
          %v5571 = vpop.f32.mrb[0].mxu0
          %5572 = vmatprep.mubr.bf16.mxu0 0
          %5573 = vmatmul.mubr.bf16.gmra.mrb[0].mxu0 %v5463
          %v5574 = vpop.f32.mrb[0].mxu0
          %v5575 = vadd.f32 0.0, %v5574
          %v5576 = vpop.f32.mrb[0].mxu0
          %v5577 = vpop.f32.mrb[0].mxu0
          %v5578 = vadd.f32 0.0, %v5577
          %v5579 = vpop.f32.mrb[0].mxu0
          %5580 = vmatprep.mubr.bf16.mxu0 0
          %5581 = vmatmul.mubr.bf16.gmra.mrb[0].mxu0 %v5465
          %v5582 = vpop.f32.mrb[0].mxu0
          %v5583 = vadd.f32 0.0, %v5582
          %v5584 = vpop.f32.mrb[0].mxu0
          %v5585 = vpop.f32.mrb[0].mxu0
          %v5586 = vadd.f32 0.0, %v5585
          %v5587 = vpop.f32.mrb[0].mxu0
          %5588 = vmatprep.mubr.bf16.mxu0 0
          %5589 = vmatmul.mubr.bf16.gmra.mrb[0].mxu0 %v5467
          %v5590 = vpop.f32.mrb[0].mxu0
          %v5591 = vadd.f32 0.0, %v5590
          %v5592 = vpop.f32.mrb[0].mxu0
          %v5593 = vpop.f32.mrb[0].mxu0
          %v5594 = vadd.f32 0.0, %v5593
          %v5595 = vpop.f32.mrb[0].mxu0
          %5596 = vmatprep.mubr.bf16.mxu0 0
          %5597 = vmatmul.mubr.bf16.gmra.mrb[0].mxu0 %v5469
          %v5598 = vpop.f32.mrb[0].mxu0
          %v5599 = vadd.f32 0.0, %v5598
          %v5600 = vpop.f32.mrb[0].mxu0
          %v5601 = vpop.f32.mrb[0].mxu0
          %v5602 = vadd.f32 0.0, %v5601
          %v5603 = vpop.f32.mrb[0].mxu0
          %5604 = vmatprep.mubr.bf16.mxu0 0
          %5605 = vmatmul.mubr.bf16.gmra.mrb[0].mxu0 %v5471
          %v5606 = vpop.f32.mrb[0].mxu0
          %v5607 = vadd.f32 0.0, %v5606
          %v5608 = vpop.f32.mrb[0].mxu0
          %v5609 = vpop.f32.mrb[0].mxu0
          %v5610 = vadd.f32 0.0, %v5609
          %v5611 = vpop.f32.mrb[0].mxu0
          %5612 = vmatprep.mubr.bf16.mxu0 0
          %5613 = vmatmul.mubr.bf16.gmra.mrb[0].mxu0 %v5473
          %v5614 = vpop.f32.mrb[0].mxu0
          %v5615 = vadd.f32 0.0, %v5614
          %v5616 = vpop.f32.mrb[0].mxu0
          %v5617 = vpop.f32.mrb[0].mxu0
          %v5618 = vadd.f32 0.0, %v5617
          %v5619 = vpop.f32.mrb[0].mxu0
          %5620 = vmatprep.mubr.bf16.mxu0 0
          %5621 = vmatmul.mubr.bf16.gmra.mrb[0].mxu0 %v5475
          %v5622 = vpop.f32.mrb[0].mxu0
          %v5623 = vadd.f32 0.0, %v5622
          %v5624 = vpop.f32.mrb[0].mxu0
          %v5625 = vpop.f32.mrb[0].mxu0
          %v5626 = vadd.f32 0.0, %v5625
          %v5627 = vpop.f32.mrb[0].mxu0
          %5628 = vdwg.mxu0
          %v5630 = vshrl.u32 %v5408, 16
          %v5632 = vrot.slane %v5630, 6
          %v5633 = vshll.u32 %v5408, 16
          %v5635 = vrot.slane %v5633, 7
          %v5636 = vor.u32 %v5632, %v5635
          %v5638 = vshrl.u32 %v5409, 16
          %v5640 = vrot.slane %v5638, 6
          %v5641 = vshll.u32 %v5409, 16
          %v5643 = vrot.slane %v5641, 7
          %v5644 = vor.u32 %v5640, %v5643
          %v5645 = vsel %vm816, %v5636, %v5644
          %v5647 = vshrl.u32 %v5410, 16
          %v5649 = vrot.slane %v5647, 6
          %v5650 = vshll.u32 %v5410, 16
          %v5652 = vrot.slane %v5650, 7
          %v5653 = vor.u32 %v5649, %v5652
          %v5654 = vsel %vm816, %v5644, %v5653
          %v5656 = vshrl.u32 %v5411, 16
          %v5658 = vrot.slane %v5656, 6
          %v5659 = vshll.u32 %v5411, 16
          %v5661 = vrot.slane %v5659, 7
          %v5662 = vor.u32 %v5658, %v5661
          %v5663 = vsel %vm816, %v5653, %v5662
          %v5665 = vshrl.u32 %v5412, 16
          %v5667 = vrot.slane %v5665, 6
          %v5668 = vshll.u32 %v5412, 16
          %v5670 = vrot.slane %v5668, 7
          %v5671 = vor.u32 %v5667, %v5670
          %v5672 = vsel %vm816, %v5662, %v5671
          %v5674 = vshrl.u32 %v5413, 16
          %v5676 = vrot.slane %v5674, 6
          %v5677 = vshll.u32 %v5413, 16
          %v5679 = vrot.slane %v5677, 7
          %v5680 = vor.u32 %v5676, %v5679
          %v5681 = vsel %vm816, %v5671, %v5680
          %v5683 = vshrl.u32 %v5414, 16
          %v5685 = vrot.slane %v5683, 6
          %v5686 = vshll.u32 %v5414, 16
          %v5688 = vrot.slane %v5686, 7
          %v5689 = vor.u32 %v5685, %v5688
          %v5690 = vsel %vm816, %v5680, %v5689
          %v5692 = vshrl.u32 %v5415, 16
          %v5694 = vrot.slane %v5692, 6
          %v5695 = vshll.u32 %v5415, 16
          %v5697 = vrot.slane %v5695, 7
          %v5698 = vor.u32 %v5694, %v5697
          %v5699 = vsel %vm816, %v5689, %v5698
          %v5701 = vshrl.u32 %v5416, 16
          %v5703 = vrot.slane %v5701, 6
          %v5704 = vshll.u32 %v5416, 16
          %v5706 = vrot.slane %v5704, 7
          %v5707 = vor.u32 %v5703, %v5706
          %v5708 = vsel %vm816, %v5698, %v5707
          %v5733 = vunpack.c.l.b16 %v5417
          %v5734 = vunpack.c.l.b16 %v5418
          %v5735 = vunpack.c.l.b16 %v5419
          %v5736 = vunpack.c.l.b16 %v5420
          %v5737 = vunpack.c.l.b16 %v5421
          %v5738 = vunpack.c.l.b16 %v5422
          %v5739 = vunpack.c.l.b16 %v5423
          %v5740 = vunpack.c.l.b16 %v5424
          %v5741 = vunpack.c.l.b16 %v5425
          %v5742 = vunpack.c.l.b16 %v5426
          %v5743 = vunpack.c.l.b16 %v5427
          %v5744 = vunpack.c.l.b16 %v5428
          %v5745 = vunpack.c.l.b16 %v5429
          %v5746 = vunpack.c.l.b16 %v5430
          %v5747 = vunpack.c.l.b16 %v5431
          %v5748 = vunpack.c.l.b16 %v5432
          %v5749 = vpack.c.b16 %v5734, %v5733
          %v5750 = vpack.c.b16 %v5736, %v5735
          %v5751 = vpack.c.b16 %v5738, %v5737
          %v5752 = vpack.c.b16 %v5740, %v5739
          %v5753 = vpack.c.b16 %v5742, %v5741
          %v5754 = vpack.c.b16 %v5744, %v5743
          %v5755 = vpack.c.b16 %v5746, %v5745
          %v5756 = vpack.c.b16 %v5748, %v5747
          %5765 = vmatprep.subr.bf16.mxu0 0
          %5766 = vmatpush1.bf16.msra.mxu0 %v5749
          %5767 = vmatprep.subr.bf16.mxu0 0
          %5768 = vmatpush1.bf16.msra.mxu0 %v5750
          %5769 = vmatprep.subr.bf16.mxu0 0
          %5770 = vmatpush1.bf16.msra.mxu0 %v5751
          %5771 = vmatprep.subr.bf16.mxu0 0
          %5772 = vmatpush1.bf16.msra.mxu0 %v5752
          %5773 = vmatprep.subr.bf16.mxu0 0
          %5774 = vmatpush1.bf16.msra.mxu0 %v5753
          %5775 = vmatprep.subr.bf16.mxu0 0
          %5776 = vmatpush1.bf16.msra.mxu0 %v5754
          %5777 = vmatprep.subr.bf16.mxu0 0
          %5778 = vmatpush1.bf16.msra.mxu0 %v5755
          %5779 = vmatprep.subr.bf16.mxu0 0
          %5780 = vmatpush1.bf16.msra.mxu0 %v5756
          %5781 = vmatprep.subr.bf16.mxu0 0
          %5782 = vmatpush1.bf16.msra.mxu0 0
          %5783 = vmatprep.subr.bf16.mxu0 0
          %5784 = vmatpush1.bf16.msra.mxu0 0
          %5785 = vmatprep.subr.bf16.mxu0 0
          %5786 = vmatpush1.bf16.msra.mxu0 0
          %5787 = vmatprep.subr.bf16.mxu0 0
          %5788 = vmatpush1.bf16.msra.mxu0 0
          %5789 = vmatprep.subr.bf16.mxu0 0
          %5790 = vmatpush1.bf16.msra.mxu0 0
          %5791 = vmatprep.subr.bf16.mxu0 0
          %5792 = vmatpush1.bf16.msra.mxu0 0
          %5793 = vmatprep.subr.bf16.mxu0 0
          %5794 = vmatpush1.bf16.msra.mxu0 0
          %5795 = vmatprep.subr.bf16.mxu0 0
          %5796 = vmatpush1.bf16.msra.mxu0 0
          %5797 = vmatprep.mubr.bf16.mxu0 0
          %5798 = vmatmul.mubr.bf16.gmra.mrb[0].mxu0 %v5645
          %v5799 = vpop.f32.mrb[0].mxu0
          %v5800 = vadd.f32 %v5567, %v5799
          %v5801 = vpop.f32.mrb[0].mxu0
          %v5802 = vpop.f32.mrb[0].mxu0
          %v5803 = vadd.f32 %v5570, %v5802
          %v5804 = vpop.f32.mrb[0].mxu0
          %5805 = vmatprep.mubr.bf16.mxu0 0
          %5806 = vmatmul.mubr.bf16.gmra.mrb[0].mxu0 %v5654
          %v5807 = vpop.f32.mrb[0].mxu0
          %v5808 = vadd.f32 %v5575, %v5807
          %v5809 = vpop.f32.mrb[0].mxu0
          %v5810 = vpop.f32.mrb[0].mxu0
          %v5811 = vadd.f32 %v5578, %v5810
          %v5812 = vpop.f32.mrb[0].mxu0
          %5813 = vmatprep.mubr.bf16.mxu0 0
          %5814 = vmatmul.mubr.bf16.gmra.mrb[0].mxu0 %v5663
          %v5815 = vpop.f32.mrb[0].mxu0
          %v5816 = vadd.f32 %v5583, %v5815
          %v5817 = vpop.f32.mrb[0].mxu0
          %v5818 = vpop.f32.mrb[0].mxu0
          %v5819 = vadd.f32 %v5586, %v5818
          %v5820 = vpop.f32.mrb[0].mxu0
          %5821 = vmatprep.mubr.bf16.mxu0 0
          %5822 = vmatmul.mubr.bf16.gmra.mrb[0].mxu0 %v5672
          %v5823 = vpop.f32.mrb[0].mxu0
          %v5824 = vadd.f32 %v5591, %v5823
          %v5825 = vpop.f32.mrb[0].mxu0
          %v5826 = vpop.f32.mrb[0].mxu0
          %v5827 = vadd.f32 %v5594, %v5826
          %v5828 = vpop.f32.mrb[0].mxu0
          %5829 = vmatprep.mubr.bf16.mxu0 0
          %5830 = vmatmul.mubr.bf16.gmra.mrb[0].mxu0 %v5681
          %v5831 = vpop.f32.mrb[0].mxu0
          %v5832 = vadd.f32 %v5599, %v5831
          %v5833 = vpop.f32.mrb[0].mxu0
          %v5834 = vpop.f32.mrb[0].mxu0
          %v5835 = vadd.f32 %v5602, %v5834
          %v5836 = vpop.f32.mrb[0].mxu0
          %5837 = vmatprep.mubr.bf16.mxu0 0
          %5838 = vmatmul.mubr.bf16.gmra.mrb[0].mxu0 %v5690
          %v5839 = vpop.f32.mrb[0].mxu0
          %v5840 = vadd.f32 %v5607, %v5839
          %v5841 = vpop.f32.mrb[0].mxu0
          %v5842 = vpop.f32.mrb[0].mxu0
          %v5843 = vadd.f32 %v5610, %v5842
          %v5844 = vpop.f32.mrb[0].mxu0
          %5845 = vmatprep.mubr.bf16.mxu0 0
          %5846 = vmatmul.mubr.bf16.gmra.mrb[0].mxu0 %v5699
          %v5847 = vpop.f32.mrb[0].mxu0
          %v5848 = vadd.f32 %v5615, %v5847
          %v5849 = vpop.f32.mrb[0].mxu0
          %v5850 = vpop.f32.mrb[0].mxu0
          %v5851 = vadd.f32 %v5618, %v5850
          %v5852 = vpop.f32.mrb[0].mxu0
          %5853 = vmatprep.mubr.bf16.mxu0 0
          %5854 = vmatmul.mubr.bf16.gmra.mrb[0].mxu0 %v5708
          %v5855 = vpop.f32.mrb[0].mxu0
          %v5856 = vadd.f32 %v5623, %v5855
          %v5857 = vpop.f32.mrb[0].mxu0
          %v5858 = vpop.f32.mrb[0].mxu0
          %v5859 = vadd.f32 %v5626, %v5858
          %v5860 = vpop.f32.mrb[0].mxu0
          %5861 = vdwg.mxu0
          %v5862 = vld [vmem:[%s585 + $0xc0] sm:$0xff]
          %v5863 = vld [vmem:[%s1054] sm:$0xf]
          %v5864 = vld [vmem:[%s1054 + $0x4] sm:$0xf]
          %v5865 = vld [vmem:[%s1054 + $0x8] sm:$0xf]
          %v5866 = vld [vmem:[%s1054 + $0xc] sm:$0xf]
          %v5867 = vld [vmem:[%s1054 + $0x10] sm:$0xf]
          %v5868 = vld [vmem:[%s1054 + $0x14] sm:$0xf]
          %v5869 = vld [vmem:[%s1054 + $0x18] sm:$0xf]
          %v5870 = vld [vmem:[%s1054 + $0x1c] sm:$0xf]
          %v5871 = vld [vmem:[%s1054 + $0x20] sm:$0xf]
          %v5872 = vld [vmem:[%s1054 + $0x24] sm:$0xf]
          %v5873 = vld [vmem:[%s1054 + $0x28] sm:$0xf]
          %v5874 = vld [vmem:[%s1054 + $0x2c] sm:$0xf]
          %v5875 = vld [vmem:[%s1054 + $0x30] sm:$0xf]
          %v5876 = vld [vmem:[%s1054 + $0x34] sm:$0xf]
          %v5877 = vld [vmem:[%s1054 + $0x38] sm:$0xf]
          %v5878 = vld [vmem:[%s1054 + $0x3c] sm:$0xf]
          %v5880 = vshrl.u32 %v5433, 16
          %v5882 = vrot.slane %v5880, 7
          %v5883 = vrot.slane %v5638, 7
          %v5884 = vor.u32 %v5883, %v5641
          %v5885 = vsel %vm1071, %v5882, %v5884
          %v5886 = vrot.slane %v5647, 7
          %v5887 = vor.u32 %v5886, %v5650
          %v5888 = vsel %vm1071, %v5883, %v5887
          %v5889 = vrot.slane %v5656, 7
          %v5890 = vor.u32 %v5889, %v5659
          %v5891 = vsel %vm1071, %v5886, %v5890
          %v5892 = vrot.slane %v5665, 7
          %v5893 = vor.u32 %v5892, %v5668
          %v5894 = vsel %vm1071, %v5889, %v5893
          %v5895 = vrot.slane %v5674, 7
          %v5896 = vor.u32 %v5895, %v5677
          %v5897 = vsel %vm1071, %v5892, %v5896
          %v5898 = vrot.slane %v5683, 7
          %v5899 = vor.u32 %v5898, %v5686
          %v5900 = vsel %vm1071, %v5895, %v5899
          %v5901 = vrot.slane %v5692, 7
          %v5902 = vor.u32 %v5901, %v5695
          %v5903 = vsel %vm1071, %v5898, %v5902
          %v5905 = vshrl.u32 %v5862, 16
          %v5907 = vrot.slane %v5905, 7
          %v5908 = vshll.u32 %v5862, 16
          %v5910 = vor.u32 %v5907, %v5908
          %v5911 = vsel %vm1071, %v5901, %v5910
          %v5936 = vunpack.c.l.b16 %v5863
          %v5937 = vunpack.c.l.b16 %v5864
          %v5938 = vunpack.c.l.b16 %v5865
          %v5939 = vunpack.c.l.b16 %v5866
          %v5940 = vunpack.c.l.b16 %v5867
          %v5941 = vunpack.c.l.b16 %v5868
          %v5942 = vunpack.c.l.b16 %v5869
          %v5943 = vunpack.c.l.b16 %v5870
          %v5944 = vunpack.c.l.b16 %v5871
          %v5945 = vunpack.c.l.b16 %v5872
          %v5946 = vunpack.c.l.b16 %v5873
          %v5947 = vunpack.c.l.b16 %v5874
          %v5948 = vunpack.c.l.b16 %v5875
          %v5949 = vunpack.c.l.b16 %v5876
          %v5950 = vunpack.c.l.b16 %v5877
          %v5951 = vunpack.c.l.b16 %v5878
          %v5952 = vpack.c.b16 %v5937, %v5936
          %v5953 = vpack.c.b16 %v5939, %v5938
          %v5954 = vpack.c.b16 %v5941, %v5940
          %v5955 = vpack.c.b16 %v5943, %v5942
          %v5956 = vpack.c.b16 %v5945, %v5944
          %v5957 = vpack.c.b16 %v5947, %v5946
          %v5958 = vpack.c.b16 %v5949, %v5948
          %v5959 = vpack.c.b16 %v5951, %v5950
          %5968 = vmatprep.subr.bf16.mxu0 0
          %5969 = vmatpush1.bf16.msra.mxu0 %v5952
          %5970 = vmatprep.subr.bf16.mxu0 0
          %5971 = vmatpush1.bf16.msra.mxu0 %v5953
          %5972 = vmatprep.subr.bf16.mxu0 0
          %5973 = vmatpush1.bf16.msra.mxu0 %v5954
          %5974 = vmatprep.subr.bf16.mxu0 0
          %5975 = vmatpush1.bf16.msra.mxu0 %v5955
          %5976 = vmatprep.subr.bf16.mxu0 0
          %5977 = vmatpush1.bf16.msra.mxu0 %v5956
          %5978 = vmatprep.subr.bf16.mxu0 0
          %5979 = vmatpush1.bf16.msra.mxu0 %v5957
          %5980 = vmatprep.subr.bf16.mxu0 0
          %5981 = vmatpush1.bf16.msra.mxu0 %v5958
          %5982 = vmatprep.subr.bf16.mxu0 0
          %5983 = vmatpush1.bf16.msra.mxu0 %v5959
          %5984 = vmatprep.subr.bf16.mxu0 0
          %5985 = vmatpush1.bf16.msra.mxu0 0
          %5986 = vmatprep.subr.bf16.mxu0 0
          %5987 = vmatpush1.bf16.msra.mxu0 0
          %5988 = vmatprep.subr.bf16.mxu0 0
          %5989 = vmatpush1.bf16.msra.mxu0 0
          %5990 = vmatprep.subr.bf16.mxu0 0
          %5991 = vmatpush1.bf16.msra.mxu0 0
          %5992 = vmatprep.subr.bf16.mxu0 0
          %5993 = vmatpush1.bf16.msra.mxu0 0
          %5994 = vmatprep.subr.bf16.mxu0 0
          %5995 = vmatpush1.bf16.msra.mxu0 0
          %5996 = vmatprep.subr.bf16.mxu0 0
          %5997 = vmatpush1.bf16.msra.mxu0 0
          %5998 = vmatprep.subr.bf16.mxu0 0
          %5999 = vmatpush1.bf16.msra.mxu0 0
          %6000 = vmatprep.mubr.bf16.mxu0 0
          %6001 = vmatmul.mubr.bf16.gmra.mrb[0].mxu0 %v5885
          %v6002 = vpop.f32.mrb[0].mxu0
          %v6003 = vadd.f32 0.0, %v6002
          %v6004 = vpop.f32.mrb[0].mxu0
          %v6005 = vpop.f32.mrb[0].mxu0
          %v6006 = vadd.f32 0.0, %v6005
          %v6007 = vpop.f32.mrb[0].mxu0
          %6008 = vmatprep.mubr.bf16.mxu0 0
          %6009 = vmatmul.mubr.bf16.gmra.mrb[0].mxu0 %v5888
          %v6010 = vpop.f32.mrb[0].mxu0
          %v6011 = vadd.f32 0.0, %v6010
          %v6012 = vpop.f32.mrb[0].mxu0
          %v6013 = vpop.f32.mrb[0].mxu0
          %v6014 = vadd.f32 0.0, %v6013
          %v6015 = vpop.f32.mrb[0].mxu0
          %6016 = vmatprep.mubr.bf16.mxu0 0
          %6017 = vmatmul.mubr.bf16.gmra.mrb[0].mxu0 %v5891
          %v6018 = vpop.f32.mrb[0].mxu0
          %v6019 = vadd.f32 0.0, %v6018
          %v6020 = vpop.f32.mrb[0].mxu0
          %v6021 = vpop.f32.mrb[0].mxu0
          %v6022 = vadd.f32 0.0, %v6021
          %v6023 = vpop.f32.mrb[0].mxu0
          %6024 = vmatprep.mubr.bf16.mxu0 0
          %6025 = vmatmul.mubr.bf16.gmra.mrb[0].mxu0 %v5894
          %v6026 = vpop.f32.mrb[0].mxu0
          %v6027 = vadd.f32 0.0, %v6026
          %v6028 = vpop.f32.mrb[0].mxu0
          %v6029 = vpop.f32.mrb[0].mxu0
          %v6030 = vadd.f32 0.0, %v6029
          %v6031 = vpop.f32.mrb[0].mxu0
          %6032 = vmatprep.mubr.bf16.mxu0 0
          %6033 = vmatmul.mubr.bf16.gmra.mrb[0].mxu0 %v5897
          %v6034 = vpop.f32.mrb[0].mxu0
          %v6035 = vadd.f32 0.0, %v6034
          %v6036 = vpop.f32.mrb[0].mxu0
          %v6037 = vpop.f32.mrb[0].mxu0
          %v6038 = vadd.f32 0.0, %v6037
          %v6039 = vpop.f32.mrb[0].mxu0
          %6040 = vmatprep.mubr.bf16.mxu0 0
          %6041 = vmatmul.mubr.bf16.gmra.mrb[0].mxu0 %v5900
          %v6042 = vpop.f32.mrb[0].mxu0
          %v6043 = vadd.f32 0.0, %v6042
          %v6044 = vpop.f32.mrb[0].mxu0
          %v6045 = vpop.f32.mrb[0].mxu0
          %v6046 = vadd.f32 0.0, %v6045
          %v6047 = vpop.f32.mrb[0].mxu0
          %6048 = vmatprep.mubr.bf16.mxu0 0
          %6049 = vmatmul.mubr.bf16.gmra.mrb[0].mxu0 %v5903
          %v6050 = vpop.f32.mrb[0].mxu0
          %v6051 = vadd.f32 0.0, %v6050
          %v6052 = vpop.f32.mrb[0].mxu0
          %v6053 = vpop.f32.mrb[0].mxu0
          %v6054 = vadd.f32 0.0, %v6053
          %v6055 = vpop.f32.mrb[0].mxu0
          %6056 = vmatprep.mubr.bf16.mxu0 0
          %6057 = vmatmul.mubr.bf16.gmra.mrb[0].mxu0 %v5911
          %v6058 = vpop.f32.mrb[0].mxu0
          %v6059 = vadd.f32 0.0, %v6058
          %v6060 = vpop.f32.mrb[0].mxu0
          %v6061 = vpop.f32.mrb[0].mxu0
          %v6062 = vadd.f32 0.0, %v6061
          %v6063 = vpop.f32.mrb[0].mxu0
          %6064 = vdwg.mxu0
          %v6065 = vadd.f32 %v5800, %v6003
          %v6066 = vadd.f32 %v5803, %v6006
          %v6067 = vadd.f32 %v5808, %v6011
          %v6068 = vadd.f32 %v5811, %v6014
          %v6069 = vadd.f32 %v5816, %v6019
          %v6070 = vadd.f32 %v5819, %v6022
          %v6071 = vadd.f32 %v5824, %v6027
          %v6072 = vadd.f32 %v5827, %v6030
          %v6073 = vadd.f32 %v5832, %v6035
          %v6074 = vadd.f32 %v5835, %v6038
          %v6075 = vadd.f32 %v5840, %v6043
          %v6076 = vadd.f32 %v5843, %v6046
          %v6077 = vadd.f32 %v5848, %v6051
          %v6078 = vadd.f32 %v5851, %v6054
          %v6079 = vadd.f32 %v5856, %v6059
          %v6080 = vadd.f32 %v5859, %v6062
          %v6081 = vld [vmem:[%s585 + $0x88] sm:$0x80]
          %v6082 = vld [vmem:[%s585 + $0x90] sm:$0xff]
          %v6083 = vld [vmem:[%s585 + $0x98] sm:$0xff]
          %v6084 = vld [vmem:[%s585 + $0xa0] sm:$0xff]
          %v6085 = vld [vmem:[%s585 + $0xa8] sm:$0xff]
          %v6086 = vld [vmem:[%s585 + $0xb0] sm:$0xff]
          %v6087 = vld [vmem:[%s585 + $0xb8] sm:$0xff]
          %v6088 = vld [vmem:[%s585 + $0xc0] sm:$0xff]
          %v6089 = vld [vmem:[%s585 + $0xc8] sm:$0xff]
          %v6090 = vld [vmem:[%s1286] sm:$0xf]
          %v6091 = vld [vmem:[%s1286 + $0x4] sm:$0xf]
          %v6092 = vld [vmem:[%s1286 + $0x8] sm:$0xf]
          %v6093 = vld [vmem:[%s1286 + $0xc] sm:$0xf]
          %v6094 = vld [vmem:[%s1286 + $0x10] sm:$0xf]
          %v6095 = vld [vmem:[%s1286 + $0x14] sm:$0xf]
          %v6096 = vld [vmem:[%s1286 + $0x18] sm:$0xf]
          %v6097 = vld [vmem:[%s1286 + $0x1c] sm:$0xf]
          %v6098 = vld [vmem:[%s1286 + $0x20] sm:$0xf]
          %v6099 = vld [vmem:[%s1286 + $0x24] sm:$0xf]
          %v6100 = vld [vmem:[%s1286 + $0x28] sm:$0xf]
          %v6101 = vld [vmem:[%s1286 + $0x2c] sm:$0xf]
          %v6102 = vld [vmem:[%s1286 + $0x30] sm:$0xf]
          %v6103 = vld [vmem:[%s1286 + $0x34] sm:$0xf]
          %v6104 = vld [vmem:[%s1286 + $0x38] sm:$0xf]
          %v6105 = vld [vmem:[%s1286 + $0x3c] sm:$0xf]
          %v6107 = vshrl.u32 %v6081, 16
          %v6109 = vrot.slane %v6107, 7
          %v6111 = vshrl.u32 %v6082, 16
          %v6113 = vrot.slane %v6111, 7
          %v6114 = vshll.u32 %v6082, 16
          %v6116 = vor.u32 %v6113, %v6114
          %v6117 = vsel %vm1071, %v6109, %v6116
          %v6119 = vshrl.u32 %v6083, 16
          %v6121 = vrot.slane %v6119, 7
          %v6122 = vshll.u32 %v6083, 16
          %v6124 = vor.u32 %v6121, %v6122
          %v6125 = vsel %vm1071, %v6113, %v6124
          %v6127 = vshrl.u32 %v6084, 16
          %v6129 = vrot.slane %v6127, 7
          %v6130 = vshll.u32 %v6084, 16
          %v6132 = vor.u32 %v6129, %v6130
          %v6133 = vsel %vm1071, %v6121, %v6132
          %v6135 = vshrl.u32 %v6085, 16
          %v6137 = vrot.slane %v6135, 7
          %v6138 = vshll.u32 %v6085, 16
          %v6140 = vor.u32 %v6137, %v6138
          %v6141 = vsel %vm1071, %v6129, %v6140
          %v6143 = vshrl.u32 %v6086, 16
          %v6145 = vrot.slane %v6143, 7
          %v6146 = vshll.u32 %v6086, 16
          %v6148 = vor.u32 %v6145, %v6146
          %v6149 = vsel %vm1071, %v6137, %v6148
          %v6151 = vshrl.u32 %v6087, 16
          %v6153 = vrot.slane %v6151, 7
          %v6154 = vshll.u32 %v6087, 16
          %v6156 = vor.u32 %v6153, %v6154
          %v6157 = vsel %vm1071, %v6145, %v6156
          %v6159 = vshrl.u32 %v6088, 16
          %v6161 = vrot.slane %v6159, 7
          %v6162 = vshll.u32 %v6088, 16
          %v6164 = vor.u32 %v6161, %v6162
          %v6165 = vsel %vm1071, %v6153, %v6164
          %v6167 = vshrl.u32 %v6089, 16
          %v6169 = vrot.slane %v6167, 7
          %v6170 = vshll.u32 %v6089, 16
          %v6172 = vor.u32 %v6169, %v6170
          %v6173 = vsel %vm1071, %v6161, %v6172
          %v6198 = vunpack.c.l.b16 %v6090
          %v6199 = vunpack.c.l.b16 %v6091
          %v6200 = vunpack.c.l.b16 %v6092
          %v6201 = vunpack.c.l.b16 %v6093
          %v6202 = vunpack.c.l.b16 %v6094
          %v6203 = vunpack.c.l.b16 %v6095
          %v6204 = vunpack.c.l.b16 %v6096
          %v6205 = vunpack.c.l.b16 %v6097
          %v6206 = vunpack.c.l.b16 %v6098
          %v6207 = vunpack.c.l.b16 %v6099
          %v6208 = vunpack.c.l.b16 %v6100
          %v6209 = vunpack.c.l.b16 %v6101
          %v6210 = vunpack.c.l.b16 %v6102
          %v6211 = vunpack.c.l.b16 %v6103
          %v6212 = vunpack.c.l.b16 %v6104
          %v6213 = vunpack.c.l.b16 %v6105
          %v6214 = vpack.c.b16 %v6199, %v6198
          %v6215 = vpack.c.b16 %v6201, %v6200
          %v6216 = vpack.c.b16 %v6203, %v6202
          %v6217 = vpack.c.b16 %v6205, %v6204
          %v6218 = vpack.c.b16 %v6207, %v6206
          %v6219 = vpack.c.b16 %v6209, %v6208
          %v6220 = vpack.c.b16 %v6211, %v6210
          %v6221 = vpack.c.b16 %v6213, %v6212
          %6230 = vmatprep.subr.bf16.mxu0 0
          %6231 = vmatpush1.bf16.msra.mxu0 %v6214
          %6232 = vmatprep.subr.bf16.mxu0 0
          %6233 = vmatpush1.bf16.msra.mxu0 %v6215
          %6234 = vmatprep.subr.bf16.mxu0 0
          %6235 = vmatpush1.bf16.msra.mxu0 %v6216
          %6236 = vmatprep.subr.bf16.mxu0 0
          %6237 = vmatpush1.bf16.msra.mxu0 %v6217
          %6238 = vmatprep.subr.bf16.mxu0 0
          %6239 = vmatpush1.bf16.msra.mxu0 %v6218
          %6240 = vmatprep.subr.bf16.mxu0 0
          %6241 = vmatpush1.bf16.msra.mxu0 %v6219
          %6242 = vmatprep.subr.bf16.mxu0 0
          %6243 = vmatpush1.bf16.msra.mxu0 %v6220
          %6244 = vmatprep.subr.bf16.mxu0 0
          %6245 = vmatpush1.bf16.msra.mxu0 %v6221
          %6246 = vmatprep.subr.bf16.mxu0 0
          %6247 = vmatpush1.bf16.msra.mxu0 0
          %6248 = vmatprep.subr.bf16.mxu0 0
          %6249 = vmatpush1.bf16.msra.mxu0 0
          %6250 = vmatprep.subr.bf16.mxu0 0
          %6251 = vmatpush1.bf16.msra.mxu0 0
          %6252 = vmatprep.subr.bf16.mxu0 0
          %6253 = vmatpush1.bf16.msra.mxu0 0
          %6254 = vmatprep.subr.bf16.mxu0 0
          %6255 = vmatpush1.bf16.msra.mxu0 0
          %6256 = vmatprep.subr.bf16.mxu0 0
          %6257 = vmatpush1.bf16.msra.mxu0 0
          %6258 = vmatprep.subr.bf16.mxu0 0
          %6259 = vmatpush1.bf16.msra.mxu0 0
          %6260 = vmatprep.subr.bf16.mxu0 0
          %6261 = vmatpush1.bf16.msra.mxu0 0
          %6262 = vmatprep.mubr.bf16.mxu0 0
          %6263 = vmatmul.mubr.bf16.gmra.mrb[0].mxu0 %v6117
          %v6264 = vpop.f32.mrb[0].mxu0
          %v6265 = vadd.f32 0.0, %v6264
          %v6266 = vpop.f32.mrb[0].mxu0
          %v6267 = vpop.f32.mrb[0].mxu0
          %v6268 = vadd.f32 0.0, %v6267
          %v6269 = vpop.f32.mrb[0].mxu0
          %6270 = vmatprep.mubr.bf16.mxu0 0
          %6271 = vmatmul.mubr.bf16.gmra.mrb[0].mxu0 %v6125
          %v6272 = vpop.f32.mrb[0].mxu0
          %v6273 = vadd.f32 0.0, %v6272
          %v6274 = vpop.f32.mrb[0].mxu0
          %v6275 = vpop.f32.mrb[0].mxu0
          %v6276 = vadd.f32 0.0, %v6275
          %v6277 = vpop.f32.mrb[0].mxu0
          %6278 = vmatprep.mubr.bf16.mxu0 0
          %6279 = vmatmul.mubr.bf16.gmra.mrb[0].mxu0 %v6133
          %v6280 = vpop.f32.mrb[0].mxu0
          %v6281 = vadd.f32 0.0, %v6280
          %v6282 = vpop.f32.mrb[0].mxu0
          %v6283 = vpop.f32.mrb[0].mxu0
          %v6284 = vadd.f32 0.0, %v6283
          %v6285 = vpop.f32.mrb[0].mxu0
          %6286 = vmatprep.mubr.bf16.mxu0 0
          %6287 = vmatmul.mubr.bf16.gmra.mrb[0].mxu0 %v6141
          %v6288 = vpop.f32.mrb[0].mxu0
          %v6289 = vadd.f32 0.0, %v6288
          %v6290 = vpop.f32.mrb[0].mxu0
          %v6291 = vpop.f32.mrb[0].mxu0
          %v6292 = vadd.f32 0.0, %v6291
          %v6293 = vpop.f32.mrb[0].mxu0
          %6294 = vmatprep.mubr.bf16.mxu0 0
          %6295 = vmatmul.mubr.bf16.gmra.mrb[0].mxu0 %v6149
          %v6296 = vpop.f32.mrb[0].mxu0
          %v6297 = vadd.f32 0.0, %v6296
          %v6298 = vpop.f32.mrb[0].mxu0
          %v6299 = vpop.f32.mrb[0].mxu0
          %v6300 = vadd.f32 0.0, %v6299
          %v6301 = vpop.f32.mrb[0].mxu0
          %6302 = vmatprep.mubr.bf16.mxu0 0
          %6303 = vmatmul.mubr.bf16.gmra.mrb[0].mxu0 %v6157
          %v6304 = vpop.f32.mrb[0].mxu0
          %v6305 = vadd.f32 0.0, %v6304
          %v6306 = vpop.f32.mrb[0].mxu0
          %v6307 = vpop.f32.mrb[0].mxu0
          %v6308 = vadd.f32 0.0, %v6307
          %v6309 = vpop.f32.mrb[0].mxu0
          %6310 = vmatprep.mubr.bf16.mxu0 0
          %6311 = vmatmul.mubr.bf16.gmra.mrb[0].mxu0 %v6165
          %v6312 = vpop.f32.mrb[0].mxu0
          %v6313 = vadd.f32 0.0, %v6312
          %v6314 = vpop.f32.mrb[0].mxu0
          %v6315 = vpop.f32.mrb[0].mxu0
          %v6316 = vadd.f32 0.0, %v6315
          %v6317 = vpop.f32.mrb[0].mxu0
          %6318 = vmatprep.mubr.bf16.mxu0 0
          %6319 = vmatmul.mubr.bf16.gmra.mrb[0].mxu0 %v6173
          %v6320 = vpop.f32.mrb[0].mxu0
          %v6321 = vadd.f32 0.0, %v6320
          %v6322 = vpop.f32.mrb[0].mxu0
          %v6323 = vpop.f32.mrb[0].mxu0
          %v6324 = vadd.f32 0.0, %v6323
          %v6325 = vpop.f32.mrb[0].mxu0
          %6326 = vdwg.mxu0
          %v6327 = vadd.f32 %v6065, %v6265
          %v6328 = vadd.f32 %v6066, %v6268
          %v6329 = vadd.f32 %v6067, %v6273
          %v6330 = vadd.f32 %v6068, %v6276
          %v6331 = vadd.f32 %v6069, %v6281
          %v6332 = vadd.f32 %v6070, %v6284
          %v6333 = vadd.f32 %v6071, %v6289
          %v6334 = vadd.f32 %v6072, %v6292
          %v6335 = vadd.f32 %v6073, %v6297
          %v6336 = vadd.f32 %v6074, %v6300
          %v6337 = vadd.f32 %v6075, %v6305
          %v6338 = vadd.f32 %v6076, %v6308
          %v6339 = vadd.f32 %v6077, %v6313
          %v6340 = vadd.f32 %v6078, %v6316
          %v6341 = vadd.f32 %v6079, %v6321
          %v6342 = vadd.f32 %v6080, %v6324
          %v6343 = vld [vmem:[%s1543] sm:$0xf]
          %v6344 = vld [vmem:[%s1543 + $0x4] sm:$0xf]
          %v6345 = vld [vmem:[%s1543 + $0x8] sm:$0xf]
          %v6346 = vld [vmem:[%s1543 + $0xc] sm:$0xf]
          %v6347 = vld [vmem:[%s1543 + $0x10] sm:$0xf]
          %v6348 = vld [vmem:[%s1543 + $0x14] sm:$0xf]
          %v6349 = vld [vmem:[%s1543 + $0x18] sm:$0xf]
          %v6350 = vld [vmem:[%s1543 + $0x1c] sm:$0xf]
          %v6351 = vld [vmem:[%s1543 + $0x20] sm:$0xf]
          %v6352 = vld [vmem:[%s1543 + $0x24] sm:$0xf]
          %v6353 = vld [vmem:[%s1543 + $0x28] sm:$0xf]
          %v6354 = vld [vmem:[%s1543 + $0x2c] sm:$0xf]
          %v6355 = vld [vmem:[%s1543 + $0x30] sm:$0xf]
          %v6356 = vld [vmem:[%s1543 + $0x34] sm:$0xf]
          %v6357 = vld [vmem:[%s1543 + $0x38] sm:$0xf]
          %v6358 = vld [vmem:[%s1543 + $0x3c] sm:$0xf]
          %v6375 = vunpack.c.l.b16 %v6343
          %v6376 = vunpack.c.l.b16 %v6344
          %v6377 = vunpack.c.l.b16 %v6345
          %v6378 = vunpack.c.l.b16 %v6346
          %v6379 = vunpack.c.l.b16 %v6347
          %v6380 = vunpack.c.l.b16 %v6348
          %v6381 = vunpack.c.l.b16 %v6349
          %v6382 = vunpack.c.l.b16 %v6350
          %v6383 = vunpack.c.l.b16 %v6351
          %v6384 = vunpack.c.l.b16 %v6352
          %v6385 = vunpack.c.l.b16 %v6353
          %v6386 = vunpack.c.l.b16 %v6354
          %v6387 = vunpack.c.l.b16 %v6355
          %v6388 = vunpack.c.l.b16 %v6356
          %v6389 = vunpack.c.l.b16 %v6357
          %v6390 = vunpack.c.l.b16 %v6358
          %v6391 = vpack.c.b16 %v6376, %v6375
          %v6392 = vpack.c.b16 %v6378, %v6377
          %v6393 = vpack.c.b16 %v6380, %v6379
          %v6394 = vpack.c.b16 %v6382, %v6381
          %v6395 = vpack.c.b16 %v6384, %v6383
          %v6396 = vpack.c.b16 %v6386, %v6385
          %v6397 = vpack.c.b16 %v6388, %v6387
          %v6398 = vpack.c.b16 %v6390, %v6389
          %6407 = vmatprep.subr.bf16.mxu0 0
          %6408 = vmatpush1.bf16.msra.mxu0 %v6391
          %6409 = vmatprep.subr.bf16.mxu0 0
          %6410 = vmatpush1.bf16.msra.mxu0 %v6392
          %6411 = vmatprep.subr.bf16.mxu0 0
          %6412 = vmatpush1.bf16.msra.mxu0 %v6393
          %6413 = vmatprep.subr.bf16.mxu0 0
          %6414 = vmatpush1.bf16.msra.mxu0 %v6394
          %6415 = vmatprep.subr.bf16.mxu0 0
          %6416 = vmatpush1.bf16.msra.mxu0 %v6395
          %6417 = vmatprep.subr.bf16.mxu0 0
          %6418 = vmatpush1.bf16.msra.mxu0 %v6396
          %6419 = vmatprep.subr.bf16.mxu0 0
          %6420 = vmatpush1.bf16.msra.mxu0 %v6397
          %6421 = vmatprep.subr.bf16.mxu0 0
          %6422 = vmatpush1.bf16.msra.mxu0 %v6398
          %6423 = vmatprep.subr.bf16.mxu0 0
          %6424 = vmatpush1.bf16.msra.mxu0 0
          %6425 = vmatprep.subr.bf16.mxu0 0
          %6426 = vmatpush1.bf16.msra.mxu0 0
          %6427 = vmatprep.subr.bf16.mxu0 0
          %6428 = vmatpush1.bf16.msra.mxu0 0
          %6429 = vmatprep.subr.bf16.mxu0 0
          %6430 = vmatpush1.bf16.msra.mxu0 0
          %6431 = vmatprep.subr.bf16.mxu0 0
          %6432 = vmatpush1.bf16.msra.mxu0 0
          %6433 = vmatprep.subr.bf16.mxu0 0
          %6434 = vmatpush1.bf16.msra.mxu0 0
          %6435 = vmatprep.subr.bf16.mxu0 0
          %6436 = vmatpush1.bf16.msra.mxu0 0
          %6437 = vmatprep.subr.bf16.mxu0 0
          %6438 = vmatpush1.bf16.msra.mxu0 0
          %6439 = vmatprep.mubr.bf16.mxu0 0
          %6440 = vmatmul.mubr.bf16.gmra.mrb[0].mxu0 %v6082
          %v6441 = vpop.f32.mrb[0].mxu0
          %v6442 = vadd.f32 0.0, %v6441
          %v6443 = vpop.f32.mrb[0].mxu0
          %v6444 = vpop.f32.mrb[0].mxu0
          %v6445 = vadd.f32 0.0, %v6444
          %v6446 = vpop.f32.mrb[0].mxu0
          %6447 = vmatprep.mubr.bf16.mxu0 0
          %6448 = vmatmul.mubr.bf16.gmra.mrb[0].mxu0 %v6083
          %v6449 = vpop.f32.mrb[0].mxu0
          %v6450 = vadd.f32 0.0, %v6449
          %v6451 = vpop.f32.mrb[0].mxu0
          %v6452 = vpop.f32.mrb[0].mxu0
          %v6453 = vadd.f32 0.0, %v6452
          %v6454 = vpop.f32.mrb[0].mxu0
          %6455 = vmatprep.mubr.bf16.mxu0 0
          %6456 = vmatmul.mubr.bf16.gmra.mrb[0].mxu0 %v6084
          %v6457 = vpop.f32.mrb[0].mxu0
          %v6458 = vadd.f32 0.0, %v6457
          %v6459 = vpop.f32.mrb[0].mxu0
          %v6460 = vpop.f32.mrb[0].mxu0
          %v6461 = vadd.f32 0.0, %v6460
          %v6462 = vpop.f32.mrb[0].mxu0
          %6463 = vmatprep.mubr.bf16.mxu0 0
          %6464 = vmatmul.mubr.bf16.gmra.mrb[0].mxu0 %v6085
          %v6465 = vpop.f32.mrb[0].mxu0
          %v6466 = vadd.f32 0.0, %v6465
          %v6467 = vpop.f32.mrb[0].mxu0
          %v6468 = vpop.f32.mrb[0].mxu0
          %v6469 = vadd.f32 0.0, %v6468
          %v6470 = vpop.f32.mrb[0].mxu0
          %6471 = vmatprep.mubr.bf16.mxu0 0
          %6472 = vmatmul.mubr.bf16.gmra.mrb[0].mxu0 %v6086
          %v6473 = vpop.f32.mrb[0].mxu0
          %v6474 = vadd.f32 0.0, %v6473
          %v6475 = vpop.f32.mrb[0].mxu0
          %v6476 = vpop.f32.mrb[0].mxu0
          %v6477 = vadd.f32 0.0, %v6476
          %v6478 = vpop.f32.mrb[0].mxu0
          %6479 = vmatprep.mubr.bf16.mxu0 0
          %6480 = vmatmul.mubr.bf16.gmra.mrb[0].mxu0 %v6087
          %v6481 = vpop.f32.mrb[0].mxu0
          %v6482 = vadd.f32 0.0, %v6481
          %v6483 = vpop.f32.mrb[0].mxu0
          %v6484 = vpop.f32.mrb[0].mxu0
          %v6485 = vadd.f32 0.0, %v6484
          %v6486 = vpop.f32.mrb[0].mxu0
          %6487 = vmatprep.mubr.bf16.mxu0 0
          %6488 = vmatmul.mubr.bf16.gmra.mrb[0].mxu0 %v6088
          %v6489 = vpop.f32.mrb[0].mxu0
          %v6490 = vadd.f32 0.0, %v6489
          %v6491 = vpop.f32.mrb[0].mxu0
          %v6492 = vpop.f32.mrb[0].mxu0
          %v6493 = vadd.f32 0.0, %v6492
          %v6494 = vpop.f32.mrb[0].mxu0
          %6495 = vmatprep.mubr.bf16.mxu0 0
          %6496 = vmatmul.mubr.bf16.gmra.mrb[0].mxu0 %v6089
          %v6497 = vpop.f32.mrb[0].mxu0
          %v6498 = vadd.f32 0.0, %v6497
          %v6499 = vpop.f32.mrb[0].mxu0
          %v6500 = vpop.f32.mrb[0].mxu0
          %v6501 = vadd.f32 0.0, %v6500
          %v6502 = vpop.f32.mrb[0].mxu0
          %6503 = vdwg.mxu0
          %v6504 = vadd.f32 %v6327, %v6442
          %v6505 = vadd.f32 %v6328, %v6445
          %v6506 = vadd.f32 %v6329, %v6450
          %v6507 = vadd.f32 %v6330, %v6453
          %v6508 = vadd.f32 %v6331, %v6458
          %v6509 = vadd.f32 %v6332, %v6461
          %v6510 = vadd.f32 %v6333, %v6466
          %v6511 = vadd.f32 %v6334, %v6469
          %v6512 = vadd.f32 %v6335, %v6474
          %v6513 = vadd.f32 %v6336, %v6477
          %v6514 = vadd.f32 %v6337, %v6482
          %v6515 = vadd.f32 %v6338, %v6485
          %v6516 = vadd.f32 %v6339, %v6490
          %v6517 = vadd.f32 %v6340, %v6493
          %v6518 = vadd.f32 %v6341, %v6498
          %v6519 = vadd.f32 %v6342, %v6501
          %v6520 = vld [vmem:[%s585 + $0x90] sm:$0xff]
          %v6521 = vld [vmem:[%s585 + $0x98] sm:$0xff]
          %v6522 = vld [vmem:[%s585 + $0xa0] sm:$0xff]
          %v6523 = vld [vmem:[%s585 + $0xa8] sm:$0xff]
          %v6524 = vld [vmem:[%s585 + $0xb0] sm:$0xff]
          %v6525 = vld [vmem:[%s585 + $0xb8] sm:$0xff]
          %v6526 = vld [vmem:[%s585 + $0xc0] sm:$0xff]
          %v6527 = vld [vmem:[%s585 + $0xc8] sm:$0xff]
          %v6528 = vld [vmem:[%s585 + $0xd0] sm:$0x1]
          %v6529 = vld [vmem:[%s1733] sm:$0xf]
          %v6530 = vld [vmem:[%s1733 + $0x4] sm:$0xf]
          %v6531 = vld [vmem:[%s1733 + $0x8] sm:$0xf]
          %v6532 = vld [vmem:[%s1733 + $0xc] sm:$0xf]
          %v6533 = vld [vmem:[%s1733 + $0x10] sm:$0xf]
          %v6534 = vld [vmem:[%s1733 + $0x14] sm:$0xf]
          %v6535 = vld [vmem:[%s1733 + $0x18] sm:$0xf]
          %v6536 = vld [vmem:[%s1733 + $0x1c] sm:$0xf]
          %v6537 = vld [vmem:[%s1733 + $0x20] sm:$0xf]
          %v6538 = vld [vmem:[%s1733 + $0x24] sm:$0xf]
          %v6539 = vld [vmem:[%s1733 + $0x28] sm:$0xf]
          %v6540 = vld [vmem:[%s1733 + $0x2c] sm:$0xf]
          %v6541 = vld [vmem:[%s1733 + $0x30] sm:$0xf]
          %v6542 = vld [vmem:[%s1733 + $0x34] sm:$0xf]
          %v6543 = vld [vmem:[%s1733 + $0x38] sm:$0xf]
          %v6544 = vld [vmem:[%s1733 + $0x3c] sm:$0xf]
          %v6546 = vshrl.u32 %v6520, 16
          %v6548 = vshll.u32 %v6520, 16
          %v6550 = vrot.slane %v6548, 1
          %v6551 = vor.u32 %v6546, %v6550
          %v6553 = vshll.u32 %v6521, 16
          %v6555 = vrot.slane %v6553, 1
          %v6556 = vsel %vm1750, %v6551, %v6555
          %v6557 = vshrl.u32 %v6521, 16
          %v6559 = vor.u32 %v6557, %v6555
          %v6561 = vshll.u32 %v6522, 16
          %v6563 = vrot.slane %v6561, 1
          %v6564 = vsel %vm1750, %v6559, %v6563
          %v6565 = vshrl.u32 %v6522, 16
          %v6567 = vor.u32 %v6565, %v6563
          %v6569 = vshll.u32 %v6523, 16
          %v6571 = vrot.slane %v6569, 1
          %v6572 = vsel %vm1750, %v6567, %v6571
          %v6573 = vshrl.u32 %v6523, 16
          %v6575 = vor.u32 %v6573, %v6571
          %v6577 = vshll.u32 %v6524, 16
          %v6579 = vrot.slane %v6577, 1
          %v6580 = vsel %vm1750, %v6575, %v6579
          %v6581 = vshrl.u32 %v6524, 16
          %v6583 = vor.u32 %v6581, %v6579
          %v6585 = vshll.u32 %v6525, 16
          %v6587 = vrot.slane %v6585, 1
          %v6588 = vsel %vm1750, %v6583, %v6587
          %v6589 = vshrl.u32 %v6525, 16
          %v6591 = vor.u32 %v6589, %v6587
          %v6593 = vshll.u32 %v6526, 16
          %v6595 = vrot.slane %v6593, 1
          %v6596 = vsel %vm1750, %v6591, %v6595
          %v6597 = vshrl.u32 %v6526, 16
          %v6599 = vor.u32 %v6597, %v6595
          %v6601 = vshll.u32 %v6527, 16
          %v6603 = vrot.slane %v6601, 1
          %v6604 = vsel %vm1750, %v6599, %v6603
          %v6605 = vshrl.u32 %v6527, 16
          %v6607 = vor.u32 %v6605, %v6603
          %v6609 = vshll.u32 %v6528, 16
          %v6611 = vrot.slane %v6609, 1
          %v6612 = vsel %vm1750, %v6607, %v6611
          %v6637 = vunpack.c.l.b16 %v6529
          %v6638 = vunpack.c.l.b16 %v6530
          %v6639 = vunpack.c.l.b16 %v6531
          %v6640 = vunpack.c.l.b16 %v6532
          %v6641 = vunpack.c.l.b16 %v6533
          %v6642 = vunpack.c.l.b16 %v6534
          %v6643 = vunpack.c.l.b16 %v6535
          %v6644 = vunpack.c.l.b16 %v6536
          %v6645 = vunpack.c.l.b16 %v6537
          %v6646 = vunpack.c.l.b16 %v6538
          %v6647 = vunpack.c.l.b16 %v6539
          %v6648 = vunpack.c.l.b16 %v6540
          %v6649 = vunpack.c.l.b16 %v6541
          %v6650 = vunpack.c.l.b16 %v6542
          %v6651 = vunpack.c.l.b16 %v6543
          %v6652 = vunpack.c.l.b16 %v6544
          %v6653 = vpack.c.b16 %v6638, %v6637
          %v6654 = vpack.c.b16 %v6640, %v6639
          %v6655 = vpack.c.b16 %v6642, %v6641
          %v6656 = vpack.c.b16 %v6644, %v6643
          %v6657 = vpack.c.b16 %v6646, %v6645
          %v6658 = vpack.c.b16 %v6648, %v6647
          %v6659 = vpack.c.b16 %v6650, %v6649
          %v6660 = vpack.c.b16 %v6652, %v6651
          %6669 = vmatprep.subr.bf16.mxu0 0
          %6670 = vmatpush1.bf16.msra.mxu0 %v6653
          %6671 = vmatprep.subr.bf16.mxu0 0
          %6672 = vmatpush1.bf16.msra.mxu0 %v6654
          %6673 = vmatprep.subr.bf16.mxu0 0
          %6674 = vmatpush1.bf16.msra.mxu0 %v6655
          %6675 = vmatprep.subr.bf16.mxu0 0
          %6676 = vmatpush1.bf16.msra.mxu0 %v6656
          %6677 = vmatprep.subr.bf16.mxu0 0
          %6678 = vmatpush1.bf16.msra.mxu0 %v6657
          %6679 = vmatprep.subr.bf16.mxu0 0
          %6680 = vmatpush1.bf16.msra.mxu0 %v6658
          %6681 = vmatprep.subr.bf16.mxu0 0
          %6682 = vmatpush1.bf16.msra.mxu0 %v6659
          %6683 = vmatprep.subr.bf16.mxu0 0
          %6684 = vmatpush1.bf16.msra.mxu0 %v6660
          %6685 = vmatprep.subr.bf16.mxu0 0
          %6686 = vmatpush1.bf16.msra.mxu0 0
          %6687 = vmatprep.subr.bf16.mxu0 0
          %6688 = vmatpush1.bf16.msra.mxu0 0
          %6689 = vmatprep.subr.bf16.mxu0 0
          %6690 = vmatpush1.bf16.msra.mxu0 0
          %6691 = vmatprep.subr.bf16.mxu0 0
          %6692 = vmatpush1.bf16.msra.mxu0 0
          %6693 = vmatprep.subr.bf16.mxu0 0
          %6694 = vmatpush1.bf16.msra.mxu0 0
          %6695 = vmatprep.subr.bf16.mxu0 0
          %6696 = vmatpush1.bf16.msra.mxu0 0
          %6697 = vmatprep.subr.bf16.mxu0 0
          %6698 = vmatpush1.bf16.msra.mxu0 0
          %6699 = vmatprep.subr.bf16.mxu0 0
          %6700 = vmatpush1.bf16.msra.mxu0 0
          %6701 = vmatprep.mubr.bf16.mxu0 0
          %6702 = vmatmul.mubr.bf16.gmra.mrb[0].mxu0 %v6556
          %v6703 = vpop.f32.mrb[0].mxu0
          %v6704 = vadd.f32 0.0, %v6703
          %v6705 = vpop.f32.mrb[0].mxu0
          %v6706 = vpop.f32.mrb[0].mxu0
          %v6707 = vadd.f32 0.0, %v6706
          %v6708 = vpop.f32.mrb[0].mxu0
          %6709 = vmatprep.mubr.bf16.mxu0 0
          %6710 = vmatmul.mubr.bf16.gmra.mrb[0].mxu0 %v6564
          %v6711 = vpop.f32.mrb[0].mxu0
          %v6712 = vadd.f32 0.0, %v6711
          %v6713 = vpop.f32.mrb[0].mxu0
          %v6714 = vpop.f32.mrb[0].mxu0
          %v6715 = vadd.f32 0.0, %v6714
          %v6716 = vpop.f32.mrb[0].mxu0
          %6717 = vmatprep.mubr.bf16.mxu0 0
          %6718 = vmatmul.mubr.bf16.gmra.mrb[0].mxu0 %v6572
          %v6719 = vpop.f32.mrb[0].mxu0
          %v6720 = vadd.f32 0.0, %v6719
          %v6721 = vpop.f32.mrb[0].mxu0
          %v6722 = vpop.f32.mrb[0].mxu0
          %v6723 = vadd.f32 0.0, %v6722
          %v6724 = vpop.f32.mrb[0].mxu0
          %6725 = vmatprep.mubr.bf16.mxu0 0
          %6726 = vmatmul.mubr.bf16.gmra.mrb[0].mxu0 %v6580
          %v6727 = vpop.f32.mrb[0].mxu0
          %v6728 = vadd.f32 0.0, %v6727
          %v6729 = vpop.f32.mrb[0].mxu0
          %v6730 = vpop.f32.mrb[0].mxu0
          %v6731 = vadd.f32 0.0, %v6730
          %v6732 = vpop.f32.mrb[0].mxu0
          %6733 = vmatprep.mubr.bf16.mxu0 0
          %6734 = vmatmul.mubr.bf16.gmra.mrb[0].mxu0 %v6588
          %v6735 = vpop.f32.mrb[0].mxu0
          %v6736 = vadd.f32 0.0, %v6735
          %v6737 = vpop.f32.mrb[0].mxu0
          %v6738 = vpop.f32.mrb[0].mxu0
          %v6739 = vadd.f32 0.0, %v6738
          %v6740 = vpop.f32.mrb[0].mxu0
          %6741 = vmatprep.mubr.bf16.mxu0 0
          %6742 = vmatmul.mubr.bf16.gmra.mrb[0].mxu0 %v6596
          %v6743 = vpop.f32.mrb[0].mxu0
          %v6744 = vadd.f32 0.0, %v6743
          %v6745 = vpop.f32.mrb[0].mxu0
          %v6746 = vpop.f32.mrb[0].mxu0
          %v6747 = vadd.f32 0.0, %v6746
          %v6748 = vpop.f32.mrb[0].mxu0
          %6749 = vmatprep.mubr.bf16.mxu0 0
          %6750 = vmatmul.mubr.bf16.gmra.mrb[0].mxu0 %v6604
          %v6751 = vpop.f32.mrb[0].mxu0
          %v6752 = vadd.f32 0.0, %v6751
          %v6753 = vpop.f32.mrb[0].mxu0
          %v6754 = vpop.f32.mrb[0].mxu0
          %v6755 = vadd.f32 0.0, %v6754
          %v6756 = vpop.f32.mrb[0].mxu0
          %6757 = vmatprep.mubr.bf16.mxu0 0
          %6758 = vmatmul.mubr.bf16.gmra.mrb[0].mxu0 %v6612
          %v6759 = vpop.f32.mrb[0].mxu0
          %v6760 = vadd.f32 0.0, %v6759
          %v6761 = vpop.f32.mrb[0].mxu0
          %v6762 = vpop.f32.mrb[0].mxu0
          %v6763 = vadd.f32 0.0, %v6762
          %v6764 = vpop.f32.mrb[0].mxu0
          %6765 = vdwg.mxu0
          %v6766 = vadd.f32 %v6504, %v6704
          %v6767 = vadd.f32 %v6505, %v6707
          %v6768 = vadd.f32 %v6506, %v6712
          %v6769 = vadd.f32 %v6507, %v6715
          %v6770 = vadd.f32 %v6508, %v6720
          %v6771 = vadd.f32 %v6509, %v6723
          %v6772 = vadd.f32 %v6510, %v6728
          %v6773 = vadd.f32 %v6511, %v6731
          %v6774 = vadd.f32 %v6512, %v6736
          %v6775 = vadd.f32 %v6513, %v6739
          %v6776 = vadd.f32 %v6514, %v6744
          %v6777 = vadd.f32 %v6515, %v6747
          %v6778 = vadd.f32 %v6516, %v6752
          %v6779 = vadd.f32 %v6517, %v6755
          %v6780 = vadd.f32 %v6518, %v6760
          %v6781 = vadd.f32 %v6519, %v6763
          %v6782 = vld [vmem:[%s585 + $0x98] sm:$0xff]
          %v6783 = vld [vmem:[%s585 + $0xa0] sm:$0xff]
          %v6784 = vld [vmem:[%s585 + $0xa8] sm:$0xff]
          %v6785 = vld [vmem:[%s585 + $0xb0] sm:$0xff]
          %v6786 = vld [vmem:[%s585 + $0xb8] sm:$0xff]
          %v6787 = vld [vmem:[%s585 + $0xc0] sm:$0xff]
          %v6788 = vld [vmem:[%s585 + $0xc8] sm:$0xff]
          %v6789 = vld [vmem:[%s585 + $0xd0] sm:$0xff]
          %v6790 = vld [vmem:[%s585 + $0xd8] sm:$0x1]
          %v6791 = vld [vmem:[%s2000] sm:$0xf]
          %v6792 = vld [vmem:[%s2000 + $0x4] sm:$0xf]
          %v6793 = vld [vmem:[%s2000 + $0x8] sm:$0xf]
          %v6794 = vld [vmem:[%s2000 + $0xc] sm:$0xf]
          %v6795 = vld [vmem:[%s2000 + $0x10] sm:$0xf]
          %v6796 = vld [vmem:[%s2000 + $0x14] sm:$0xf]
          %v6797 = vld [vmem:[%s2000 + $0x18] sm:$0xf]
          %v6798 = vld [vmem:[%s2000 + $0x1c] sm:$0xf]
          %v6799 = vld [vmem:[%s2000 + $0x20] sm:$0xf]
          %v6800 = vld [vmem:[%s2000 + $0x24] sm:$0xf]
          %v6801 = vld [vmem:[%s2000 + $0x28] sm:$0xf]
          %v6802 = vld [vmem:[%s2000 + $0x2c] sm:$0xf]
          %v6803 = vld [vmem:[%s2000 + $0x30] sm:$0xf]
          %v6804 = vld [vmem:[%s2000 + $0x34] sm:$0xf]
          %v6805 = vld [vmem:[%s2000 + $0x38] sm:$0xf]
          %v6806 = vld [vmem:[%s2000 + $0x3c] sm:$0xf]
          %v6808 = vshrl.u32 %v6782, 16
          %v6810 = vshll.u32 %v6782, 16
          %v6812 = vrot.slane %v6810, 1
          %v6813 = vor.u32 %v6808, %v6812
          %v6815 = vshll.u32 %v6783, 16
          %v6817 = vrot.slane %v6815, 1
          %v6818 = vsel %vm1750, %v6813, %v6817
          %v6819 = vshrl.u32 %v6783, 16
          %v6821 = vor.u32 %v6819, %v6817
          %v6823 = vshll.u32 %v6784, 16
          %v6825 = vrot.slane %v6823, 1
          %v6826 = vsel %vm1750, %v6821, %v6825
          %v6827 = vshrl.u32 %v6784, 16
          %v6829 = vor.u32 %v6827, %v6825
          %v6831 = vshll.u32 %v6785, 16
          %v6833 = vrot.slane %v6831, 1
          %v6834 = vsel %vm1750, %v6829, %v6833
          %v6835 = vshrl.u32 %v6785, 16
          %v6837 = vor.u32 %v6835, %v6833
          %v6839 = vshll.u32 %v6786, 16
          %v6841 = vrot.slane %v6839, 1
          %v6842 = vsel %vm1750, %v6837, %v6841
          %v6843 = vshrl.u32 %v6786, 16
          %v6845 = vor.u32 %v6843, %v6841
          %v6847 = vshll.u32 %v6787, 16
          %v6849 = vrot.slane %v6847, 1
          %v6850 = vsel %vm1750, %v6845, %v6849
          %v6851 = vshrl.u32 %v6787, 16
          %v6853 = vor.u32 %v6851, %v6849
          %v6855 = vshll.u32 %v6788, 16
          %v6857 = vrot.slane %v6855, 1
          %v6858 = vsel %vm1750, %v6853, %v6857
          %v6859 = vshrl.u32 %v6788, 16
          %v6861 = vor.u32 %v6859, %v6857
          %v6863 = vshll.u32 %v6789, 16
          %v6865 = vrot.slane %v6863, 1
          %v6866 = vsel %vm1750, %v6861, %v6865
          %v6867 = vshrl.u32 %v6789, 16
          %v6869 = vor.u32 %v6867, %v6865
          %v6871 = vshll.u32 %v6790, 16
          %v6873 = vrot.slane %v6871, 1
          %v6874 = vsel %vm1750, %v6869, %v6873
          %v6899 = vunpack.c.l.b16 %v6791
          %v6900 = vunpack.c.l.b16 %v6792
          %v6901 = vunpack.c.l.b16 %v6793
          %v6902 = vunpack.c.l.b16 %v6794
          %v6903 = vunpack.c.l.b16 %v6795
          %v6904 = vunpack.c.l.b16 %v6796
          %v6905 = vunpack.c.l.b16 %v6797
          %v6906 = vunpack.c.l.b16 %v6798
          %v6907 = vunpack.c.l.b16 %v6799
          %v6908 = vunpack.c.l.b16 %v6800
          %v6909 = vunpack.c.l.b16 %v6801
          %v6910 = vunpack.c.l.b16 %v6802
          %v6911 = vunpack.c.l.b16 %v6803
          %v6912 = vunpack.c.l.b16 %v6804
          %v6913 = vunpack.c.l.b16 %v6805
          %v6914 = vunpack.c.l.b16 %v6806
          %v6915 = vpack.c.b16 %v6900, %v6899
          %v6916 = vpack.c.b16 %v6902, %v6901
          %v6917 = vpack.c.b16 %v6904, %v6903
          %v6918 = vpack.c.b16 %v6906, %v6905
          %v6919 = vpack.c.b16 %v6908, %v6907
          %v6920 = vpack.c.b16 %v6910, %v6909
          %v6921 = vpack.c.b16 %v6912, %v6911
          %v6922 = vpack.c.b16 %v6914, %v6913
          %6931 = vmatprep.subr.bf16.mxu0 0
          %6932 = vmatpush1.bf16.msra.mxu0 %v6915
          %6933 = vmatprep.subr.bf16.mxu0 0
          %6934 = vmatpush1.bf16.msra.mxu0 %v6916
          %6935 = vmatprep.subr.bf16.mxu0 0
          %6936 = vmatpush1.bf16.msra.mxu0 %v6917
          %6937 = vmatprep.subr.bf16.mxu0 0
          %6938 = vmatpush1.bf16.msra.mxu0 %v6918
          %6939 = vmatprep.subr.bf16.mxu0 0
          %6940 = vmatpush1.bf16.msra.mxu0 %v6919
          %6941 = vmatprep.subr.bf16.mxu0 0
          %6942 = vmatpush1.bf16.msra.mxu0 %v6920
          %6943 = vmatprep.subr.bf16.mxu0 0
          %6944 = vmatpush1.bf16.msra.mxu0 %v6921
          %6945 = vmatprep.subr.bf16.mxu0 0
          %6946 = vmatpush1.bf16.msra.mxu0 %v6922
          %6947 = vmatprep.subr.bf16.mxu0 0
          %6948 = vmatpush1.bf16.msra.mxu0 0
          %6949 = vmatprep.subr.bf16.mxu0 0
          %6950 = vmatpush1.bf16.msra.mxu0 0
          %6951 = vmatprep.subr.bf16.mxu0 0
          %6952 = vmatpush1.bf16.msra.mxu0 0
          %6953 = vmatprep.subr.bf16.mxu0 0
          %6954 = vmatpush1.bf16.msra.mxu0 0
          %6955 = vmatprep.subr.bf16.mxu0 0
          %6956 = vmatpush1.bf16.msra.mxu0 0
          %6957 = vmatprep.subr.bf16.mxu0 0
          %6958 = vmatpush1.bf16.msra.mxu0 0
          %6959 = vmatprep.subr.bf16.mxu0 0
          %6960 = vmatpush1.bf16.msra.mxu0 0
          %6961 = vmatprep.subr.bf16.mxu0 0
          %6962 = vmatpush1.bf16.msra.mxu0 0
          %6963 = vmatprep.mubr.bf16.mxu0 0
          %6964 = vmatmul.mubr.bf16.gmra.mrb[0].mxu0 %v6818
          %v6965 = vpop.f32.mrb[0].mxu0
          %v6966 = vadd.f32 0.0, %v6965
          %v6967 = vpop.f32.mrb[0].mxu0
          %v6968 = vpop.f32.mrb[0].mxu0
          %v6969 = vadd.f32 0.0, %v6968
          %v6970 = vpop.f32.mrb[0].mxu0
          %6971 = vmatprep.mubr.bf16.mxu0 0
          %6972 = vmatmul.mubr.bf16.gmra.mrb[0].mxu0 %v6826
          %v6973 = vpop.f32.mrb[0].mxu0
          %v6974 = vadd.f32 0.0, %v6973
          %v6975 = vpop.f32.mrb[0].mxu0
          %v6976 = vpop.f32.mrb[0].mxu0
          %v6977 = vadd.f32 0.0, %v6976
          %v6978 = vpop.f32.mrb[0].mxu0
          %6979 = vmatprep.mubr.bf16.mxu0 0
          %6980 = vmatmul.mubr.bf16.gmra.mrb[0].mxu0 %v6834
          %v6981 = vpop.f32.mrb[0].mxu0
          %v6982 = vadd.f32 0.0, %v6981
          %v6983 = vpop.f32.mrb[0].mxu0
          %v6984 = vpop.f32.mrb[0].mxu0
          %v6985 = vadd.f32 0.0, %v6984
          %v6986 = vpop.f32.mrb[0].mxu0
          %6987 = vmatprep.mubr.bf16.mxu0 0
          %6988 = vmatmul.mubr.bf16.gmra.mrb[0].mxu0 %v6842
          %v6989 = vpop.f32.mrb[0].mxu0
          %v6990 = vadd.f32 0.0, %v6989
          %v6991 = vpop.f32.mrb[0].mxu0
          %v6992 = vpop.f32.mrb[0].mxu0
          %v6993 = vadd.f32 0.0, %v6992
          %v6994 = vpop.f32.mrb[0].mxu0
          %6995 = vmatprep.mubr.bf16.mxu0 0
          %6996 = vmatmul.mubr.bf16.gmra.mrb[0].mxu0 %v6850
          %v6997 = vpop.f32.mrb[0].mxu0
          %v6998 = vadd.f32 0.0, %v6997
          %v6999 = vpop.f32.mrb[0].mxu0
          %v7000 = vpop.f32.mrb[0].mxu0
          %v7001 = vadd.f32 0.0, %v7000
          %v7002 = vpop.f32.mrb[0].mxu0
          %7003 = vmatprep.mubr.bf16.mxu0 0
          %7004 = vmatmul.mubr.bf16.gmra.mrb[0].mxu0 %v6858
          %v7005 = vpop.f32.mrb[0].mxu0
          %v7006 = vadd.f32 0.0, %v7005
          %v7007 = vpop.f32.mrb[0].mxu0
          %v7008 = vpop.f32.mrb[0].mxu0
          %v7009 = vadd.f32 0.0, %v7008
          %v7010 = vpop.f32.mrb[0].mxu0
          %7011 = vmatprep.mubr.bf16.mxu0 0
          %7012 = vmatmul.mubr.bf16.gmra.mrb[0].mxu0 %v6866
          %v7013 = vpop.f32.mrb[0].mxu0
          %v7014 = vadd.f32 0.0, %v7013
          %v7015 = vpop.f32.mrb[0].mxu0
          %v7016 = vpop.f32.mrb[0].mxu0
          %v7017 = vadd.f32 0.0, %v7016
          %v7018 = vpop.f32.mrb[0].mxu0
          %7019 = vmatprep.mubr.bf16.mxu0 0
          %7020 = vmatmul.mubr.bf16.gmra.mrb[0].mxu0 %v6874
          %v7021 = vpop.f32.mrb[0].mxu0
          %v7022 = vadd.f32 0.0, %v7021
          %v7023 = vpop.f32.mrb[0].mxu0
          %v7024 = vpop.f32.mrb[0].mxu0
          %v7025 = vadd.f32 0.0, %v7024
          %v7026 = vpop.f32.mrb[0].mxu0
          %7027 = vdwg.mxu0
          %v7028 = vadd.f32 %v6766, %v6966
          %v7029 = vadd.f32 %v6767, %v6969
          %v7030 = vadd.f32 %v6768, %v6974
          %v7031 = vadd.f32 %v6769, %v6977
          %v7032 = vadd.f32 %v6770, %v6982
          %v7033 = vadd.f32 %v6771, %v6985
          %v7034 = vadd.f32 %v6772, %v6990
          %v7035 = vadd.f32 %v6773, %v6993
          %v7036 = vadd.f32 %v6774, %v6998
          %v7037 = vadd.f32 %v6775, %v7001
          %v7038 = vadd.f32 %v6776, %v7006
          %v7039 = vadd.f32 %v6777, %v7009
          %v7040 = vadd.f32 %v6778, %v7014
          %v7041 = vadd.f32 %v6779, %v7017
          %v7042 = vadd.f32 %v6780, %v7022
          %v7043 = vadd.f32 %v6781, %v7025
          %v7044 = vld [vmem:[%s585 + $0x98] sm:$0xfe]
          %v7045 = vld [vmem:[%s2258] sm:$0xf]
          %v7046 = vld [vmem:[%s2258 + $0x4] sm:$0xf]
          %v7047 = vld [vmem:[%s2258 + $0x8] sm:$0xf]
          %v7048 = vld [vmem:[%s2258 + $0xc] sm:$0xf]
          %v7049 = vld [vmem:[%s2258 + $0x10] sm:$0xf]
          %v7050 = vld [vmem:[%s2258 + $0x14] sm:$0xf]
          %v7051 = vld [vmem:[%s2258 + $0x18] sm:$0xf]
          %v7052 = vld [vmem:[%s2258 + $0x1c] sm:$0xf]
          %v7053 = vld [vmem:[%s2258 + $0x20] sm:$0xf]
          %v7054 = vld [vmem:[%s2258 + $0x24] sm:$0xf]
          %v7055 = vld [vmem:[%s2258 + $0x28] sm:$0xf]
          %v7056 = vld [vmem:[%s2258 + $0x2c] sm:$0xf]
          %v7057 = vld [vmem:[%s2258 + $0x30] sm:$0xf]
          %v7058 = vld [vmem:[%s2258 + $0x34] sm:$0xf]
          %v7059 = vld [vmem:[%s2258 + $0x38] sm:$0xf]
          %v7060 = vld [vmem:[%s2258 + $0x3c] sm:$0xf]
          %v7070 = vrot.slane %v7044, 1
          %v7071 = vrot.slane %v6783, 1
          %v7072 = vsel %vm2284, %v7070, %v7071
          %v7073 = vrot.slane %v6784, 1
          %v7074 = vsel %vm2284, %v7071, %v7073
          %v7075 = vrot.slane %v6785, 1
          %v7076 = vsel %vm2284, %v7073, %v7075
          %v7077 = vrot.slane %v6786, 1
          %v7078 = vsel %vm2284, %v7075, %v7077
          %v7079 = vrot.slane %v6787, 1
          %v7080 = vsel %vm2284, %v7077, %v7079
          %v7081 = vrot.slane %v6788, 1
          %v7082 = vsel %vm2284, %v7079, %v7081
          %v7083 = vrot.slane %v6789, 1
          %v7084 = vsel %vm2284, %v7081, %v7083
          %v7085 = vrot.slane %v6790, 1
          %v7086 = vsel %vm2284, %v7083, %v7085
          %v7111 = vunpack.c.l.b16 %v7045
          %v7112 = vunpack.c.l.b16 %v7046
          %v7113 = vunpack.c.l.b16 %v7047
          %v7114 = vunpack.c.l.b16 %v7048
          %v7115 = vunpack.c.l.b16 %v7049
          %v7116 = vunpack.c.l.b16 %v7050
          %v7117 = vunpack.c.l.b16 %v7051
          %v7118 = vunpack.c.l.b16 %v7052
          %v7119 = vunpack.c.l.b16 %v7053
          %v7120 = vunpack.c.l.b16 %v7054
          %v7121 = vunpack.c.l.b16 %v7055
          %v7122 = vunpack.c.l.b16 %v7056
          %v7123 = vunpack.c.l.b16 %v7057
          %v7124 = vunpack.c.l.b16 %v7058
          %v7125 = vunpack.c.l.b16 %v7059
          %v7126 = vunpack.c.l.b16 %v7060
          %v7127 = vpack.c.b16 %v7112, %v7111
          %v7128 = vpack.c.b16 %v7114, %v7113
          %v7129 = vpack.c.b16 %v7116, %v7115
          %v7130 = vpack.c.b16 %v7118, %v7117
          %v7131 = vpack.c.b16 %v7120, %v7119
          %v7132 = vpack.c.b16 %v7122, %v7121
          %v7133 = vpack.c.b16 %v7124, %v7123
          %v7134 = vpack.c.b16 %v7126, %v7125
          %7143 = vmatprep.subr.bf16.mxu0 0
          %7144 = vmatpush1.bf16.msra.mxu0 %v7127
          %7145 = vmatprep.subr.bf16.mxu0 0
          %7146 = vmatpush1.bf16.msra.mxu0 %v7128
          %7147 = vmatprep.subr.bf16.mxu0 0
          %7148 = vmatpush1.bf16.msra.mxu0 %v7129
          %7149 = vmatprep.subr.bf16.mxu0 0
          %7150 = vmatpush1.bf16.msra.mxu0 %v7130
          %7151 = vmatprep.subr.bf16.mxu0 0
          %7152 = vmatpush1.bf16.msra.mxu0 %v7131
          %7153 = vmatprep.subr.bf16.mxu0 0
          %7154 = vmatpush1.bf16.msra.mxu0 %v7132
          %7155 = vmatprep.subr.bf16.mxu0 0
          %7156 = vmatpush1.bf16.msra.mxu0 %v7133
          %7157 = vmatprep.subr.bf16.mxu0 0
          %7158 = vmatpush1.bf16.msra.mxu0 %v7134
          %7159 = vmatprep.subr.bf16.mxu0 0
          %7160 = vmatpush1.bf16.msra.mxu0 0
          %7161 = vmatprep.subr.bf16.mxu0 0
          %7162 = vmatpush1.bf16.msra.mxu0 0
          %7163 = vmatprep.subr.bf16.mxu0 0
          %7164 = vmatpush1.bf16.msra.mxu0 0
          %7165 = vmatprep.subr.bf16.mxu0 0
          %7166 = vmatpush1.bf16.msra.mxu0 0
          %7167 = vmatprep.subr.bf16.mxu0 0
          %7168 = vmatpush1.bf16.msra.mxu0 0
          %7169 = vmatprep.subr.bf16.mxu0 0
          %7170 = vmatpush1.bf16.msra.mxu0 0
          %7171 = vmatprep.subr.bf16.mxu0 0
          %7172 = vmatpush1.bf16.msra.mxu0 0
          %7173 = vmatprep.subr.bf16.mxu0 0
          %7174 = vmatpush1.bf16.msra.mxu0 0
          %7175 = vmatprep.mubr.bf16.mxu0 0
          %7176 = vmatmul.mubr.bf16.gmra.mrb[0].mxu0 %v7072
          %v7177 = vpop.f32.mrb[0].mxu0
          %v7178 = vadd.f32 0.0, %v7177
          %v7179 = vpop.f32.mrb[0].mxu0
          %v7180 = vpop.f32.mrb[0].mxu0
          %v7181 = vadd.f32 0.0, %v7180
          %v7182 = vpop.f32.mrb[0].mxu0
          %7183 = vmatprep.mubr.bf16.mxu0 0
          %7184 = vmatmul.mubr.bf16.gmra.mrb[0].mxu0 %v7074
          %v7185 = vpop.f32.mrb[0].mxu0
          %v7186 = vadd.f32 0.0, %v7185
          %v7187 = vpop.f32.mrb[0].mxu0
          %v7188 = vpop.f32.mrb[0].mxu0
          %v7189 = vadd.f32 0.0, %v7188
          %v7190 = vpop.f32.mrb[0].mxu0
          %7191 = vmatprep.mubr.bf16.mxu0 0
          %7192 = vmatmul.mubr.bf16.gmra.mrb[0].mxu0 %v7076
          %v7193 = vpop.f32.mrb[0].mxu0
          %v7194 = vadd.f32 0.0, %v7193
          %v7195 = vpop.f32.mrb[0].mxu0
          %v7196 = vpop.f32.mrb[0].mxu0
          %v7197 = vadd.f32 0.0, %v7196
          %v7198 = vpop.f32.mrb[0].mxu0
          %7199 = vmatprep.mubr.bf16.mxu0 0
          %7200 = vmatmul.mubr.bf16.gmra.mrb[0].mxu0 %v7078
          %v7201 = vpop.f32.mrb[0].mxu0
          %v7202 = vadd.f32 0.0, %v7201
          %v7203 = vpop.f32.mrb[0].mxu0
          %v7204 = vpop.f32.mrb[0].mxu0
          %v7205 = vadd.f32 0.0, %v7204
          %v7206 = vpop.f32.mrb[0].mxu0
          %7207 = vmatprep.mubr.bf16.mxu0 0
          %7208 = vmatmul.mubr.bf16.gmra.mrb[0].mxu0 %v7080
          %v7209 = vpop.f32.mrb[0].mxu0
          %v7210 = vadd.f32 0.0, %v7209
          %v7211 = vpop.f32.mrb[0].mxu0
          %v7212 = vpop.f32.mrb[0].mxu0
          %v7213 = vadd.f32 0.0, %v7212
          %v7214 = vpop.f32.mrb[0].mxu0
          %7215 = vmatprep.mubr.bf16.mxu0 0
          %7216 = vmatmul.mubr.bf16.gmra.mrb[0].mxu0 %v7082
          %v7217 = vpop.f32.mrb[0].mxu0
          %v7218 = vadd.f32 0.0, %v7217
          %v7219 = vpop.f32.mrb[0].mxu0
          %v7220 = vpop.f32.mrb[0].mxu0
          %v7221 = vadd.f32 0.0, %v7220
          %v7222 = vpop.f32.mrb[0].mxu0
          %7223 = vmatprep.mubr.bf16.mxu0 0
          %7224 = vmatmul.mubr.bf16.gmra.mrb[0].mxu0 %v7084
          %v7225 = vpop.f32.mrb[0].mxu0
          %v7226 = vadd.f32 0.0, %v7225
          %v7227 = vpop.f32.mrb[0].mxu0
          %v7228 = vpop.f32.mrb[0].mxu0
          %v7229 = vadd.f32 0.0, %v7228
          %v7230 = vpop.f32.mrb[0].mxu0
          %7231 = vmatprep.mubr.bf16.mxu0 0
          %7232 = vmatmul.mubr.bf16.gmra.mrb[0].mxu0 %v7086
          %v7233 = vpop.f32.mrb[0].mxu0
          %v7234 = vadd.f32 0.0, %v7233
          %v7235 = vpop.f32.mrb[0].mxu0
          %v7236 = vpop.f32.mrb[0].mxu0
          %v7237 = vadd.f32 0.0, %v7236
          %v7238 = vpop.f32.mrb[0].mxu0
          %7239 = vdwg.mxu0
          %v7240 = vadd.f32 %v7028, %v7178
          %v7241 = vadd.f32 %v7029, %v7181
          %v7242 = vadd.f32 %v7030, %v7186
          %v7243 = vadd.f32 %v7031, %v7189
          %v7244 = vadd.f32 %v7032, %v7194
          %v7245 = vadd.f32 %v7033, %v7197
          %v7246 = vadd.f32 %v7034, %v7202
          %v7247 = vadd.f32 %v7035, %v7205
          %v7248 = vadd.f32 %v7036, %v7210
          %v7249 = vadd.f32 %v7037, %v7213
          %v7250 = vadd.f32 %v7038, %v7218
          %v7251 = vadd.f32 %v7039, %v7221
          %v7252 = vadd.f32 %v7040, %v7226
          %v7253 = vadd.f32 %v7041, %v7229
          %v7254 = vadd.f32 %v7042, %v7234
          %v7255 = vadd.f32 %v7043, %v7237
          %v7256 = vld [vmem:[%s585 + $0xd8] sm:$0x3]
          %v7257 = vld [vmem:[%s2475] sm:$0xf]
          %v7258 = vld [vmem:[%s2475 + $0x4] sm:$0xf]
          %v7259 = vld [vmem:[%s2475 + $0x8] sm:$0xf]
          %v7260 = vld [vmem:[%s2475 + $0xc] sm:$0xf]
          %v7261 = vld [vmem:[%s2475 + $0x10] sm:$0xf]
          %v7262 = vld [vmem:[%s2475 + $0x14] sm:$0xf]
          %v7263 = vld [vmem:[%s2475 + $0x18] sm:$0xf]
          %v7264 = vld [vmem:[%s2475 + $0x1c] sm:$0xf]
          %v7265 = vld [vmem:[%s2475 + $0x20] sm:$0xf]
          %v7266 = vld [vmem:[%s2475 + $0x24] sm:$0xf]
          %v7267 = vld [vmem:[%s2475 + $0x28] sm:$0xf]
          %v7268 = vld [vmem:[%s2475 + $0x2c] sm:$0xf]
          %v7269 = vld [vmem:[%s2475 + $0x30] sm:$0xf]
          %v7270 = vld [vmem:[%s2475 + $0x34] sm:$0xf]
          %v7271 = vld [vmem:[%s2475 + $0x38] sm:$0xf]
          %v7272 = vld [vmem:[%s2475 + $0x3c] sm:$0xf]
          %v7274 = vshrl.u32 %v7044, 16
          %v7276 = vrot.slane %v7274, 1
          %v7277 = vshll.u32 %v7044, 16
          %v7279 = vrot.slane %v7277, 2
          %v7280 = vor.u32 %v7276, %v7279
          %v7281 = vrot.slane %v6819, 1
          %v7282 = vrot.slane %v6815, 2
          %v7283 = vor.u32 %v7281, %v7282
          %v7284 = vsel %vm2492, %v7280, %v7283
          %v7285 = vrot.slane %v6827, 1
          %v7286 = vrot.slane %v6823, 2
          %v7287 = vor.u32 %v7285, %v7286
          %v7288 = vsel %vm2492, %v7283, %v7287
          %v7289 = vrot.slane %v6835, 1
          %v7290 = vrot.slane %v6831, 2
          %v7291 = vor.u32 %v7289, %v7290
          %v7292 = vsel %vm2492, %v7287, %v7291
          %v7293 = vrot.slane %v6843, 1
          %v7294 = vrot.slane %v6839, 2
          %v7295 = vor.u32 %v7293, %v7294
          %v7296 = vsel %vm2492, %v7291, %v7295
          %v7297 = vrot.slane %v6851, 1
          %v7298 = vrot.slane %v6847, 2
          %v7299 = vor.u32 %v7297, %v7298
          %v7300 = vsel %vm2492, %v7295, %v7299
          %v7301 = vrot.slane %v6859, 1
          %v7302 = vrot.slane %v6855, 2
          %v7303 = vor.u32 %v7301, %v7302
          %v7304 = vsel %vm2492, %v7299, %v7303
          %v7305 = vrot.slane %v6867, 1
          %v7306 = vrot.slane %v6863, 2
          %v7307 = vor.u32 %v7305, %v7306
          %v7308 = vsel %vm2492, %v7303, %v7307
          %v7310 = vshrl.u32 %v7256, 16
          %v7312 = vrot.slane %v7310, 1
          %v7313 = vshll.u32 %v7256, 16
          %v7315 = vrot.slane %v7313, 2
          %v7316 = vor.u32 %v7312, %v7315
          %v7317 = vsel %vm2492, %v7307, %v7316
          %v7342 = vunpack.c.l.b16 %v7257
          %v7343 = vunpack.c.l.b16 %v7258
          %v7344 = vunpack.c.l.b16 %v7259
          %v7345 = vunpack.c.l.b16 %v7260
          %v7346 = vunpack.c.l.b16 %v7261
          %v7347 = vunpack.c.l.b16 %v7262
          %v7348 = vunpack.c.l.b16 %v7263
          %v7349 = vunpack.c.l.b16 %v7264
          %v7350 = vunpack.c.l.b16 %v7265
          %v7351 = vunpack.c.l.b16 %v7266
          %v7352 = vunpack.c.l.b16 %v7267
          %v7353 = vunpack.c.l.b16 %v7268
          %v7354 = vunpack.c.l.b16 %v7269
          %v7355 = vunpack.c.l.b16 %v7270
          %v7356 = vunpack.c.l.b16 %v7271
          %v7357 = vunpack.c.l.b16 %v7272
          %v7358 = vpack.c.b16 %v7343, %v7342
          %v7359 = vpack.c.b16 %v7345, %v7344
          %v7360 = vpack.c.b16 %v7347, %v7346
          %v7361 = vpack.c.b16 %v7349, %v7348
          %v7362 = vpack.c.b16 %v7351, %v7350
          %v7363 = vpack.c.b16 %v7353, %v7352
          %v7364 = vpack.c.b16 %v7355, %v7354
          %v7365 = vpack.c.b16 %v7357, %v7356
          %7374 = vmatprep.subr.bf16.mxu0 0
          %7375 = vmatpush1.bf16.msra.mxu0 %v7358
          %7376 = vmatprep.subr.bf16.mxu0 0
          %7377 = vmatpush1.bf16.msra.mxu0 %v7359
          %7378 = vmatprep.subr.bf16.mxu0 0
          %7379 = vmatpush1.bf16.msra.mxu0 %v7360
          %7380 = vmatprep.subr.bf16.mxu0 0
          %7381 = vmatpush1.bf16.msra.mxu0 %v7361
          %7382 = vmatprep.subr.bf16.mxu0 0
          %7383 = vmatpush1.bf16.msra.mxu0 %v7362
          %7384 = vmatprep.subr.bf16.mxu0 0
          %7385 = vmatpush1.bf16.msra.mxu0 %v7363
          %7386 = vmatprep.subr.bf16.mxu0 0
          %7387 = vmatpush1.bf16.msra.mxu0 %v7364
          %7388 = vmatprep.subr.bf16.mxu0 0
          %7389 = vmatpush1.bf16.msra.mxu0 %v7365
          %7390 = vmatprep.subr.bf16.mxu0 0
          %7391 = vmatpush1.bf16.msra.mxu0 0
          %7392 = vmatprep.subr.bf16.mxu0 0
          %7393 = vmatpush1.bf16.msra.mxu0 0
          %7394 = vmatprep.subr.bf16.mxu0 0
          %7395 = vmatpush1.bf16.msra.mxu0 0
          %7396 = vmatprep.subr.bf16.mxu0 0
          %7397 = vmatpush1.bf16.msra.mxu0 0
          %7398 = vmatprep.subr.bf16.mxu0 0
          %7399 = vmatpush1.bf16.msra.mxu0 0
          %7400 = vmatprep.subr.bf16.mxu0 0
          %7401 = vmatpush1.bf16.msra.mxu0 0
          %7402 = vmatprep.subr.bf16.mxu0 0
          %7403 = vmatpush1.bf16.msra.mxu0 0
          %7404 = vmatprep.subr.bf16.mxu0 0
          %7405 = vmatpush1.bf16.msra.mxu0 0
          %7406 = vmatprep.mubr.bf16.mxu0 0
          %7407 = vmatmul.mubr.bf16.gmra.mrb[0].mxu0 %v7284
          %v7408 = vpop.f32.mrb[0].mxu0
          %v7409 = vadd.f32 0.0, %v7408
          %v7410 = vpop.f32.mrb[0].mxu0
          %v7411 = vpop.f32.mrb[0].mxu0
          %v7412 = vadd.f32 0.0, %v7411
          %v7413 = vpop.f32.mrb[0].mxu0
          %7414 = vmatprep.mubr.bf16.mxu0 0
          %7415 = vmatmul.mubr.bf16.gmra.mrb[0].mxu0 %v7288
          %v7416 = vpop.f32.mrb[0].mxu0
          %v7417 = vadd.f32 0.0, %v7416
          %v7418 = vpop.f32.mrb[0].mxu0
          %v7419 = vpop.f32.mrb[0].mxu0
          %v7420 = vadd.f32 0.0, %v7419
          %v7421 = vpop.f32.mrb[0].mxu0
          %7422 = vmatprep.mubr.bf16.mxu0 0
          %7423 = vmatmul.mubr.bf16.gmra.mrb[0].mxu0 %v7292
          %v7424 = vpop.f32.mrb[0].mxu0
          %v7425 = vadd.f32 0.0, %v7424
          %v7426 = vpop.f32.mrb[0].mxu0
          %v7427 = vpop.f32.mrb[0].mxu0
          %v7428 = vadd.f32 0.0, %v7427
          %v7429 = vpop.f32.mrb[0].mxu0
          %7430 = vmatprep.mubr.bf16.mxu0 0
          %7431 = vmatmul.mubr.bf16.gmra.mrb[0].mxu0 %v7296
          %v7432 = vpop.f32.mrb[0].mxu0
          %v7433 = vadd.f32 0.0, %v7432
          %v7434 = vpop.f32.mrb[0].mxu0
          %v7435 = vpop.f32.mrb[0].mxu0
          %v7436 = vadd.f32 0.0, %v7435
          %v7437 = vpop.f32.mrb[0].mxu0
          %7438 = vmatprep.mubr.bf16.mxu0 0
          %7439 = vmatmul.mubr.bf16.gmra.mrb[0].mxu0 %v7300
          %v7440 = vpop.f32.mrb[0].mxu0
          %v7441 = vadd.f32 0.0, %v7440
          %v7442 = vpop.f32.mrb[0].mxu0
          %v7443 = vpop.f32.mrb[0].mxu0
          %v7444 = vadd.f32 0.0, %v7443
          %v7445 = vpop.f32.mrb[0].mxu0
          %7446 = vmatprep.mubr.bf16.mxu0 0
          %7447 = vmatmul.mubr.bf16.gmra.mrb[0].mxu0 %v7304
          %v7448 = vpop.f32.mrb[0].mxu0
          %v7449 = vadd.f32 0.0, %v7448
          %v7450 = vpop.f32.mrb[0].mxu0
          %v7451 = vpop.f32.mrb[0].mxu0
          %v7452 = vadd.f32 0.0, %v7451
          %v7453 = vpop.f32.mrb[0].mxu0
          %7454 = vmatprep.mubr.bf16.mxu0 0
          %7455 = vmatmul.mubr.bf16.gmra.mrb[0].mxu0 %v7308
          %v7456 = vpop.f32.mrb[0].mxu0
          %v7457 = vadd.f32 0.0, %v7456
          %v7458 = vpop.f32.mrb[0].mxu0
          %v7459 = vpop.f32.mrb[0].mxu0
          %v7460 = vadd.f32 0.0, %v7459
          %v7461 = vpop.f32.mrb[0].mxu0
          %7462 = vmatprep.mubr.bf16.mxu0 0
          %7463 = vmatmul.mubr.bf16.gmra.mrb[0].mxu0 %v7317
          %v7464 = vpop.f32.mrb[0].mxu0
          %v7465 = vadd.f32 0.0, %v7464
          %v7466 = vpop.f32.mrb[0].mxu0
          %v7467 = vpop.f32.mrb[0].mxu0
          %v7468 = vadd.f32 0.0, %v7467
          %v7469 = vpop.f32.mrb[0].mxu0
          %7470 = vdwg.mxu0
          %v7471 = vadd.f32 %v7240, %v7409
          %v7472 = vadd.f32 %v7241, %v7412
          %v7473 = vadd.f32 %v7242, %v7417
          %v7474 = vadd.f32 %v7243, %v7420
          %v7475 = vadd.f32 %v7244, %v7425
          %v7476 = vadd.f32 %v7245, %v7428
          %v7477 = vadd.f32 %v7246, %v7433
          %v7478 = vadd.f32 %v7247, %v7436
          %v7479 = vadd.f32 %v7248, %v7441
          %v7480 = vadd.f32 %v7249, %v7444
          %v7481 = vadd.f32 %v7250, %v7449
          %v7482 = vadd.f32 %v7251, %v7452
          %v7483 = vadd.f32 %v7252, %v7457
          %v7484 = vadd.f32 %v7253, %v7460
          %v7485 = vadd.f32 %v7254, %v7465
          %v7486 = vadd.f32 %v7255, %v7468
          %v7487 = vmul.f32 %v7471, %v2711
          %v7488 = vmul.f32 %v7472, %v2711
          %v7489 = vmul.f32 %v7473, %v2711
          %v7490 = vmul.f32 %v7474, %v2711
          %v7491 = vmul.f32 %v7475, %v2711
          %v7492 = vmul.f32 %v7476, %v2711
          %v7493 = vmul.f32 %v7477, %v2711
          %v7494 = vmul.f32 %v7478, %v2711
          %v7495 = vmul.f32 %v7479, %v2711
          %v7496 = vmul.f32 %v7480, %v2711
          %v7497 = vmul.f32 %v7481, %v2711
          %v7498 = vmul.f32 %v7482, %v2711
          %v7499 = vmul.f32 %v7483, %v2711
          %v7500 = vmul.f32 %v7484, %v2711
          %v7501 = vmul.f32 %v7485, %v2711
          %v7502 = vmul.f32 %v7486, %v2711
          %v7503 = vadd.f32 %v7487, %v2733
          %v7504 = vadd.f32 %v7488, %v2733
          %v7505 = vadd.f32 %v7489, %v2733
          %v7506 = vadd.f32 %v7490, %v2733
          %v7507 = vadd.f32 %v7491, %v2733
          %v7508 = vadd.f32 %v7492, %v2733
          %v7509 = vadd.f32 %v7493, %v2733
          %v7510 = vadd.f32 %v7494, %v2733
          %v7511 = vadd.f32 %v7495, %v2733
          %v7512 = vadd.f32 %v7496, %v2733
          %v7513 = vadd.f32 %v7497, %v2733
          %v7514 = vadd.f32 %v7498, %v2733
          %v7515 = vadd.f32 %v7499, %v2733
          %v7516 = vadd.f32 %v7500, %v2733
          %v7517 = vadd.f32 %v7501, %v2733
          %v7518 = vadd.f32 %v7502, %v2733
          %v7519 = vld [vmem:[#allocation3 + $0x100] sm:$0xff]
          %v7520 = vld [vmem:[#allocation3 + $0x108] sm:$0xff]
          %v7521 = vld [vmem:[#allocation3 + $0x110] sm:$0xff]
          %v7522 = vld [vmem:[#allocation3 + $0x118] sm:$0xff]
          %v7523 = vld [vmem:[#allocation3 + $0x120] sm:$0xff]
          %v7524 = vld [vmem:[#allocation3 + $0x128] sm:$0xff]
          %v7525 = vld [vmem:[#allocation3 + $0x130] sm:$0xff]
          %v7526 = vld [vmem:[#allocation3 + $0x138] sm:$0xff]
          %v7527 = vld [vmem:[#allocation3 + $0x140] sm:$0xff]
          %v7528 = vld [vmem:[#allocation3 + $0x148] sm:$0xff]
          %v7529 = vld [vmem:[#allocation3 + $0x150] sm:$0xff]
          %v7530 = vld [vmem:[#allocation3 + $0x158] sm:$0xff]
          %v7531 = vld [vmem:[#allocation3 + $0x160] sm:$0xff]
          %v7532 = vld [vmem:[#allocation3 + $0x168] sm:$0xff]
          %v7533 = vld [vmem:[#allocation3 + $0x170] sm:$0xff]
          %v7534 = vld [vmem:[#allocation3 + $0x178] sm:$0xff]
          %v7535 = vsel %vm2769, %v7519, 0.0
          %v7536 = vsel %vm2769, %v7520, 0.0
          %v7537 = vsel %vm2769, %v7521, 0.0
          %v7538 = vsel %vm2769, %v7522, 0.0
          %v7539 = vsel %vm2769, %v7523, 0.0
          %v7540 = vsel %vm2769, %v7524, 0.0
          %v7541 = vsel %vm2769, %v7525, 0.0
          %v7542 = vsel %vm2769, %v7526, 0.0
          %v7543 = vsel %vm2769, %v7527, 0.0
          %v7544 = vsel %vm2769, %v7528, 0.0
          %v7545 = vsel %vm2769, %v7529, 0.0
          %v7546 = vsel %vm2769, %v7530, 0.0
          %v7547 = vsel %vm2769, %v7531, 0.0
          %v7548 = vsel %vm2769, %v7532, 0.0
          %v7549 = vsel %vm2769, %v7533, 0.0
          %v7550 = vsel %vm2769, %v7534, 0.0
          %v7551 = vadd.f32 %v7503, %v7535
          %v7552 = vadd.f32 %v7504, %v7536
          %v7553 = vadd.f32 %v7505, %v7537
          %v7554 = vadd.f32 %v7506, %v7538
          %v7555 = vadd.f32 %v7507, %v7539
          %v7556 = vadd.f32 %v7508, %v7540
          %v7557 = vadd.f32 %v7509, %v7541
          %v7558 = vadd.f32 %v7510, %v7542
          %v7559 = vadd.f32 %v7511, %v7543
          %v7560 = vadd.f32 %v7512, %v7544
          %v7561 = vadd.f32 %v7513, %v7545
          %v7562 = vadd.f32 %v7514, %v7546
          %v7563 = vadd.f32 %v7515, %v7547
          %v7564 = vadd.f32 %v7516, %v7548
          %v7565 = vadd.f32 %v7517, %v7549
          %v7566 = vadd.f32 %v7518, %v7550
          %v7567 = vmax.f32 %v7551, %v2802
          %v7568 = vmax.f32 %v7552, %v2802
          %v7569 = vmax.f32 %v7553, %v2802
          %v7570 = vmax.f32 %v7554, %v2802
          %v7571 = vmax.f32 %v7555, %v2802
          %v7572 = vmax.f32 %v7556, %v2802
          %v7573 = vmax.f32 %v7557, %v2802
          %v7574 = vmax.f32 %v7558, %v2802
          %v7575 = vmax.f32 %v7559, %v2802
          %v7576 = vmax.f32 %v7560, %v2802
          %v7577 = vmax.f32 %v7561, %v2802
          %v7578 = vmax.f32 %v7562, %v2802
          %v7579 = vmax.f32 %v7563, %v2802
          %v7580 = vmax.f32 %v7564, %v2802
          %v7581 = vmax.f32 %v7565, %v2802
          %v7582 = vmax.f32 %v7566, %v2802
          %v7583 = vld [vmem:[%s1 + $0x80] sm:$0xf]
          %v7584 = vld [vmem:[%s1 + $0x84] sm:$0xf]
          %v7585 = vld [vmem:[%s1 + $0x88] sm:$0xf]
          %v7586 = vld [vmem:[%s1 + $0x8c] sm:$0xf]
          %v7587 = vld [vmem:[%s1 + $0x90] sm:$0xf]
          %v7588 = vld [vmem:[%s1 + $0x94] sm:$0xf]
          %v7589 = vld [vmem:[%s1 + $0x98] sm:$0xf]
          %v7590 = vld [vmem:[%s1 + $0x9c] sm:$0xf]
          %v7591 = vld [vmem:[%s1 + $0xa0] sm:$0xf]
          %v7592 = vld [vmem:[%s1 + $0xa4] sm:$0xf]
          %v7593 = vld [vmem:[%s1 + $0xa8] sm:$0xf]
          %v7594 = vld [vmem:[%s1 + $0xac] sm:$0xf]
          %v7595 = vld [vmem:[%s1 + $0xb0] sm:$0xf]
          %v7596 = vld [vmem:[%s1 + $0xb4] sm:$0xf]
          %v7597 = vld [vmem:[%s1 + $0xb8] sm:$0xf]
          %v7598 = vld [vmem:[%s1 + $0xbc] sm:$0xf]
          %vm7599 = vcmp.gt.bf16.partialorder %v7583, 0
          %vm7600 = vcmp.gt.bf16.partialorder %v7584, 0
          %vm7601 = vcmp.gt.bf16.partialorder %v7585, 0
          %vm7602 = vcmp.gt.bf16.partialorder %v7586, 0
          %vm7603 = vcmp.gt.bf16.partialorder %v7587, 0
          %vm7604 = vcmp.gt.bf16.partialorder %v7588, 0
          %vm7605 = vcmp.gt.bf16.partialorder %v7589, 0
          %vm7606 = vcmp.gt.bf16.partialorder %v7590, 0
          %vm7607 = vcmp.gt.bf16.partialorder %v7591, 0
          %vm7608 = vcmp.gt.bf16.partialorder %v7592, 0
          %vm7609 = vcmp.gt.bf16.partialorder %v7593, 0
          %vm7610 = vcmp.gt.bf16.partialorder %v7594, 0
          %vm7611 = vcmp.gt.bf16.partialorder %v7595, 0
          %vm7612 = vcmp.gt.bf16.partialorder %v7596, 0
          %vm7613 = vcmp.gt.bf16.partialorder %v7597, 0
          %vm7614 = vcmp.gt.bf16.partialorder %v7598, 0
          %v7615 = vpack.c.bf16 %v7568, %v7567
          %v7616 = vpack.c.bf16 %v7570, %v7569
          %v7617 = vpack.c.bf16 %v7572, %v7571
          %v7618 = vpack.c.bf16 %v7574, %v7573
          %v7619 = vpack.c.bf16 %v7576, %v7575
          %v7620 = vpack.c.bf16 %v7578, %v7577
          %v7621 = vpack.c.bf16 %v7580, %v7579
          %v7622 = vpack.c.bf16 %v7582, %v7581
          %v7631 = vunpack.c.l.b16 %v7615
          %v7632 = vunpack.c.h.b16 %v7615
          %v7633 = vunpack.c.l.b16 %v7616
          %v7634 = vunpack.c.h.b16 %v7616
          %v7635 = vunpack.c.l.b16 %v7617
          %v7636 = vunpack.c.h.b16 %v7617
          %v7637 = vunpack.c.l.b16 %v7618
          %v7638 = vunpack.c.h.b16 %v7618
          %v7639 = vunpack.c.l.b16 %v7619
          %v7640 = vunpack.c.h.b16 %v7619
          %v7641 = vunpack.c.l.b16 %v7620
          %v7642 = vunpack.c.h.b16 %v7620
          %v7643 = vunpack.c.l.b16 %v7621
          %v7644 = vunpack.c.h.b16 %v7621
          %v7645 = vunpack.c.l.b16 %v7622
          %v7646 = vunpack.c.h.b16 %v7622
          %v7647 = vpack.c.b16 %v7631, %v7631
          %v7648 = vpack.c.b16 %v7632, %v7632
          %v7649 = vpack.c.b16 %v7633, %v7633
          %v7650 = vpack.c.b16 %v7634, %v7634
          %v7651 = vpack.c.b16 %v7635, %v7635
          %v7652 = vpack.c.b16 %v7636, %v7636
          %v7653 = vpack.c.b16 %v7637, %v7637
          %v7654 = vpack.c.b16 %v7638, %v7638
          %v7655 = vpack.c.b16 %v7639, %v7639
          %v7656 = vpack.c.b16 %v7640, %v7640
          %v7657 = vpack.c.b16 %v7641, %v7641
          %v7658 = vpack.c.b16 %v7642, %v7642
          %v7659 = vpack.c.b16 %v7643, %v7643
          %v7660 = vpack.c.b16 %v7644, %v7644
          %v7661 = vpack.c.b16 %v7645, %v7645
          %v7662 = vpack.c.b16 %v7646, %v7646
          %v7679 = vsel %vm7599, %v7647, 0
          %v7680 = vsel %vm7600, %v7648, 0
          %v7681 = vsel %vm7601, %v7649, 0
          %v7682 = vsel %vm7602, %v7650, 0
          %v7683 = vsel %vm7603, %v7651, 0
          %v7684 = vsel %vm7604, %v7652, 0
          %v7685 = vsel %vm7605, %v7653, 0
          %v7686 = vsel %vm7606, %v7654, 0
          %v7687 = vsel %vm7607, %v7655, 0
          %v7688 = vsel %vm7608, %v7656, 0
          %v7689 = vsel %vm7609, %v7657, 0
          %v7690 = vsel %vm7610, %v7658, 0
          %v7691 = vsel %vm7611, %v7659, 0
          %v7692 = vsel %vm7612, %v7660, 0
          %v7693 = vsel %vm7613, %v7661, 0
          %v7694 = vsel %vm7614, %v7662, 0
          %v7711 = vunpack.c.l.b16 %v7679
          %v7712 = vunpack.c.l.b16 %v7680
          %v7713 = vunpack.c.l.b16 %v7681
          %v7714 = vunpack.c.l.b16 %v7682
          %v7715 = vunpack.c.l.b16 %v7683
          %v7716 = vunpack.c.l.b16 %v7684
          %v7717 = vunpack.c.l.b16 %v7685
          %v7718 = vunpack.c.l.b16 %v7686
          %v7719 = vunpack.c.l.b16 %v7687
          %v7720 = vunpack.c.l.b16 %v7688
          %v7721 = vunpack.c.l.b16 %v7689
          %v7722 = vunpack.c.l.b16 %v7690
          %v7723 = vunpack.c.l.b16 %v7691
          %v7724 = vunpack.c.l.b16 %v7692
          %v7725 = vunpack.c.l.b16 %v7693
          %v7726 = vunpack.c.l.b16 %v7694
          %v7727 = vpack.c.b16 %v7712, %v7711
          %v7728 = vpack.c.b16 %v7714, %v7713
          %v7729 = vpack.c.b16 %v7716, %v7715
          %v7730 = vpack.c.b16 %v7718, %v7717
          %v7731 = vpack.c.b16 %v7720, %v7719
          %v7732 = vpack.c.b16 %v7722, %v7721
          %v7733 = vpack.c.b16 %v7724, %v7723
          %v7734 = vpack.c.b16 %v7726, %v7725
          %7743 = vst [vmem:[%s2981 + $0x90] sm:$0xff] %v7727
          %7744 = vst [vmem:[%s2981 + $0x98] sm:$0xff] %v7728
          %7745 = vst [vmem:[%s2981 + $0xa0] sm:$0xff] %v7729
          %7746 = vst [vmem:[%s2981 + $0xa8] sm:$0xff] %v7730
          %7747 = vst [vmem:[%s2981 + $0xb0] sm:$0xff] %v7731
          %7748 = vst [vmem:[%s2981 + $0xb8] sm:$0xff] %v7732
          %7749 = vst [vmem:[%s2981 + $0xc0] sm:$0xff] %v7733
          %7750 = vst [vmem:[%s2981 + $0xc8] sm:$0xff] %v7734
          // Predicated region
          $region76: #{noise_resnet.1} parent=56 // pred_check
            _
          $region77: #{noise_resnet.1} parent=56 // pred_check_branch
            %7752 = sbr.rel (%p576) target = $region79
          $region78: #{noise_resnet.1} parent=56 // pred_region
            %7753 = vst [vmem:[#allocation3 + $0x100] sm:$0xff] %v7567
            %7754 = vst [vmem:[#allocation3 + $0x108] sm:$0xff] %v7568
            %7755 = vst [vmem:[#allocation3 + $0x110] sm:$0xff] %v7569
            %7756 = vst [vmem:[#allocation3 + $0x118] sm:$0xff] %v7570
            %7757 = vst [vmem:[#allocation3 + $0x120] sm:$0xff] %v7571
            %7758 = vst [vmem:[#allocation3 + $0x128] sm:$0xff] %v7572
            %7759 = vst [vmem:[#allocation3 + $0x130] sm:$0xff] %v7573
            %7760 = vst [vmem:[#allocation3 + $0x138] sm:$0xff] %v7574
            %7761 = vst [vmem:[#allocation3 + $0x140] sm:$0xff] %v7575
            %7762 = vst [vmem:[#allocation3 + $0x148] sm:$0xff] %v7576
            %7763 = vst [vmem:[#allocation3 + $0x150] sm:$0xff] %v7577
            %7764 = vst [vmem:[#allocation3 + $0x158] sm:$0xff] %v7578
            %7765 = vst [vmem:[#allocation3 + $0x160] sm:$0xff] %v7579
            %7766 = vst [vmem:[#allocation3 + $0x168] sm:$0xff] %v7580
            %7767 = vst [vmem:[#allocation3 + $0x170] sm:$0xff] %v7581
            %7768 = vst [vmem:[#allocation3 + $0x178] sm:$0xff] %v7582
          $region79: #{noise_resnet.1} parent=56 // pred_fallthru
            _
          // Predicated region
          $region80: #{noise_resnet.1} parent=56 // pred_check
            %p7769 = pneg %p3008
          $region81: #{noise_resnet.1} parent=56 // pred_check_branch
            %7771 = sbr.rel (%p7769) target = $region83
          $region82: #{noise_resnet.1} parent=56 // pred_region
            %7772 = vst [vmem:[%s268 + $0x100] sm:$0xff] %v7567
            %7773 = vst [vmem:[%s268 + $0x108] sm:$0xff] %v7568
            %7774 = vst [vmem:[%s268 + $0x110] sm:$0xff] %v7569
            %7775 = vst [vmem:[%s268 + $0x118] sm:$0xff] %v7570
            %7776 = vst [vmem:[%s268 + $0x120] sm:$0xff] %v7571
            %7777 = vst [vmem:[%s268 + $0x128] sm:$0xff] %v7572
            %7778 = vst [vmem:[%s268 + $0x130] sm:$0xff] %v7573
            %7779 = vst [vmem:[%s268 + $0x138] sm:$0xff] %v7574
            %7780 = vst [vmem:[%s268 + $0x140] sm:$0xff] %v7575
            %7781 = vst [vmem:[%s268 + $0x148] sm:$0xff] %v7576
            %7782 = vst [vmem:[%s268 + $0x150] sm:$0xff] %v7577
            %7783 = vst [vmem:[%s268 + $0x158] sm:$0xff] %v7578
            %7784 = vst [vmem:[%s268 + $0x160] sm:$0xff] %v7579
            %7785 = vst [vmem:[%s268 + $0x168] sm:$0xff] %v7580
            %7786 = vst [vmem:[%s268 + $0x170] sm:$0xff] %v7581
            %7787 = vst [vmem:[%s268 + $0x178] sm:$0xff] %v7582
          $region83: #{noise_resnet.1} parent=56 // pred_fallthru
            _
        $region57: #{noise_resnet.1} parent=39 // loop_footer
          %s548 = sadd.s32 1, %s544
        $region58: #{noise_resnet.1} parent=39 // loop_footer_branch
          %543 = sbr.rel target = $region54
        $region59: #{noise_resnet.1} parent=39 // loop_exit
          _
        %p7788 = scmp.lt.s32.totalorder %s18, 1
        %s7789 = scalar_select %p7788, %s18, 1
        %s7790 = smul.addr %s7789, 48
        %s7791 = smul.addr %s7790, 8
        %s7792 = scalar_lea.vmem %s5, %s7791
        // Predicated region
        $region84: #{noise_resnet.1} parent=39 // pred_check
          %p7793 = pneg %p146
        $region85: #{noise_resnet.1} parent=39 // pred_check_branch
          %7795 = sbr.rel (%p7793) target = $region87
        $region86: #{noise_resnet.1} parent=39 // pred_region
          _
        $region87: #{noise_resnet.1} parent=39 // pred_fallthru
          _
      $region40: #{noise_resnet.1} parent=5 // pred_fallthru
        _
      %p7796 = scmp.le.s32.totalorder 2, %s13
      // Predicated region
      $region88: #{noise_resnet.1} parent=5 // pred_check
        %p7797 = pneg %p7796
      $region89: #{noise_resnet.1} parent=5 // pred_check_branch
        %7799 = sbr.rel (%p7797) target = $region91
      $region90: #{noise_resnet.1} parent=5 // pred_region
        %s7800 = ssub.s32 %s13, 2
        // Predicated region
        $region92: #{noise_resnet.1} parent=90 // pred_check
          %p7801 = pneg %p152
        $region93: #{noise_resnet.1} parent=90 // pred_check_branch
          %7803 = sbr.rel (%p7801) target = $region95
        $region94: #{noise_resnet.1} parent=90 // pred_region
          %p7804 = scmp.lt.s32.totalorder %s19, 1
          %s7805 = scalar_select %p7804, %s19, 1
          %s7806 = smul.addr %s7805, 48
          %s7807 = smul.addr %s7806, 8
          %s7808 = scalar_lea.vmem %s5, %s7807
        $region95: #{noise_resnet.1} parent=90 // pred_fallthru
          _
      $region91: #{noise_resnet.1} parent=5 // pred_fallthru
        _
    $region6: #{noise_resnet.1} parent=1 // loop_footer
      %s17 = sadd.s32 1, %s13
    $region7: #{noise_resnet.1} parent=1 // loop_footer_branch
      %12 = sbr.rel target = $region3
    $region8: #{noise_resnet.1} parent=1 // loop_exit
      _
    %7809 = vsyncpa [#allocation5], 1
    %s7810 = scalar_lea.sflag [#allocation5], 1
    %7811 = vsyncpa %s7810, 1
    %7812 = vsyncpa [#allocation7], 1

</llo_original>
